<compile_context>
chip_gen: v7x
topology: tpu7x:2x2x1
jax: 0.10.0
libtpu: 0.0.40
codegen_flags: <defaults>
</compile_context>

<pallas_src>
import functools
import math

import jax
import jax.numpy as jnp
from jax.experimental import pallas as pl
from jax.experimental.pallas import tpu as pltpu

DOT_DTYPE = jnp.bfloat16   # MXU operand dtype; accumulation stays f32.
NEG_INF = -1e9
LN_EPS = 1e-6

CONFIG = dict(
    TOKEN_SIZE=20,
    WORD_EMBED_SIZE=16,
    HSIZE=32,
    MULTI_HEAD=4,
    HIDDEN_SIZE_HEAD=8,
    FF_SIZE=64,
    REL_SIZE=16,
    FRCNFEAT_SIZE=24,
    BBOX_FEATURE=True,
    BBOXFEAT_EMB_SIZE=8,
    ATTFLAT_MLP_SIZE=32,
    ATTFLAT_GLIMPSES=1,
    ATTFLAT_OUT_SIZE=64,
    LAYERS=1,
    OPS_NORM=True,
    OPS_RESIDUAL=True,
    GENOTYPE={
        'enc': [['sa', 'rsa'], ['ffn']],
        'dec': [['sa', 'rsa'], ['ga'], ['ffn']],
    },
)


# --------------------------------------------------------------------------------------
# In-kernel helpers
# --------------------------------------------------------------------------------------
def _dot(a, b):
    return jnp.dot(a.astype(DOT_DTYPE), b.astype(DOT_DTYPE),
                   preferred_element_type=jnp.float32)


def _dot_dims(a, b, dims):
    return jax.lax.dot_general(a.astype(DOT_DTYPE), b.astype(DOT_DTYPE), dims,
                               preferred_element_type=jnp.float32)


def _mcan_layernorm(x, g, b, eps):
    # MCAN LayerNorm: unbiased std (torch.Tensor.std), eps added to the std (not variance).
    d = x.shape[-1]
    mean = jnp.mean(x, axis=-1, keepdims=True)
    diff = x - mean
    var = jnp.sum(diff * diff, axis=-1, keepdims=True) / (d - 1)
    return g * diff / (jnp.sqrt(var) + eps) + b


def _full_spec(shape):
    # Full-array block, constant across the grid (weights / biases).
    return pl.BlockSpec(shape, lambda *args: (0,) * len(shape))


def _cost(flops, transcendentals, *arrays, extra_bytes=0):
    nbytes = sum(int(a.size) * a.dtype.itemsize for a in arrays) + int(extra_bytes)
    return pl.CostEstimate(flops=int(flops), transcendentals=int(transcendentals),
                           bytes_accessed=int(nbytes))


# --------------------------------------------------------------------------------------
# Small fused linear (only used for the relation-embedding projections)
# --------------------------------------------------------------------------------------
def _linear_kernel(x_ref, w_ref, b_ref, o_ref, *, activation):
    y = _dot(x_ref[...], w_ref[...]) + b_ref[...]
    if activation == 'relu':
        y = jnp.maximum(y, 0.0)
    elif activation == 'log_relu':           # log(clamp(relu(y), min=1e-6))
        y = jnp.log(jnp.maximum(y, 1e-6))
    o_ref[...] = y


def pallas_linear(x, w, b, activation='none'):
    lead = x.shape[:-1]
    K = x.shape[-1]
    N = w.shape[-1]
    x2 = x.reshape(-1, K).astype(jnp.float32)
    rows = x2.shape[0]
    out = pl.pallas_call(
        functools.partial(_linear_kernel, activation=activation),
        out_shape=jax.ShapeDtypeStruct((rows, N), jnp.float32),
        cost_estimate=_cost(2 * rows * K * N,
                            rows * N if activation == 'log_relu' else 0,
                            x2, w, extra_bytes=rows * N * 4),
    )(x2, w.astype(jnp.float32), b.reshape(1, N).astype(jnp.float32))
    return out.reshape(*lead, N)


# --------------------------------------------------------------------------------------
# Fused LSTM (input projection + recurrence + hidden-state writeback in one kernel)
# --------------------------------------------------------------------------------------
def _lstm_kernel(x_ref, wih_ref, bih_ref, whh_ref, bhh_ref, o_ref, *, hidden):
    S, B, _ = x_ref.shape

    def step(t, carry):
        h, c = carry
        gates = (_dot(x_ref[t], wih_ref[...]) + bih_ref[...]
                 + _dot(h, whh_ref[...]) + bhh_ref[...])
        gi, gf, gg, go = jnp.split(gates, 4, axis=-1)      # PyTorch LSTM gate order i,f,g,o
        c = jax.nn.sigmoid(gf) * c + jax.nn.sigmoid(gi) * jnp.tanh(gg)
        h = jax.nn.sigmoid(go) * jnp.tanh(c)
        o_ref[t] = h
        return (h, c)

    h0 = jnp.zeros((B, hidden), jnp.float32)
    c0 = jnp.zeros((B, hidden), jnp.float32)
    jax.lax.fori_loop(0, S, step, (h0, c0), unroll=True)


def lstm_forward(x, lp):
    # Time recurrence is inherently sequential; it runs as an unrolled fori_loop inside
    # one Pallas kernel with h/c kept in vregs across time steps.
    B, S, E = x.shape
    H = lp['w_hh'].shape[0]
    xt = jnp.swapaxes(x, 0, 1).astype(jnp.float32)          # (S, B, E)
    out = pl.pallas_call(
        functools.partial(_lstm_kernel, hidden=H),
        out_shape=jax.ShapeDtypeStruct((S, B, H), jnp.float32),
        cost_estimate=_cost(2 * S * B * (E + H) * 4 * H, 8 * S * B * H,
                            xt, lp['w_ih'], lp['w_hh'], extra_bytes=S * B * H * 4),
    )(xt, lp['w_ih'], lp['b_ih'].reshape(1, 4 * H),
      lp['w_hh'], lp['b_hh'].reshape(1, 4 * H))
    return jnp.swapaxes(out, 0, 1)                          # (B, S, H)


# --------------------------------------------------------------------------------------
# Fused image-feature projection: bbox linear + (implicit concat) + imgfeat linear
# --------------------------------------------------------------------------------------
def _imgfeat_kernel(frcn_ref, bbox_ref, wbb_ref, bbb_ref, wfr_ref, wbe_ref, bim_ref, o_ref):
    bb = _dot(bbox_ref[...], wbb_ref[...]) + bbb_ref[...]
    # concat(frcn, bbox_emb) @ W  ==  frcn @ W[:F] + bbox_emb @ W[F:]
    o_ref[...] = _dot(frcn_ref[...], wfr_ref[...]) + _dot(bb, wbe_ref[...]) + bim_ref[...]


def imgfeat_forward(frcn_feat, bbox_feat, p_bbox, p_img, C):
    B, Sy, F = frcn_feat.shape
    H = C['HSIZE']
    E = C['BBOXFEAT_EMB_SIZE']
    frcn2 = frcn_feat.reshape(B * Sy, F).astype(jnp.float32)
    bbox2 = bbox_feat.reshape(B * Sy, -1).astype(jnp.float32)
    wfr, wbe = p_img['w'][:F], p_img['w'][F:]
    out = pl.pallas_call(
        _imgfeat_kernel,
        out_shape=jax.ShapeDtypeStruct((B * Sy, H), jnp.float32),
        cost_estimate=_cost(2 * B * Sy * (5 * E + (F + E) * H), 0,
                            frcn2, bbox2, p_img['w'], p_bbox['w'],
                            extra_bytes=B * Sy * H * 4),
    )(frcn2, bbox2, p_bbox['w'], p_bbox['b'].reshape(1, E),
      wfr, wbe, p_img['b'].reshape(1, H))
    return out.reshape(B, Sy, H)


# --------------------------------------------------------------------------------------
# Fused multi-head attention op: QKV proj + all heads + merge + residual + LayerNorm
# --------------------------------------------------------------------------------------
def _mhatt_kernel(*refs, nh, dh, scale, eps, residual, norm, has_rel):
    if has_rel:
        (x_ref, ctx_ref, mask_ref, rel_ref, wq_ref, bq_ref, wkv_ref, bkv_ref,
         wm_ref, bm_ref, g_ref, bln_ref, o_ref) = refs
    else:
        (x_ref, ctx_ref, mask_ref, wq_ref, bq_ref, wkv_ref, bkv_ref,
         wm_ref, bm_ref, g_ref, bln_ref, o_ref) = refs
        rel_ref = None

    x = x_ref[0]                                   # (Sq, H)
    ctx = ctx_ref[0]                               # (Sk, H)
    mask = mask_ref[0]                             # (1, Sk) additive key mask
    H = nh * dh

    q = _dot(x, wq_ref[...]) + bq_ref[...]         # (Sq, H)
    kv = _dot(ctx, wkv_ref[...]) + bkv_ref[...]    # (Sk, 2H) — fused K/V projection
    k = kv[:, :H]
    v = kv[:, H:]

    heads = []
    for h in range(nh):                            # nh=4, unrolled; heads sliced in VMEM
        qh = q[:, h * dh:(h + 1) * dh]
        kh = k[:, h * dh:(h + 1) * dh]
        vh = v[:, h * dh:(h + 1) * dh]
        s = _dot_dims(qh, kh, (((1,), (1,)), ((), ()))) * scale + mask   # (Sq, Sk)
        if rel_ref is not None:
            s = s + rel_ref[0, h]
        m = jnp.max(s, axis=-1, keepdims=True)
        p = jnp.exp(s - m)
        denom = jnp.sum(p, axis=-1, keepdims=True)
        p = p * pl.reciprocal(denom, approx=True)
        heads.append(_dot(p, vh))                                        # (Sq, dh)

    att = jnp.concatenate(heads, axis=-1)          # (Sq, H)
    y = _dot(att, wm_ref[...]) + bm_ref[...]
    if residual:
        y = y + x
    if norm:
        y = _mcan_layernorm(y, g_ref[...], bln_ref[...], eps)
    o_ref[0] = y


def fused_mhatt(p, x, ctx, mask_add, C, rel_bias=None):
    B, Sq, H = x.shape
    Sk = ctx.shape[1]
    nh, dh = C['MULTI_HEAD'], C['HIDDEN_SIZE_HEAD']
    scale = 1.0 / math.sqrt(dh)

    wq, bq = p['q']['w'], p['q']['b'].reshape(1, H)
    wkv = jnp.concatenate([p['k']['w'], p['v']['w']], axis=-1)           # (H, 2H)
    bkv = jnp.concatenate([p['k']['b'], p['v']['b']], axis=0).reshape(1, 2 * H)
    wm, bm = p['merge']['w'], p['merge']['b'].reshape(1, H)
    if C['OPS_NORM']:
        g, bl = p['ln']['g'].reshape(1, H), p['ln']['b'].reshape(1, H)
    else:
        g, bl = jnp.ones((1, H), jnp.float32), jnp.zeros((1, H), jnp.float32)

    inputs = [x.astype(jnp.float32), ctx.astype(jnp.float32), mask_add]
    in_specs = [
        pl.BlockSpec((1, Sq, H), lambda i: (i, 0, 0)),
        pl.BlockSpec((1, Sk, H), lambda i: (i, 0, 0)),
        pl.BlockSpec((1, 1, Sk), lambda i: (i, 0, 0)),
    ]
    if rel_bias is not None:
        inputs.append(rel_bias.astype(jnp.float32))
        in_specs.append(pl.BlockSpec((1, nh, Sq, Sk), lambda i: (i, 0, 0, 0)))
    weights = [wq, bq, wkv, bkv, wm, bm, g, bl]
    inputs += weights
    in_specs += [_full_spec(w.shape) for w in weights]

    flops = 2 * B * (Sq * H * H + Sk * H * 2 * H + nh * 2 * Sq * Sk * dh + Sq * H * H)
    out = pl.pallas_call(
        functools.partial(_mhatt_kernel, nh=nh, dh=dh, scale=scale, eps=LN_EPS,
                          residual=C['OPS_RESIDUAL'], norm=C['OPS_NORM'],
                          has_rel=rel_bias is not None),
        out_shape=jax.ShapeDtypeStruct((B, Sq, H), jnp.float32),
        grid=(B,),
        in_specs=in_specs,
        out_specs=pl.BlockSpec((1, Sq, H), lambda i: (i, 0, 0)),
        compiler_params=pltpu.CompilerParams(dimension_semantics=("parallel",)),
        cost_estimate=_cost(flops, B * nh * Sq * Sk, *inputs, extra_bytes=B * Sq * H * 4),
    )(*inputs)
    return out


# --------------------------------------------------------------------------------------
# Fused FFN op: fc1 + relu + fc2 + residual + LayerNorm
# --------------------------------------------------------------------------------------
def _ffn_kernel(x_ref, w1_ref, b1_ref, w2_ref, b2_ref, g_ref, bln_ref, o_ref, *,
                eps, residual, norm):
    x = x_ref[...]
    h = jnp.maximum(_dot(x, w1_ref[...]) + b1_ref[...], 0.0)
    y = _dot(h, w2_ref[...]) + b2_ref[...]
    if residual:
        y = y + x
    if norm:
        y = _mcan_layernorm(y, g_ref[...], bln_ref[...], eps)
    o_ref[...] = y


def fused_ffn(p, x, C):
    B, S, H = x.shape
    F = C['FF_SIZE']
    x2 = x.reshape(B * S, H).astype(jnp.float32)
    if C['OPS_NORM']:
        g, bl = p['ln']['g'].reshape(1, H), p['ln']['b'].reshape(1, H)
    else:
        g, bl = jnp.ones((1, H), jnp.float32), jnp.zeros((1, H), jnp.float32)
    out = pl.pallas_call(
        functools.partial(_ffn_kernel, eps=LN_EPS, residual=C['OPS_RESIDUAL'],
                          norm=C['OPS_NORM']),
        out_shape=jax.ShapeDtypeStruct((B * S, H), jnp.float32),
        cost_estimate=_cost(4 * B * S * H * F, 0, x2, p['fc1']['w'], p['fc2']['w'],
                            extra_bytes=B * S * H * 4),
    )(x2, p['fc1']['w'], p['fc1']['b'].reshape(1, F),
      p['fc2']['w'], p['fc2']['b'].reshape(1, H), g, bl)
    return out.reshape(B, S, H)


# --------------------------------------------------------------------------------------
# Fused AttFlat: mlp(relu) -> masked softmax over seq -> pooling -> merge linear
# --------------------------------------------------------------------------------------
def _attflat_kernel(x_ref, mask_ref, w1_ref, b1_ref, w2_ref, b2_ref, wm_ref, bm_ref,
                    o_ref, *, glimpses):
    x = x_ref[0]                                               # (S, H)
    a = jnp.maximum(_dot(x, w1_ref[...]) + b1_ref[...], 0.0)   # (S, MLP)
    a = _dot(a, w2_ref[...]) + b2_ref[...] + mask_ref[0]       # (S, G) + (S,1) mask
    m = jnp.max(a, axis=0, keepdims=True)
    pexp = jnp.exp(a - m)
    denom = jnp.sum(pexp, axis=0, keepdims=True)
    p = pexp * pl.reciprocal(denom, approx=True)               # softmax over seq
    pooled = []
    for gi in range(glimpses):                                 # G=1 in config
        w = p[:, gi:gi + 1]                                    # (S, 1)
        pooled.append(jnp.sum(w * x, axis=0, keepdims=True))   # (1, H)
    flat = jnp.concatenate(pooled, axis=-1)                    # (1, G*H)
    o_ref[0] = _dot(flat, wm_ref[...]) + bm_ref[...]           # (1, OUT)


def fused_attflat(p, x, mask_col, C):
    B, S, H = x.shape
    G = C['ATTFLAT_GLIMPSES']
    M = C['ATTFLAT_MLP_SIZE']
    O = C['ATTFLAT_OUT_SIZE']
    inputs = [x.astype(jnp.float32), mask_col,
              p['fc1']['w'], p['fc1']['b'].reshape(1, M),
              p['fc2']['w'], p['fc2']['b'].reshape(1, G),
              p['merge']['w'], p['merge']['b'].reshape(1, O)]
    in_specs = [pl.BlockSpec((1, S, H), lambda i: (i, 0, 0)),
                pl.BlockSpec((1, S, 1), lambda i: (i, 0, 0))] + \
               [_full_spec(a.shape) for a in inputs[2:]]
    out = pl.pallas_call(
        functools.partial(_attflat_kernel, glimpses=G),
        out_shape=jax.ShapeDtypeStruct((B, 1, O), jnp.float32),
        grid=(B,),
        in_specs=in_specs,
        out_specs=pl.BlockSpec((1, 1, O), lambda i: (i, 0, 0)),
        compiler_params=pltpu.CompilerParams(dimension_semantics=("parallel",)),
        cost_estimate=_cost(2 * B * (S * H * M + S * M * G + G * S * H + G * H * O),
                            B * S * G, *inputs, extra_bytes=B * O * 4),
    )(*inputs)
    return out.reshape(B, O)


# --------------------------------------------------------------------------------------
# Fused head: (x_out + y_out) -> LayerNorm -> proj -> sigmoid
# --------------------------------------------------------------------------------------
def _final_kernel(x_ref, y_ref, g_ref, b_ref, wp_ref, bp_ref, o_ref, *, eps):
    xy = x_ref[...] + y_ref[...]
    z = _mcan_layernorm(xy, g_ref[...], b_ref[...], eps)
    s = _dot(z, wp_ref[...]) + bp_ref[...]
    o_ref[...] = jax.nn.sigmoid(s)


def fused_final(x_out, y_out, p_ln, p_proj):
    B, O = x_out.shape
    out = pl.pallas_call(
        functools.partial(_final_kernel, eps=LN_EPS),
        out_shape=jax.ShapeDtypeStruct((B, 1), jnp.float32),
        cost_estimate=_cost(2 * B * O + 6 * B * O, B, x_out, y_out, p_proj['w'],
                            extra_bytes=B * 4),
    )(x_out.astype(jnp.float32), y_out.astype(jnp.float32),
      p_ln['g'].reshape(1, O), p_ln['b'].reshape(1, O),
      p_proj['w'], p_proj['b'].reshape(1, 1))
    return out[:, 0]


# --------------------------------------------------------------------------------------
# Parameter initialization (deterministic, synthetic)
# --------------------------------------------------------------------------------------
def _dense(key, din, dout, scale=0.05):
    kw, kb = jax.random.split(key)
    return {'w': jax.random.normal(kw, (din, dout), jnp.float32) * scale,
            'b': jax.random.normal(kb, (dout,), jnp.float32) * 0.01}


def _ln(d):
    return {'g': jnp.ones((d,), jnp.float32), 'b': jnp.zeros((d,), jnp.float32)}


def _init_op(key, name, C):
    H = C['HSIZE']
    ks = jax.random.split(key, 8)
    if name in ('sa', 'ga'):
        p = {'q': _dense(ks[0], H, H), 'k': _dense(ks[1], H, H),
             'v': _dense(ks[2], H, H), 'merge': _dense(ks[3], H, H)}
    elif name == 'rsa':
        p = {'q': _dense(ks[0], H, H), 'k': _dense(ks[1], H, H),
             'v': _dense(ks[2], H, H), 'merge': _dense(ks[3], H, H),
             'rel': _dense(ks[4], C['REL_SIZE'], C['MULTI_HEAD'])}
    elif name == 'ffn':
        p = {'fc1': _dense(ks[0], H, C['FF_SIZE']),
             'fc2': _dense(ks[1], C['FF_SIZE'], H)}
    else:
        raise ValueError(name)
    if C['OPS_NORM']:
        p['ln'] = _ln(H)
    return p


def _init_cell(key, gene, C):
    rows = []
    for node in gene:
        row = []
        for op_name in node:
            key, sub = jax.random.split(key)
            row.append((op_name, _init_op(sub, op_name, C)))
        rows.append(row)
    return rows


def _init_attflat(key, C):
    H, G = C['HSIZE'], C['ATTFLAT_GLIMPSES']
    ks = jax.random.split(key, 3)
    return {'fc1': _dense(ks[0], H, C['ATTFLAT_MLP_SIZE']),
            'fc2': _dense(ks[1], C['ATTFLAT_MLP_SIZE'], G),
            'merge': _dense(ks[2], H * G, C['ATTFLAT_OUT_SIZE'])}


def init_net(key, C):
    E, H = C['WORD_EMBED_SIZE'], C['HSIZE']
    keys = list(jax.random.split(key, 16))
    it = iter(keys)
    p = {}
    p['embedding'] = jax.random.normal(next(it), (C['TOKEN_SIZE'], E), jnp.float32) * 0.1
    p['lstm'] = {
        'w_ih': jax.random.normal(next(it), (E, 4 * H), jnp.float32) * 0.05,
        'b_ih': jnp.zeros((4 * H,), jnp.float32),
        'w_hh': jax.random.normal(next(it), (H, 4 * H), jnp.float32) * 0.05,
        'b_hh': jnp.zeros((4 * H,), jnp.float32),
    }
    p['bboxfeat_linear'] = _dense(next(it), 5, C['BBOXFEAT_EMB_SIZE'])
    p['imgfeat_linear'] = _dense(next(it), C['FRCNFEAT_SIZE'] + C['BBOXFEAT_EMB_SIZE'], H)
    p['linear_y_rel'] = _dense(next(it), 4, C['REL_SIZE'])
    p['enc'] = [_init_cell(next(it), C['GENOTYPE']['enc'], C) for _ in range(C['LAYERS'])]
    p['dec'] = [_init_cell(next(it), C['GENOTYPE']['dec'], C) for _ in range(C['LAYERS'])]
    p['attflat_x'] = _init_attflat(next(it), C)
    p['attflat_y'] = _init_attflat(next(it), C)
    p['proj_norm'] = _ln(C['ATTFLAT_OUT_SIZE'])
    p['proj'] = _dense(next(it), C['ATTFLAT_OUT_SIZE'], 1)
    return p


# --------------------------------------------------------------------------------------
# Ops / cells / network (glue in JAX, hot paths fused in Pallas)
# --------------------------------------------------------------------------------------
def op_sa(p, s, pre, s_mask, pre_mask, rel, C):
    return fused_mhatt(p, s, s, s_mask, C)


def op_rsa(p, s, pre, s_mask, pre_mask, rel, C):
    # rel head projection + relu + log(clamp(., 1e-6)) fused in one linear kernel; the
    # (B,S,S,nh)->(B,nh,S,S) permute is one tiny XLA transpose (avoids in-kernel relayout).
    rb = pallas_linear(rel, p['rel']['w'], p['rel']['b'], 'log_relu')
    rel_bias = jnp.transpose(rb, (0, 3, 1, 2))
    return fused_mhatt(p, s, s, s_mask, C, rel_bias=rel_bias)


def op_ga(p, s, pre, s_mask, pre_mask, rel, C):
    return fused_mhatt(p, s, pre, pre_mask, C)


def op_ffn(p, s, pre, s_mask, pre_mask, rel, C):
    return fused_ffn(p, s, C)


OP_FORWARD = {'sa': op_sa, 'rsa': op_rsa, 'ga': op_ga, 'ffn': op_ffn}


def cell_forward(cell, s, pre, s_mask, pre_mask, rel, C):
    for row in cell:
        s = sum(OP_FORWARD[name](p, s, pre, s_mask, pre_mask, rel, C) for name, p in row)
    return s


def net_forward(params, frcn_feat, bbox_feat, y_rel_embed, ques_ix, x_rel_embed, C):
    # padding masks: additive key mask (B,1,S) for attention, column mask (B,S,1) for attflat
    x_pad = (ques_ix == 0)
    y_pad = (jnp.sum(jnp.abs(frcn_feat), axis=-1) == 0)
    x_key_mask = jnp.where(x_pad, NEG_INF, 0.0).astype(jnp.float32)[:, None, :]
    y_key_mask = jnp.where(y_pad, NEG_INF, 0.0).astype(jnp.float32)[:, None, :]
    x_col_mask = jnp.where(x_pad, NEG_INF, 0.0).astype(jnp.float32)[:, :, None]
    y_col_mask = jnp.where(y_pad, NEG_INF, 0.0).astype(jnp.float32)[:, :, None]

    # language branch: embedding gather (XLA) + fused LSTM kernel
    lang_feat = params['embedding'][ques_ix]
    x = lstm_forward(lang_feat, params['lstm'])

    # image branch: fused bbox-embed + projection kernel
    y = imgfeat_forward(frcn_feat, bbox_feat, params['bboxfeat_linear'],
                        params['imgfeat_linear'], C)

    # relation embedding for image branch
    y_rel = pallas_linear(y_rel_embed, params['linear_y_rel']['w'],
                          params['linear_y_rel']['b'], 'relu')

    for cell in params['enc']:
        x = cell_forward(cell, x, None, x_key_mask, None, x_rel_embed, C)
    for cell in params['dec']:
        y = cell_forward(cell, y, x, y_key_mask, x_key_mask, y_rel, C)

    x_out = fused_attflat(params['attflat_x'], x, x_col_mask, C)
    y_out = fused_attflat(params['attflat_y'], y, y_col_mask, C)
    return fused_final(x_out, y_out, params['proj_norm'], params['proj'])


# --------------------------------------------------------------------------------------
# Demo
# --------------------------------------------------------------------------------------
if __name__ == "__main__":
    C = CONFIG
    B, Sx, Sy = 2, 8, 8

    key = jax.random.PRNGKey(0)
    k_in, k_params = jax.random.split(key)
    k1, k2, k3, k4, k5 = jax.random.split(k_in, 5)

    ques_ix = jax.random.randint(k1, (B, Sx), 1, C['TOKEN_SIZE']).astype(jnp.int32)
    ques_ix = ques_ix.at[1, 6:].set(0)                                  # padded tokens
    frcn_feat = jax.random.normal(k2, (B, Sy, C['FRCNFEAT_SIZE']), jnp.float32)
    frcn_feat = frcn_feat.at[0, Sy - 1, :].set(0.0)                     # padded box
    bbox_feat = jax.random.uniform(k3, (B, Sy, 5), dtype=jnp.float32)
    y_rel_embed = jax.random.normal(k4, (B, Sy, Sy, 4), jnp.float32)
    x_rel_embed = jax.random.normal(k5, (B, Sx, Sx, C['REL_SIZE']), jnp.float32)

    params = init_net(k_params, C)

    fwd = jax.jit(lambda f, bb, yr, q, xr: net_forward(params, f, bb, yr, q, xr, C))
    scores = fwd(frcn_feat, bbox_feat, y_rel_embed, ques_ix, x_rel_embed)
    scores = jax.block_until_ready(scores)

    assert scores.shape == (B,), scores.shape
    assert bool(jnp.all(jnp.isfinite(scores)))
    assert bool(jnp.all((scores >= 0.0) & (scores <= 1.0)))
    print("KERNEL_OK")
</pallas_src>

<mosaic_0001>
module attributes {stable_mosaic.version = 11 : i64} {
  func.func @_linear_kernel(%arg0: memref<128x16xf32, #tpu.memory_space<vmem>>, %arg1: memref<16x4xf32, #tpu.memory_space<vmem>>, %arg2: memref<1x4xf32, #tpu.memory_space<vmem>>, %arg3: memref<128x4xf32, #tpu.memory_space<vmem>>) attributes {dimension_semantics = [], scalar_prefetch = 0 : i64, scratch_operands = 0 : i64, tpu.core_type = #tpu.core_type<tc>} {
    %c0 = arith.constant 0 : index
    %c0_0 = arith.constant 0 : index
    %0 = vector.load %arg0[%c0, %c0_0] : memref<128x16xf32, #tpu.memory_space<vmem>>, vector<128x16xf32>
    %c0_1 = arith.constant 0 : index
    %c0_2 = arith.constant 0 : index
    %1 = vector.load %arg1[%c0_1, %c0_2] : memref<16x4xf32, #tpu.memory_space<vmem>>, vector<16x4xf32>
    %2 = arith.truncf %0 : vector<128x16xf32> to vector<128x16xbf16>
    %3 = arith.truncf %1 : vector<16x4xf32> to vector<16x4xbf16>
    %cst = arith.constant dense<0.000000e+00> : vector<128x4xf32>
    %4 = tpu.matmul %2, %3, %cst {dimension_numbers = #tpu.dot_dimension_numbers<[1], [0], [0], [1], [0, 0, 1, 1], [], []>} : vector<128x16xbf16>, vector<16x4xbf16>, vector<128x4xf32> -> vector<128x4xf32>
    %c0_3 = arith.constant 0 : index
    %c0_4 = arith.constant 0 : index
    %5 = vector.load %arg2[%c0_3, %c0_4] : memref<1x4xf32, #tpu.memory_space<vmem>>, vector<1x4xf32>
    %6 = vector.broadcast %5 : vector<1x4xf32> to vector<128x4xf32>
    %7 = arith.addf %4, %6 : vector<128x4xf32>
    %cst_5 = arith.constant 9.99999997E-7 : f32
    %8 = vector.broadcast %cst_5 : f32 to vector<128x4xf32>
    %9 = arith.maximumf %7, %8 : vector<128x4xf32>
    %10 = math.log %9 : vector<128x4xf32>
    %c0_6 = arith.constant 0 : index
    %c0_7 = arith.constant 0 : index
    %11 = vector.load %arg3[%c0_6, %c0_7] : memref<128x4xf32, #tpu.memory_space<vmem>>, vector<128x4xf32>
    tpu.vector_store %arg3[%c0_6, %c0_7], %10 {strides = array<i32>} : memref<128x4xf32, #tpu.memory_space<vmem>>, vector<128x4xf32>,
    return
  }
}

module attributes {stable_mosaic.version = 11 : i64} {
  func.func @_mhatt_kernel(%arg0: i32, %arg1: memref<1x8x32xf32, #tpu.memory_space<vmem>>, %arg2: memref<1x8x32xf32, #tpu.memory_space<vmem>>, %arg3: memref<1x1x8xf32, #tpu.memory_space<vmem>>, %arg4: memref<1x4x8x8xf32, #tpu.memory_space<vmem>>, %arg5: memref<32x32xf32, #tpu.memory_space<vmem>>, %arg6: memref<1x32xf32, #tpu.memory_space<vmem>>, %arg7: memref<32x64xf32, #tpu.memory_space<vmem>>, %arg8: memref<1x64xf32, #tpu.memory_space<vmem>>, %arg9: memref<32x32xf32, #tpu.memory_space<vmem>>, %arg10: memref<1x32xf32, #tpu.memory_space<vmem>>, %arg11: memref<1x32xf32, #tpu.memory_space<vmem>>, %arg12: memref<1x32xf32, #tpu.memory_space<vmem>>, %arg13: memref<1x8x32xf32, #tpu.memory_space<vmem>>) attributes {dimension_semantics = [#tpu.dimension_semantics<parallel>], iteration_bounds = array<i64: 2>, scalar_prefetch = 0 : i64, scratch_operands = 0 : i64, tpu.core_type = #tpu.core_type<tc>, window_params = [{transform_indices = @transform_0, window_bounds = array<i64: 1, 8, 32>}, {transform_indices = @transform_1, window_bounds = array<i64: 1, 8, 32>}, {transform_indices = @transform_2, window_bounds = array<i64: 1, 1, 8>}, {transform_indices = @transform_3, window_bounds = array<i64: 1, 4, 8, 8>}, {pipeline_mode = #tpu.pipeline_mode<synchronous>, transform_indices = @transform_4, window_bounds = array<i64: 32, 32>}, {pipeline_mode = #tpu.pipeline_mode<synchronous>, transform_indices = @transform_5, window_bounds = array<i64: 1, 32>}, {pipeline_mode = #tpu.pipeline_mode<synchronous>, transform_indices = @transform_6, window_bounds = array<i64: 32, 64>}, {pipeline_mode = #tpu.pipeline_mode<synchronous>, transform_indices = @transform_7, window_bounds = array<i64: 1, 64>}, {pipeline_mode = #tpu.pipeline_mode<synchronous>, transform_indices = @transform_8, window_bounds = array<i64: 32, 32>}, {pipeline_mode = #tpu.pipeline_mode<synchronous>, transform_indices = @transform_9, window_bounds = array<i64: 1, 32>}, {pipeline_mode = #tpu.pipeline_mode<synchronous>, transform_indices = @transform_10, window_bounds = array<i64: 1, 32>}, {pipeline_mode = #tpu.pipeline_mode<synchronous>, transform_indices = @transform_11, window_bounds = array<i64: 1, 32>}, {transform_indices = @transform_12, window_bounds = array<i64: 1, 8, 32>}]} {
    %c0 = arith.constant 0 : index
    %c0_0 = arith.constant 0 : index
    %c0_1 = arith.constant 0 : index
    %0 = vector.load %arg1[%c0, %c0_0, %c0_1] : memref<1x8x32xf32, #tpu.memory_space<vmem>>, vector<1x8x32xf32>
    %1 = vector.shape_cast %0 : vector<1x8x32xf32> to vector<8x32xf32>
    %c0_2 = arith.constant 0 : index
    %c0_3 = arith.constant 0 : index
    %c0_4 = arith.constant 0 : index
    %2 = vector.load %arg2[%c0_2, %c0_3, %c0_4] : memref<1x8x32xf32, #tpu.memory_space<vmem>>, vector<1x8x32xf32>
    %3 = vector.shape_cast %2 : vector<1x8x32xf32> to vector<8x32xf32>
    %c0_5 = arith.constant 0 : index
    %c0_6 = arith.constant 0 : index
    %c0_7 = arith.constant 0 : index
    %4 = vector.load %arg3[%c0_5, %c0_6, %c0_7] : memref<1x1x8xf32, #tpu.memory_space<vmem>>, vector<1x1x8xf32>
    %5 = vector.shape_cast %4 : vector<1x1x8xf32> to vector<1x8xf32>
    %c0_8 = arith.constant 0 : index
    %c0_9 = arith.constant 0 : index
    %6 = vector.load %arg5[%c0_8, %c0_9] : memref<32x32xf32, #tpu.memory_space<vmem>>, vector<32x32xf32>
    %7 = arith.truncf %1 : vector<8x32xf32> to vector<8x32xbf16>
    %8 = arith.truncf %6 : vector<32x32xf32> to vector<32x32xbf16>
    %cst = arith.constant dense<0.000000e+00> : vector<8x32xf32>
    %9 = tpu.matmul %7, %8, %cst {dimension_numbers = #tpu.dot_dimension_numbers<[1], [0], [0], [1], [0, 0, 1, 1], [], []>} : vector<8x32xbf16>, vector<32x32xbf16>, vector<8x32xf32> -> vector<8x32xf32>
    %c0_10 = arith.constant 0 : index
    %c0_11 = arith.constant 0 : index
    %10 = vector.load %arg6[%c0_10, %c0_11] : memref<1x32xf32, #tpu.memory_space<vmem>>, vector<1x32xf32>
    %11 = vector.broadcast %10 : vector<1x32xf32> to vector<8x32xf32>
    %12 = arith.addf %9, %11 : vector<8x32xf32>
    %c0_12 = arith.constant 0 : index
    %c0_13 = arith.constant 0 : index
    %13 = vector.load %arg7[%c0_12, %c0_13] : memref<32x64xf32, #tpu.memory_space<vmem>>, vector<32x64xf32>
    %14 = arith.truncf %3 : vector<8x32xf32> to vector<8x32xbf16>
    %15 = arith.truncf %13 : vector<32x64xf32> to vector<32x64xbf16>
    %cst_14 = arith.constant dense<0.000000e+00> : vector<8x64xf32>
    %16 = tpu.matmul %14, %15, %cst_14 {dimension_numbers = #tpu.dot_dimension_numbers<[1], [0], [0], [1], [0, 0, 1, 1], [], []>} : vector<8x32xbf16>, vector<32x64xbf16>, vector<8x64xf32> -> vector<8x64xf32>
    %c0_15 = arith.constant 0 : index
    %c0_16 = arith.constant 0 : index
    %17 = vector.load %arg8[%c0_15, %c0_16] : memref<1x64xf32, #tpu.memory_space<vmem>>, vector<1x64xf32>
    %18 = vector.broadcast %17 : vector<1x64xf32> to vector<8x64xf32>
    %19 = arith.addf %16, %18 : vector<8x64xf32>
    %20 = vector.extract_strided_slice %19 {offsets = [0, 0], sizes = [8, 32], strides = [1, 1]} : vector<8x64xf32> to vector<8x32xf32>
    %21 = vector.extract_strided_slice %19 {offsets = [0, 32], sizes = [8, 32], strides = [1, 1]} : vector<8x64xf32> to vector<8x32xf32>
    %22 = vector.extract_strided_slice %12 {offsets = [0, 0], sizes = [8, 8], strides = [1, 1]} : vector<8x32xf32> to vector<8x8xf32>
    %23 = vector.extract_strided_slice %20 {offsets = [0, 0], sizes = [8, 8], strides = [1, 1]} : vector<8x32xf32> to vector<8x8xf32>
    %24 = vector.extract_strided_slice %21 {offsets = [0, 0], sizes = [8, 8], strides = [1, 1]} : vector<8x32xf32> to vector<8x8xf32>
    %25 = arith.truncf %22 : vector<8x8xf32> to vector<8x8xbf16>
    %26 = arith.truncf %23 : vector<8x8xf32> to vector<8x8xbf16>
    %cst_17 = arith.constant dense<0.000000e+00> : vector<8x8xf32>
    %27 = tpu.matmul %25, %26, %cst_17 {dimension_numbers = #tpu.dot_dimension_numbers<[1], [1], [0], [0], [0, 0, 1, 0], [], []>} : vector<8x8xbf16>, vector<8x8xbf16>, vector<8x8xf32> -> vector<8x8xf32>
    %cst_18 = arith.constant 0.353553385 : f32
    %28 = vector.broadcast %cst_18 : f32 to vector<8x8xf32>
    %29 = arith.mulf %27, %28 : vector<8x8xf32>
    %30 = vector.broadcast %5 : vector<1x8xf32> to vector<8x8xf32>
    %31 = arith.addf %29, %30 : vector<8x8xf32>
    %c0_19 = arith.constant 0 : index
    %c0_20 = arith.constant 0 : index
    %c0_21 = arith.constant 0 : index
    %c0_22 = arith.constant 0 : index
    %32 = vector.load %arg4[%c0_19, %c0_20, %c0_21, %c0_22] : memref<1x4x8x8xf32, #tpu.memory_space<vmem>>, vector<1x1x8x8xf32>
    %33 = vector.shape_cast %32 : vector<1x1x8x8xf32> to vector<8x8xf32>
    %34 = arith.addf %31, %33 : vector<8x8xf32>
    %cst_23 = arith.constant dense<0xFF800000> : vector<8xf32>
    %35 = vector.multi_reduction <maximumf>, %34, %cst_23 [1] : vector<8x8xf32> to vector<8xf32>
    %36 = vector.shape_cast %35 : vector<8xf32> to vector<8x1xf32>
    %37 = vector.broadcast %36 : vector<8x1xf32> to vector<8x8xf32>
    %38 = arith.subf %34, %37 : vector<8x8xf32>
    %39 = math.exp %38 : vector<8x8xf32>
    %cst_24 = arith.constant dense<0.000000e+00> : vector<8xf32>
    %40 = vector.multi_reduction <add>, %39, %cst_24 [1] : vector<8x8xf32> to vector<8xf32>
    %41 = vector.shape_cast %40 : vector<8xf32> to vector<8x1xf32>
    %42 = tpu.reciprocal %41 {approx = true} : vector<8x1xf32> -> vector<8x1xf32>
    %43 = vector.broadcast %42 : vector<8x1xf32> to vector<8x8xf32>
    %44 = arith.mulf %39, %43 : vector<8x8xf32>
    %45 = arith.truncf %44 : vector<8x8xf32> to vector<8x8xbf16>
    %46 = arith.truncf %24 : vector<8x8xf32> to vector<8x8xbf16>
    %cst_25 = arith.constant dense<0.000000e+00> : vector<8x8xf32>
    %47 = tpu.matmul %45, %46, %cst_25 {dimension_numbers = #tpu.dot_dimension_numbers<[1], [0], [0], [1], [0, 0, 1, 1], [], []>} : vector<8x8xbf16>, vector<8x8xbf16>, vector<8x8xf32> -> vector<8x8xf32>
    %48 = vector.extract_strided_slice %12 {offsets = [0, 8], sizes = [8, 8], strides = [1, 1]} : vector<8x32xf32> to vector<8x8xf32>
    %49 = vector.extract_strided_slice %20 {offsets = [0, 8], sizes = [8, 8], strides = [1, 1]} : vector<8x32xf32> to vector<8x8xf32>
    %50 = vector.extract_strided_slice %21 {offsets = [0, 8], sizes = [8, 8], strides = [1, 1]} : vector<8x32xf32> to vector<8x8xf32>
    %51 = arith.truncf %48 : vector<8x8xf32> to vector<8x8xbf16>
    %52 = arith.truncf %49 : vector<8x8xf32> to vector<8x8xbf16>
    %cst_26 = arith.constant dense<0.000000e+00> : vector<8x8xf32>
    %53 = tpu.matmul %51, %52, %cst_26 {dimension_numbers = #tpu.dot_dimension_numbers<[1], [1], [0], [0], [0, 0, 1, 0], [], []>} : vector<8x8xbf16>, vector<8x8xbf16>, vector<8x8xf32> -> vector<8x8xf32>
    %cst_27 = arith.constant 0.353553385 : f32
    %54 = vector.broadcast %cst_27 : f32 to vector<8x8xf32>
    %55 = arith.mulf %53, %54 : vector<8x8xf32>
    %56 = vector.broadcast %5 : vector<1x8xf32> to vector<8x8xf32>
    %57 = arith.addf %55, %56 : vector<8x8xf32>
    %c0_28 = arith.constant 0 : index
    %c1 = arith.constant 1 : index
    %c0_29 = arith.constant 0 : index
    %c0_30 = arith.constant 0 : index
    %58 = vector.load %arg4[%c0_28, %c1, %c0_29, %c0_30] : memref<1x4x8x8xf32, #tpu.memory_space<vmem>>, vector<1x1x8x8xf32>
    %59 = vector.shape_cast %58 : vector<1x1x8x8xf32> to vector<8x8xf32>
    %60 = arith.addf %57, %59 : vector<8x8xf32>
    %cst_31 = arith.constant dense<0xFF800000> : vector<8xf32>
    %61 = vector.multi_reduction <maximumf>, %60, %cst_31 [1] : vector<8x8xf32> to vector<8xf32>
    %62 = vector.shape_cast %61 : vector<8xf32> to vector<8x1xf32>
    %63 = vector.broadcast %62 : vector<8x1xf32> to vector<8x8xf32>
    %64 = arith.subf %60, %63 : vector<8x8xf32>
    %65 = math.exp %64 : vector<8x8xf32>
    %cst_32 = arith.constant dense<0.000000e+00> : vector<8xf32>
    %66 = vector.multi_reduction <add>, %65, %cst_32 [1] : vector<8x8xf32> to vector<8xf32>
    %67 = vector.shape_cast %66 : vector<8xf32> to vector<8x1xf32>
    %68 = tpu.reciprocal %67 {approx = true} : vector<8x1xf32> -> vector<8x1xf32>
    %69 = vector.broadcast %68 : vector<8x1xf32> to vector<8x8xf32>
    %70 = arith.mulf %65, %69 : vector<8x8xf32>
    %71 = arith.truncf %70 : vector<8x8xf32> to vector<8x8xbf16>
    %72 = arith.truncf %50 : vector<8x8xf32> to vector<8x8xbf16>
    %cst_33 = arith.constant dense<0.000000e+00> : vector<8x8xf32>
    %73 = tpu.matmul %71, %72, %cst_33 {dimension_numbers = #tpu.dot_dimension_numbers<[1], [0], [0], [1], [0, 0, 1, 1], [], []>} : vector<8x8xbf16>, vector<8x8xbf16>, vector<8x8xf32> -> vector<8x8xf32>
    %74 = vector.extract_strided_slice %12 {offsets = [0, 16], sizes = [8, 8], strides = [1, 1]} : vector<8x32xf32> to vector<8x8xf32>
    %75 = vector.extract_strided_slice %20 {offsets = [0, 16], sizes = [8, 8], strides = [1, 1]} : vector<8x32xf32> to vector<8x8xf32>
    %76 = vector.extract_strided_slice %21 {offsets = [0, 16], sizes = [8, 8], strides = [1, 1]} : vector<8x32xf32> to vector<8x8xf32>
    %77 = arith.truncf %74 : vector<8x8xf32> to vector<8x8xbf16>
    %78 = arith.truncf %75 : vector<8x8xf32> to vector<8x8xbf16>
    %cst_34 = arith.constant dense<0.000000e+00> : vector<8x8xf32>
    %79 = tpu.matmul %77, %78, %cst_34 {dimension_numbers = #tpu.dot_dimension_numbers<[1], [1], [0], [0], [0, 0, 1, 0], [], []>} : vector<8x8xbf16>, vector<8x8xbf16>, vector<8x8xf32> -> vector<8x8xf32>
    %cst_35 = arith.constant 0.353553385 : f32
    %80 = vector.broadcast %cst_35 : f32 to vector<8x8xf32>
    %81 = arith.mulf %79, %80 : vector<8x8xf32>
    %82 = vector.broadcast %5 : vector<1x8xf32> to vector<8x8xf32>
    %83 = arith.addf %81, %82 : vector<8x8xf32>
    %c0_36 = arith.constant 0 : index
    %c2 = arith.constant 2 : index
    %c0_37 = arith.constant 0 : index
    %c0_38 = arith.constant 0 : index
    %84 = vector.load %arg4[%c0_36, %c2, %c0_37, %c0_38] : memref<1x4x8x8xf32, #tpu.memory_space<vmem>>, vector<1x1x8x8xf32>
    %85 = vector.shape_cast %84 : vector<1x1x8x8xf32> to vector<8x8xf32>
    %86 = arith.addf %83, %85 : vector<8x8xf32>
    %cst_39 = arith.constant dense<0xFF800000> : vector<8xf32>
    %87 = vector.multi_reduction <maximumf>, %86, %cst_39 [1] : vector<8x8xf32> to vector<8xf32>
    %88 = vector.shape_cast %87 : vector<8xf32> to vector<8x1xf32>
    %89 = vector.broadcast %88 : vector<8x1xf32> to vector<8x8xf32>
    %90 = arith.subf %86, %89 : vector<8x8xf32>
    %91 = math.exp %90 : vector<8x8xf32>
    %cst_40 = arith.constant dense<0.000000e+00> : vector<8xf32>
    %92 = vector.multi_reduction <add>, %91, %cst_40 [1] : vector<8x8xf32> to vector<8xf32>
    %93 = vector.shape_cast %92 : vector<8xf32> to vector<8x1xf32>
    %94 = tpu.reciprocal %93 {approx = true} : vector<8x1xf32> -> vector<8x1xf32>
    %95 = vector.broadcast %94 : vector<8x1xf32> to vector<8x8xf32>
    %96 = arith.mulf %91, %95 : vector<8x8xf32>
    %97 = arith.truncf %96 : vector<8x8xf32> to vector<8x8xbf16>
    %98 = arith.truncf %76 : vector<8x8xf32> to vector<8x8xbf16>
    %cst_41 = arith.constant dense<0.000000e+00> : vector<8x8xf32>
    %99 = tpu.matmul %97, %98, %cst_41 {dimension_numbers = #tpu.dot_dimension_numbers<[1], [0], [0], [1], [0, 0, 1, 1], [], []>} : vector<8x8xbf16>, vector<8x8xbf16>, vector<8x8xf32> -> vector<8x8xf32>
    %100 = vector.extract_strided_slice %12 {offsets = [0, 24], sizes = [8, 8], strides = [1, 1]} : vector<8x32xf32> to vector<8x8xf32>
    %101 = vector.extract_strided_slice %20 {offsets = [0, 24], sizes = [8, 8], strides = [1, 1]} : vector<8x32xf32> to vector<8x8xf32>
    %102 = vector.extract_strided_slice %21 {offsets = [0, 24], sizes = [8, 8], strides = [1, 1]} : vector<8x32xf32> to vector<8x8xf32>
    %103 = arith.truncf %100 : vector<8x8xf32> to vector<8x8xbf16>
    %104 = arith.truncf %101 : vector<8x8xf32> to vector<8x8xbf16>
    %cst_42 = arith.constant dense<0.000000e+00> : vector<8x8xf32>
    %105 = tpu.matmul %103, %104, %cst_42 {dimension_numbers = #tpu.dot_dimension_numbers<[1], [1], [0], [0], [0, 0, 1, 0], [], []>} : vector<8x8xbf16>, vector<8x8xbf16>, vector<8x8xf32> -> vector<8x8xf32>
    %cst_43 = arith.constant 0.353553385 : f32
    %106 = vector.broadcast %cst_43 : f32 to vector<8x8xf32>
    %107 = arith.mulf %105, %106 : vector<8x8xf32>
    %108 = vector.broadcast %5 : vector<1x8xf32> to vector<8x8xf32>
    %109 = arith.addf %107, %108 : vector<8x8xf32>
    %c0_44 = arith.constant 0 : index
    %c3 = arith.constant 3 : index
    %c0_45 = arith.constant 0 : index
    %c0_46 = arith.constant 0 : index
    %110 = vector.load %arg4[%c0_44, %c3, %c0_45, %c0_46] : memref<1x4x8x8xf32, #tpu.memory_space<vmem>>, vector<1x1x8x8xf32>
    %111 = vector.shape_cast %110 : vector<1x1x8x8xf32> to vector<8x8xf32>
    %112 = arith.addf %109, %111 : vector<8x8xf32>
    %cst_47 = arith.constant dense<0xFF800000> : vector<8xf32>
    %113 = vector.multi_reduction <maximumf>, %112, %cst_47 [1] : vector<8x8xf32> to vector<8xf32>
    %114 = vector.shape_cast %113 : vector<8xf32> to vector<8x1xf32>
    %115 = vector.broadcast %114 : vector<8x1xf32> to vector<8x8xf32>
    %116 = arith.subf %112, %115 : vector<8x8xf32>
    %117 = math.exp %116 : vector<8x8xf32>
    %cst_48 = arith.constant dense<0.000000e+00> : vector<8xf32>
    %118 = vector.multi_reduction <add>, %117, %cst_48 [1] : vector<8x8xf32> to vector<8xf32>
    %119 = vector.shape_cast %118 : vector<8xf32> to vector<8x1xf32>
    %120 = tpu.reciprocal %119 {approx = true} : vector<8x1xf32> -> vector<8x1xf32>
    %121 = vector.broadcast %120 : vector<8x1xf32> to vector<8x8xf32>
    %122 = arith.mulf %117, %121 : vector<8x8xf32>
    %123 = arith.truncf %122 : vector<8x8xf32> to vector<8x8xbf16>
    %124 = arith.truncf %102 : vector<8x8xf32> to vector<8x8xbf16>
    %cst_49 = arith.constant dense<0.000000e+00> : vector<8x8xf32>
    %125 = tpu.matmul %123, %124, %cst_49 {dimension_numbers = #tpu.dot_dimension_numbers<[1], [0], [0], [1], [0, 0, 1, 1], [], []>} : vector<8x8xbf16>, vector<8x8xbf16>, vector<8x8xf32> -> vector<8x8xf32>
    %126 = tpu.concatenate %47, %73, %99, %125 in 1 : vector<8x8xf32>, vector<8x8xf32>, vector<8x8xf32>, vector<8x8xf32> -> vector<8x32xf32>
    %c0_50 = arith.constant 0 : index
    %c0_51 = arith.constant 0 : index
    %127 = vector.load %arg9[%c0_50, %c0_51] : memref<32x32xf32, #tpu.memory_space<vmem>>, vector<32x32xf32>
    %128 = arith.truncf %126 : vector<8x32xf32> to vector<8x32xbf16>
    %129 = arith.truncf %127 : vector<32x32xf32> to vector<32x32xbf16>
    %cst_52 = arith.constant dense<0.000000e+00> : vector<8x32xf32>
    %130 = tpu.matmul %128, %129, %cst_52 {dimension_numbers = #tpu.dot_dimension_numbers<[1], [0], [0], [1], [0, 0, 1, 1], [], []>} : vector<8x32xbf16>, vector<32x32xbf16>, vector<8x32xf32> -> vector<8x32xf32>
    %c0_53 = arith.constant 0 : index
    %c0_54 = arith.constant 0 : index
    %131 = vector.load %arg10[%c0_53, %c0_54] : memref<1x32xf32, #tpu.memory_space<vmem>>, vector<1x32xf32>
    %132 = vector.broadcast %131 : vector<1x32xf32> to vector<8x32xf32>
    %133 = arith.addf %130, %132 : vector<8x32xf32>
    %134 = arith.addf %133, %1 : vector<8x32xf32>
    %c0_55 = arith.constant 0 : index
    %c0_56 = arith.constant 0 : index
    %135 = vector.load %arg11[%c0_55, %c0_56] : memref<1x32xf32, #tpu.memory_space<vmem>>, vector<1x32xf32>
    %c0_57 = arith.constant 0 : index
    %c0_58 = arith.constant 0 : index
    %136 = vector.load %arg12[%c0_57, %c0_58] : memref<1x32xf32, #tpu.memory_space<vmem>>, vector<1x32xf32>
    %cst_59 = arith.constant dense<0.000000e+00> : vector<8xf32>
    %137 = vector.multi_reduction <add>, %134, %cst_59 [1] : vector<8x32xf32> to vector<8xf32>
    %138 = vector.shape_cast %137 : vector<8xf32> to vector<8x1xf32>
    %cst_60 = arith.constant 3.200000e+01 : f32
    %139 = vector.broadcast %cst_60 : f32 to vector<8x1xf32>
    %140 = arith.divf %138, %139 : vector<8x1xf32>
    %141 = vector.broadcast %140 : vector<8x1xf32> to vector<8x32xf32>
    %142 = arith.subf %134, %141 : vector<8x32xf32>
    %143 = arith.mulf %142, %142 : vector<8x32xf32>
    %cst_61 = arith.constant dense<0.000000e+00> : vector<8xf32>
    %144 = vector.multi_reduction <add>, %143, %cst_61 [1] : vector<8x32xf32> to vector<8xf32>
    %145 = vector.shape_cast %144 : vector<8xf32> to vector<8x1xf32>
    %cst_62 = arith.constant 3.100000e+01 : f32
    %146 = vector.broadcast %cst_62 : f32 to vector<8x1xf32>
    %147 = arith.divf %145, %146 : vector<8x1xf32>
    %148 = vector.broadcast %135 : vector<1x32xf32> to vector<8x32xf32>
    %149 = arith.mulf %148, %142 : vector<8x32xf32>
    %150 = math.sqrt %147 : vector<8x1xf32>
    %cst_63 = arith.constant 9.99999997E-7 : f32
    %151 = vector.broadcast %cst_63 : f32 to vector<8x1xf32>
    %152 = arith.addf %150, %151 : vector<8x1xf32>
    %153 = vector.broadcast %152 : vector<8x1xf32> to vector<8x32xf32>
    %154 = arith.divf %149, %153 : vector<8x32xf32>
    %155 = vector.broadcast %136 : vector<1x32xf32> to vector<8x32xf32>
    %156 = arith.addf %154, %155 : vector<8x32xf32>
    %c0_64 = arith.constant 0 : index
    %c0_65 = arith.constant 0 : index
    %c0_66 = arith.constant 0 : index
    %157 = vector.load %arg13[%c0_64, %c0_65, %c0_66] : memref<1x8x32xf32, #tpu.memory_space<vmem>>, vector<1x8x32xf32>
    %158 = vector.shape_cast %157 : vector<1x8x32xf32> to vector<8x32xf32>
    %159 = vector.shape_cast %156 : vector<8x32xf32> to vector<1x8x32xf32>
    tpu.vector_store %arg13[%c0_64, %c0_65, %c0_66], %159 {strides = array<i32>} : memref<1x8x32xf32, #tpu.memory_space<vmem>>, vector<1x8x32xf32>,
    return
  }
  func.func @transform_0(%arg0: i32) -> (i32, i32, i32) {
    %c0_i32 = arith.constant 0 : i32
    %c0_i32_0 = arith.constant 0 : i32
    %c0_i32_1 = arith.constant 0 : i32
    return %arg0, %c0_i32, %c0_i32_0 : i32, i32, i32
  }
  func.func @transform_1(%arg0: i32) -> (i32, i32, i32) {
    %c0_i32 = arith.constant 0 : i32
    %c0_i32_0 = arith.constant 0 : i32
    %c0_i32_1 = arith.constant 0 : i32
    return %arg0, %c0_i32, %c0_i32_0 : i32, i32, i32
  }
  func.func @transform_2(%arg0: i32) -> (i32, i32, i32) {
    %c0_i32 = arith.constant 0 : i32
    %c0_i32_0 = arith.constant 0 : i32
    %c0_i32_1 = arith.constant 0 : i32
    return %arg0, %c0_i32, %c0_i32_0 : i32, i32, i32
  }
  func.func @transform_3(%arg0: i32) -> (i32, i32, i32, i32) {
    %c0_i32 = arith.constant 0 : i32
    %c0_i32_0 = arith.constant 0 : i32
    %c0_i32_1 = arith.constant 0 : i32
    %c0_i32_2 = arith.constant 0 : i32
    return %arg0, %c0_i32, %c0_i32_0, %c0_i32_1 : i32, i32, i32, i32
  }
  func.func @transform_4(%arg0: i32) -> (i32, i32) {
    %c0_i32 = arith.constant 0 : i32
    %c0_i32_0 = arith.constant 0 : i32
    %c0_i32_1 = arith.constant 0 : i32
    return %c0_i32, %c0_i32_0 : i32, i32
  }
  func.func @transform_5(%arg0: i32) -> (i32, i32) {
    %c0_i32 = arith.constant 0 : i32
    %c0_i32_0 = arith.constant 0 : i32
    %c0_i32_1 = arith.constant 0 : i32
    return %c0_i32, %c0_i32_0 : i32, i32
  }
  func.func @transform_6(%arg0: i32) -> (i32, i32) {
    %c0_i32 = arith.constant 0 : i32
    %c0_i32_0 = arith.constant 0 : i32
    %c0_i32_1 = arith.constant 0 : i32
    return %c0_i32, %c0_i32_0 : i32, i32
  }
  func.func @transform_7(%arg0: i32) -> (i32, i32) {
    %c0_i32 = arith.constant 0 : i32
    %c0_i32_0 = arith.constant 0 : i32
    %c0_i32_1 = arith.constant 0 : i32
    return %c0_i32, %c0_i32_0 : i32, i32
  }
  func.func @transform_8(%arg0: i32) -> (i32, i32) {
    %c0_i32 = arith.constant 0 : i32
    %c0_i32_0 = arith.constant 0 : i32
    %c0_i32_1 = arith.constant 0 : i32
    return %c0_i32, %c0_i32_0 : i32, i32
  }
  func.func @transform_9(%arg0: i32) -> (i32, i32) {
    %c0_i32 = arith.constant 0 : i32
    %c0_i32_0 = arith.constant 0 : i32
    %c0_i32_1 = arith.constant 0 : i32
    return %c0_i32, %c0_i32_0 : i32, i32
  }
  func.func @transform_10(%arg0: i32) -> (i32, i32) {
    %c0_i32 = arith.constant 0 : i32
    %c0_i32_0 = arith.constant 0 : i32
    %c0_i32_1 = arith.constant 0 : i32
    return %c0_i32, %c0_i32_0 : i32, i32
  }
  func.func @transform_11(%arg0: i32) -> (i32, i32) {
    %c0_i32 = arith.constant 0 : i32
    %c0_i32_0 = arith.constant 0 : i32
    %c0_i32_1 = arith.constant 0 : i32
    return %c0_i32, %c0_i32_0 : i32, i32
  }
  func.func @transform_12(%arg0: i32) -> (i32, i32, i32) {
    %c0_i32 = arith.constant 0 : i32
    %c0_i32_0 = arith.constant 0 : i32
    %c0_i32_1 = arith.constant 0 : i32
    return %arg0, %c0_i32, %c0_i32_0 : i32, i32, i32
  }
}

module attributes {stable_mosaic.version = 11 : i64} {
  func.func @_lstm_kernel(%arg0: memref<8x2x16xf32, #tpu.memory_space<vmem>>, %arg1: memref<16x128xf32, #tpu.memory_space<vmem>>, %arg2: memref<1x128xf32, #tpu.memory_space<vmem>>, %arg3: memref<32x128xf32, #tpu.memory_space<vmem>>, %arg4: memref<1x128xf32, #tpu.memory_space<vmem>>, %arg5: memref<8x2x32xf32, #tpu.memory_space<vmem>>) attributes {dimension_semantics = [], scalar_prefetch = 0 : i64, scratch_operands = 0 : i64, tpu.core_type = #tpu.core_type<tc>} {
    %cst = arith.constant 0.000000e+00 : f32
    %0 = vector.broadcast %cst : f32 to vector<2x32xf32>
    %cst_0 = arith.constant 0.000000e+00 : f32
    %1 = vector.broadcast %cst_0 : f32 to vector<2x32xf32>
    %c0_i32 = arith.constant 0 : i32
    %2 = arith.index_cast %c0_i32 : i32 to index
    %c0 = arith.constant 0 : index
    %c0_1 = arith.constant 0 : index
    %3 = vector.load %arg0[%2, %c0, %c0_1] : memref<8x2x16xf32, #tpu.memory_space<vmem>>, vector<1x2x16xf32>
    %4 = vector.shape_cast %3 : vector<1x2x16xf32> to vector<2x16xf32>
    %c0_2 = arith.constant 0 : index
    %c0_3 = arith.constant 0 : index
    %5 = vector.load %arg1[%c0_2, %c0_3] : memref<16x128xf32, #tpu.memory_space<vmem>>, vector<16x128xf32>
    %6 = arith.truncf %4 : vector<2x16xf32> to vector<2x16xbf16>
    %7 = arith.truncf %5 : vector<16x128xf32> to vector<16x128xbf16>
    %cst_4 = arith.constant dense<0.000000e+00> : vector<2x128xf32>
    %8 = tpu.matmul %6, %7, %cst_4 {dimension_numbers = #tpu.dot_dimension_numbers<[1], [0], [0], [1], [0, 0, 1, 1], [], []>} : vector<2x16xbf16>, vector<16x128xbf16>, vector<2x128xf32> -> vector<2x128xf32>
    %c0_5 = arith.constant 0 : index
    %c0_6 = arith.constant 0 : index
    %9 = vector.load %arg2[%c0_5, %c0_6] : memref<1x128xf32, #tpu.memory_space<vmem>>, vector<1x128xf32>
    %10 = vector.broadcast %9 : vector<1x128xf32> to vector<2x128xf32>
    %11 = arith.addf %8, %10 : vector<2x128xf32>
    %c0_7 = arith.constant 0 : index
    %c0_8 = arith.constant 0 : index
    %12 = vector.load %arg3[%c0_7, %c0_8] : memref<32x128xf32, #tpu.memory_space<vmem>>, vector<32x128xf32>
    %13 = arith.truncf %0 : vector<2x32xf32> to vector<2x32xbf16>
    %14 = arith.truncf %12 : vector<32x128xf32> to vector<32x128xbf16>
    %cst_9 = arith.constant dense<0.000000e+00> : vector<2x128xf32>
    %15 = tpu.matmul %13, %14, %cst_9 {dimension_numbers = #tpu.dot_dimension_numbers<[1], [0], [0], [1], [0, 0, 1, 1], [], []>} : vector<2x32xbf16>, vector<32x128xbf16>, vector<2x128xf32> -> vector<2x128xf32>
    %16 = arith.addf %11, %15 : vector<2x128xf32>
    %c0_10 = arith.constant 0 : index
    %c0_11 = arith.constant 0 : index
    %17 = vector.load %arg4[%c0_10, %c0_11] : memref<1x128xf32, #tpu.memory_space<vmem>>, vector<1x128xf32>
    %18 = vector.broadcast %17 : vector<1x128xf32> to vector<2x128xf32>
    %19 = arith.addf %16, %18 : vector<2x128xf32>
    %20 = vector.extract_strided_slice %19 {offsets = [0, 0], sizes = [2, 32], strides = [1, 1]} : vector<2x128xf32> to vector<2x32xf32>
    %21 = vector.extract_strided_slice %19 {offsets = [0, 32], sizes = [2, 32], strides = [1, 1]} : vector<2x128xf32> to vector<2x32xf32>
    %22 = vector.extract_strided_slice %19 {offsets = [0, 64], sizes = [2, 32], strides = [1, 1]} : vector<2x128xf32> to vector<2x32xf32>
    %23 = vector.extract_strided_slice %19 {offsets = [0, 96], sizes = [2, 32], strides = [1, 1]} : vector<2x128xf32> to vector<2x32xf32>
    %24 = arith.negf %21 : vector<2x32xf32>
    %25 = math.exp %24 : vector<2x32xf32>
    %cst_12 = arith.constant 1.000000e+00 : f32
    %26 = vector.broadcast %cst_12 : f32 to vector<2x32xf32>
    %27 = arith.addf %26, %25 : vector<2x32xf32>
    %28 = arith.divf %26, %27 : vector<2x32xf32>
    %29 = arith.mulf %28, %1 : vector<2x32xf32>
    %30 = arith.negf %20 : vector<2x32xf32>
    %31 = math.exp %30 : vector<2x32xf32>
    %cst_13 = arith.constant 1.000000e+00 : f32
    %32 = vector.broadcast %cst_13 : f32 to vector<2x32xf32>
    %33 = arith.addf %32, %31 : vector<2x32xf32>
    %34 = arith.divf %32, %33 : vector<2x32xf32>
    %35 = math.tanh %22 : vector<2x32xf32>
    %36 = arith.mulf %34, %35 : vector<2x32xf32>
    %37 = arith.addf %29, %36 : vector<2x32xf32>
    %38 = arith.negf %23 : vector<2x32xf32>
    %39 = math.exp %38 : vector<2x32xf32>
    %cst_14 = arith.constant 1.000000e+00 : f32
    %40 = vector.broadcast %cst_14 : f32 to vector<2x32xf32>
    %41 = arith.addf %40, %39 : vector<2x32xf32>
    %42 = arith.divf %40, %41 : vector<2x32xf32>
    %43 = math.tanh %37 : vector<2x32xf32>
    %44 = arith.mulf %42, %43 : vector<2x32xf32>
    %45 = arith.index_cast %c0_i32 : i32 to index
    %c0_15 = arith.constant 0 : index
    %c0_16 = arith.constant 0 : index
    %46 = vector.load %arg5[%45, %c0_15, %c0_16] : memref<8x2x32xf32, #tpu.memory_space<vmem>>, vector<1x2x32xf32>
    %47 = vector.shape_cast %46 : vector<1x2x32xf32> to vector<2x32xf32>
    %48 = vector.shape_cast %44 : vector<2x32xf32> to vector<1x2x32xf32>
    tpu.vector_store %arg5[%45, %c0_15, %c0_16], %48 {strides = array<i32>} : memref<8x2x32xf32, #tpu.memory_space<vmem>>, vector<1x2x32xf32>,
    %c1_i32 = arith.constant 1 : i32
    %49 = arith.index_cast %c1_i32 : i32 to index
    %c0_17 = arith.constant 0 : index
    %c0_18 = arith.constant 0 : index
    %50 = vector.load %arg0[%49, %c0_17, %c0_18] : memref<8x2x16xf32, #tpu.memory_space<vmem>>, vector<1x2x16xf32>
    %51 = vector.shape_cast %50 : vector<1x2x16xf32> to vector<2x16xf32>
    %c0_19 = arith.constant 0 : index
    %c0_20 = arith.constant 0 : index
    %52 = vector.load %arg1[%c0_19, %c0_20] : memref<16x128xf32, #tpu.memory_space<vmem>>, vector<16x128xf32>
    %53 = arith.truncf %51 : vector<2x16xf32> to vector<2x16xbf16>
    %54 = arith.truncf %52 : vector<16x128xf32> to vector<16x128xbf16>
    %cst_21 = arith.constant dense<0.000000e+00> : vector<2x128xf32>
    %55 = tpu.matmul %53, %54, %cst_21 {dimension_numbers = #tpu.dot_dimension_numbers<[1], [0], [0], [1], [0, 0, 1, 1], [], []>} : vector<2x16xbf16>, vector<16x128xbf16>, vector<2x128xf32> -> vector<2x128xf32>
    %c0_22 = arith.constant 0 : index
    %c0_23 = arith.constant 0 : index
    %56 = vector.load %arg2[%c0_22, %c0_23] : memref<1x128xf32, #tpu.memory_space<vmem>>, vector<1x128xf32>
    %57 = vector.broadcast %56 : vector<1x128xf32> to vector<2x128xf32>
    %58 = arith.addf %55, %57 : vector<2x128xf32>
    %c0_24 = arith.constant 0 : index
    %c0_25 = arith.constant 0 : index
    %59 = vector.load %arg3[%c0_24, %c0_25] : memref<32x128xf32, #tpu.memory_space<vmem>>, vector<32x128xf32>
    %60 = arith.truncf %44 : vector<2x32xf32> to vector<2x32xbf16>
    %61 = arith.truncf %59 : vector<32x128xf32> to vector<32x128xbf16>
    %cst_26 = arith.constant dense<0.000000e+00> : vector<2x128xf32>
    %62 = tpu.matmul %60, %61, %cst_26 {dimension_numbers = #tpu.dot_dimension_numbers<[1], [0], [0], [1], [0, 0, 1, 1], [], []>} : vector<2x32xbf16>, vector<32x128xbf16>, vector<2x128xf32> -> vector<2x128xf32>
    %63 = arith.addf %58, %62 : vector<2x128xf32>
    %c0_27 = arith.constant 0 : index
    %c0_28 = arith.constant 0 : index
    %64 = vector.load %arg4[%c0_27, %c0_28] : memref<1x128xf32, #tpu.memory_space<vmem>>, vector<1x128xf32>
    %65 = vector.broadcast %64 : vector<1x128xf32> to vector<2x128xf32>
    %66 = arith.addf %63, %65 : vector<2x128xf32>
    %67 = vector.extract_strided_slice %66 {offsets = [0, 0], sizes = [2, 32], strides = [1, 1]} : vector<2x128xf32> to vector<2x32xf32>
    %68 = vector.extract_strided_slice %66 {offsets = [0, 32], sizes = [2, 32], strides = [1, 1]} : vector<2x128xf32> to vector<2x32xf32>
    %69 = vector.extract_strided_slice %66 {offsets = [0, 64], sizes = [2, 32], strides = [1, 1]} : vector<2x128xf32> to vector<2x32xf32>
    %70 = vector.extract_strided_slice %66 {offsets = [0, 96], sizes = [2, 32], strides = [1, 1]} : vector<2x128xf32> to vector<2x32xf32>
    %71 = arith.negf %68 : vector<2x32xf32>
    %72 = math.exp %71 : vector<2x32xf32>
    %cst_29 = arith.constant 1.000000e+00 : f32
    %73 = vector.broadcast %cst_29 : f32 to vector<2x32xf32>
    %74 = arith.addf %73, %72 : vector<2x32xf32>
    %75 = arith.divf %73, %74 : vector<2x32xf32>
    %76 = arith.mulf %75, %37 : vector<2x32xf32>
    %77 = arith.negf %67 : vector<2x32xf32>
    %78 = math.exp %77 : vector<2x32xf32>
    %cst_30 = arith.constant 1.000000e+00 : f32
    %79 = vector.broadcast %cst_30 : f32 to vector<2x32xf32>
    %80 = arith.addf %79, %78 : vector<2x32xf32>
    %81 = arith.divf %79, %80 : vector<2x32xf32>
    %82 = math.tanh %69 : vector<2x32xf32>
    %83 = arith.mulf %81, %82 : vector<2x32xf32>
    %84 = arith.addf %76, %83 : vector<2x32xf32>
    %85 = arith.negf %70 : vector<2x32xf32>
    %86 = math.exp %85 : vector<2x32xf32>
    %cst_31 = arith.constant 1.000000e+00 : f32
    %87 = vector.broadcast %cst_31 : f32 to vector<2x32xf32>
    %88 = arith.addf %87, %86 : vector<2x32xf32>
    %89 = arith.divf %87, %88 : vector<2x32xf32>
    %90 = math.tanh %84 : vector<2x32xf32>
    %91 = arith.mulf %89, %90 : vector<2x32xf32>
    %92 = arith.index_cast %c1_i32 : i32 to index
    %c0_32 = arith.constant 0 : index
    %c0_33 = arith.constant 0 : index
    %93 = vector.load %arg5[%92, %c0_32, %c0_33] : memref<8x2x32xf32, #tpu.memory_space<vmem>>, vector<1x2x32xf32>
    %94 = vector.shape_cast %93 : vector<1x2x32xf32> to vector<2x32xf32>
    %95 = vector.shape_cast %91 : vector<2x32xf32> to vector<1x2x32xf32>
    tpu.vector_store %arg5[%92, %c0_32, %c0_33], %95 {strides = array<i32>} : memref<8x2x32xf32, #tpu.memory_space<vmem>>, vector<1x2x32xf32>,
    %c2_i32 = arith.constant 2 : i32
    %96 = arith.index_cast %c2_i32 : i32 to index
    %c0_34 = arith.constant 0 : index
    %c0_35 = arith.constant 0 : index
    %97 = vector.load %arg0[%96, %c0_34, %c0_35] : memref<8x2x16xf32, #tpu.memory_space<vmem>>, vector<1x2x16xf32>
    %98 = vector.shape_cast %97 : vector<1x2x16xf32> to vector<2x16xf32>
    %c0_36 = arith.constant 0 : index
    %c0_37 = arith.constant 0 : index
    %99 = vector.load %arg1[%c0_36, %c0_37] : memref<16x128xf32, #tpu.memory_space<vmem>>, vector<16x128xf32>
    %100 = arith.truncf %98 : vector<2x16xf32> to vector<2x16xbf16>
    %101 = arith.truncf %99 : vector<16x128xf32> to vector<16x128xbf16>
    %cst_38 = arith.constant dense<0.000000e+00> : vector<2x128xf32>
    %102 = tpu.matmul %100, %101, %cst_38 {dimension_numbers = #tpu.dot_dimension_numbers<[1], [0], [0], [1], [0, 0, 1, 1], [], []>} : vector<2x16xbf16>, vector<16x128xbf16>, vector<2x128xf32> -> vector<2x128xf32>
    %c0_39 = arith.constant 0 : index
    %c0_40 = arith.constant 0 : index
    %103 = vector.load %arg2[%c0_39, %c0_40] : memref<1x128xf32, #tpu.memory_space<vmem>>, vector<1x128xf32>
    %104 = vector.broadcast %103 : vector<1x128xf32> to vector<2x128xf32>
    %105 = arith.addf %102, %104 : vector<2x128xf32>
    %c0_41 = arith.constant 0 : index
    %c0_42 = arith.constant 0 : index
    %106 = vector.load %arg3[%c0_41, %c0_42] : memref<32x128xf32, #tpu.memory_space<vmem>>, vector<32x128xf32>
    %107 = arith.truncf %91 : vector<2x32xf32> to vector<2x32xbf16>
    %108 = arith.truncf %106 : vector<32x128xf32> to vector<32x128xbf16>
    %cst_43 = arith.constant dense<0.000000e+00> : vector<2x128xf32>
    %109 = tpu.matmul %107, %108, %cst_43 {dimension_numbers = #tpu.dot_dimension_numbers<[1], [0], [0], [1], [0, 0, 1, 1], [], []>} : vector<2x32xbf16>, vector<32x128xbf16>, vector<2x128xf32> -> vector<2x128xf32>
    %110 = arith.addf %105, %109 : vector<2x128xf32>
    %c0_44 = arith.constant 0 : index
    %c0_45 = arith.constant 0 : index
    %111 = vector.load %arg4[%c0_44, %c0_45] : memref<1x128xf32, #tpu.memory_space<vmem>>, vector<1x128xf32>
    %112 = vector.broadcast %111 : vector<1x128xf32> to vector<2x128xf32>
    %113 = arith.addf %110, %112 : vector<2x128xf32>
    %114 = vector.extract_strided_slice %113 {offsets = [0, 0], sizes = [2, 32], strides = [1, 1]} : vector<2x128xf32> to vector<2x32xf32>
    %115 = vector.extract_strided_slice %113 {offsets = [0, 32], sizes = [2, 32], strides = [1, 1]} : vector<2x128xf32> to vector<2x32xf32>
    %116 = vector.extract_strided_slice %113 {offsets = [0, 64], sizes = [2, 32], strides = [1, 1]} : vector<2x128xf32> to vector<2x32xf32>
    %117 = vector.extract_strided_slice %113 {offsets = [0, 96], sizes = [2, 32], strides = [1, 1]} : vector<2x128xf32> to vector<2x32xf32>
    %118 = arith.negf %115 : vector<2x32xf32>
    %119 = math.exp %118 : vector<2x32xf32>
    %cst_46 = arith.constant 1.000000e+00 : f32
    %120 = vector.broadcast %cst_46 : f32 to vector<2x32xf32>
    %121 = arith.addf %120, %119 : vector<2x32xf32>
    %122 = arith.divf %120, %121 : vector<2x32xf32>
    %123 = arith.mulf %122, %84 : vector<2x32xf32>
    %124 = arith.negf %114 : vector<2x32xf32>
    %125 = math.exp %124 : vector<2x32xf32>
    %cst_47 = arith.constant 1.000000e+00 : f32
    %126 = vector.broadcast %cst_47 : f32 to vector<2x32xf32>
    %127 = arith.addf %126, %125 : vector<2x32xf32>
    %128 = arith.divf %126, %127 : vector<2x32xf32>
    %129 = math.tanh %116 : vector<2x32xf32>
    %130 = arith.mulf %128, %129 : vector<2x32xf32>
    %131 = arith.addf %123, %130 : vector<2x32xf32>
    %132 = arith.negf %117 : vector<2x32xf32>
    %133 = math.exp %132 : vector<2x32xf32>
    %cst_48 = arith.constant 1.000000e+00 : f32
    %134 = vector.broadcast %cst_48 : f32 to vector<2x32xf32>
    %135 = arith.addf %134, %133 : vector<2x32xf32>
    %136 = arith.divf %134, %135 : vector<2x32xf32>
    %137 = math.tanh %131 : vector<2x32xf32>
    %138 = arith.mulf %136, %137 : vector<2x32xf32>
    %139 = arith.index_cast %c2_i32 : i32 to index
    %c0_49 = arith.constant 0 : index
    %c0_50 = arith.constant 0 : index
    %140 = vector.load %arg5[%139, %c0_49, %c0_50] : memref<8x2x32xf32, #tpu.memory_space<vmem>>, vector<1x2x32xf32>
    %141 = vector.shape_cast %140 : vector<1x2x32xf32> to vector<2x32xf32>
    %142 = vector.shape_cast %138 : vector<2x32xf32> to vector<1x2x32xf32>
    tpu.vector_store %arg5[%139, %c0_49, %c0_50], %142 {strides = array<i32>} : memref<8x2x32xf32, #tpu.memory_space<vmem>>, vector<1x2x32xf32>,
    %c3_i32 = arith.constant 3 : i32
    %143 = arith.index_cast %c3_i32 : i32 to index
    %c0_51 = arith.constant 0 : index
    %c0_52 = arith.constant 0 : index
    %144 = vector.load %arg0[%143, %c0_51, %c0_52] : memref<8x2x16xf32, #tpu.memory_space<vmem>>, vector<1x2x16xf32>
    %145 = vector.shape_cast %144 : vector<1x2x16xf32> to vector<2x16xf32>
    %c0_53 = arith.constant 0 : index
    %c0_54 = arith.constant 0 : index
    %146 = vector.load %arg1[%c0_53, %c0_54] : memref<16x128xf32, #tpu.memory_space<vmem>>, vector<16x128xf32>
    %147 = arith.truncf %145 : vector<2x16xf32> to vector<2x16xbf16>
    %148 = arith.truncf %146 : vector<16x128xf32> to vector<16x128xbf16>
    %cst_55 = arith.constant dense<0.000000e+00> : vector<2x128xf32>
    %149 = tpu.matmul %147, %148, %cst_55 {dimension_numbers = #tpu.dot_dimension_numbers<[1], [0], [0], [1], [0, 0, 1, 1], [], []>} : vector<2x16xbf16>, vector<16x128xbf16>, vector<2x128xf32> -> vector<2x128xf32>
    %c0_56 = arith.constant 0 : index
    %c0_57 = arith.constant 0 : index
    %150 = vector.load %arg2[%c0_56, %c0_57] : memref<1x128xf32, #tpu.memory_space<vmem>>, vector<1x128xf32>
    %151 = vector.broadcast %150 : vector<1x128xf32> to vector<2x128xf32>
    %152 = arith.addf %149, %151 : vector<2x128xf32>
    %c0_58 = arith.constant 0 : index
    %c0_59 = arith.constant 0 : index
    %153 = vector.load %arg3[%c0_58, %c0_59] : memref<32x128xf32, #tpu.memory_space<vmem>>, vector<32x128xf32>
    %154 = arith.truncf %138 : vector<2x32xf32> to vector<2x32xbf16>
    %155 = arith.truncf %153 : vector<32x128xf32> to vector<32x128xbf16>
    %cst_60 = arith.constant dense<0.000000e+00> : vector<2x128xf32>
    %156 = tpu.matmul %154, %155, %cst_60 {dimension_numbers = #tpu.dot_dimension_numbers<[1], [0], [0], [1], [0, 0, 1, 1], [], []>} : vector<2x32xbf16>, vector<32x128xbf16>, vector<2x128xf32> -> vector<2x128xf32>
    %157 = arith.addf %152, %156 : vector<2x128xf32>
    %c0_61 = arith.constant 0 : index
    %c0_62 = arith.constant 0 : index
    %158 = vector.load %arg4[%c0_61, %c0_62] : memref<1x128xf32, #tpu.memory_space<vmem>>, vector<1x128xf32>
    %159 = vector.broadcast %158 : vector<1x128xf32> to vector<2x128xf32>
    %160 = arith.addf %157, %159 : vector<2x128xf32>
    %161 = vector.extract_strided_slice %160 {offsets = [0, 0], sizes = [2, 32], strides = [1, 1]} : vector<2x128xf32> to vector<2x32xf32>
    %162 = vector.extract_strided_slice %160 {offsets = [0, 32], sizes = [2, 32], strides = [1, 1]} : vector<2x128xf32> to vector<2x32xf32>
    %163 = vector.extract_strided_slice %160 {offsets = [0, 64], sizes = [2, 32], strides = [1, 1]} : vector<2x128xf32> to vector<2x32xf32>
    %164 = vector.extract_strided_slice %160 {offsets = [0, 96], sizes = [2, 32], strides = [1, 1]} : vector<2x128xf32> to vector<2x32xf32>
    %165 = arith.negf %162 : vector<2x32xf32>
    %166 = math.exp %165 : vector<2x32xf32>
    %cst_63 = arith.constant 1.000000e+00 : f32
    %167 = vector.broadcast %cst_63 : f32 to vector<2x32xf32>
    %168 = arith.addf %167, %166 : vector<2x32xf32>
    %169 = arith.divf %167, %168 : vector<2x32xf32>
    %170 = arith.mulf %169, %131 : vector<2x32xf32>
    %171 = arith.negf %161 : vector<2x32xf32>
    %172 = math.exp %171 : vector<2x32xf32>
    %cst_64 = arith.constant 1.000000e+00 : f32
    %173 = vector.broadcast %cst_64 : f32 to vector<2x32xf32>
    %174 = arith.addf %173, %172 : vector<2x32xf32>
    %175 = arith.divf %173, %174 : vector<2x32xf32>
    %176 = math.tanh %163 : vector<2x32xf32>
    %177 = arith.mulf %175, %176 : vector<2x32xf32>
    %178 = arith.addf %170, %177 : vector<2x32xf32>
    %179 = arith.negf %164 : vector<2x32xf32>
    %180 = math.exp %179 : vector<2x32xf32>
    %cst_65 = arith.constant 1.000000e+00 : f32
    %181 = vector.broadcast %cst_65 : f32 to vector<2x32xf32>
    %182 = arith.addf %181, %180 : vector<2x32xf32>
    %183 = arith.divf %181, %182 : vector<2x32xf32>
    %184 = math.tanh %178 : vector<2x32xf32>
    %185 = arith.mulf %183, %184 : vector<2x32xf32>
    %186 = arith.index_cast %c3_i32 : i32 to index
    %c0_66 = arith.constant 0 : index
    %c0_67 = arith.constant 0 : index
    %187 = vector.load %arg5[%186, %c0_66, %c0_67] : memref<8x2x32xf32, #tpu.memory_space<vmem>>, vector<1x2x32xf32>
    %188 = vector.shape_cast %187 : vector<1x2x32xf32> to vector<2x32xf32>
    %189 = vector.shape_cast %185 : vector<2x32xf32> to vector<1x2x32xf32>
    tpu.vector_store %arg5[%186, %c0_66, %c0_67], %189 {strides = array<i32>} : memref<8x2x32xf32, #tpu.memory_space<vmem>>, vector<1x2x32xf32>,
    %c4_i32 = arith.constant 4 : i32
    %190 = arith.index_cast %c4_i32 : i32 to index
    %c0_68 = arith.constant 0 : index
    %c0_69 = arith.constant 0 : index
    %191 = vector.load %arg0[%190, %c0_68, %c0_69] : memref<8x2x16xf32, #tpu.memory_space<vmem>>, vector<1x2x16xf32>
    %192 = vector.shape_cast %191 : vector<1x2x16xf32> to vector<2x16xf32>
    %c0_70 = arith.constant 0 : index
    %c0_71 = arith.constant 0 : index
    %193 = vector.load %arg1[%c0_70, %c0_71] : memref<16x128xf32, #tpu.memory_space<vmem>>, vector<16x128xf32>
    %194 = arith.truncf %192 : vector<2x16xf32> to vector<2x16xbf16>
    %195 = arith.truncf %193 : vector<16x128xf32> to vector<16x128xbf16>
    %cst_72 = arith.constant dense<0.000000e+00> : vector<2x128xf32>
    %196 = tpu.matmul %194, %195, %cst_72 {dimension_numbers = #tpu.dot_dimension_numbers<[1], [0], [0], [1], [0, 0, 1, 1], [], []>} : vector<2x16xbf16>, vector<16x128xbf16>, vector<2x128xf32> -> vector<2x128xf32>
    %c0_73 = arith.constant 0 : index
    %c0_74 = arith.constant 0 : index
    %197 = vector.load %arg2[%c0_73, %c0_74] : memref<1x128xf32, #tpu.memory_space<vmem>>, vector<1x128xf32>
    %198 = vector.broadcast %197 : vector<1x128xf32> to vector<2x128xf32>
    %199 = arith.addf %196, %198 : vector<2x128xf32>
    %c0_75 = arith.constant 0 : index
    %c0_76 = arith.constant 0 : index
    %200 = vector.load %arg3[%c0_75, %c0_76] : memref<32x128xf32, #tpu.memory_space<vmem>>, vector<32x128xf32>
    %201 = arith.truncf %185 : vector<2x32xf32> to vector<2x32xbf16>
    %202 = arith.truncf %200 : vector<32x128xf32> to vector<32x128xbf16>
    %cst_77 = arith.constant dense<0.000000e+00> : vector<2x128xf32>
    %203 = tpu.matmul %201, %202, %cst_77 {dimension_numbers = #tpu.dot_dimension_numbers<[1], [0], [0], [1], [0, 0, 1, 1], [], []>} : vector<2x32xbf16>, vector<32x128xbf16>, vector<2x128xf32> -> vector<2x128xf32>
    %204 = arith.addf %199, %203 : vector<2x128xf32>
    %c0_78 = arith.constant 0 : index
    %c0_79 = arith.constant 0 : index
    %205 = vector.load %arg4[%c0_78, %c0_79] : memref<1x128xf32, #tpu.memory_space<vmem>>, vector<1x128xf32>
    %206 = vector.broadcast %205 : vector<1x128xf32> to vector<2x128xf32>
    %207 = arith.addf %204, %206 : vector<2x128xf32>
    %208 = vector.extract_strided_slice %207 {offsets = [0, 0], sizes = [2, 32], strides = [1, 1]} : vector<2x128xf32> to vector<2x32xf32>
    %209 = vector.extract_strided_slice %207 {offsets = [0, 32], sizes = [2, 32], strides = [1, 1]} : vector<2x128xf32> to vector<2x32xf32>
    %210 = vector.extract_strided_slice %207 {offsets = [0, 64], sizes = [2, 32], strides = [1, 1]} : vector<2x128xf32> to vector<2x32xf32>
    %211 = vector.extract_strided_slice %207 {offsets = [0, 96], sizes = [2, 32], strides = [1, 1]} : vector<2x128xf32> to vector<2x32xf32>
    %212 = arith.negf %209 : vector<2x32xf32>
    %213 = math.exp %212 : vector<2x32xf32>
    %cst_80 = arith.constant 1.000000e+00 : f32
    %214 = vector.broadcast %cst_80 : f32 to vector<2x32xf32>
    %215 = arith.addf %214, %213 : vector<2x32xf32>
    %216 = arith.divf %214, %215 : vector<2x32xf32>
    %217 = arith.mulf %216, %178 : vector<2x32xf32>
    %218 = arith.negf %208 : vector<2x32xf32>
    %219 = math.exp %218 : vector<2x32xf32>
    %cst_81 = arith.constant 1.000000e+00 : f32
    %220 = vector.broadcast %cst_81 : f32 to vector<2x32xf32>
    %221 = arith.addf %220, %219 : vector<2x32xf32>
    %222 = arith.divf %220, %221 : vector<2x32xf32>
    %223 = math.tanh %210 : vector<2x32xf32>
    %224 = arith.mulf %222, %223 : vector<2x32xf32>
    %225 = arith.addf %217, %224 : vector<2x32xf32>
    %226 = arith.negf %211 : vector<2x32xf32>
    %227 = math.exp %226 : vector<2x32xf32>
    %cst_82 = arith.constant 1.000000e+00 : f32
    %228 = vector.broadcast %cst_82 : f32 to vector<2x32xf32>
    %229 = arith.addf %228, %227 : vector<2x32xf32>
    %230 = arith.divf %228, %229 : vector<2x32xf32>
    %231 = math.tanh %225 : vector<2x32xf32>
    %232 = arith.mulf %230, %231 : vector<2x32xf32>
    %233 = arith.index_cast %c4_i32 : i32 to index
    %c0_83 = arith.constant 0 : index
    %c0_84 = arith.constant 0 : index
    %234 = vector.load %arg5[%233, %c0_83, %c0_84] : memref<8x2x32xf32, #tpu.memory_space<vmem>>, vector<1x2x32xf32>
    %235 = vector.shape_cast %234 : vector<1x2x32xf32> to vector<2x32xf32>
    %236 = vector.shape_cast %232 : vector<2x32xf32> to vector<1x2x32xf32>
    tpu.vector_store %arg5[%233, %c0_83, %c0_84], %236 {strides = array<i32>} : memref<8x2x32xf32, #tpu.memory_space<vmem>>, vector<1x2x32xf32>,
    %c5_i32 = arith.constant 5 : i32
    %237 = arith.index_cast %c5_i32 : i32 to index
    %c0_85 = arith.constant 0 : index
    %c0_86 = arith.constant 0 : index
    %238 = vector.load %arg0[%237, %c0_85, %c0_86] : memref<8x2x16xf32, #tpu.memory_space<vmem>>, vector<1x2x16xf32>
    %239 = vector.shape_cast %238 : vector<1x2x16xf32> to vector<2x16xf32>
    %c0_87 = arith.constant 0 : index
    %c0_88 = arith.constant 0 : index
    %240 = vector.load %arg1[%c0_87, %c0_88] : memref<16x128xf32, #tpu.memory_space<vmem>>, vector<16x128xf32>
    %241 = arith.truncf %239 : vector<2x16xf32> to vector<2x16xbf16>
    %242 = arith.truncf %240 : vector<16x128xf32> to vector<16x128xbf16>
    %cst_89 = arith.constant dense<0.000000e+00> : vector<2x128xf32>
    %243 = tpu.matmul %241, %242, %cst_89 {dimension_numbers = #tpu.dot_dimension_numbers<[1], [0], [0], [1], [0, 0, 1, 1], [], []>} : vector<2x16xbf16>, vector<16x128xbf16>, vector<2x128xf32> -> vector<2x128xf32>
    %c0_90 = arith.constant 0 : index
    %c0_91 = arith.constant 0 : index
    %244 = vector.load %arg2[%c0_90, %c0_91] : memref<1x128xf32, #tpu.memory_space<vmem>>, vector<1x128xf32>
    %245 = vector.broadcast %244 : vector<1x128xf32> to vector<2x128xf32>
    %246 = arith.addf %243, %245 : vector<2x128xf32>
    %c0_92 = arith.constant 0 : index
    %c0_93 = arith.constant 0 : index
    %247 = vector.load %arg3[%c0_92, %c0_93] : memref<32x128xf32, #tpu.memory_space<vmem>>, vector<32x128xf32>
    %248 = arith.truncf %232 : vector<2x32xf32> to vector<2x32xbf16>
    %249 = arith.truncf %247 : vector<32x128xf32> to vector<32x128xbf16>
    %cst_94 = arith.constant dense<0.000000e+00> : vector<2x128xf32>
    %250 = tpu.matmul %248, %249, %cst_94 {dimension_numbers = #tpu.dot_dimension_numbers<[1], [0], [0], [1], [0, 0, 1, 1], [], []>} : vector<2x32xbf16>, vector<32x128xbf16>, vector<2x128xf32> -> vector<2x128xf32>
    %251 = arith.addf %246, %250 : vector<2x128xf32>
    %c0_95 = arith.constant 0 : index
    %c0_96 = arith.constant 0 : index
    %252 = vector.load %arg4[%c0_95, %c0_96] : memref<1x128xf32, #tpu.memory_space<vmem>>, vector<1x128xf32>
    %253 = vector.broadcast %252 : vector<1x128xf32> to vector<2x128xf32>
    %254 = arith.addf %251, %253 : vector<2x128xf32>
    %255 = vector.extract_strided_slice %254 {offsets = [0, 0], sizes = [2, 32], strides = [1, 1]} : vector<2x128xf32> to vector<2x32xf32>
    %256 = vector.extract_strided_slice %254 {offsets = [0, 32], sizes = [2, 32], strides = [1, 1]} : vector<2x128xf32> to vector<2x32xf32>
    %257 = vector.extract_strided_slice %254 {offsets = [0, 64], sizes = [2, 32], strides = [1, 1]} : vector<2x128xf32> to vector<2x32xf32>
    %258 = vector.extract_strided_slice %254 {offsets = [0, 96], sizes = [2, 32], strides = [1, 1]} : vector<2x128xf32> to vector<2x32xf32>
    %259 = arith.negf %256 : vector<2x32xf32>
    %260 = math.exp %259 : vector<2x32xf32>
    %cst_97 = arith.constant 1.000000e+00 : f32
    %261 = vector.broadcast %cst_97 : f32 to vector<2x32xf32>
    %262 = arith.addf %261, %260 : vector<2x32xf32>
    %263 = arith.divf %261, %262 : vector<2x32xf32>
    %264 = arith.mulf %263, %225 : vector<2x32xf32>
    %265 = arith.negf %255 : vector<2x32xf32>
    %266 = math.exp %265 : vector<2x32xf32>
    %cst_98 = arith.constant 1.000000e+00 : f32
    %267 = vector.broadcast %cst_98 : f32 to vector<2x32xf32>
    %268 = arith.addf %267, %266 : vector<2x32xf32>
    %269 = arith.divf %267, %268 : vector<2x32xf32>
    %270 = math.tanh %257 : vector<2x32xf32>
    %271 = arith.mulf %269, %270 : vector<2x32xf32>
    %272 = arith.addf %264, %271 : vector<2x32xf32>
    %273 = arith.negf %258 : vector<2x32xf32>
    %274 = math.exp %273 : vector<2x32xf32>
    %cst_99 = arith.constant 1.000000e+00 : f32
    %275 = vector.broadcast %cst_99 : f32 to vector<2x32xf32>
    %276 = arith.addf %275, %274 : vector<2x32xf32>
    %277 = arith.divf %275, %276 : vector<2x32xf32>
    %278 = math.tanh %272 : vector<2x32xf32>
    %279 = arith.mulf %277, %278 : vector<2x32xf32>
    %280 = arith.index_cast %c5_i32 : i32 to index
    %c0_100 = arith.constant 0 : index
    %c0_101 = arith.constant 0 : index
    %281 = vector.load %arg5[%280, %c0_100, %c0_101] : memref<8x2x32xf32, #tpu.memory_space<vmem>>, vector<1x2x32xf32>
    %282 = vector.shape_cast %281 : vector<1x2x32xf32> to vector<2x32xf32>
    %283 = vector.shape_cast %279 : vector<2x32xf32> to vector<1x2x32xf32>
    tpu.vector_store %arg5[%280, %c0_100, %c0_101], %283 {strides = array<i32>} : memref<8x2x32xf32, #tpu.memory_space<vmem>>, vector<1x2x32xf32>,
    %c6_i32 = arith.constant 6 : i32
    %284 = arith.index_cast %c6_i32 : i32 to index
    %c0_102 = arith.constant 0 : index
    %c0_103 = arith.constant 0 : index
    %285 = vector.load %arg0[%284, %c0_102, %c0_103] : memref<8x2x16xf32, #tpu.memory_space<vmem>>, vector<1x2x16xf32>
    %286 = vector.shape_cast %285 : vector<1x2x16xf32> to vector<2x16xf32>
    %c0_104 = arith.constant 0 : index
    %c0_105 = arith.constant 0 : index
    %287 = vector.load %arg1[%c0_104, %c0_105] : memref<16x128xf32, #tpu.memory_space<vmem>>, vector<16x128xf32>
    %288 = arith.truncf %286 : vector<2x16xf32> to vector<2x16xbf16>
    %289 = arith.truncf %287 : vector<16x128xf32> to vector<16x128xbf16>
    %cst_106 = arith.constant dense<0.000000e+00> : vector<2x128xf32>
    %290 = tpu.matmul %288, %289, %cst_106 {dimension_numbers = #tpu.dot_dimension_numbers<[1], [0], [0], [1], [0, 0, 1, 1], [], []>} : vector<2x16xbf16>, vector<16x128xbf16>, vector<2x128xf32> -> vector<2x128xf32>
    %c0_107 = arith.constant 0 : index
    %c0_108 = arith.constant 0 : index
    %291 = vector.load %arg2[%c0_107, %c0_108] : memref<1x128xf32, #tpu.memory_space<vmem>>, vector<1x128xf32>
    %292 = vector.broadcast %291 : vector<1x128xf32> to vector<2x128xf32>
    %293 = arith.addf %290, %292 : vector<2x128xf32>
    %c0_109 = arith.constant 0 : index
    %c0_110 = arith.constant 0 : index
    %294 = vector.load %arg3[%c0_109, %c0_110] : memref<32x128xf32, #tpu.memory_space<vmem>>, vector<32x128xf32>
    %295 = arith.truncf %279 : vector<2x32xf32> to vector<2x32xbf16>
    %296 = arith.truncf %294 : vector<32x128xf32> to vector<32x128xbf16>
    %cst_111 = arith.constant dense<0.000000e+00> : vector<2x128xf32>
    %297 = tpu.matmul %295, %296, %cst_111 {dimension_numbers = #tpu.dot_dimension_numbers<[1], [0], [0], [1], [0, 0, 1, 1], [], []>} : vector<2x32xbf16>, vector<32x128xbf16>, vector<2x128xf32> -> vector<2x128xf32>
    %298 = arith.addf %293, %297 : vector<2x128xf32>
    %c0_112 = arith.constant 0 : index
    %c0_113 = arith.constant 0 : index
    %299 = vector.load %arg4[%c0_112, %c0_113] : memref<1x128xf32, #tpu.memory_space<vmem>>, vector<1x128xf32>
    %300 = vector.broadcast %299 : vector<1x128xf32> to vector<2x128xf32>
    %301 = arith.addf %298, %300 : vector<2x128xf32>
    %302 = vector.extract_strided_slice %301 {offsets = [0, 0], sizes = [2, 32], strides = [1, 1]} : vector<2x128xf32> to vector<2x32xf32>
    %303 = vector.extract_strided_slice %301 {offsets = [0, 32], sizes = [2, 32], strides = [1, 1]} : vector<2x128xf32> to vector<2x32xf32>
    %304 = vector.extract_strided_slice %301 {offsets = [0, 64], sizes = [2, 32], strides = [1, 1]} : vector<2x128xf32> to vector<2x32xf32>
    %305 = vector.extract_strided_slice %301 {offsets = [0, 96], sizes = [2, 32], strides = [1, 1]} : vector<2x128xf32> to vector<2x32xf32>
    %306 = arith.negf %303 : vector<2x32xf32>
    %307 = math.exp %306 : vector<2x32xf32>
    %cst_114 = arith.constant 1.000000e+00 : f32
    %308 = vector.broadcast %cst_114 : f32 to vector<2x32xf32>
    %309 = arith.addf %308, %307 : vector<2x32xf32>
    %310 = arith.divf %308, %309 : vector<2x32xf32>
    %311 = arith.mulf %310, %272 : vector<2x32xf32>
    %312 = arith.negf %302 : vector<2x32xf32>
    %313 = math.exp %312 : vector<2x32xf32>
    %cst_115 = arith.constant 1.000000e+00 : f32
    %314 = vector.broadcast %cst_115 : f32 to vector<2x32xf32>
    %315 = arith.addf %314, %313 : vector<2x32xf32>
    %316 = arith.divf %314, %315 : vector<2x32xf32>
    %317 = math.tanh %304 : vector<2x32xf32>
    %318 = arith.mulf %316, %317 : vector<2x32xf32>
    %319 = arith.addf %311, %318 : vector<2x32xf32>
    %320 = arith.negf %305 : vector<2x32xf32>
    %321 = math.exp %320 : vector<2x32xf32>
    %cst_116 = arith.constant 1.000000e+00 : f32
    %322 = vector.broadcast %cst_116 : f32 to vector<2x32xf32>
    %323 = arith.addf %322, %321 : vector<2x32xf32>
    %324 = arith.divf %322, %323 : vector<2x32xf32>
    %325 = math.tanh %319 : vector<2x32xf32>
    %326 = arith.mulf %324, %325 : vector<2x32xf32>
    %327 = arith.index_cast %c6_i32 : i32 to index
    %c0_117 = arith.constant 0 : index
    %c0_118 = arith.constant 0 : index
    %328 = vector.load %arg5[%327, %c0_117, %c0_118] : memref<8x2x32xf32, #tpu.memory_space<vmem>>, vector<1x2x32xf32>
    %329 = vector.shape_cast %328 : vector<1x2x32xf32> to vector<2x32xf32>
    %330 = vector.shape_cast %326 : vector<2x32xf32> to vector<1x2x32xf32>
    tpu.vector_store %arg5[%327, %c0_117, %c0_118], %330 {strides = array<i32>} : memref<8x2x32xf32, #tpu.memory_space<vmem>>, vector<1x2x32xf32>,
    %c7_i32 = arith.constant 7 : i32
    %331 = arith.index_cast %c7_i32 : i32 to index
    %c0_119 = arith.constant 0 : index
    %c0_120 = arith.constant 0 : index
    %332 = vector.load %arg0[%331, %c0_119, %c0_120] : memref<8x2x16xf32, #tpu.memory_space<vmem>>, vector<1x2x16xf32>
    %333 = vector.shape_cast %332 : vector<1x2x16xf32> to vector<2x16xf32>
    %c0_121 = arith.constant 0 : index
    %c0_122 = arith.constant 0 : index
    %334 = vector.load %arg1[%c0_121, %c0_122] : memref<16x128xf32, #tpu.memory_space<vmem>>, vector<16x128xf32>
    %335 = arith.truncf %333 : vector<2x16xf32> to vector<2x16xbf16>
    %336 = arith.truncf %334 : vector<16x128xf32> to vector<16x128xbf16>
    %cst_123 = arith.constant dense<0.000000e+00> : vector<2x128xf32>
    %337 = tpu.matmul %335, %336, %cst_123 {dimension_numbers = #tpu.dot_dimension_numbers<[1], [0], [0], [1], [0, 0, 1, 1], [], []>} : vector<2x16xbf16>, vector<16x128xbf16>, vector<2x128xf32> -> vector<2x128xf32>
    %c0_124 = arith.constant 0 : index
    %c0_125 = arith.constant 0 : index
    %338 = vector.load %arg2[%c0_124, %c0_125] : memref<1x128xf32, #tpu.memory_space<vmem>>, vector<1x128xf32>
    %339 = vector.broadcast %338 : vector<1x128xf32> to vector<2x128xf32>
    %340 = arith.addf %337, %339 : vector<2x128xf32>
    %c0_126 = arith.constant 0 : index
    %c0_127 = arith.constant 0 : index
    %341 = vector.load %arg3[%c0_126, %c0_127] : memref<32x128xf32, #tpu.memory_space<vmem>>, vector<32x128xf32>
    %342 = arith.truncf %326 : vector<2x32xf32> to vector<2x32xbf16>
    %343 = arith.truncf %341 : vector<32x128xf32> to vector<32x128xbf16>
    %cst_128 = arith.constant dense<0.000000e+00> : vector<2x128xf32>
    %344 = tpu.matmul %342, %343, %cst_128 {dimension_numbers = #tpu.dot_dimension_numbers<[1], [0], [0], [1], [0, 0, 1, 1], [], []>} : vector<2x32xbf16>, vector<32x128xbf16>, vector<2x128xf32> -> vector<2x128xf32>
    %345 = arith.addf %340, %344 : vector<2x128xf32>
    %c0_129 = arith.constant 0 : index
    %c0_130 = arith.constant 0 : index
    %346 = vector.load %arg4[%c0_129, %c0_130] : memref<1x128xf32, #tpu.memory_space<vmem>>, vector<1x128xf32>
    %347 = vector.broadcast %346 : vector<1x128xf32> to vector<2x128xf32>
    %348 = arith.addf %345, %347 : vector<2x128xf32>
    %349 = vector.extract_strided_slice %348 {offsets = [0, 0], sizes = [2, 32], strides = [1, 1]} : vector<2x128xf32> to vector<2x32xf32>
    %350 = vector.extract_strided_slice %348 {offsets = [0, 32], sizes = [2, 32], strides = [1, 1]} : vector<2x128xf32> to vector<2x32xf32>
    %351 = vector.extract_strided_slice %348 {offsets = [0, 64], sizes = [2, 32], strides = [1, 1]} : vector<2x128xf32> to vector<2x32xf32>
    %352 = vector.extract_strided_slice %348 {offsets = [0, 96], sizes = [2, 32], strides = [1, 1]} : vector<2x128xf32> to vector<2x32xf32>
    %353 = arith.negf %350 : vector<2x32xf32>
    %354 = math.exp %353 : vector<2x32xf32>
    %cst_131 = arith.constant 1.000000e+00 : f32
    %355 = vector.broadcast %cst_131 : f32 to vector<2x32xf32>
    %356 = arith.addf %355, %354 : vector<2x32xf32>
    %357 = arith.divf %355, %356 : vector<2x32xf32>
    %358 = arith.mulf %357, %319 : vector<2x32xf32>
    %359 = arith.negf %349 : vector<2x32xf32>
    %360 = math.exp %359 : vector<2x32xf32>
    %cst_132 = arith.constant 1.000000e+00 : f32
    %361 = vector.broadcast %cst_132 : f32 to vector<2x32xf32>
    %362 = arith.addf %361, %360 : vector<2x32xf32>
    %363 = arith.divf %361, %362 : vector<2x32xf32>
    %364 = math.tanh %351 : vector<2x32xf32>
    %365 = arith.mulf %363, %364 : vector<2x32xf32>
    %366 = arith.addf %358, %365 : vector<2x32xf32>
    %367 = arith.negf %352 : vector<2x32xf32>
    %368 = math.exp %367 : vector<2x32xf32>
    %cst_133 = arith.constant 1.000000e+00 : f32
    %369 = vector.broadcast %cst_133 : f32 to vector<2x32xf32>
    %370 = arith.addf %369, %368 : vector<2x32xf32>
    %371 = arith.divf %369, %370 : vector<2x32xf32>
    %372 = math.tanh %366 : vector<2x32xf32>
    %373 = arith.mulf %371, %372 : vector<2x32xf32>
    %374 = arith.index_cast %c7_i32 : i32 to index
    %c0_134 = arith.constant 0 : index
    %c0_135 = arith.constant 0 : index
    %375 = vector.load %arg5[%374, %c0_134, %c0_135] : memref<8x2x32xf32, #tpu.memory_space<vmem>>, vector<1x2x32xf32>
    %376 = vector.shape_cast %375 : vector<1x2x32xf32> to vector<2x32xf32>
    %377 = vector.shape_cast %373 : vector<2x32xf32> to vector<1x2x32xf32>
    tpu.vector_store %arg5[%374, %c0_134, %c0_135], %377 {strides = array<i32>} : memref<8x2x32xf32, #tpu.memory_space<vmem>>, vector<1x2x32xf32>,
    %c8_i32 = arith.constant 8 : i32
    return
  }
}

module attributes {stable_mosaic.version = 11 : i64} {
  func.func @_mhatt_kernel(%arg0: i32, %arg1: memref<1x8x32xf32, #tpu.memory_space<vmem>>, %arg2: memref<1x8x32xf32, #tpu.memory_space<vmem>>, %arg3: memref<1x1x8xf32, #tpu.memory_space<vmem>>, %arg4: memref<32x32xf32, #tpu.memory_space<vmem>>, %arg5: memref<1x32xf32, #tpu.memory_space<vmem>>, %arg6: memref<32x64xf32, #tpu.memory_space<vmem>>, %arg7: memref<1x64xf32, #tpu.memory_space<vmem>>, %arg8: memref<32x32xf32, #tpu.memory_space<vmem>>, %arg9: memref<1x32xf32, #tpu.memory_space<vmem>>, %arg10: memref<1x32xf32, #tpu.memory_space<vmem>>, %arg11: memref<1x32xf32, #tpu.memory_space<vmem>>, %arg12: memref<1x8x32xf32, #tpu.memory_space<vmem>>) attributes {dimension_semantics = [#tpu.dimension_semantics<parallel>], iteration_bounds = array<i64: 2>, scalar_prefetch = 0 : i64, scratch_operands = 0 : i64, tpu.core_type = #tpu.core_type<tc>, window_params = [{transform_indices = @transform_0, window_bounds = array<i64: 1, 8, 32>}, {transform_indices = @transform_1, window_bounds = array<i64: 1, 8, 32>}, {transform_indices = @transform_2, window_bounds = array<i64: 1, 1, 8>}, {pipeline_mode = #tpu.pipeline_mode<synchronous>, transform_indices = @transform_3, window_bounds = array<i64: 32, 32>}, {pipeline_mode = #tpu.pipeline_mode<synchronous>, transform_indices = @transform_4, window_bounds = array<i64: 1, 32>}, {pipeline_mode = #tpu.pipeline_mode<synchronous>, transform_indices = @transform_5, window_bounds = array<i64: 32, 64>}, {pipeline_mode = #tpu.pipeline_mode<synchronous>, transform_indices = @transform_6, window_bounds = array<i64: 1, 64>}, {pipeline_mode = #tpu.pipeline_mode<synchronous>, transform_indices = @transform_7, window_bounds = array<i64: 32, 32>}, {pipeline_mode = #tpu.pipeline_mode<synchronous>, transform_indices = @transform_8, window_bounds = array<i64: 1, 32>}, {pipeline_mode = #tpu.pipeline_mode<synchronous>, transform_indices = @transform_9, window_bounds = array<i64: 1, 32>}, {pipeline_mode = #tpu.pipeline_mode<synchronous>, transform_indices = @transform_10, window_bounds = array<i64: 1, 32>}, {transform_indices = @transform_11, window_bounds = array<i64: 1, 8, 32>}]} {
    %c0 = arith.constant 0 : index
    %c0_0 = arith.constant 0 : index
    %c0_1 = arith.constant 0 : index
    %0 = vector.load %arg1[%c0, %c0_0, %c0_1] : memref<1x8x32xf32, #tpu.memory_space<vmem>>, vector<1x8x32xf32>
    %1 = vector.shape_cast %0 : vector<1x8x32xf32> to vector<8x32xf32>
    %c0_2 = arith.constant 0 : index
    %c0_3 = arith.constant 0 : index
    %c0_4 = arith.constant 0 : index
    %2 = vector.load %arg2[%c0_2, %c0_3, %c0_4] : memref<1x8x32xf32, #tpu.memory_space<vmem>>, vector<1x8x32xf32>
    %3 = vector.shape_cast %2 : vector<1x8x32xf32> to vector<8x32xf32>
    %c0_5 = arith.constant 0 : index
    %c0_6 = arith.constant 0 : index
    %c0_7 = arith.constant 0 : index
    %4 = vector.load %arg3[%c0_5, %c0_6, %c0_7] : memref<1x1x8xf32, #tpu.memory_space<vmem>>, vector<1x1x8xf32>
    %5 = vector.shape_cast %4 : vector<1x1x8xf32> to vector<1x8xf32>
    %c0_8 = arith.constant 0 : index
    %c0_9 = arith.constant 0 : index
    %6 = vector.load %arg4[%c0_8, %c0_9] : memref<32x32xf32, #tpu.memory_space<vmem>>, vector<32x32xf32>
    %7 = arith.truncf %1 : vector<8x32xf32> to vector<8x32xbf16>
    %8 = arith.truncf %6 : vector<32x32xf32> to vector<32x32xbf16>
    %cst = arith.constant dense<0.000000e+00> : vector<8x32xf32>
    %9 = tpu.matmul %7, %8, %cst {dimension_numbers = #tpu.dot_dimension_numbers<[1], [0], [0], [1], [0, 0, 1, 1], [], []>} : vector<8x32xbf16>, vector<32x32xbf16>, vector<8x32xf32> -> vector<8x32xf32>
    %c0_10 = arith.constant 0 : index
    %c0_11 = arith.constant 0 : index
    %10 = vector.load %arg5[%c0_10, %c0_11] : memref<1x32xf32, #tpu.memory_space<vmem>>, vector<1x32xf32>
    %11 = vector.broadcast %10 : vector<1x32xf32> to vector<8x32xf32>
    %12 = arith.addf %9, %11 : vector<8x32xf32>
    %c0_12 = arith.constant 0 : index
    %c0_13 = arith.constant 0 : index
    %13 = vector.load %arg6[%c0_12, %c0_13] : memref<32x64xf32, #tpu.memory_space<vmem>>, vector<32x64xf32>
    %14 = arith.truncf %3 : vector<8x32xf32> to vector<8x32xbf16>
    %15 = arith.truncf %13 : vector<32x64xf32> to vector<32x64xbf16>
    %cst_14 = arith.constant dense<0.000000e+00> : vector<8x64xf32>
    %16 = tpu.matmul %14, %15, %cst_14 {dimension_numbers = #tpu.dot_dimension_numbers<[1], [0], [0], [1], [0, 0, 1, 1], [], []>} : vector<8x32xbf16>, vector<32x64xbf16>, vector<8x64xf32> -> vector<8x64xf32>
    %c0_15 = arith.constant 0 : index
    %c0_16 = arith.constant 0 : index
    %17 = vector.load %arg7[%c0_15, %c0_16] : memref<1x64xf32, #tpu.memory_space<vmem>>, vector<1x64xf32>
    %18 = vector.broadcast %17 : vector<1x64xf32> to vector<8x64xf32>
    %19 = arith.addf %16, %18 : vector<8x64xf32>
    %20 = vector.extract_strided_slice %19 {offsets = [0, 0], sizes = [8, 32], strides = [1, 1]} : vector<8x64xf32> to vector<8x32xf32>
    %21 = vector.extract_strided_slice %19 {offsets = [0, 32], sizes = [8, 32], strides = [1, 1]} : vector<8x64xf32> to vector<8x32xf32>
    %22 = vector.extract_strided_slice %12 {offsets = [0, 0], sizes = [8, 8], strides = [1, 1]} : vector<8x32xf32> to vector<8x8xf32>
    %23 = vector.extract_strided_slice %20 {offsets = [0, 0], sizes = [8, 8], strides = [1, 1]} : vector<8x32xf32> to vector<8x8xf32>
    %24 = vector.extract_strided_slice %21 {offsets = [0, 0], sizes = [8, 8], strides = [1, 1]} : vector<8x32xf32> to vector<8x8xf32>
    %25 = arith.truncf %22 : vector<8x8xf32> to vector<8x8xbf16>
    %26 = arith.truncf %23 : vector<8x8xf32> to vector<8x8xbf16>
    %cst_17 = arith.constant dense<0.000000e+00> : vector<8x8xf32>
    %27 = tpu.matmul %25, %26, %cst_17 {dimension_numbers = #tpu.dot_dimension_numbers<[1], [1], [0], [0], [0, 0, 1, 0], [], []>} : vector<8x8xbf16>, vector<8x8xbf16>, vector<8x8xf32> -> vector<8x8xf32>
    %cst_18 = arith.constant 0.353553385 : f32
    %28 = vector.broadcast %cst_18 : f32 to vector<8x8xf32>
    %29 = arith.mulf %27, %28 : vector<8x8xf32>
    %30 = vector.broadcast %5 : vector<1x8xf32> to vector<8x8xf32>
    %31 = arith.addf %29, %30 : vector<8x8xf32>
    %cst_19 = arith.constant dense<0xFF800000> : vector<8xf32>
    %32 = vector.multi_reduction <maximumf>, %31, %cst_19 [1] : vector<8x8xf32> to vector<8xf32>
    %33 = vector.shape_cast %32 : vector<8xf32> to vector<8x1xf32>
    %34 = vector.broadcast %33 : vector<8x1xf32> to vector<8x8xf32>
    %35 = arith.subf %31, %34 : vector<8x8xf32>
    %36 = math.exp %35 : vector<8x8xf32>
    %cst_20 = arith.constant dense<0.000000e+00> : vector<8xf32>
    %37 = vector.multi_reduction <add>, %36, %cst_20 [1] : vector<8x8xf32> to vector<8xf32>
    %38 = vector.shape_cast %37 : vector<8xf32> to vector<8x1xf32>
    %39 = tpu.reciprocal %38 {approx = true} : vector<8x1xf32> -> vector<8x1xf32>
    %40 = vector.broadcast %39 : vector<8x1xf32> to vector<8x8xf32>
    %41 = arith.mulf %36, %40 : vector<8x8xf32>
    %42 = arith.truncf %41 : vector<8x8xf32> to vector<8x8xbf16>
    %43 = arith.truncf %24 : vector<8x8xf32> to vector<8x8xbf16>
    %cst_21 = arith.constant dense<0.000000e+00> : vector<8x8xf32>
    %44 = tpu.matmul %42, %43, %cst_21 {dimension_numbers = #tpu.dot_dimension_numbers<[1], [0], [0], [1], [0, 0, 1, 1], [], []>} : vector<8x8xbf16>, vector<8x8xbf16>, vector<8x8xf32> -> vector<8x8xf32>
    %45 = vector.extract_strided_slice %12 {offsets = [0, 8], sizes = [8, 8], strides = [1, 1]} : vector<8x32xf32> to vector<8x8xf32>
    %46 = vector.extract_strided_slice %20 {offsets = [0, 8], sizes = [8, 8], strides = [1, 1]} : vector<8x32xf32> to vector<8x8xf32>
    %47 = vector.extract_strided_slice %21 {offsets = [0, 8], sizes = [8, 8], strides = [1, 1]} : vector<8x32xf32> to vector<8x8xf32>
    %48 = arith.truncf %45 : vector<8x8xf32> to vector<8x8xbf16>
    %49 = arith.truncf %46 : vector<8x8xf32> to vector<8x8xbf16>
    %cst_22 = arith.constant dense<0.000000e+00> : vector<8x8xf32>
    %50 = tpu.matmul %48, %49, %cst_22 {dimension_numbers = #tpu.dot_dimension_numbers<[1], [1], [0], [0], [0, 0, 1, 0], [], []>} : vector<8x8xbf16>, vector<8x8xbf16>, vector<8x8xf32> -> vector<8x8xf32>
    %cst_23 = arith.constant 0.353553385 : f32
    %51 = vector.broadcast %cst_23 : f32 to vector<8x8xf32>
    %52 = arith.mulf %50, %51 : vector<8x8xf32>
    %53 = vector.broadcast %5 : vector<1x8xf32> to vector<8x8xf32>
    %54 = arith.addf %52, %53 : vector<8x8xf32>
    %cst_24 = arith.constant dense<0xFF800000> : vector<8xf32>
    %55 = vector.multi_reduction <maximumf>, %54, %cst_24 [1] : vector<8x8xf32> to vector<8xf32>
    %56 = vector.shape_cast %55 : vector<8xf32> to vector<8x1xf32>
    %57 = vector.broadcast %56 : vector<8x1xf32> to vector<8x8xf32>
    %58 = arith.subf %54, %57 : vector<8x8xf32>
    %59 = math.exp %58 : vector<8x8xf32>
    %cst_25 = arith.constant dense<0.000000e+00> : vector<8xf32>
    %60 = vector.multi_reduction <add>, %59, %cst_25 [1] : vector<8x8xf32> to vector<8xf32>
    %61 = vector.shape_cast %60 : vector<8xf32> to vector<8x1xf32>
    %62 = tpu.reciprocal %61 {approx = true} : vector<8x1xf32> -> vector<8x1xf32>
    %63 = vector.broadcast %62 : vector<8x1xf32> to vector<8x8xf32>
    %64 = arith.mulf %59, %63 : vector<8x8xf32>
    %65 = arith.truncf %64 : vector<8x8xf32> to vector<8x8xbf16>
    %66 = arith.truncf %47 : vector<8x8xf32> to vector<8x8xbf16>
    %cst_26 = arith.constant dense<0.000000e+00> : vector<8x8xf32>
    %67 = tpu.matmul %65, %66, %cst_26 {dimension_numbers = #tpu.dot_dimension_numbers<[1], [0], [0], [1], [0, 0, 1, 1], [], []>} : vector<8x8xbf16>, vector<8x8xbf16>, vector<8x8xf32> -> vector<8x8xf32>
    %68 = vector.extract_strided_slice %12 {offsets = [0, 16], sizes = [8, 8], strides = [1, 1]} : vector<8x32xf32> to vector<8x8xf32>
    %69 = vector.extract_strided_slice %20 {offsets = [0, 16], sizes = [8, 8], strides = [1, 1]} : vector<8x32xf32> to vector<8x8xf32>
    %70 = vector.extract_strided_slice %21 {offsets = [0, 16], sizes = [8, 8], strides = [1, 1]} : vector<8x32xf32> to vector<8x8xf32>
    %71 = arith.truncf %68 : vector<8x8xf32> to vector<8x8xbf16>
    %72 = arith.truncf %69 : vector<8x8xf32> to vector<8x8xbf16>
    %cst_27 = arith.constant dense<0.000000e+00> : vector<8x8xf32>
    %73 = tpu.matmul %71, %72, %cst_27 {dimension_numbers = #tpu.dot_dimension_numbers<[1], [1], [0], [0], [0, 0, 1, 0], [], []>} : vector<8x8xbf16>, vector<8x8xbf16>, vector<8x8xf32> -> vector<8x8xf32>
    %cst_28 = arith.constant 0.353553385 : f32
    %74 = vector.broadcast %cst_28 : f32 to vector<8x8xf32>
    %75 = arith.mulf %73, %74 : vector<8x8xf32>
    %76 = vector.broadcast %5 : vector<1x8xf32> to vector<8x8xf32>
    %77 = arith.addf %75, %76 : vector<8x8xf32>
    %cst_29 = arith.constant dense<0xFF800000> : vector<8xf32>
    %78 = vector.multi_reduction <maximumf>, %77, %cst_29 [1] : vector<8x8xf32> to vector<8xf32>
    %79 = vector.shape_cast %78 : vector<8xf32> to vector<8x1xf32>
    %80 = vector.broadcast %79 : vector<8x1xf32> to vector<8x8xf32>
    %81 = arith.subf %77, %80 : vector<8x8xf32>
    %82 = math.exp %81 : vector<8x8xf32>
    %cst_30 = arith.constant dense<0.000000e+00> : vector<8xf32>
    %83 = vector.multi_reduction <add>, %82, %cst_30 [1] : vector<8x8xf32> to vector<8xf32>
    %84 = vector.shape_cast %83 : vector<8xf32> to vector<8x1xf32>
    %85 = tpu.reciprocal %84 {approx = true} : vector<8x1xf32> -> vector<8x1xf32>
    %86 = vector.broadcast %85 : vector<8x1xf32> to vector<8x8xf32>
    %87 = arith.mulf %82, %86 : vector<8x8xf32>
    %88 = arith.truncf %87 : vector<8x8xf32> to vector<8x8xbf16>
    %89 = arith.truncf %70 : vector<8x8xf32> to vector<8x8xbf16>
    %cst_31 = arith.constant dense<0.000000e+00> : vector<8x8xf32>
    %90 = tpu.matmul %88, %89, %cst_31 {dimension_numbers = #tpu.dot_dimension_numbers<[1], [0], [0], [1], [0, 0, 1, 1], [], []>} : vector<8x8xbf16>, vector<8x8xbf16>, vector<8x8xf32> -> vector<8x8xf32>
    %91 = vector.extract_strided_slice %12 {offsets = [0, 24], sizes = [8, 8], strides = [1, 1]} : vector<8x32xf32> to vector<8x8xf32>
    %92 = vector.extract_strided_slice %20 {offsets = [0, 24], sizes = [8, 8], strides = [1, 1]} : vector<8x32xf32> to vector<8x8xf32>
    %93 = vector.extract_strided_slice %21 {offsets = [0, 24], sizes = [8, 8], strides = [1, 1]} : vector<8x32xf32> to vector<8x8xf32>
    %94 = arith.truncf %91 : vector<8x8xf32> to vector<8x8xbf16>
    %95 = arith.truncf %92 : vector<8x8xf32> to vector<8x8xbf16>
    %cst_32 = arith.constant dense<0.000000e+00> : vector<8x8xf32>
    %96 = tpu.matmul %94, %95, %cst_32 {dimension_numbers = #tpu.dot_dimension_numbers<[1], [1], [0], [0], [0, 0, 1, 0], [], []>} : vector<8x8xbf16>, vector<8x8xbf16>, vector<8x8xf32> -> vector<8x8xf32>
    %cst_33 = arith.constant 0.353553385 : f32
    %97 = vector.broadcast %cst_33 : f32 to vector<8x8xf32>
    %98 = arith.mulf %96, %97 : vector<8x8xf32>
    %99 = vector.broadcast %5 : vector<1x8xf32> to vector<8x8xf32>
    %100 = arith.addf %98, %99 : vector<8x8xf32>
    %cst_34 = arith.constant dense<0xFF800000> : vector<8xf32>
    %101 = vector.multi_reduction <maximumf>, %100, %cst_34 [1] : vector<8x8xf32> to vector<8xf32>
    %102 = vector.shape_cast %101 : vector<8xf32> to vector<8x1xf32>
    %103 = vector.broadcast %102 : vector<8x1xf32> to vector<8x8xf32>
    %104 = arith.subf %100, %103 : vector<8x8xf32>
    %105 = math.exp %104 : vector<8x8xf32>
    %cst_35 = arith.constant dense<0.000000e+00> : vector<8xf32>
    %106 = vector.multi_reduction <add>, %105, %cst_35 [1] : vector<8x8xf32> to vector<8xf32>
    %107 = vector.shape_cast %106 : vector<8xf32> to vector<8x1xf32>
    %108 = tpu.reciprocal %107 {approx = true} : vector<8x1xf32> -> vector<8x1xf32>
    %109 = vector.broadcast %108 : vector<8x1xf32> to vector<8x8xf32>
    %110 = arith.mulf %105, %109 : vector<8x8xf32>
    %111 = arith.truncf %110 : vector<8x8xf32> to vector<8x8xbf16>
    %112 = arith.truncf %93 : vector<8x8xf32> to vector<8x8xbf16>
    %cst_36 = arith.constant dense<0.000000e+00> : vector<8x8xf32>
    %113 = tpu.matmul %111, %112, %cst_36 {dimension_numbers = #tpu.dot_dimension_numbers<[1], [0], [0], [1], [0, 0, 1, 1], [], []>} : vector<8x8xbf16>, vector<8x8xbf16>, vector<8x8xf32> -> vector<8x8xf32>
    %114 = tpu.concatenate %44, %67, %90, %113 in 1 : vector<8x8xf32>, vector<8x8xf32>, vector<8x8xf32>, vector<8x8xf32> -> vector<8x32xf32>
    %c0_37 = arith.constant 0 : index
    %c0_38 = arith.constant 0 : index
    %115 = vector.load %arg8[%c0_37, %c0_38] : memref<32x32xf32, #tpu.memory_space<vmem>>, vector<32x32xf32>
    %116 = arith.truncf %114 : vector<8x32xf32> to vector<8x32xbf16>
    %117 = arith.truncf %115 : vector<32x32xf32> to vector<32x32xbf16>
    %cst_39 = arith.constant dense<0.000000e+00> : vector<8x32xf32>
    %118 = tpu.matmul %116, %117, %cst_39 {dimension_numbers = #tpu.dot_dimension_numbers<[1], [0], [0], [1], [0, 0, 1, 1], [], []>} : vector<8x32xbf16>, vector<32x32xbf16>, vector<8x32xf32> -> vector<8x32xf32>
    %c0_40 = arith.constant 0 : index
    %c0_41 = arith.constant 0 : index
    %119 = vector.load %arg9[%c0_40, %c0_41] : memref<1x32xf32, #tpu.memory_space<vmem>>, vector<1x32xf32>
    %120 = vector.broadcast %119 : vector<1x32xf32> to vector<8x32xf32>
    %121 = arith.addf %118, %120 : vector<8x32xf32>
    %122 = arith.addf %121, %1 : vector<8x32xf32>
    %c0_42 = arith.constant 0 : index
    %c0_43 = arith.constant 0 : index
    %123 = vector.load %arg10[%c0_42, %c0_43] : memref<1x32xf32, #tpu.memory_space<vmem>>, vector<1x32xf32>
    %c0_44 = arith.constant 0 : index
    %c0_45 = arith.constant 0 : index
    %124 = vector.load %arg11[%c0_44, %c0_45] : memref<1x32xf32, #tpu.memory_space<vmem>>, vector<1x32xf32>
    %cst_46 = arith.constant dense<0.000000e+00> : vector<8xf32>
    %125 = vector.multi_reduction <add>, %122, %cst_46 [1] : vector<8x32xf32> to vector<8xf32>
    %126 = vector.shape_cast %125 : vector<8xf32> to vector<8x1xf32>
    %cst_47 = arith.constant 3.200000e+01 : f32
    %127 = vector.broadcast %cst_47 : f32 to vector<8x1xf32>
    %128 = arith.divf %126, %127 : vector<8x1xf32>
    %129 = vector.broadcast %128 : vector<8x1xf32> to vector<8x32xf32>
    %130 = arith.subf %122, %129 : vector<8x32xf32>
    %131 = arith.mulf %130, %130 : vector<8x32xf32>
    %cst_48 = arith.constant dense<0.000000e+00> : vector<8xf32>
    %132 = vector.multi_reduction <add>, %131, %cst_48 [1] : vector<8x32xf32> to vector<8xf32>
    %133 = vector.shape_cast %132 : vector<8xf32> to vector<8x1xf32>
    %cst_49 = arith.constant 3.100000e+01 : f32
    %134 = vector.broadcast %cst_49 : f32 to vector<8x1xf32>
    %135 = arith.divf %133, %134 : vector<8x1xf32>
    %136 = vector.broadcast %123 : vector<1x32xf32> to vector<8x32xf32>
    %137 = arith.mulf %136, %130 : vector<8x32xf32>
    %138 = math.sqrt %135 : vector<8x1xf32>
    %cst_50 = arith.constant 9.99999997E-7 : f32
    %139 = vector.broadcast %cst_50 : f32 to vector<8x1xf32>
    %140 = arith.addf %138, %139 : vector<8x1xf32>
    %141 = vector.broadcast %140 : vector<8x1xf32> to vector<8x32xf32>
    %142 = arith.divf %137, %141 : vector<8x32xf32>
    %143 = vector.broadcast %124 : vector<1x32xf32> to vector<8x32xf32>
    %144 = arith.addf %142, %143 : vector<8x32xf32>
    %c0_51 = arith.constant 0 : index
    %c0_52 = arith.constant 0 : index
    %c0_53 = arith.constant 0 : index
    %145 = vector.load %arg12[%c0_51, %c0_52, %c0_53] : memref<1x8x32xf32, #tpu.memory_space<vmem>>, vector<1x8x32xf32>
    %146 = vector.shape_cast %145 : vector<1x8x32xf32> to vector<8x32xf32>
    %147 = vector.shape_cast %144 : vector<8x32xf32> to vector<1x8x32xf32>
    tpu.vector_store %arg12[%c0_51, %c0_52, %c0_53], %147 {strides = array<i32>} : memref<1x8x32xf32, #tpu.memory_space<vmem>>, vector<1x8x32xf32>,
    return
  }
  func.func @transform_0(%arg0: i32) -> (i32, i32, i32) {
    %c0_i32 = arith.constant 0 : i32
    %c0_i32_0 = arith.constant 0 : i32
    %c0_i32_1 = arith.constant 0 : i32
    return %arg0, %c0_i32, %c0_i32_0 : i32, i32, i32
  }
  func.func @transform_1(%arg0: i32) -> (i32, i32, i32) {
    %c0_i32 = arith.constant 0 : i32
    %c0_i32_0 = arith.constant 0 : i32
    %c0_i32_1 = arith.constant 0 : i32
    return %arg0, %c0_i32, %c0_i32_0 : i32, i32, i32
  }
  func.func @transform_2(%arg0: i32) -> (i32, i32, i32) {
    %c0_i32 = arith.constant 0 : i32
    %c0_i32_0 = arith.constant 0 : i32
    %c0_i32_1 = arith.constant 0 : i32
    return %arg0, %c0_i32, %c0_i32_0 : i32, i32, i32
  }
  func.func @transform_3(%arg0: i32) -> (i32, i32) {
    %c0_i32 = arith.constant 0 : i32
    %c0_i32_0 = arith.constant 0 : i32
    %c0_i32_1 = arith.constant 0 : i32
    return %c0_i32, %c0_i32_0 : i32, i32
  }
  func.func @transform_4(%arg0: i32) -> (i32, i32) {
    %c0_i32 = arith.constant 0 : i32
    %c0_i32_0 = arith.constant 0 : i32
    %c0_i32_1 = arith.constant 0 : i32
    return %c0_i32, %c0_i32_0 : i32, i32
  }
  func.func @transform_5(%arg0: i32) -> (i32, i32) {
    %c0_i32 = arith.constant 0 : i32
    %c0_i32_0 = arith.constant 0 : i32
    %c0_i32_1 = arith.constant 0 : i32
    return %c0_i32, %c0_i32_0 : i32, i32
  }
  func.func @transform_6(%arg0: i32) -> (i32, i32) {
    %c0_i32 = arith.constant 0 : i32
    %c0_i32_0 = arith.constant 0 : i32
    %c0_i32_1 = arith.constant 0 : i32
    return %c0_i32, %c0_i32_0 : i32, i32
  }
  func.func @transform_7(%arg0: i32) -> (i32, i32) {
    %c0_i32 = arith.constant 0 : i32
    %c0_i32_0 = arith.constant 0 : i32
    %c0_i32_1 = arith.constant 0 : i32
    return %c0_i32, %c0_i32_0 : i32, i32
  }
  func.func @transform_8(%arg0: i32) -> (i32, i32) {
    %c0_i32 = arith.constant 0 : i32
    %c0_i32_0 = arith.constant 0 : i32
    %c0_i32_1 = arith.constant 0 : i32
    return %c0_i32, %c0_i32_0 : i32, i32
  }
  func.func @transform_9(%arg0: i32) -> (i32, i32) {
    %c0_i32 = arith.constant 0 : i32
    %c0_i32_0 = arith.constant 0 : i32
    %c0_i32_1 = arith.constant 0 : i32
    return %c0_i32, %c0_i32_0 : i32, i32
  }
  func.func @transform_10(%arg0: i32) -> (i32, i32) {
    %c0_i32 = arith.constant 0 : i32
    %c0_i32_0 = arith.constant 0 : i32
    %c0_i32_1 = arith.constant 0 : i32
    return %c0_i32, %c0_i32_0 : i32, i32
  }
  func.func @transform_11(%arg0: i32) -> (i32, i32, i32) {
    %c0_i32 = arith.constant 0 : i32
    %c0_i32_0 = arith.constant 0 : i32
    %c0_i32_1 = arith.constant 0 : i32
    return %arg0, %c0_i32, %c0_i32_0 : i32, i32, i32
  }
}

module attributes {stable_mosaic.version = 11 : i64} {
  func.func @_ffn_kernel(%arg0: memref<16x32xf32, #tpu.memory_space<vmem>>, %arg1: memref<32x64xf32, #tpu.memory_space<vmem>>, %arg2: memref<1x64xf32, #tpu.memory_space<vmem>>, %arg3: memref<64x32xf32, #tpu.memory_space<vmem>>, %arg4: memref<1x32xf32, #tpu.memory_space<vmem>>, %arg5: memref<1x32xf32, #tpu.memory_space<vmem>>, %arg6: memref<1x32xf32, #tpu.memory_space<vmem>>, %arg7: memref<16x32xf32, #tpu.memory_space<vmem>>) attributes {dimension_semantics = [], scalar_prefetch = 0 : i64, scratch_operands = 0 : i64, tpu.core_type = #tpu.core_type<tc>} {
    %c0 = arith.constant 0 : index
    %c0_0 = arith.constant 0 : index
    %0 = vector.load %arg0[%c0, %c0_0] : memref<16x32xf32, #tpu.memory_space<vmem>>, vector<16x32xf32>
    %c0_1 = arith.constant 0 : index
    %c0_2 = arith.constant 0 : index
    %1 = vector.load %arg1[%c0_1, %c0_2] : memref<32x64xf32, #tpu.memory_space<vmem>>, vector<32x64xf32>
    %2 = arith.truncf %0 : vector<16x32xf32> to vector<16x32xbf16>
    %3 = arith.truncf %1 : vector<32x64xf32> to vector<32x64xbf16>
    %cst = arith.constant dense<0.000000e+00> : vector<16x64xf32>
    %4 = tpu.matmul %2, %3, %cst {dimension_numbers = #tpu.dot_dimension_numbers<[1], [0], [0], [1], [0, 0, 1, 1], [], []>} : vector<16x32xbf16>, vector<32x64xbf16>, vector<16x64xf32> -> vector<16x64xf32>
    %c0_3 = arith.constant 0 : index
    %c0_4 = arith.constant 0 : index
    %5 = vector.load %arg2[%c0_3, %c0_4] : memref<1x64xf32, #tpu.memory_space<vmem>>, vector<1x64xf32>
    %6 = vector.broadcast %5 : vector<1x64xf32> to vector<16x64xf32>
    %7 = arith.addf %4, %6 : vector<16x64xf32>
    %cst_5 = arith.constant 0.000000e+00 : f32
    %8 = vector.broadcast %cst_5 : f32 to vector<16x64xf32>
    %9 = arith.maximumf %7, %8 : vector<16x64xf32>
    %c0_6 = arith.constant 0 : index
    %c0_7 = arith.constant 0 : index
    %10 = vector.load %arg3[%c0_6, %c0_7] : memref<64x32xf32, #tpu.memory_space<vmem>>, vector<64x32xf32>
    %11 = arith.truncf %9 : vector<16x64xf32> to vector<16x64xbf16>
    %12 = arith.truncf %10 : vector<64x32xf32> to vector<64x32xbf16>
    %cst_8 = arith.constant dense<0.000000e+00> : vector<16x32xf32>
    %13 = tpu.matmul %11, %12, %cst_8 {dimension_numbers = #tpu.dot_dimension_numbers<[1], [0], [0], [1], [0, 0, 1, 1], [], []>} : vector<16x64xbf16>, vector<64x32xbf16>, vector<16x32xf32> -> vector<16x32xf32>
    %c0_9 = arith.constant 0 : index
    %c0_10 = arith.constant 0 : index
    %14 = vector.load %arg4[%c0_9, %c0_10] : memref<1x32xf32, #tpu.memory_space<vmem>>, vector<1x32xf32>
    %15 = vector.broadcast %14 : vector<1x32xf32> to vector<16x32xf32>
    %16 = arith.addf %13, %15 : vector<16x32xf32>
    %17 = arith.addf %16, %0 : vector<16x32xf32>
    %c0_11 = arith.constant 0 : index
    %c0_12 = arith.constant 0 : index
    %18 = vector.load %arg5[%c0_11, %c0_12] : memref<1x32xf32, #tpu.memory_space<vmem>>, vector<1x32xf32>
    %c0_13 = arith.constant 0 : index
    %c0_14 = arith.constant 0 : index
    %19 = vector.load %arg6[%c0_13, %c0_14] : memref<1x32xf32, #tpu.memory_space<vmem>>, vector<1x32xf32>
    %cst_15 = arith.constant dense<0.000000e+00> : vector<16xf32>
    %20 = vector.multi_reduction <add>, %17, %cst_15 [1] : vector<16x32xf32> to vector<16xf32>
    %21 = vector.shape_cast %20 : vector<16xf32> to vector<16x1xf32>
    %cst_16 = arith.constant 3.200000e+01 : f32
    %22 = vector.broadcast %cst_16 : f32 to vector<16x1xf32>
    %23 = arith.divf %21, %22 : vector<16x1xf32>
    %24 = vector.broadcast %23 : vector<16x1xf32> to vector<16x32xf32>
    %25 = arith.subf %17, %24 : vector<16x32xf32>
    %26 = arith.mulf %25, %25 : vector<16x32xf32>
    %cst_17 = arith.constant dense<0.000000e+00> : vector<16xf32>
    %27 = vector.multi_reduction <add>, %26, %cst_17 [1] : vector<16x32xf32> to vector<16xf32>
    %28 = vector.shape_cast %27 : vector<16xf32> to vector<16x1xf32>
    %cst_18 = arith.constant 3.100000e+01 : f32
    %29 = vector.broadcast %cst_18 : f32 to vector<16x1xf32>
    %30 = arith.divf %28, %29 : vector<16x1xf32>
    %31 = vector.broadcast %18 : vector<1x32xf32> to vector<16x32xf32>
    %32 = arith.mulf %31, %25 : vector<16x32xf32>
    %33 = math.sqrt %30 : vector<16x1xf32>
    %cst_19 = arith.constant 9.99999997E-7 : f32
    %34 = vector.broadcast %cst_19 : f32 to vector<16x1xf32>
    %35 = arith.addf %33, %34 : vector<16x1xf32>
    %36 = vector.broadcast %35 : vector<16x1xf32> to vector<16x32xf32>
    %37 = arith.divf %32, %36 : vector<16x32xf32>
    %38 = vector.broadcast %19 : vector<1x32xf32> to vector<16x32xf32>
    %39 = arith.addf %37, %38 : vector<16x32xf32>
    %c0_20 = arith.constant 0 : index
    %c0_21 = arith.constant 0 : index
    %40 = vector.load %arg7[%c0_20, %c0_21] : memref<16x32xf32, #tpu.memory_space<vmem>>, vector<16x32xf32>
    tpu.vector_store %arg7[%c0_20, %c0_21], %39 {strides = array<i32>} : memref<16x32xf32, #tpu.memory_space<vmem>>, vector<16x32xf32>,
    return
  }
}

module attributes {stable_mosaic.version = 11 : i64} {
  func.func @_imgfeat_kernel(%arg0: memref<16x24xf32, #tpu.memory_space<vmem>>, %arg1: memref<16x5xf32, #tpu.memory_space<vmem>>, %arg2: memref<5x8xf32, #tpu.memory_space<vmem>>, %arg3: memref<1x8xf32, #tpu.memory_space<vmem>>, %arg4: memref<24x32xf32, #tpu.memory_space<vmem>>, %arg5: memref<8x32xf32, #tpu.memory_space<vmem>>, %arg6: memref<1x32xf32, #tpu.memory_space<vmem>>, %arg7: memref<16x32xf32, #tpu.memory_space<vmem>>) attributes {dimension_semantics = [], scalar_prefetch = 0 : i64, scratch_operands = 0 : i64, tpu.core_type = #tpu.core_type<tc>} {
    %c0 = arith.constant 0 : index
    %c0_0 = arith.constant 0 : index
    %0 = vector.load %arg1[%c0, %c0_0] : memref<16x5xf32, #tpu.memory_space<vmem>>, vector<16x5xf32>
    %c0_1 = arith.constant 0 : index
    %c0_2 = arith.constant 0 : index
    %1 = vector.load %arg2[%c0_1, %c0_2] : memref<5x8xf32, #tpu.memory_space<vmem>>, vector<5x8xf32>
    %2 = arith.truncf %0 : vector<16x5xf32> to vector<16x5xbf16>
    %3 = arith.truncf %1 : vector<5x8xf32> to vector<5x8xbf16>
    %cst = arith.constant dense<0.000000e+00> : vector<16x8xf32>
    %4 = tpu.matmul %2, %3, %cst {dimension_numbers = #tpu.dot_dimension_numbers<[1], [0], [0], [1], [0, 0, 1, 1], [], []>} : vector<16x5xbf16>, vector<5x8xbf16>, vector<16x8xf32> -> vector<16x8xf32>
    %c0_3 = arith.constant 0 : index
    %c0_4 = arith.constant 0 : index
    %5 = vector.load %arg3[%c0_3, %c0_4] : memref<1x8xf32, #tpu.memory_space<vmem>>, vector<1x8xf32>
    %6 = vector.broadcast %5 : vector<1x8xf32> to vector<16x8xf32>
    %7 = arith.addf %4, %6 : vector<16x8xf32>
    %c0_5 = arith.constant 0 : index
    %c0_6 = arith.constant 0 : index
    %8 = vector.load %arg0[%c0_5, %c0_6] : memref<16x24xf32, #tpu.memory_space<vmem>>, vector<16x24xf32>
    %c0_7 = arith.constant 0 : index
    %c0_8 = arith.constant 0 : index
    %9 = vector.load %arg4[%c0_7, %c0_8] : memref<24x32xf32, #tpu.memory_space<vmem>>, vector<24x32xf32>
    %10 = arith.truncf %8 : vector<16x24xf32> to vector<16x24xbf16>
    %11 = arith.truncf %9 : vector<24x32xf32> to vector<24x32xbf16>
    %cst_9 = arith.constant dense<0.000000e+00> : vector<16x32xf32>
    %12 = tpu.matmul %10, %11, %cst_9 {dimension_numbers = #tpu.dot_dimension_numbers<[1], [0], [0], [1], [0, 0, 1, 1], [], []>} : vector<16x24xbf16>, vector<24x32xbf16>, vector<16x32xf32> -> vector<16x32xf32>
    %c0_10 = arith.constant 0 : index
    %c0_11 = arith.constant 0 : index
    %13 = vector.load %arg5[%c0_10, %c0_11] : memref<8x32xf32, #tpu.memory_space<vmem>>, vector<8x32xf32>
    %14 = arith.truncf %7 : vector<16x8xf32> to vector<16x8xbf16>
    %15 = arith.truncf %13 : vector<8x32xf32> to vector<8x32xbf16>
    %cst_12 = arith.constant dense<0.000000e+00> : vector<16x32xf32>
    %16 = tpu.matmul %14, %15, %cst_12 {dimension_numbers = #tpu.dot_dimension_numbers<[1], [0], [0], [1], [0, 0, 1, 1], [], []>} : vector<16x8xbf16>, vector<8x32xbf16>, vector<16x32xf32> -> vector<16x32xf32>
    %17 = arith.addf %12, %16 : vector<16x32xf32>
    %c0_13 = arith.constant 0 : index
    %c0_14 = arith.constant 0 : index
    %18 = vector.load %arg6[%c0_13, %c0_14] : memref<1x32xf32, #tpu.memory_space<vmem>>, vector<1x32xf32>
    %19 = vector.broadcast %18 : vector<1x32xf32> to vector<16x32xf32>
    %20 = arith.addf %17, %19 : vector<16x32xf32>
    %c0_15 = arith.constant 0 : index
    %c0_16 = arith.constant 0 : index
    %21 = vector.load %arg7[%c0_15, %c0_16] : memref<16x32xf32, #tpu.memory_space<vmem>>, vector<16x32xf32>
    tpu.vector_store %arg7[%c0_15, %c0_16], %20 {strides = array<i32>} : memref<16x32xf32, #tpu.memory_space<vmem>>, vector<16x32xf32>,
    return
  }
}

module attributes {stable_mosaic.version = 11 : i64} {
  func.func @_linear_kernel(%arg0: memref<128x4xf32, #tpu.memory_space<vmem>>, %arg1: memref<4x16xf32, #tpu.memory_space<vmem>>, %arg2: memref<1x16xf32, #tpu.memory_space<vmem>>, %arg3: memref<128x16xf32, #tpu.memory_space<vmem>>) attributes {dimension_semantics = [], scalar_prefetch = 0 : i64, scratch_operands = 0 : i64, tpu.core_type = #tpu.core_type<tc>} {
    %c0 = arith.constant 0 : index
    %c0_0 = arith.constant 0 : index
    %0 = vector.load %arg0[%c0, %c0_0] : memref<128x4xf32, #tpu.memory_space<vmem>>, vector<128x4xf32>
    %c0_1 = arith.constant 0 : index
    %c0_2 = arith.constant 0 : index
    %1 = vector.load %arg1[%c0_1, %c0_2] : memref<4x16xf32, #tpu.memory_space<vmem>>, vector<4x16xf32>
    %2 = arith.truncf %0 : vector<128x4xf32> to vector<128x4xbf16>
    %3 = arith.truncf %1 : vector<4x16xf32> to vector<4x16xbf16>
    %cst = arith.constant dense<0.000000e+00> : vector<128x16xf32>
    %4 = tpu.matmul %2, %3, %cst {dimension_numbers = #tpu.dot_dimension_numbers<[1], [0], [0], [1], [0, 0, 1, 1], [], []>} : vector<128x4xbf16>, vector<4x16xbf16>, vector<128x16xf32> -> vector<128x16xf32>
    %c0_3 = arith.constant 0 : index
    %c0_4 = arith.constant 0 : index
    %5 = vector.load %arg2[%c0_3, %c0_4] : memref<1x16xf32, #tpu.memory_space<vmem>>, vector<1x16xf32>
    %6 = vector.broadcast %5 : vector<1x16xf32> to vector<128x16xf32>
    %7 = arith.addf %4, %6 : vector<128x16xf32>
    %cst_5 = arith.constant 0.000000e+00 : f32
    %8 = vector.broadcast %cst_5 : f32 to vector<128x16xf32>
    %9 = arith.maximumf %7, %8 : vector<128x16xf32>
    %c0_6 = arith.constant 0 : index
    %c0_7 = arith.constant 0 : index
    %10 = vector.load %arg3[%c0_6, %c0_7] : memref<128x16xf32, #tpu.memory_space<vmem>>, vector<128x16xf32>
    tpu.vector_store %arg3[%c0_6, %c0_7], %9 {strides = array<i32>} : memref<128x16xf32, #tpu.memory_space<vmem>>, vector<128x16xf32>,
    return
  }
}

module attributes {stable_mosaic.version = 11 : i64} {
  func.func @_attflat_kernel(%arg0: i32, %arg1: memref<1x8x32xf32, #tpu.memory_space<vmem>>, %arg2: memref<1x8x1xf32, #tpu.memory_space<vmem>>, %arg3: memref<32x32xf32, #tpu.memory_space<vmem>>, %arg4: memref<1x32xf32, #tpu.memory_space<vmem>>, %arg5: memref<32x1xf32, #tpu.memory_space<vmem>>, %arg6: memref<1x1xf32, #tpu.memory_space<vmem>>, %arg7: memref<32x64xf32, #tpu.memory_space<vmem>>, %arg8: memref<1x64xf32, #tpu.memory_space<vmem>>, %arg9: memref<1x1x64xf32, #tpu.memory_space<vmem>>) attributes {dimension_semantics = [#tpu.dimension_semantics<parallel>], iteration_bounds = array<i64: 2>, scalar_prefetch = 0 : i64, scratch_operands = 0 : i64, tpu.core_type = #tpu.core_type<tc>, window_params = [{transform_indices = @transform_0, window_bounds = array<i64: 1, 8, 32>}, {transform_indices = @transform_1, window_bounds = array<i64: 1, 8, 1>}, {pipeline_mode = #tpu.pipeline_mode<synchronous>, transform_indices = @transform_2, window_bounds = array<i64: 32, 32>}, {pipeline_mode = #tpu.pipeline_mode<synchronous>, transform_indices = @transform_3, window_bounds = array<i64: 1, 32>}, {pipeline_mode = #tpu.pipeline_mode<synchronous>, transform_indices = @transform_4, window_bounds = array<i64: 32, 1>}, {pipeline_mode = #tpu.pipeline_mode<synchronous>, transform_indices = @transform_5, window_bounds = array<i64: 1, 1>}, {pipeline_mode = #tpu.pipeline_mode<synchronous>, transform_indices = @transform_6, window_bounds = array<i64: 32, 64>}, {pipeline_mode = #tpu.pipeline_mode<synchronous>, transform_indices = @transform_7, window_bounds = array<i64: 1, 64>}, {transform_indices = @transform_8, window_bounds = array<i64: 1, 1, 64>}]} {
    %c0 = arith.constant 0 : index
    %c0_0 = arith.constant 0 : index
    %c0_1 = arith.constant 0 : index
    %0 = vector.load %arg1[%c0, %c0_0, %c0_1] : memref<1x8x32xf32, #tpu.memory_space<vmem>>, vector<1x8x32xf32>
    %1 = vector.shape_cast %0 : vector<1x8x32xf32> to vector<8x32xf32>
    %c0_2 = arith.constant 0 : index
    %c0_3 = arith.constant 0 : index
    %2 = vector.load %arg3[%c0_2, %c0_3] : memref<32x32xf32, #tpu.memory_space<vmem>>, vector<32x32xf32>
    %3 = arith.truncf %1 : vector<8x32xf32> to vector<8x32xbf16>
    %4 = arith.truncf %2 : vector<32x32xf32> to vector<32x32xbf16>
    %cst = arith.constant dense<0.000000e+00> : vector<8x32xf32>
    %5 = tpu.matmul %3, %4, %cst {dimension_numbers = #tpu.dot_dimension_numbers<[1], [0], [0], [1], [0, 0, 1, 1], [], []>} : vector<8x32xbf16>, vector<32x32xbf16>, vector<8x32xf32> -> vector<8x32xf32>
    %c0_4 = arith.constant 0 : index
    %c0_5 = arith.constant 0 : index
    %6 = vector.load %arg4[%c0_4, %c0_5] : memref<1x32xf32, #tpu.memory_space<vmem>>, vector<1x32xf32>
    %7 = vector.broadcast %6 : vector<1x32xf32> to vector<8x32xf32>
    %8 = arith.addf %5, %7 : vector<8x32xf32>
    %cst_6 = arith.constant 0.000000e+00 : f32
    %9 = vector.broadcast %cst_6 : f32 to vector<8x32xf32>
    %10 = arith.maximumf %8, %9 : vector<8x32xf32>
    %c0_7 = arith.constant 0 : index
    %c0_8 = arith.constant 0 : index
    %11 = vector.load %arg5[%c0_7, %c0_8] : memref<32x1xf32, #tpu.memory_space<vmem>>, vector<32x1xf32>
    %12 = arith.truncf %10 : vector<8x32xf32> to vector<8x32xbf16>
    %13 = arith.truncf %11 : vector<32x1xf32> to vector<32x1xbf16>
    %cst_9 = arith.constant dense<0.000000e+00> : vector<8x1xf32>
    %14 = tpu.matmul %12, %13, %cst_9 {dimension_numbers = #tpu.dot_dimension_numbers<[1], [0], [0], [1], [0, 0, 1, 1], [], []>} : vector<8x32xbf16>, vector<32x1xbf16>, vector<8x1xf32> -> vector<8x1xf32>
    %c0_10 = arith.constant 0 : index
    %c0_11 = arith.constant 0 : index
    %15 = vector.load %arg6[%c0_10, %c0_11] : memref<1x1xf32, #tpu.memory_space<vmem>>, vector<1x1xf32>
    %16 = vector.broadcast %15 : vector<1x1xf32> to vector<8x1xf32>
    %17 = arith.addf %14, %16 : vector<8x1xf32>
    %c0_12 = arith.constant 0 : index
    %c0_13 = arith.constant 0 : index
    %c0_14 = arith.constant 0 : index
    %18 = vector.load %arg2[%c0_12, %c0_13, %c0_14] : memref<1x8x1xf32, #tpu.memory_space<vmem>>, vector<1x8x1xf32>
    %19 = vector.shape_cast %18 : vector<1x8x1xf32> to vector<8x1xf32>
    %20 = arith.addf %17, %19 : vector<8x1xf32>
    %cst_15 = arith.constant dense<0xFF800000> : vector<1xf32>
    %21 = vector.multi_reduction <maximumf>, %20, %cst_15 [0] : vector<8x1xf32> to vector<1xf32>
    %22 = vector.shape_cast %21 : vector<1xf32> to vector<1x1xf32>
    %23 = vector.broadcast %22 : vector<1x1xf32> to vector<8x1xf32>
    %24 = arith.subf %20, %23 : vector<8x1xf32>
    %25 = math.exp %24 : vector<8x1xf32>
    %cst_16 = arith.constant dense<0.000000e+00> : vector<1xf32>
    %26 = vector.multi_reduction <add>, %25, %cst_16 [0] : vector<8x1xf32> to vector<1xf32>
    %27 = vector.shape_cast %26 : vector<1xf32> to vector<1x1xf32>
    %28 = tpu.reciprocal %27 {approx = true} : vector<1x1xf32> -> vector<1x1xf32>
    %29 = vector.broadcast %28 : vector<1x1xf32> to vector<8x1xf32>
    %30 = arith.mulf %25, %29 : vector<8x1xf32>
    %31 = vector.broadcast %30 : vector<8x1xf32> to vector<8x32xf32>
    %32 = arith.mulf %31, %1 : vector<8x32xf32>
    %cst_17 = arith.constant dense<0.000000e+00> : vector<32xf32>
    %33 = vector.multi_reduction <add>, %32, %cst_17 [0] : vector<8x32xf32> to vector<32xf32>
    %34 = vector.shape_cast %33 : vector<32xf32> to vector<1x32xf32>
    %c0_18 = arith.constant 0 : index
    %c0_19 = arith.constant 0 : index
    %35 = vector.load %arg7[%c0_18, %c0_19] : memref<32x64xf32, #tpu.memory_space<vmem>>, vector<32x64xf32>
    %36 = arith.truncf %34 : vector<1x32xf32> to vector<1x32xbf16>
    %37 = arith.truncf %35 : vector<32x64xf32> to vector<32x64xbf16>
    %cst_20 = arith.constant dense<0.000000e+00> : vector<1x64xf32>
    %38 = tpu.matmul %36, %37, %cst_20 {dimension_numbers = #tpu.dot_dimension_numbers<[1], [0], [0], [1], [0, 0, 1, 1], [], []>} : vector<1x32xbf16>, vector<32x64xbf16>, vector<1x64xf32> -> vector<1x64xf32>
    %c0_21 = arith.constant 0 : index
    %c0_22 = arith.constant 0 : index
    %39 = vector.load %arg8[%c0_21, %c0_22] : memref<1x64xf32, #tpu.memory_space<vmem>>, vector<1x64xf32>
    %40 = arith.addf %38, %39 : vector<1x64xf32>
    %c0_23 = arith.constant 0 : index
    %c0_24 = arith.constant 0 : index
    %c0_25 = arith.constant 0 : index
    %41 = vector.load %arg9[%c0_23, %c0_24, %c0_25] : memref<1x1x64xf32, #tpu.memory_space<vmem>>, vector<1x1x64xf32>
    %42 = vector.shape_cast %41 : vector<1x1x64xf32> to vector<1x64xf32>
    %43 = vector.shape_cast %40 : vector<1x64xf32> to vector<1x1x64xf32>
    tpu.vector_store %arg9[%c0_23, %c0_24, %c0_25], %43 {strides = array<i32>} : memref<1x1x64xf32, #tpu.memory_space<vmem>>, vector<1x1x64xf32>,
    return
  }
  func.func @transform_0(%arg0: i32) -> (i32, i32, i32) {
    %c0_i32 = arith.constant 0 : i32
    %c0_i32_0 = arith.constant 0 : i32
    %c0_i32_1 = arith.constant 0 : i32
    return %arg0, %c0_i32, %c0_i32_0 : i32, i32, i32
  }
  func.func @transform_1(%arg0: i32) -> (i32, i32, i32) {
    %c0_i32 = arith.constant 0 : i32
    %c0_i32_0 = arith.constant 0 : i32
    %c0_i32_1 = arith.constant 0 : i32
    return %arg0, %c0_i32, %c0_i32_0 : i32, i32, i32
  }
  func.func @transform_2(%arg0: i32) -> (i32, i32) {
    %c0_i32 = arith.constant 0 : i32
    %c0_i32_0 = arith.constant 0 : i32
    %c0_i32_1 = arith.constant 0 : i32
    return %c0_i32, %c0_i32_0 : i32, i32
  }
  func.func @transform_3(%arg0: i32) -> (i32, i32) {
    %c0_i32 = arith.constant 0 : i32
    %c0_i32_0 = arith.constant 0 : i32
    %c0_i32_1 = arith.constant 0 : i32
    return %c0_i32, %c0_i32_0 : i32, i32
  }
  func.func @transform_4(%arg0: i32) -> (i32, i32) {
    %c0_i32 = arith.constant 0 : i32
    %c0_i32_0 = arith.constant 0 : i32
    %c0_i32_1 = arith.constant 0 : i32
    return %c0_i32, %c0_i32_0 : i32, i32
  }
  func.func @transform_5(%arg0: i32) -> (i32, i32) {
    %c0_i32 = arith.constant 0 : i32
    %c0_i32_0 = arith.constant 0 : i32
    %c0_i32_1 = arith.constant 0 : i32
    return %c0_i32, %c0_i32_0 : i32, i32
  }
  func.func @transform_6(%arg0: i32) -> (i32, i32) {
    %c0_i32 = arith.constant 0 : i32
    %c0_i32_0 = arith.constant 0 : i32
    %c0_i32_1 = arith.constant 0 : i32
    return %c0_i32, %c0_i32_0 : i32, i32
  }
  func.func @transform_7(%arg0: i32) -> (i32, i32) {
    %c0_i32 = arith.constant 0 : i32
    %c0_i32_0 = arith.constant 0 : i32
    %c0_i32_1 = arith.constant 0 : i32
    return %c0_i32, %c0_i32_0 : i32, i32
  }
  func.func @transform_8(%arg0: i32) -> (i32, i32, i32) {
    %c0_i32 = arith.constant 0 : i32
    %c0_i32_0 = arith.constant 0 : i32
    %c0_i32_1 = arith.constant 0 : i32
    return %arg0, %c0_i32, %c0_i32_0 : i32, i32, i32
  }
}

module attributes {stable_mosaic.version = 11 : i64} {
  func.func @_final_kernel(%arg0: memref<2x64xf32, #tpu.memory_space<vmem>>, %arg1: memref<2x64xf32, #tpu.memory_space<vmem>>, %arg2: memref<1x64xf32, #tpu.memory_space<vmem>>, %arg3: memref<1x64xf32, #tpu.memory_space<vmem>>, %arg4: memref<64x1xf32, #tpu.memory_space<vmem>>, %arg5: memref<1x1xf32, #tpu.memory_space<vmem>>, %arg6: memref<2x1xf32, #tpu.memory_space<vmem>>) attributes {dimension_semantics = [], scalar_prefetch = 0 : i64, scratch_operands = 0 : i64, tpu.core_type = #tpu.core_type<tc>} {
    %c0 = arith.constant 0 : index
    %c0_0 = arith.constant 0 : index
    %0 = vector.load %arg0[%c0, %c0_0] : memref<2x64xf32, #tpu.memory_space<vmem>>, vector<2x64xf32>
    %c0_1 = arith.constant 0 : index
    %c0_2 = arith.constant 0 : index
    %1 = vector.load %arg1[%c0_1, %c0_2] : memref<2x64xf32, #tpu.memory_space<vmem>>, vector<2x64xf32>
    %2 = arith.addf %0, %1 : vector<2x64xf32>
    %c0_3 = arith.constant 0 : index
    %c0_4 = arith.constant 0 : index
    %3 = vector.load %arg2[%c0_3, %c0_4] : memref<1x64xf32, #tpu.memory_space<vmem>>, vector<1x64xf32>
    %c0_5 = arith.constant 0 : index
    %c0_6 = arith.constant 0 : index
    %4 = vector.load %arg3[%c0_5, %c0_6] : memref<1x64xf32, #tpu.memory_space<vmem>>, vector<1x64xf32>
    %cst = arith.constant dense<0.000000e+00> : vector<2xf32>
    %5 = vector.multi_reduction <add>, %2, %cst [1] : vector<2x64xf32> to vector<2xf32>
    %6 = vector.shape_cast %5 : vector<2xf32> to vector<2x1xf32>
    %cst_7 = arith.constant 6.400000e+01 : f32
    %7 = vector.broadcast %cst_7 : f32 to vector<2x1xf32>
    %8 = arith.divf %6, %7 : vector<2x1xf32>
    %9 = vector.broadcast %8 : vector<2x1xf32> to vector<2x64xf32>
    %10 = arith.subf %2, %9 : vector<2x64xf32>
    %11 = arith.mulf %10, %10 : vector<2x64xf32>
    %cst_8 = arith.constant dense<0.000000e+00> : vector<2xf32>
    %12 = vector.multi_reduction <add>, %11, %cst_8 [1] : vector<2x64xf32> to vector<2xf32>
    %13 = vector.shape_cast %12 : vector<2xf32> to vector<2x1xf32>
    %cst_9 = arith.constant 6.300000e+01 : f32
    %14 = vector.broadcast %cst_9 : f32 to vector<2x1xf32>
    %15 = arith.divf %13, %14 : vector<2x1xf32>
    %16 = vector.broadcast %3 : vector<1x64xf32> to vector<2x64xf32>
    %17 = arith.mulf %16, %10 : vector<2x64xf32>
    %18 = math.sqrt %15 : vector<2x1xf32>
    %cst_10 = arith.constant 9.99999997E-7 : f32
    %19 = vector.broadcast %cst_10 : f32 to vector<2x1xf32>
    %20 = arith.addf %18, %19 : vector<2x1xf32>
    %21 = vector.broadcast %20 : vector<2x1xf32> to vector<2x64xf32>
    %22 = arith.divf %17, %21 : vector<2x64xf32>
    %23 = vector.broadcast %4 : vector<1x64xf32> to vector<2x64xf32>
    %24 = arith.addf %22, %23 : vector<2x64xf32>
    %c0_11 = arith.constant 0 : index
    %c0_12 = arith.constant 0 : index
    %25 = vector.load %arg4[%c0_11, %c0_12] : memref<64x1xf32, #tpu.memory_space<vmem>>, vector<64x1xf32>
    %26 = arith.truncf %24 : vector<2x64xf32> to vector<2x64xbf16>
    %27 = arith.truncf %25 : vector<64x1xf32> to vector<64x1xbf16>
    %cst_13 = arith.constant dense<0.000000e+00> : vector<2x1xf32>
    %28 = tpu.matmul %26, %27, %cst_13 {dimension_numbers = #tpu.dot_dimension_numbers<[1], [0], [0], [1], [0, 0, 1, 1], [], []>} : vector<2x64xbf16>, vector<64x1xbf16>, vector<2x1xf32> -> vector<2x1xf32>
    %c0_14 = arith.constant 0 : index
    %c0_15 = arith.constant 0 : index
    %29 = vector.load %arg5[%c0_14, %c0_15] : memref<1x1xf32, #tpu.memory_space<vmem>>, vector<1x1xf32>
    %30 = vector.broadcast %29 : vector<1x1xf32> to vector<2x1xf32>
    %31 = arith.addf %28, %30 : vector<2x1xf32>
    %32 = arith.negf %31 : vector<2x1xf32>
    %33 = math.exp %32 : vector<2x1xf32>
    %cst_16 = arith.constant 1.000000e+00 : f32
    %34 = vector.broadcast %cst_16 : f32 to vector<2x1xf32>
    %35 = arith.addf %34, %33 : vector<2x1xf32>
    %36 = arith.divf %34, %35 : vector<2x1xf32>
    %c0_17 = arith.constant 0 : index
    %c0_18 = arith.constant 0 : index
    %37 = vector.load %arg6[%c0_17, %c0_18] : memref<2x1xf32, #tpu.memory_space<vmem>>, vector<2x1xf32>
    tpu.vector_store %arg6[%c0_17, %c0_18], %36 {strides = array<i32>} : memref<2x1xf32, #tpu.memory_space<vmem>>, vector<2x1xf32>,
    return
  }
}

</mosaic_0001>

<llo_original>
// kernel: _lambda_.19
$region0: #{_lambda_.19}
  #allocation0 [shape = 'u32[]', space=smem, size = 0x4, offset = 0x4, fixed_abs, tag = 'smem constant byte address 0x4 - core index']
  #allocation1 [shape = 'u32[144,128]{1,0:T(1,128)}', space=vmem, size = 0x12000, scoped, tag = 'internal scratch']
  %s0 = inlined_call_operand.vmem [shape: f32[128,16], index: 0, kind: input, shape index: {}]
  %s1 = inlined_call_operand.vmem [shape: f32[16,4], index: 1, kind: input, shape index: {}]
  %s2 = inlined_call_operand.vmem [shape: f32[1,4], index: 2, kind: input, shape index: {}]
  %s3 = inlined_call_operand.vmem [shape: f32[128,4], index: 3, kind: output, shape index: {}]
  %s4 = sld [smem:[#allocation0]]
  $region22: #{_lambda_.19} parent=0
    _
  %s6 = ssub.s32 1, %s4
  %s7 = scalar_select 0, %s6, %s4
  // Predicated region
  $region2: #{_lambda_.19} parent=0 // pred_check
    _
  $region3: #{_lambda_.19} parent=0 // pred_check_branch
    %9 = sbr.rel (0) target = $region5
  $region4: #{_lambda_.19} parent=0 // pred_region
    _
  $region5: #{_lambda_.19} parent=0 // pred_fallthru
    _
  // Predicated region
  $region6: #{_lambda_.19} parent=0 // pred_check
    _
  $region7: #{_lambda_.19} parent=0 // pred_check_branch
    %11 = sbr.rel (0) target = $region9
  $region8: #{_lambda_.19} parent=0 // pred_region
    _
  $region9: #{_lambda_.19} parent=0 // pred_fallthru
    _
  // Predicated region
  $region10: #{_lambda_.19} parent=0 // pred_check
    _
  $region11: #{_lambda_.19} parent=0 // pred_check_branch
    %13 = sbr.rel (0) target = $region13
  $region12: #{_lambda_.19} parent=0 // pred_region
    _
  $region13: #{_lambda_.19} parent=0 // pred_fallthru
    _
  %v15 = vld [vmem:[%s0] sm:$0xff]
  %v16 = vld [vmem:[%s0 + $0x8] sm:$0xff]
  %v17 = vld [vmem:[%s0 + $0x10] sm:$0xff]
  %v18 = vld [vmem:[%s0 + $0x18] sm:$0xff]
  %v19 = vld [vmem:[%s0 + $0x20] sm:$0xff]
  %v20 = vld [vmem:[%s0 + $0x28] sm:$0xff]
  %v21 = vld [vmem:[%s0 + $0x30] sm:$0xff]
  %v22 = vld [vmem:[%s0 + $0x38] sm:$0xff]
  %v23 = vld [vmem:[%s0 + $0x40] sm:$0xff]
  %v24 = vld [vmem:[%s0 + $0x48] sm:$0xff]
  %v25 = vld [vmem:[%s0 + $0x50] sm:$0xff]
  %v26 = vld [vmem:[%s0 + $0x58] sm:$0xff]
  %v27 = vld [vmem:[%s0 + $0x60] sm:$0xff]
  %v28 = vld [vmem:[%s0 + $0x68] sm:$0xff]
  %v29 = vld [vmem:[%s0 + $0x70] sm:$0xff]
  %v30 = vld [vmem:[%s0 + $0x78] sm:$0xff]
  %v31 = vld [vmem:[%s1] sm:$0xff]
  %v32 = vld [vmem:[%s1 + $0x8] sm:$0xff]
  %v33 = vpack.c.bf16 %v16, %v15
  %v34 = vpack.c.bf16 %v18, %v17
  %v35 = vpack.c.bf16 %v20, %v19
  %v36 = vpack.c.bf16 %v22, %v21
  %v37 = vpack.c.bf16 %v24, %v23
  %v38 = vpack.c.bf16 %v26, %v25
  %v39 = vpack.c.bf16 %v28, %v27
  %v40 = vpack.c.bf16 %v30, %v29
  %v41 = vpack.c.bf16 %v32, %v31
  %v42 = vld [vmem:[%s2] sm:$0x1]
  %v44 = vlaneseq
  %v45 = vshrl.u32 %v44, 7
  %v46 = vsub.s32 0, %v45
  %v47 = vrot.slane %v42, %v46
  %vm49 = vcmask 130048
  %v51 = vsel %vm49, %v33, 0
  %v54 = vsel %vm49, %v34, 0
  %v57 = vsel %vm49, %v35, 0
  %v60 = vsel %vm49, %v36, 0
  %v63 = vsel %vm49, %v37, 0
  %v66 = vsel %vm49, %v38, 0
  %v69 = vsel %vm49, %v39, 0
  %v72 = vsel %vm49, %v40, 0
  %74 = vmatprep.subr.bf16.mxu0 0
  %75 = vmatpush1.bf16.msra.mxu0 %v41
  %76 = vmatprep.subr.bf16.mxu0 0
  %77 = vmatpush1.bf16.msra.mxu0 0
  %78 = vmatprep.subr.bf16.mxu0 0
  %79 = vmatpush1.bf16.msra.mxu0 0
  %80 = vmatprep.subr.bf16.mxu0 0
  %81 = vmatpush1.bf16.msra.mxu0 0
  %82 = vmatprep.subr.bf16.mxu0 0
  %83 = vmatpush1.bf16.msra.mxu0 0
  %84 = vmatprep.subr.bf16.mxu0 0
  %85 = vmatpush1.bf16.msra.mxu0 0
  %86 = vmatprep.subr.bf16.mxu0 0
  %87 = vmatpush1.bf16.msra.mxu0 0
  %88 = vmatprep.subr.bf16.mxu0 0
  %89 = vmatpush1.bf16.msra.mxu0 0
  %90 = vmatprep.subr.bf16.mxu0 0
  %91 = vmatpush1.bf16.msra.mxu0 0
  %92 = vmatprep.subr.bf16.mxu0 0
  %93 = vmatpush1.bf16.msra.mxu0 0
  %94 = vmatprep.subr.bf16.mxu0 0
  %95 = vmatpush1.bf16.msra.mxu0 0
  %96 = vmatprep.subr.bf16.mxu0 0
  %97 = vmatpush1.bf16.msra.mxu0 0
  %98 = vmatprep.subr.bf16.mxu0 0
  %99 = vmatpush1.bf16.msra.mxu0 0
  %100 = vmatprep.subr.bf16.mxu0 0
  %101 = vmatpush1.bf16.msra.mxu0 0
  %102 = vmatprep.subr.bf16.mxu0 0
  %103 = vmatpush1.bf16.msra.mxu0 0
  %104 = vmatprep.subr.bf16.mxu0 0
  %105 = vmatpush1.bf16.msra.mxu0 0
  %106 = vmatprep.mubr.bf16.mxu0 0
  %107 = vmatmul.mubr.bf16.gmra.mrb[0].mxu0 %v51
  %v108 = vpop.f32.mrb[0].mxu0
  %v109 = vadd.f32 %v47, %v108
  %v110 = vpop.f32.mrb[0].mxu0
  %v111 = vpop.f32.mrb[0].mxu0
  %v112 = vadd.f32 %v47, %v111
  %v113 = vpop.f32.mrb[0].mxu0
  %114 = vmatprep.mubr.bf16.mxu0 0
  %115 = vmatmul.mubr.bf16.gmra.mrb[0].mxu0 %v54
  %v116 = vpop.f32.mrb[0].mxu0
  %v117 = vadd.f32 %v47, %v116
  %v118 = vpop.f32.mrb[0].mxu0
  %v119 = vpop.f32.mrb[0].mxu0
  %v120 = vadd.f32 %v47, %v119
  %v121 = vpop.f32.mrb[0].mxu0
  %122 = vmatprep.mubr.bf16.mxu0 0
  %123 = vmatmul.mubr.bf16.gmra.mrb[0].mxu0 %v57
  %v124 = vpop.f32.mrb[0].mxu0
  %v125 = vadd.f32 %v47, %v124
  %v126 = vpop.f32.mrb[0].mxu0
  %v127 = vpop.f32.mrb[0].mxu0
  %v128 = vadd.f32 %v47, %v127
  %v129 = vpop.f32.mrb[0].mxu0
  %130 = vmatprep.mubr.bf16.mxu0 0
  %131 = vmatmul.mubr.bf16.gmra.mrb[0].mxu0 %v60
  %v132 = vpop.f32.mrb[0].mxu0
  %v133 = vadd.f32 %v47, %v132
  %v134 = vpop.f32.mrb[0].mxu0
  %v135 = vpop.f32.mrb[0].mxu0
  %v136 = vadd.f32 %v47, %v135
  %v137 = vpop.f32.mrb[0].mxu0
  %138 = vmatprep.mubr.bf16.mxu0 0
  %139 = vmatmul.mubr.bf16.gmra.mrb[0].mxu0 %v63
  %v140 = vpop.f32.mrb[0].mxu0
  %v141 = vadd.f32 %v47, %v140
  %v142 = vpop.f32.mrb[0].mxu0
  %v143 = vpop.f32.mrb[0].mxu0
  %v144 = vadd.f32 %v47, %v143
  %v145 = vpop.f32.mrb[0].mxu0
  %146 = vmatprep.mubr.bf16.mxu0 0
  %147 = vmatmul.mubr.bf16.gmra.mrb[0].mxu0 %v66
  %v148 = vpop.f32.mrb[0].mxu0
  %v149 = vadd.f32 %v47, %v148
  %v150 = vpop.f32.mrb[0].mxu0
  %v151 = vpop.f32.mrb[0].mxu0
  %v152 = vadd.f32 %v47, %v151
  %v153 = vpop.f32.mrb[0].mxu0
  %154 = vmatprep.mubr.bf16.mxu0 0
  %155 = vmatmul.mubr.bf16.gmra.mrb[0].mxu0 %v69
  %v156 = vpop.f32.mrb[0].mxu0
  %v157 = vadd.f32 %v47, %v156
  %v158 = vpop.f32.mrb[0].mxu0
  %v159 = vpop.f32.mrb[0].mxu0
  %v160 = vadd.f32 %v47, %v159
  %v161 = vpop.f32.mrb[0].mxu0
  %162 = vmatprep.mubr.bf16.mxu0 0
  %163 = vmatmul.mubr.bf16.gmra.mrb[0].mxu0 %v72
  %v164 = vpop.f32.mrb[0].mxu0
  %v165 = vadd.f32 %v47, %v164
  %v166 = vpop.f32.mrb[0].mxu0
  %v167 = vpop.f32.mrb[0].mxu0
  %v168 = vadd.f32 %v47, %v167
  %v169 = vpop.f32.mrb[0].mxu0
  %170 = vdwg.mxu0
  %v171 = vmax.f32 %v109, 1e-06
  %v172 = vmax.f32 %v112, 1e-06
  %v173 = vmax.f32 %v117, 1e-06
  %v174 = vmax.f32 %v120, 1e-06
  %v175 = vmax.f32 %v125, 1e-06
  %v176 = vmax.f32 %v128, 1e-06
  %v177 = vmax.f32 %v133, 1e-06
  %v178 = vmax.f32 %v136, 1e-06
  %v179 = vmax.f32 %v141, 1e-06
  %v180 = vmax.f32 %v144, 1e-06
  %v181 = vmax.f32 %v149, 1e-06
  %v182 = vmax.f32 %v152, 1e-06
  %v183 = vmax.f32 %v157, 1e-06
  %v184 = vmax.f32 %v160, 1e-06
  %v185 = vmax.f32 %v165, 1e-06
  %v186 = vmax.f32 %v168, 1e-06
  %v187 = vlog2.pop %v171
  %v188 = vmul.f32 %v187, 0.6931472
  %v189 = vlog2.pop %v172
  %v190 = vmul.f32 %v189, 0.6931472
  %v191 = vlog2.pop %v173
  %v192 = vmul.f32 %v191, 0.6931472
  %v193 = vlog2.pop %v174
  %v194 = vmul.f32 %v193, 0.6931472
  %v195 = vlog2.pop %v175
  %v196 = vmul.f32 %v195, 0.6931472
  %v197 = vlog2.pop %v176
  %v198 = vmul.f32 %v197, 0.6931472
  %v199 = vlog2.pop %v177
  %v200 = vmul.f32 %v199, 0.6931472
  %v201 = vlog2.pop %v178
  %v202 = vmul.f32 %v201, 0.6931472
  %v203 = vlog2.pop %v179
  %v204 = vmul.f32 %v203, 0.6931472
  %v205 = vlog2.pop %v180
  %v206 = vmul.f32 %v205, 0.6931472
  %v207 = vlog2.pop %v181
  %v208 = vmul.f32 %v207, 0.6931472
  %v209 = vlog2.pop %v182
  %v210 = vmul.f32 %v209, 0.6931472
  %v211 = vlog2.pop %v183
  %v212 = vmul.f32 %v211, 0.6931472
  %v213 = vlog2.pop %v184
  %v214 = vmul.f32 %v213, 0.6931472
  %v215 = vlog2.pop %v185
  %v216 = vmul.f32 %v215, 0.6931472
  %v217 = vlog2.pop %v186
  %v218 = vmul.f32 %v217, 0.6931472
  %vm219 = vcmask 31744
  %220 = vst.msk [vmem:[%s3] sm:$0xff] %vm219, %v188
  %221 = vst.msk [vmem:[%s3 + $0x8] sm:$0xff] %vm219, %v190
  %222 = vst.msk [vmem:[%s3 + $0x10] sm:$0xff] %vm219, %v192
  %223 = vst.msk [vmem:[%s3 + $0x18] sm:$0xff] %vm219, %v194
  %224 = vst.msk [vmem:[%s3 + $0x20] sm:$0xff] %vm219, %v196
  %225 = vst.msk [vmem:[%s3 + $0x28] sm:$0xff] %vm219, %v198
  %226 = vst.msk [vmem:[%s3 + $0x30] sm:$0xff] %vm219, %v200
  %227 = vst.msk [vmem:[%s3 + $0x38] sm:$0xff] %vm219, %v202
  %228 = vst.msk [vmem:[%s3 + $0x40] sm:$0xff] %vm219, %v204
  %229 = vst.msk [vmem:[%s3 + $0x48] sm:$0xff] %vm219, %v206
  %230 = vst.msk [vmem:[%s3 + $0x50] sm:$0xff] %vm219, %v208
  %231 = vst.msk [vmem:[%s3 + $0x58] sm:$0xff] %vm219, %v210
  %232 = vst.msk [vmem:[%s3 + $0x60] sm:$0xff] %vm219, %v212
  %233 = vst.msk [vmem:[%s3 + $0x68] sm:$0xff] %vm219, %v214
  %234 = vst.msk [vmem:[%s3 + $0x70] sm:$0xff] %vm219, %v216
  %235 = vst.msk [vmem:[%s3 + $0x78] sm:$0xff] %vm219, %v218
  // Predicated region
  $region14: #{_lambda_.19} parent=0 // pred_check
    _
  $region15: #{_lambda_.19} parent=0 // pred_check_branch
    %237 = sbr.rel (0) target = $region17
  $region16: #{_lambda_.19} parent=0 // pred_region
    _
  $region17: #{_lambda_.19} parent=0 // pred_fallthru
    _
  // Predicated region
  $region18: #{_lambda_.19} parent=0 // pred_check
    _
  $region19: #{_lambda_.19} parent=0 // pred_check_branch
    %239 = sbr.rel (0) target = $region21
  $region20: #{_lambda_.19} parent=0 // pred_region
    _
  $region21: #{_lambda_.19} parent=0 // pred_fallthru
    _

// kernel: _lambda_.20
$region0: #{_lambda_.20}
  #allocation0 [shape = 'u32[]', space=smem, size = 0x4, offset = 0x4, fixed_abs, tag = 'smem constant byte address 0x4 - core index']
  #allocation1 [shape = 'u32[144,128]{1,0:T(1,128)}', space=vmem, size = 0x12000, scoped, tag = 'internal scratch']
  %s0 = inlined_call_operand.vmem [shape: f32[2,8,32], index: 0, kind: input, shape index: {}, may-alias: {0,1}]
  %s1 = inlined_call_operand.vmem [shape: f32[2,8,32], index: 1, kind: input, shape index: {}, may-alias: {0,1}]
  %s2 = inlined_call_operand.vmem [shape: f32[2,1,8], index: 2, kind: input, shape index: {}]
  %s3 = inlined_call_operand.vmem [shape: f32[2,4,8,8], index: 3, kind: input, shape index: {}]
  %s4 = inlined_call_operand.vmem [shape: f32[32,32], index: 4, kind: input, shape index: {}]
  %s5 = inlined_call_operand.vmem [shape: f32[1,32], index: 5, kind: input, shape index: {}]
  %s6 = inlined_call_operand.vmem [shape: f32[32,64], index: 6, kind: input, shape index: {}]
  %s7 = inlined_call_operand.vmem [shape: f32[1,64], index: 7, kind: input, shape index: {}]
  %s8 = inlined_call_operand.vmem [shape: f32[32,32], index: 8, kind: input, shape index: {}]
  %s9 = inlined_call_operand.vmem [shape: f32[1,32], index: 9, kind: input, shape index: {}]
  %s10 = inlined_call_operand.vmem [shape: f32[1,32], index: 10, kind: input, shape index: {}]
  %s11 = inlined_call_operand.vmem [shape: f32[1,32], index: 11, kind: input, shape index: {}]
  %s12 = inlined_call_operand.vmem [shape: f32[2,8,32], index: 12, kind: output, shape index: {}]
  %s13 = sld [smem:[#allocation0]]
  $region81: #{_lambda_.20} parent=0
    _
  %s15 = ssub.s32 1, %s13
  %s16 = scalar_select 0, %s15, %s13
  loop: start=0, step=1, limit=4
  $region2: #{_lambda_.20} parent=0 // loop_pre_header
    _
  $region3: #{_lambda_.20} parent=0 // loop_header
    %s18 = sphi 0, %s22
    %p19 = scmp.ge.s32.totalorder %s18, 4
    %s28 = sphi 0, %s30
    %s31 = sphi 0, %s28
    %s32 = sphi 0, %s31
    %s48 = sphi 0, %s32
    %s54 = sphi 0, %s56
    %s57 = sphi 0, %s54
    %s58 = sphi 0, %s57
    %s74 = sphi 0, %s58
    %s80 = sphi 0, %s82
    %s83 = sphi 0, %s80
    %s84 = sphi 0, %s83
    %s100 = sphi 0, %s84
    %s106 = sphi 0, %s108
    %s109 = sphi 0, %s106
    %s110 = sphi 0, %s109
    %s126 = sphi 0, %s110
    %s130 = sphi 0, %s130
    %s132 = sphi 0, %s130
    %s133 = sphi 0, %s132
    %s147 = sphi 0, %s133
    %s151 = sphi 0, %s151
    %s153 = sphi 0, %s151
    %s154 = sphi 0, %s153
    %s168 = sphi 0, %s154
    %s172 = sphi 0, %s172
    %s174 = sphi 0, %s172
    %s175 = sphi 0, %s174
    %s189 = sphi 0, %s175
    %s193 = sphi 0, %s193
    %s195 = sphi 0, %s193
    %s196 = sphi 0, %s195
    %s210 = sphi 0, %s196
    %s214 = sphi 0, %s214
    %s216 = sphi 0, %s214
    %s217 = sphi 0, %s216
    %s231 = sphi 0, %s217
    %s235 = sphi 0, %s235
    %s237 = sphi 0, %s235
    %s238 = sphi 0, %s237
    %s252 = sphi 0, %s238
    %s256 = sphi 0, %s256
    %s258 = sphi 0, %s256
    %s259 = sphi 0, %s258
    %s273 = sphi 0, %s259
    %s277 = sphi 0, %s277
    %s279 = sphi 0, %s277
    %s280 = sphi 0, %s279
    %s294 = sphi 0, %s280
    %s300 = sphi 0, %s302
    %s303 = sphi 0, %s300
    %s304 = sphi 0, %s303
    %s320 = sphi 0, %s304
  $region4: #{_lambda_.20} parent=0 // loop_header_branch
    %21 = sbr.rel (%p19) target = $region8
  $region5: #{_lambda_.20} parent=0 // loop_body
    %s23 = ssub.s32 %s18, 1
    %s24 = ssub.s32 %s18, 2
    %s25 = sadd.s32 %s18, 1
    %s26 = ssub.s32 %s18, %s25
    %p27 = scmp.eq.s32.totalorder %s26, 0
    %s29 = sadd.s32 %s28, 1
    %s30 = scalar_select %p27, %s28, %s29
    %p33 = pneg %p27
    %p34 = scmp.eq.s32.totalorder %s18, 1
    %p35 = por %p33, %p34
    %p36 = scmp.ne.s32.totalorder %s28, %s31
    %p37 = scmp.eq.s32.totalorder %s18, 0
    %p38 = por %p36, %p37
    %p39 = scmp.ne.s32.totalorder %s28, %s31
    %p40 = scmp.eq.s32.totalorder %s23, 1
    %p41 = por %p39, %p40
    %p42 = scmp.ne.s32.totalorder %s31, %s32
    %p43 = scmp.eq.s32.totalorder %s23, 0
    %p44 = por %p42, %p43
    %p45 = scmp.ne.s32.totalorder %s31, %s32
    %p46 = scmp.eq.s32.totalorder %s24, 1
    %p47 = por %p45, %p46
    %p49 = scmp.ne.s32.totalorder %s32, %s48
    %p50 = scmp.eq.s32.totalorder %s24, 0
    %p51 = por %p49, %p50
    %s52 = ssub.s32 %s18, %s25
    %p53 = scmp.eq.s32.totalorder %s52, 0
    %s55 = sadd.s32 %s54, 1
    %s56 = scalar_select %p53, %s54, %s55
    %p59 = pneg %p53
    %p60 = scmp.eq.s32.totalorder %s18, 1
    %p61 = por %p59, %p60
    %p62 = scmp.ne.s32.totalorder %s54, %s57
    %p63 = scmp.eq.s32.totalorder %s18, 0
    %p64 = por %p62, %p63
    %p65 = scmp.ne.s32.totalorder %s54, %s57
    %p66 = scmp.eq.s32.totalorder %s23, 1
    %p67 = por %p65, %p66
    %p68 = scmp.ne.s32.totalorder %s57, %s58
    %p69 = scmp.eq.s32.totalorder %s23, 0
    %p70 = por %p68, %p69
    %p71 = scmp.ne.s32.totalorder %s57, %s58
    %p72 = scmp.eq.s32.totalorder %s24, 1
    %p73 = por %p71, %p72
    %p75 = scmp.ne.s32.totalorder %s58, %s74
    %p76 = scmp.eq.s32.totalorder %s24, 0
    %p77 = por %p75, %p76
    %s78 = ssub.s32 %s18, %s25
    %p79 = scmp.eq.s32.totalorder %s78, 0
    %s81 = sadd.s32 %s80, 1
    %s82 = scalar_select %p79, %s80, %s81
    %p85 = pneg %p79
    %p86 = scmp.eq.s32.totalorder %s18, 1
    %p87 = por %p85, %p86
    %p88 = scmp.ne.s32.totalorder %s80, %s83
    %p89 = scmp.eq.s32.totalorder %s18, 0
    %p90 = por %p88, %p89
    %p91 = scmp.ne.s32.totalorder %s80, %s83
    %p92 = scmp.eq.s32.totalorder %s23, 1
    %p93 = por %p91, %p92
    %p94 = scmp.ne.s32.totalorder %s83, %s84
    %p95 = scmp.eq.s32.totalorder %s23, 0
    %p96 = por %p94, %p95
    %p97 = scmp.ne.s32.totalorder %s83, %s84
    %p98 = scmp.eq.s32.totalorder %s24, 1
    %p99 = por %p97, %p98
    %p101 = scmp.ne.s32.totalorder %s84, %s100
    %p102 = scmp.eq.s32.totalorder %s24, 0
    %p103 = por %p101, %p102
    %s104 = ssub.s32 %s18, %s25
    %p105 = scmp.eq.s32.totalorder %s104, 0
    %s107 = sadd.s32 %s106, 1
    %s108 = scalar_select %p105, %s106, %s107
    %p111 = pneg %p105
    %p112 = scmp.eq.s32.totalorder %s18, 1
    %p113 = por %p111, %p112
    %p114 = scmp.ne.s32.totalorder %s106, %s109
    %p115 = scmp.eq.s32.totalorder %s18, 0
    %p116 = por %p114, %p115
    %p117 = scmp.ne.s32.totalorder %s106, %s109
    %p118 = scmp.eq.s32.totalorder %s23, 1
    %p119 = por %p117, %p118
    %p120 = scmp.ne.s32.totalorder %s109, %s110
    %p121 = scmp.eq.s32.totalorder %s23, 0
    %p122 = por %p120, %p121
    %p123 = scmp.ne.s32.totalorder %s109, %s110
    %p124 = scmp.eq.s32.totalorder %s24, 1
    %p125 = por %p123, %p124
    %p127 = scmp.ne.s32.totalorder %s110, %s126
    %p128 = scmp.eq.s32.totalorder %s24, 0
    %p129 = por %p127, %p128
    %s131 = sadd.s32 %s130, 1
    %p134 = scmp.eq.s32.totalorder %s18, 1
    %p135 = scmp.ne.s32.totalorder %s130, %s132
    %p136 = scmp.eq.s32.totalorder %s18, 0
    %p137 = por %p135, %p136
    %p138 = scmp.ne.s32.totalorder %s130, %s132
    %p139 = scmp.eq.s32.totalorder %s23, 1
    %p140 = por %p138, %p139
    %p141 = scmp.ne.s32.totalorder %s132, %s133
    %p142 = scmp.eq.s32.totalorder %s23, 0
    %p143 = por %p141, %p142
    %p144 = scmp.ne.s32.totalorder %s132, %s133
    %p145 = scmp.eq.s32.totalorder %s24, 1
    %p146 = por %p144, %p145
    %p148 = scmp.ne.s32.totalorder %s133, %s147
    %p149 = scmp.eq.s32.totalorder %s24, 0
    %p150 = por %p148, %p149
    %s152 = sadd.s32 %s151, 1
    %p155 = scmp.eq.s32.totalorder %s18, 1
    %p156 = scmp.ne.s32.totalorder %s151, %s153
    %p157 = scmp.eq.s32.totalorder %s18, 0
    %p158 = por %p156, %p157
    %p159 = scmp.ne.s32.totalorder %s151, %s153
    %p160 = scmp.eq.s32.totalorder %s23, 1
    %p161 = por %p159, %p160
    %p162 = scmp.ne.s32.totalorder %s153, %s154
    %p163 = scmp.eq.s32.totalorder %s23, 0
    %p164 = por %p162, %p163
    %p165 = scmp.ne.s32.totalorder %s153, %s154
    %p166 = scmp.eq.s32.totalorder %s24, 1
    %p167 = por %p165, %p166
    %p169 = scmp.ne.s32.totalorder %s154, %s168
    %p170 = scmp.eq.s32.totalorder %s24, 0
    %p171 = por %p169, %p170
    %s173 = sadd.s32 %s172, 1
    %p176 = scmp.eq.s32.totalorder %s18, 1
    %p177 = scmp.ne.s32.totalorder %s172, %s174
    %p178 = scmp.eq.s32.totalorder %s18, 0
    %p179 = por %p177, %p178
    %p180 = scmp.ne.s32.totalorder %s172, %s174
    %p181 = scmp.eq.s32.totalorder %s23, 1
    %p182 = por %p180, %p181
    %p183 = scmp.ne.s32.totalorder %s174, %s175
    %p184 = scmp.eq.s32.totalorder %s23, 0
    %p185 = por %p183, %p184
    %p186 = scmp.ne.s32.totalorder %s174, %s175
    %p187 = scmp.eq.s32.totalorder %s24, 1
    %p188 = por %p186, %p187
    %p190 = scmp.ne.s32.totalorder %s175, %s189
    %p191 = scmp.eq.s32.totalorder %s24, 0
    %p192 = por %p190, %p191
    %s194 = sadd.s32 %s193, 1
    %p197 = scmp.eq.s32.totalorder %s18, 1
    %p198 = scmp.ne.s32.totalorder %s193, %s195
    %p199 = scmp.eq.s32.totalorder %s18, 0
    %p200 = por %p198, %p199
    %p201 = scmp.ne.s32.totalorder %s193, %s195
    %p202 = scmp.eq.s32.totalorder %s23, 1
    %p203 = por %p201, %p202
    %p204 = scmp.ne.s32.totalorder %s195, %s196
    %p205 = scmp.eq.s32.totalorder %s23, 0
    %p206 = por %p204, %p205
    %p207 = scmp.ne.s32.totalorder %s195, %s196
    %p208 = scmp.eq.s32.totalorder %s24, 1
    %p209 = por %p207, %p208
    %p211 = scmp.ne.s32.totalorder %s196, %s210
    %p212 = scmp.eq.s32.totalorder %s24, 0
    %p213 = por %p211, %p212
    %s215 = sadd.s32 %s214, 1
    %p218 = scmp.eq.s32.totalorder %s18, 1
    %p219 = scmp.ne.s32.totalorder %s214, %s216
    %p220 = scmp.eq.s32.totalorder %s18, 0
    %p221 = por %p219, %p220
    %p222 = scmp.ne.s32.totalorder %s214, %s216
    %p223 = scmp.eq.s32.totalorder %s23, 1
    %p224 = por %p222, %p223
    %p225 = scmp.ne.s32.totalorder %s216, %s217
    %p226 = scmp.eq.s32.totalorder %s23, 0
    %p227 = por %p225, %p226
    %p228 = scmp.ne.s32.totalorder %s216, %s217
    %p229 = scmp.eq.s32.totalorder %s24, 1
    %p230 = por %p228, %p229
    %p232 = scmp.ne.s32.totalorder %s217, %s231
    %p233 = scmp.eq.s32.totalorder %s24, 0
    %p234 = por %p232, %p233
    %s236 = sadd.s32 %s235, 1
    %p239 = scmp.eq.s32.totalorder %s18, 1
    %p240 = scmp.ne.s32.totalorder %s235, %s237
    %p241 = scmp.eq.s32.totalorder %s18, 0
    %p242 = por %p240, %p241
    %p243 = scmp.ne.s32.totalorder %s235, %s237
    %p244 = scmp.eq.s32.totalorder %s23, 1
    %p245 = por %p243, %p244
    %p246 = scmp.ne.s32.totalorder %s237, %s238
    %p247 = scmp.eq.s32.totalorder %s23, 0
    %p248 = por %p246, %p247
    %p249 = scmp.ne.s32.totalorder %s237, %s238
    %p250 = scmp.eq.s32.totalorder %s24, 1
    %p251 = por %p249, %p250
    %p253 = scmp.ne.s32.totalorder %s238, %s252
    %p254 = scmp.eq.s32.totalorder %s24, 0
    %p255 = por %p253, %p254
    %s257 = sadd.s32 %s256, 1
    %p260 = scmp.eq.s32.totalorder %s18, 1
    %p261 = scmp.ne.s32.totalorder %s256, %s258
    %p262 = scmp.eq.s32.totalorder %s18, 0
    %p263 = por %p261, %p262
    %p264 = scmp.ne.s32.totalorder %s256, %s258
    %p265 = scmp.eq.s32.totalorder %s23, 1
    %p266 = por %p264, %p265
    %p267 = scmp.ne.s32.totalorder %s258, %s259
    %p268 = scmp.eq.s32.totalorder %s23, 0
    %p269 = por %p267, %p268
    %p270 = scmp.ne.s32.totalorder %s258, %s259
    %p271 = scmp.eq.s32.totalorder %s24, 1
    %p272 = por %p270, %p271
    %p274 = scmp.ne.s32.totalorder %s259, %s273
    %p275 = scmp.eq.s32.totalorder %s24, 0
    %p276 = por %p274, %p275
    %s278 = sadd.s32 %s277, 1
    %p281 = scmp.eq.s32.totalorder %s18, 1
    %p282 = scmp.ne.s32.totalorder %s277, %s279
    %p283 = scmp.eq.s32.totalorder %s18, 0
    %p284 = por %p282, %p283
    %p285 = scmp.ne.s32.totalorder %s277, %s279
    %p286 = scmp.eq.s32.totalorder %s23, 1
    %p287 = por %p285, %p286
    %p288 = scmp.ne.s32.totalorder %s279, %s280
    %p289 = scmp.eq.s32.totalorder %s23, 0
    %p290 = por %p288, %p289
    %p291 = scmp.ne.s32.totalorder %s279, %s280
    %p292 = scmp.eq.s32.totalorder %s24, 1
    %p293 = por %p291, %p292
    %p295 = scmp.ne.s32.totalorder %s280, %s294
    %p296 = scmp.eq.s32.totalorder %s24, 0
    %p297 = por %p295, %p296
    %s298 = ssub.s32 %s18, %s25
    %p299 = scmp.eq.s32.totalorder %s298, 0
    %s301 = sadd.s32 %s300, 1
    %s302 = scalar_select %p299, %s300, %s301
    %p305 = pneg %p299
    %p306 = scmp.eq.s32.totalorder %s18, 1
    %p307 = por %p305, %p306
    %p308 = scmp.ne.s32.totalorder %s300, %s303
    %p309 = scmp.eq.s32.totalorder %s18, 0
    %p310 = por %p308, %p309
    %p311 = scmp.ne.s32.totalorder %s300, %s303
    %p312 = scmp.eq.s32.totalorder %s23, 1
    %p313 = por %p311, %p312
    %p314 = scmp.ne.s32.totalorder %s303, %s304
    %p315 = scmp.eq.s32.totalorder %s23, 0
    %p316 = por %p314, %p315
    %p317 = scmp.ne.s32.totalorder %s303, %s304
    %p318 = scmp.eq.s32.totalorder %s24, 1
    %p319 = por %p317, %p318
    %p321 = scmp.ne.s32.totalorder %s304, %s320
    %p322 = scmp.eq.s32.totalorder %s24, 0
    %p323 = por %p321, %p322
    %p324 = scmp.le.s32.totalorder 1, %s18
    %p325 = scmp.lt.s32.totalorder %s18, 3
    %p326 = pnand %p324, %p325
    %p327 = pneg %p326
    // Predicated region
    $region9: #{_lambda_.20} parent=5 // pred_check
      _
    $region10: #{_lambda_.20} parent=5 // pred_check_branch
      %329 = sbr.rel (%p326) target = $region12
    $region11: #{_lambda_.20} parent=5 // pred_region
      %s330 = ssub.s32 %s18, 1
      // Predicated region
      $region13: #{_lambda_.20} parent=11 // pred_check
        %p331 = pneg %p143
      $region14: #{_lambda_.20} parent=11 // pred_check_branch
        %333 = sbr.rel (%p331) target = $region16
      $region15: #{_lambda_.20} parent=11 // pred_region
        _
      $region16: #{_lambda_.20} parent=11 // pred_fallthru
        _
      // Predicated region
      $region17: #{_lambda_.20} parent=11 // pred_check
        %p334 = pneg %p164
      $region18: #{_lambda_.20} parent=11 // pred_check_branch
        %336 = sbr.rel (%p334) target = $region20
      $region19: #{_lambda_.20} parent=11 // pred_region
        _
      $region20: #{_lambda_.20} parent=11 // pred_fallthru
        _
      // Predicated region
      $region21: #{_lambda_.20} parent=11 // pred_check
        %p337 = pneg %p185
      $region22: #{_lambda_.20} parent=11 // pred_check_branch
        %339 = sbr.rel (%p337) target = $region24
      $region23: #{_lambda_.20} parent=11 // pred_region
        _
      $region24: #{_lambda_.20} parent=11 // pred_fallthru
        _
      // Predicated region
      $region25: #{_lambda_.20} parent=11 // pred_check
        %p340 = pneg %p206
      $region26: #{_lambda_.20} parent=11 // pred_check_branch
        %342 = sbr.rel (%p340) target = $region28
      $region27: #{_lambda_.20} parent=11 // pred_region
        _
      $region28: #{_lambda_.20} parent=11 // pred_fallthru
        _
      // Predicated region
      $region29: #{_lambda_.20} parent=11 // pred_check
        %p343 = pneg %p227
      $region30: #{_lambda_.20} parent=11 // pred_check_branch
        %345 = sbr.rel (%p343) target = $region32
      $region31: #{_lambda_.20} parent=11 // pred_region
        _
      $region32: #{_lambda_.20} parent=11 // pred_fallthru
        _
      // Predicated region
      $region33: #{_lambda_.20} parent=11 // pred_check
        %p346 = pneg %p248
      $region34: #{_lambda_.20} parent=11 // pred_check_branch
        %348 = sbr.rel (%p346) target = $region36
      $region35: #{_lambda_.20} parent=11 // pred_region
        _
      $region36: #{_lambda_.20} parent=11 // pred_fallthru
        _
      // Predicated region
      $region37: #{_lambda_.20} parent=11 // pred_check
        %p349 = pneg %p269
      $region38: #{_lambda_.20} parent=11 // pred_check_branch
        %351 = sbr.rel (%p349) target = $region40
      $region39: #{_lambda_.20} parent=11 // pred_region
        _
      $region40: #{_lambda_.20} parent=11 // pred_fallthru
        _
      // Predicated region
      $region41: #{_lambda_.20} parent=11 // pred_check
        %p352 = pneg %p290
      $region42: #{_lambda_.20} parent=11 // pred_check_branch
        %354 = sbr.rel (%p352) target = $region44
      $region43: #{_lambda_.20} parent=11 // pred_region
        _
      $region44: #{_lambda_.20} parent=11 // pred_fallthru
        _
    $region12: #{_lambda_.20} parent=5 // pred_fallthru
      _
    %p355 = scmp.lt.s32.totalorder %s18, 2
    // Predicated region
    $region45: #{_lambda_.20} parent=5 // pred_check
      %p356 = pneg %p355
    $region46: #{_lambda_.20} parent=5 // pred_check_branch
      %358 = sbr.rel (%p356) target = $region48
    $region47: #{_lambda_.20} parent=5 // pred_region
      // Predicated region
      $region49: #{_lambda_.20} parent=47 // pred_check
        %p359 = pneg %p38
      $region50: #{_lambda_.20} parent=47 // pred_check_branch
        %361 = sbr.rel (%p359) target = $region52
      $region51: #{_lambda_.20} parent=47 // pred_region
        %p362 = scmp.lt.s32.totalorder %s18, 1
        %s363 = scalar_select %p362, %s18, 1
        %s364 = smul.addr %s363, 8
        %s365 = scalar_lea.vmem %s0, %s364
      $region52: #{_lambda_.20} parent=47 // pred_fallthru
        _
      // Predicated region
      $region53: #{_lambda_.20} parent=47 // pred_check
        %p366 = pneg %p64
      $region54: #{_lambda_.20} parent=47 // pred_check_branch
        %368 = sbr.rel (%p366) target = $region56
      $region55: #{_lambda_.20} parent=47 // pred_region
        %p369 = scmp.lt.s32.totalorder %s18, 1
        %s370 = scalar_select %p369, %s18, 1
        %s371 = smul.addr %s370, 8
        %s372 = scalar_lea.vmem %s1, %s371
      $region56: #{_lambda_.20} parent=47 // pred_fallthru
        _
      // Predicated region
      $region57: #{_lambda_.20} parent=47 // pred_check
        %p373 = pneg %p90
      $region58: #{_lambda_.20} parent=47 // pred_check_branch
        %375 = sbr.rel (%p373) target = $region60
      $region59: #{_lambda_.20} parent=47 // pred_region
        %p376 = scmp.lt.s32.totalorder %s18, 1
        %s377 = scalar_select %p376, %s18, 1
        %s378 = scalar_lea.vmem %s2, %s377
      $region60: #{_lambda_.20} parent=47 // pred_fallthru
        _
      // Predicated region
      $region61: #{_lambda_.20} parent=47 // pred_check
        %p379 = pneg %p116
      $region62: #{_lambda_.20} parent=47 // pred_check_branch
        %381 = sbr.rel (%p379) target = $region64
      $region63: #{_lambda_.20} parent=47 // pred_region
        %p382 = scmp.lt.s32.totalorder %s18, 1
        %s383 = scalar_select %p382, %s18, 1
        %s384 = smul.addr %s383, 4
        %s385 = smul.addr %s384, 8
        %s386 = scalar_lea.vmem %s3, %s385
      $region64: #{_lambda_.20} parent=47 // pred_fallthru
        _
    $region48: #{_lambda_.20} parent=5 // pred_fallthru
      _
    %p387 = scmp.le.s32.totalorder 1, %s18
    %p388 = scmp.lt.s32.totalorder %s18, 3
    %p389 = pnand %p387, %p388
    %p390 = pneg %p389
    // Predicated region
    $region65: #{_lambda_.20} parent=5 // pred_check
      _
    $region66: #{_lambda_.20} parent=5 // pred_check_branch
      %392 = sbr.rel (%p389) target = $region68
    $region67: #{_lambda_.20} parent=5 // pred_region
      %s393 = ssub.s32 %s18, 1
      %p394 = scmp.lt.s32.totalorder %s23, 1
      %s395 = scalar_select %p394, %s23, 1
      %s396 = smul.addr %s395, 8
      %s397 = scalar_lea.vmem %s0, %s396
      %p398 = pneg %p44
      %p399 = pneg %p41
      %p400 = scmp.lt.s32.totalorder %s23, 1
      %s401 = scalar_select %p400, %s23, 1
      %s402 = smul.addr %s401, 8
      %s403 = scalar_lea.vmem %s1, %s402
      %p404 = pneg %p70
      %p405 = pneg %p67
      %p406 = scmp.lt.s32.totalorder %s23, 1
      %s407 = scalar_select %p406, %s23, 1
      %s408 = scalar_lea.vmem %s2, %s407
      %p409 = pneg %p96
      %p410 = pneg %p93
      %p411 = scmp.lt.s32.totalorder %s23, 1
      %s412 = scalar_select %p411, %s23, 1
      %s413 = smul.addr %s412, 4
      %s414 = smul.addr %s413, 8
      %s415 = scalar_lea.vmem %s3, %s414
      %p416 = pneg %p122
      %p417 = pneg %p119
      %p418 = pneg %p143
      %p419 = pneg %p140
      %p420 = pneg %p164
      %p421 = pneg %p161
      %p422 = pneg %p185
      %p423 = pneg %p182
      %p424 = pneg %p206
      %p425 = pneg %p203
      %p426 = pneg %p227
      %p427 = pneg %p224
      %p428 = pneg %p248
      %p429 = pneg %p245
      %p430 = pneg %p269
      %p431 = pneg %p266
      %p432 = pneg %p290
      %p433 = pneg %p287
      %p434 = pneg %p316
      %p435 = pneg %p313
      %p436 = scmp.lt.s32.totalorder %s23, 1
      %s437 = scalar_select %p436, %s23, 1
      %s438 = smul.addr %s437, 8
      %s439 = scalar_lea.vmem %s12, %s438
      %p440 = scmp.lt.s32.totalorder %s23, 1
      %s441 = scalar_select %p440, %s23, 1
      %s442 = smul.addr %s441, 8
      %s443 = scalar_lea.vmem %s0, %s442
      %p444 = scmp.lt.s32.totalorder %s23, 1
      %s445 = scalar_select %p444, %s23, 1
      %s446 = smul.addr %s445, 8
      %s447 = scalar_lea.vmem %s1, %s446
      %p448 = scmp.lt.s32.totalorder %s23, 1
      %s449 = scalar_select %p448, %s23, 1
      %s450 = scalar_lea.vmem %s2, %s449
      %p451 = scmp.lt.s32.totalorder %s23, 1
      %s452 = scalar_select %p451, %s23, 1
      %s453 = smul.addr %s452, 4
      %s454 = smul.addr %s453, 8
      %s455 = scalar_lea.vmem %s3, %s454
      %p456 = scmp.lt.s32.totalorder %s23, 1
      %s457 = scalar_select %p456, %s23, 1
      %s458 = smul.addr %s457, 8
      %s459 = scalar_lea.vmem %s12, %s458
      %v461 = vld [vmem:[%s443] sm:$0xff]
      %v462 = vld [vmem:[%s447] sm:$0xff]
      %v463 = vld [vmem:[%s450] sm:$0x1]
      %v464 = vld [vmem:[%s4] sm:$0xff]
      %v465 = vld [vmem:[%s4 + $0x8] sm:$0xff]
      %v466 = vld [vmem:[%s4 + $0x10] sm:$0xff]
      %v467 = vld [vmem:[%s4 + $0x18] sm:$0xff]
      %v468 = vpack.c.bf16 %v461, %v461
      %v469 = vpack.c.bf16 %v465, %v464
      %v470 = vpack.c.bf16 %v467, %v466
      %v471 = vld [vmem:[%s5] sm:$0x1]
      %v473 = vlaneseq
      %v474 = vshrl.u32 %v473, 7
      %v475 = vsub.s32 0, %v474
      %v476 = vrot.slane %v471, %v475
      %vm478 = vcmask 261120
      %v480 = vsel %vm478, %v468, 0
      %482 = vmatprep.subr.bf16.mxu0 0
      %483 = vmatpush1.bf16.msra.mxu0 %v469
      %484 = vmatprep.subr.bf16.mxu0 0
      %485 = vmatpush1.bf16.msra.mxu0 %v470
      %486 = vmatprep.subr.bf16.mxu0 0
      %487 = vmatpush1.bf16.msra.mxu0 0
      %488 = vmatprep.subr.bf16.mxu0 0
      %489 = vmatpush1.bf16.msra.mxu0 0
      %490 = vmatprep.subr.bf16.mxu0 0
      %491 = vmatpush1.bf16.msra.mxu0 0
      %492 = vmatprep.subr.bf16.mxu0 0
      %493 = vmatpush1.bf16.msra.mxu0 0
      %494 = vmatprep.subr.bf16.mxu0 0
      %495 = vmatpush1.bf16.msra.mxu0 0
      %496 = vmatprep.subr.bf16.mxu0 0
      %497 = vmatpush1.bf16.msra.mxu0 0
      %498 = vmatprep.subr.bf16.mxu0 0
      %499 = vmatpush1.bf16.msra.mxu0 0
      %500 = vmatprep.subr.bf16.mxu0 0
      %501 = vmatpush1.bf16.msra.mxu0 0
      %502 = vmatprep.subr.bf16.mxu0 0
      %503 = vmatpush1.bf16.msra.mxu0 0
      %504 = vmatprep.subr.bf16.mxu0 0
      %505 = vmatpush1.bf16.msra.mxu0 0
      %506 = vmatprep.subr.bf16.mxu0 0
      %507 = vmatpush1.bf16.msra.mxu0 0
      %508 = vmatprep.subr.bf16.mxu0 0
      %509 = vmatpush1.bf16.msra.mxu0 0
      %510 = vmatprep.subr.bf16.mxu0 0
      %511 = vmatpush1.bf16.msra.mxu0 0
      %512 = vmatprep.subr.bf16.mxu0 0
      %513 = vmatpush1.bf16.msra.mxu0 0
      %514 = vmatprep.mubr.bf16.mxu0 0
      %515 = vmatmul.mubr.bf16.gmra.mrb[0].mxu0 %v480
      %v516 = vpop.f32.mrb[0].mxu0
      %v517 = vadd.f32 %v476, %v516
      %v518 = vpop.f32.mrb[0].mxu0
      %v519 = vpop.f32.mrb[0].mxu0
      %v520 = vpop.f32.mrb[0].mxu0
      %521 = vdwg.mxu0
      %v522 = vld [vmem:[%s6] sm:$0xff]
      %v523 = vld [vmem:[%s6 + $0x8] sm:$0xff]
      %v524 = vld [vmem:[%s6 + $0x10] sm:$0xff]
      %v525 = vld [vmem:[%s6 + $0x18] sm:$0xff]
      %v526 = vpack.c.bf16 %v462, %v462
      %v527 = vpack.c.bf16 %v523, %v522
      %v528 = vpack.c.bf16 %v525, %v524
      %v529 = vld [vmem:[%s7] sm:$0x1]
      %v531 = vlaneseq
      %v532 = vshrl.u32 %v531, 7
      %v533 = vsub.s32 0, %v532
      %v534 = vrot.slane %v529, %v533
      %v537 = vsel %vm478, %v526, 0
      %539 = vmatprep.subr.bf16.mxu0 0
      %540 = vmatpush1.bf16.msra.mxu0 %v527
      %541 = vmatprep.subr.bf16.mxu0 0
      %542 = vmatpush1.bf16.msra.mxu0 %v528
      %543 = vmatprep.subr.bf16.mxu0 0
      %544 = vmatpush1.bf16.msra.mxu0 0
      %545 = vmatprep.subr.bf16.mxu0 0
      %546 = vmatpush1.bf16.msra.mxu0 0
      %547 = vmatprep.subr.bf16.mxu0 0
      %548 = vmatpush1.bf16.msra.mxu0 0
      %549 = vmatprep.subr.bf16.mxu0 0
      %550 = vmatpush1.bf16.msra.mxu0 0
      %551 = vmatprep.subr.bf16.mxu0 0
      %552 = vmatpush1.bf16.msra.mxu0 0
      %553 = vmatprep.subr.bf16.mxu0 0
      %554 = vmatpush1.bf16.msra.mxu0 0
      %555 = vmatprep.subr.bf16.mxu0 0
      %556 = vmatpush1.bf16.msra.mxu0 0
      %557 = vmatprep.subr.bf16.mxu0 0
      %558 = vmatpush1.bf16.msra.mxu0 0
      %559 = vmatprep.subr.bf16.mxu0 0
      %560 = vmatpush1.bf16.msra.mxu0 0
      %561 = vmatprep.subr.bf16.mxu0 0
      %562 = vmatpush1.bf16.msra.mxu0 0
      %563 = vmatprep.subr.bf16.mxu0 0
      %564 = vmatpush1.bf16.msra.mxu0 0
      %565 = vmatprep.subr.bf16.mxu0 0
      %566 = vmatpush1.bf16.msra.mxu0 0
      %567 = vmatprep.subr.bf16.mxu0 0
      %568 = vmatpush1.bf16.msra.mxu0 0
      %569 = vmatprep.subr.bf16.mxu0 0
      %570 = vmatpush1.bf16.msra.mxu0 0
      %571 = vmatprep.mubr.bf16.mxu0 0
      %572 = vmatmul.mubr.bf16.gmra.mrb[0].mxu0 %v537
      %v573 = vpop.f32.mrb[0].mxu0
      %v574 = vadd.f32 %v534, %v573
      %v575 = vpop.f32.mrb[0].mxu0
      %v576 = vpop.f32.mrb[0].mxu0
      %v577 = vpop.f32.mrb[0].mxu0
      %578 = vdwg.mxu0
      %v579 = vpack.c.bf16 %v517, %v517
      %v580 = vpack.c.bf16 %v574, %v574
      %vm581 = vcmask 64512
      %v583 = vsel %vm581, %v579, 0
      %v586 = vsel %vm581, %v580, 0
      %588 = vmatprep.subr.bf16.mxu0 0
      %589 = vmatpush1.bf16.xpose.msra.mxu0 %v586
      %590 = vmatprep.subr.bf16.mxu0 0
      %591 = vmatpush1.bf16.xpose.msra.mxu0 0
      %592 = vmatprep.subr.bf16.mxu0 0
      %593 = vmatpush1.bf16.xpose.msra.mxu0 0
      %594 = vmatprep.subr.bf16.mxu0 0
      %595 = vmatpush1.bf16.xpose.msra.mxu0 0
      %596 = vmatprep.subr.bf16.mxu0 0
      %597 = vmatpush1.bf16.xpose.msra.mxu0 0
      %598 = vmatprep.subr.bf16.mxu0 0
      %599 = vmatpush1.bf16.xpose.msra.mxu0 0
      %600 = vmatprep.subr.bf16.mxu0 0
      %601 = vmatpush1.bf16.xpose.msra.mxu0 0
      %602 = vmatprep.subr.bf16.mxu0 0
      %603 = vmatpush1.bf16.xpose.msra.mxu0 0
      %604 = vmatprep.subr.bf16.mxu0 0
      %605 = vmatpush1.bf16.xpose.msra.mxu0 0
      %606 = vmatprep.subr.bf16.mxu0 0
      %607 = vmatpush1.bf16.xpose.msra.mxu0 0
      %608 = vmatprep.subr.bf16.mxu0 0
      %609 = vmatpush1.bf16.xpose.msra.mxu0 0
      %610 = vmatprep.subr.bf16.mxu0 0
      %611 = vmatpush1.bf16.xpose.msra.mxu0 0
      %612 = vmatprep.subr.bf16.mxu0 0
      %613 = vmatpush1.bf16.xpose.msra.mxu0 0
      %614 = vmatprep.subr.bf16.mxu0 0
      %615 = vmatpush1.bf16.xpose.msra.mxu0 0
      %616 = vmatprep.subr.bf16.mxu0 0
      %617 = vmatpush1.bf16.xpose.msra.mxu0 0
      %618 = vmatprep.subr.bf16.mxu0 0
      %619 = vmatpush1.bf16.xpose.msra.mxu0 0
      %620 = vmatprep.mubr.bf16.mxu0 0
      %621 = vmatmul.mubr.bf16.gmra.mrb[0].mxu0 %v583
      %v622 = vpop.f32.mrb[0].mxu0
      %v623 = vadd.f32 0.0, %v622
      %v624 = vpop.f32.mrb[0].mxu0
      %v625 = vpop.f32.mrb[0].mxu0
      %v626 = vpop.f32.mrb[0].mxu0
      %627 = vdwg.mxu0
      %v628 = vmul.f32 %v623, 0.35355338
      %v630 = vlaneseq
      %v631 = vshrl.u32 %v630, 7
      %v632 = vsub.s32 0, %v631
      %v633 = vrot.slane %v463, %v632
      %v635 = vadd.f32 %v628, %v633
      %v636 = vld [vmem:[%s455] sm:$0xff]
      %v637 = vadd.f32 %v635, %v636
      %v638 = vsel %vm581, %v637, -inf
      %639 = vmax.xlane.f32.xlu0 %v638
      %v640 = vpop.xlane.xlu0 %639
      %v641 = vsub.f32 %v637, %v640
      %v642 = vmul.f32 %v641, 1.442695
      %v643 = vpow.pop %v642
      %v644 = vsel %vm581, %v643, 0.0
      %645 = vadd.xlane.f32.xlu0 %v644
      %v646 = vpop.xlane.xlu0 %645
      %v647 = vrcp.pop %v646
      %v648 = vmul.f32 %v643, %v647
      %v649 = vpack.c.bf16 %v648, %v648
      %651 = vrot.lane.b32.xlu0 %v580, 96
      %v652 = vpop.permute.xlu0 %651
      %v654 = vsel %vm581, %v649, 0
      %vm656 = vcmask 1043456
      %v658 = vsel %vm656, %v652, 0
      %660 = vmatprep.subr.bf16.mxu0 0
      %661 = vmatpush1.bf16.msra.mxu0 %v658
      %662 = vmatprep.subr.bf16.mxu0 0
      %663 = vmatpush1.bf16.msra.mxu0 0
      %664 = vmatprep.subr.bf16.mxu0 0
      %665 = vmatpush1.bf16.msra.mxu0 0
      %666 = vmatprep.subr.bf16.mxu0 0
      %667 = vmatpush1.bf16.msra.mxu0 0
      %668 = vmatprep.subr.bf16.mxu0 0
      %669 = vmatpush1.bf16.msra.mxu0 0
      %670 = vmatprep.subr.bf16.mxu0 0
      %671 = vmatpush1.bf16.msra.mxu0 0
      %672 = vmatprep.subr.bf16.mxu0 0
      %673 = vmatpush1.bf16.msra.mxu0 0
      %674 = vmatprep.subr.bf16.mxu0 0
      %675 = vmatpush1.bf16.msra.mxu0 0
      %676 = vmatprep.subr.bf16.mxu0 0
      %677 = vmatpush1.bf16.msra.mxu0 0
      %678 = vmatprep.subr.bf16.mxu0 0
      %679 = vmatpush1.bf16.msra.mxu0 0
      %680 = vmatprep.subr.bf16.mxu0 0
      %681 = vmatpush1.bf16.msra.mxu0 0
      %682 = vmatprep.subr.bf16.mxu0 0
      %683 = vmatpush1.bf16.msra.mxu0 0
      %684 = vmatprep.subr.bf16.mxu0 0
      %685 = vmatpush1.bf16.msra.mxu0 0
      %686 = vmatprep.subr.bf16.mxu0 0
      %687 = vmatpush1.bf16.msra.mxu0 0
      %688 = vmatprep.subr.bf16.mxu0 0
      %689 = vmatpush1.bf16.msra.mxu0 0
      %690 = vmatprep.subr.bf16.mxu0 0
      %691 = vmatpush1.bf16.msra.mxu0 0
      %692 = vmatprep.mubr.bf16.mxu0 0
      %693 = vmatmul.mubr.bf16.gmra.mrb[0].mxu0 %v654
      %v694 = vpop.f32.mrb[0].mxu0
      %v695 = vadd.f32 0.0, %v694
      %v696 = vpop.f32.mrb[0].mxu0
      %v697 = vpop.f32.mrb[0].mxu0
      %v698 = vpop.f32.mrb[0].mxu0
      %699 = vdwg.mxu0
      %701 = vrot.lane.b32.xlu0 %v579, 120
      %v702 = vpop.permute.xlu0 %701
      %703 = vrot.lane.b32.xlu0 %v580, 120
      %v704 = vpop.permute.xlu0 %703
      %v706 = vsel %vm581, %v702, 0
      %v709 = vsel %vm581, %v704, 0
      %711 = vmatprep.subr.bf16.mxu0 0
      %712 = vmatpush1.bf16.xpose.msra.mxu0 %v709
      %713 = vmatprep.subr.bf16.mxu0 0
      %714 = vmatpush1.bf16.xpose.msra.mxu0 0
      %715 = vmatprep.subr.bf16.mxu0 0
      %716 = vmatpush1.bf16.xpose.msra.mxu0 0
      %717 = vmatprep.subr.bf16.mxu0 0
      %718 = vmatpush1.bf16.xpose.msra.mxu0 0
      %719 = vmatprep.subr.bf16.mxu0 0
      %720 = vmatpush1.bf16.xpose.msra.mxu0 0
      %721 = vmatprep.subr.bf16.mxu0 0
      %722 = vmatpush1.bf16.xpose.msra.mxu0 0
      %723 = vmatprep.subr.bf16.mxu0 0
      %724 = vmatpush1.bf16.xpose.msra.mxu0 0
      %725 = vmatprep.subr.bf16.mxu0 0
      %726 = vmatpush1.bf16.xpose.msra.mxu0 0
      %727 = vmatprep.subr.bf16.mxu0 0
      %728 = vmatpush1.bf16.xpose.msra.mxu0 0
      %729 = vmatprep.subr.bf16.mxu0 0
      %730 = vmatpush1.bf16.xpose.msra.mxu0 0
      %731 = vmatprep.subr.bf16.mxu0 0
      %732 = vmatpush1.bf16.xpose.msra.mxu0 0
      %733 = vmatprep.subr.bf16.mxu0 0
      %734 = vmatpush1.bf16.xpose.msra.mxu0 0
      %735 = vmatprep.subr.bf16.mxu0 0
      %736 = vmatpush1.bf16.xpose.msra.mxu0 0
      %737 = vmatprep.subr.bf16.mxu0 0
      %738 = vmatpush1.bf16.xpose.msra.mxu0 0
      %739 = vmatprep.subr.bf16.mxu0 0
      %740 = vmatpush1.bf16.xpose.msra.mxu0 0
      %741 = vmatprep.subr.bf16.mxu0 0
      %742 = vmatpush1.bf16.xpose.msra.mxu0 0
      %743 = vmatprep.mubr.bf16.mxu0 0
      %744 = vmatmul.mubr.bf16.gmra.mrb[0].mxu0 %v706
      %v745 = vpop.f32.mrb[0].mxu0
      %v746 = vadd.f32 0.0, %v745
      %v747 = vpop.f32.mrb[0].mxu0
      %v748 = vpop.f32.mrb[0].mxu0
      %v749 = vpop.f32.mrb[0].mxu0
      %750 = vdwg.mxu0
      %v751 = vmul.f32 %v746, 0.35355338
      %v752 = vadd.f32 %v751, %v633
      %s753 = scalar_lea.vmem %s455, 8
      %v754 = vld [vmem:[%s753] sm:$0xff]
      %v755 = vadd.f32 %v752, %v754
      %v756 = vsel %vm581, %v755, -inf
      %757 = vmax.xlane.f32.xlu0 %v756
      %v758 = vpop.xlane.xlu0 %757
      %v759 = vsub.f32 %v755, %v758
      %v760 = vmul.f32 %v759, 1.442695
      %v761 = vpow.pop %v760
      %v762 = vsel %vm581, %v761, 0.0
      %763 = vadd.xlane.f32.xlu0 %v762
      %v764 = vpop.xlane.xlu0 %763
      %v765 = vrcp.pop %v764
      %v766 = vmul.f32 %v761, %v765
      %v767 = vpack.c.bf16 %v766, %v766
      %768 = vrot.lane.b32.xlu0 %v580, 88
      %v769 = vpop.permute.xlu0 %768
      %v771 = vsel %vm581, %v767, 0
      %v774 = vsel %vm656, %v769, 0
      %776 = vmatprep.subr.bf16.mxu0 0
      %777 = vmatpush1.bf16.msra.mxu0 %v774
      %778 = vmatprep.subr.bf16.mxu0 0
      %779 = vmatpush1.bf16.msra.mxu0 0
      %780 = vmatprep.subr.bf16.mxu0 0
      %781 = vmatpush1.bf16.msra.mxu0 0
      %782 = vmatprep.subr.bf16.mxu0 0
      %783 = vmatpush1.bf16.msra.mxu0 0
      %784 = vmatprep.subr.bf16.mxu0 0
      %785 = vmatpush1.bf16.msra.mxu0 0
      %786 = vmatprep.subr.bf16.mxu0 0
      %787 = vmatpush1.bf16.msra.mxu0 0
      %788 = vmatprep.subr.bf16.mxu0 0
      %789 = vmatpush1.bf16.msra.mxu0 0
      %790 = vmatprep.subr.bf16.mxu0 0
      %791 = vmatpush1.bf16.msra.mxu0 0
      %792 = vmatprep.subr.bf16.mxu0 0
      %793 = vmatpush1.bf16.msra.mxu0 0
      %794 = vmatprep.subr.bf16.mxu0 0
      %795 = vmatpush1.bf16.msra.mxu0 0
      %796 = vmatprep.subr.bf16.mxu0 0
      %797 = vmatpush1.bf16.msra.mxu0 0
      %798 = vmatprep.subr.bf16.mxu0 0
      %799 = vmatpush1.bf16.msra.mxu0 0
      %800 = vmatprep.subr.bf16.mxu0 0
      %801 = vmatpush1.bf16.msra.mxu0 0
      %802 = vmatprep.subr.bf16.mxu0 0
      %803 = vmatpush1.bf16.msra.mxu0 0
      %804 = vmatprep.subr.bf16.mxu0 0
      %805 = vmatpush1.bf16.msra.mxu0 0
      %806 = vmatprep.subr.bf16.mxu0 0
      %807 = vmatpush1.bf16.msra.mxu0 0
      %808 = vmatprep.mubr.bf16.mxu0 0
      %809 = vmatmul.mubr.bf16.gmra.mrb[0].mxu0 %v771
      %v810 = vpop.f32.mrb[0].mxu0
      %v811 = vadd.f32 0.0, %v810
      %v812 = vpop.f32.mrb[0].mxu0
      %v813 = vpop.f32.mrb[0].mxu0
      %v814 = vpop.f32.mrb[0].mxu0
      %815 = vdwg.mxu0
      %816 = vrot.lane.b32.xlu0 %v579, 112
      %v817 = vpop.permute.xlu0 %816
      %818 = vrot.lane.b32.xlu0 %v580, 112
      %v819 = vpop.permute.xlu0 %818
      %v821 = vsel %vm581, %v817, 0
      %v824 = vsel %vm581, %v819, 0
      %826 = vmatprep.subr.bf16.mxu0 0
      %827 = vmatpush1.bf16.xpose.msra.mxu0 %v824
      %828 = vmatprep.subr.bf16.mxu0 0
      %829 = vmatpush1.bf16.xpose.msra.mxu0 0
      %830 = vmatprep.subr.bf16.mxu0 0
      %831 = vmatpush1.bf16.xpose.msra.mxu0 0
      %832 = vmatprep.subr.bf16.mxu0 0
      %833 = vmatpush1.bf16.xpose.msra.mxu0 0
      %834 = vmatprep.subr.bf16.mxu0 0
      %835 = vmatpush1.bf16.xpose.msra.mxu0 0
      %836 = vmatprep.subr.bf16.mxu0 0
      %837 = vmatpush1.bf16.xpose.msra.mxu0 0
      %838 = vmatprep.subr.bf16.mxu0 0
      %839 = vmatpush1.bf16.xpose.msra.mxu0 0
      %840 = vmatprep.subr.bf16.mxu0 0
      %841 = vmatpush1.bf16.xpose.msra.mxu0 0
      %842 = vmatprep.subr.bf16.mxu0 0
      %843 = vmatpush1.bf16.xpose.msra.mxu0 0
      %844 = vmatprep.subr.bf16.mxu0 0
      %845 = vmatpush1.bf16.xpose.msra.mxu0 0
      %846 = vmatprep.subr.bf16.mxu0 0
      %847 = vmatpush1.bf16.xpose.msra.mxu0 0
      %848 = vmatprep.subr.bf16.mxu0 0
      %849 = vmatpush1.bf16.xpose.msra.mxu0 0
      %850 = vmatprep.subr.bf16.mxu0 0
      %851 = vmatpush1.bf16.xpose.msra.mxu0 0
      %852 = vmatprep.subr.bf16.mxu0 0
      %853 = vmatpush1.bf16.xpose.msra.mxu0 0
      %854 = vmatprep.subr.bf16.mxu0 0
      %855 = vmatpush1.bf16.xpose.msra.mxu0 0
      %856 = vmatprep.subr.bf16.mxu0 0
      %857 = vmatpush1.bf16.xpose.msra.mxu0 0
      %858 = vmatprep.mubr.bf16.mxu0 0
      %859 = vmatmul.mubr.bf16.gmra.mrb[0].mxu0 %v821
      %v860 = vpop.f32.mrb[0].mxu0
      %v861 = vadd.f32 0.0, %v860
      %v862 = vpop.f32.mrb[0].mxu0
      %v863 = vpop.f32.mrb[0].mxu0
      %v864 = vpop.f32.mrb[0].mxu0
      %865 = vdwg.mxu0
      %v866 = vmul.f32 %v861, 0.35355338
      %v867 = vadd.f32 %v866, %v633
      %s868 = scalar_lea.vmem %s455, 16
      %v869 = vld [vmem:[%s868] sm:$0xff]
      %v870 = vadd.f32 %v867, %v869
      %v871 = vsel %vm581, %v870, -inf
      %872 = vmax.xlane.f32.xlu0 %v871
      %v873 = vpop.xlane.xlu0 %872
      %v874 = vsub.f32 %v870, %v873
      %v875 = vmul.f32 %v874, 1.442695
      %v876 = vpow.pop %v875
      %v877 = vsel %vm581, %v876, 0.0
      %878 = vadd.xlane.f32.xlu0 %v877
      %v879 = vpop.xlane.xlu0 %878
      %v880 = vrcp.pop %v879
      %v881 = vmul.f32 %v876, %v880
      %v882 = vpack.c.bf16 %v881, %v881
      %883 = vrot.lane.b32.xlu0 %v580, 80
      %v884 = vpop.permute.xlu0 %883
      %v886 = vsel %vm581, %v882, 0
      %v889 = vsel %vm656, %v884, 0
      %891 = vmatprep.subr.bf16.mxu0 0
      %892 = vmatpush1.bf16.msra.mxu0 %v889
      %893 = vmatprep.subr.bf16.mxu0 0
      %894 = vmatpush1.bf16.msra.mxu0 0
      %895 = vmatprep.subr.bf16.mxu0 0
      %896 = vmatpush1.bf16.msra.mxu0 0
      %897 = vmatprep.subr.bf16.mxu0 0
      %898 = vmatpush1.bf16.msra.mxu0 0
      %899 = vmatprep.subr.bf16.mxu0 0
      %900 = vmatpush1.bf16.msra.mxu0 0
      %901 = vmatprep.subr.bf16.mxu0 0
      %902 = vmatpush1.bf16.msra.mxu0 0
      %903 = vmatprep.subr.bf16.mxu0 0
      %904 = vmatpush1.bf16.msra.mxu0 0
      %905 = vmatprep.subr.bf16.mxu0 0
      %906 = vmatpush1.bf16.msra.mxu0 0
      %907 = vmatprep.subr.bf16.mxu0 0
      %908 = vmatpush1.bf16.msra.mxu0 0
      %909 = vmatprep.subr.bf16.mxu0 0
      %910 = vmatpush1.bf16.msra.mxu0 0
      %911 = vmatprep.subr.bf16.mxu0 0
      %912 = vmatpush1.bf16.msra.mxu0 0
      %913 = vmatprep.subr.bf16.mxu0 0
      %914 = vmatpush1.bf16.msra.mxu0 0
      %915 = vmatprep.subr.bf16.mxu0 0
      %916 = vmatpush1.bf16.msra.mxu0 0
      %917 = vmatprep.subr.bf16.mxu0 0
      %918 = vmatpush1.bf16.msra.mxu0 0
      %919 = vmatprep.subr.bf16.mxu0 0
      %920 = vmatpush1.bf16.msra.mxu0 0
      %921 = vmatprep.subr.bf16.mxu0 0
      %922 = vmatpush1.bf16.msra.mxu0 0
      %923 = vmatprep.mubr.bf16.mxu0 0
      %924 = vmatmul.mubr.bf16.gmra.mrb[0].mxu0 %v886
      %v925 = vpop.f32.mrb[0].mxu0
      %v926 = vadd.f32 0.0, %v925
      %v927 = vpop.f32.mrb[0].mxu0
      %v928 = vpop.f32.mrb[0].mxu0
      %v929 = vpop.f32.mrb[0].mxu0
      %930 = vdwg.mxu0
      %931 = vrot.lane.b32.xlu0 %v579, 104
      %v932 = vpop.permute.xlu0 %931
      %933 = vrot.lane.b32.xlu0 %v580, 104
      %v934 = vpop.permute.xlu0 %933
      %v936 = vsel %vm581, %v932, 0
      %v939 = vsel %vm581, %v934, 0
      %941 = vmatprep.subr.bf16.mxu0 0
      %942 = vmatpush1.bf16.xpose.msra.mxu0 %v939
      %943 = vmatprep.subr.bf16.mxu0 0
      %944 = vmatpush1.bf16.xpose.msra.mxu0 0
      %945 = vmatprep.subr.bf16.mxu0 0
      %946 = vmatpush1.bf16.xpose.msra.mxu0 0
      %947 = vmatprep.subr.bf16.mxu0 0
      %948 = vmatpush1.bf16.xpose.msra.mxu0 0
      %949 = vmatprep.subr.bf16.mxu0 0
      %950 = vmatpush1.bf16.xpose.msra.mxu0 0
      %951 = vmatprep.subr.bf16.mxu0 0
      %952 = vmatpush1.bf16.xpose.msra.mxu0 0
      %953 = vmatprep.subr.bf16.mxu0 0
      %954 = vmatpush1.bf16.xpose.msra.mxu0 0
      %955 = vmatprep.subr.bf16.mxu0 0
      %956 = vmatpush1.bf16.xpose.msra.mxu0 0
      %957 = vmatprep.subr.bf16.mxu0 0
      %958 = vmatpush1.bf16.xpose.msra.mxu0 0
      %959 = vmatprep.subr.bf16.mxu0 0
      %960 = vmatpush1.bf16.xpose.msra.mxu0 0
      %961 = vmatprep.subr.bf16.mxu0 0
      %962 = vmatpush1.bf16.xpose.msra.mxu0 0
      %963 = vmatprep.subr.bf16.mxu0 0
      %964 = vmatpush1.bf16.xpose.msra.mxu0 0
      %965 = vmatprep.subr.bf16.mxu0 0
      %966 = vmatpush1.bf16.xpose.msra.mxu0 0
      %967 = vmatprep.subr.bf16.mxu0 0
      %968 = vmatpush1.bf16.xpose.msra.mxu0 0
      %969 = vmatprep.subr.bf16.mxu0 0
      %970 = vmatpush1.bf16.xpose.msra.mxu0 0
      %971 = vmatprep.subr.bf16.mxu0 0
      %972 = vmatpush1.bf16.xpose.msra.mxu0 0
      %973 = vmatprep.mubr.bf16.mxu0 0
      %974 = vmatmul.mubr.bf16.gmra.mrb[0].mxu0 %v936
      %v975 = vpop.f32.mrb[0].mxu0
      %v976 = vadd.f32 0.0, %v975
      %v977 = vpop.f32.mrb[0].mxu0
      %v978 = vpop.f32.mrb[0].mxu0
      %v979 = vpop.f32.mrb[0].mxu0
      %980 = vdwg.mxu0
      %v981 = vmul.f32 %v976, 0.35355338
      %v982 = vadd.f32 %v981, %v633
      %s983 = scalar_lea.vmem %s455, 24
      %v984 = vld [vmem:[%s983] sm:$0xff]
      %v985 = vadd.f32 %v982, %v984
      %v986 = vsel %vm581, %v985, -inf
      %987 = vmax.xlane.f32.xlu0 %v986
      %v988 = vpop.xlane.xlu0 %987
      %v989 = vsub.f32 %v985, %v988
      %v990 = vmul.f32 %v989, 1.442695
      %v991 = vpow.pop %v990
      %v992 = vsel %vm581, %v991, 0.0
      %993 = vadd.xlane.f32.xlu0 %v992
      %v994 = vpop.xlane.xlu0 %993
      %v995 = vrcp.pop %v994
      %v996 = vmul.f32 %v991, %v995
      %v997 = vpack.c.bf16 %v996, %v996
      %998 = vrot.lane.b32.xlu0 %v580, 72
      %v999 = vpop.permute.xlu0 %998
      %v1001 = vsel %vm581, %v997, 0
      %v1004 = vsel %vm656, %v999, 0
      %1006 = vmatprep.subr.bf16.mxu0 0
      %1007 = vmatpush1.bf16.msra.mxu0 %v1004
      %1008 = vmatprep.subr.bf16.mxu0 0
      %1009 = vmatpush1.bf16.msra.mxu0 0
      %1010 = vmatprep.subr.bf16.mxu0 0
      %1011 = vmatpush1.bf16.msra.mxu0 0
      %1012 = vmatprep.subr.bf16.mxu0 0
      %1013 = vmatpush1.bf16.msra.mxu0 0
      %1014 = vmatprep.subr.bf16.mxu0 0
      %1015 = vmatpush1.bf16.msra.mxu0 0
      %1016 = vmatprep.subr.bf16.mxu0 0
      %1017 = vmatpush1.bf16.msra.mxu0 0
      %1018 = vmatprep.subr.bf16.mxu0 0
      %1019 = vmatpush1.bf16.msra.mxu0 0
      %1020 = vmatprep.subr.bf16.mxu0 0
      %1021 = vmatpush1.bf16.msra.mxu0 0
      %1022 = vmatprep.subr.bf16.mxu0 0
      %1023 = vmatpush1.bf16.msra.mxu0 0
      %1024 = vmatprep.subr.bf16.mxu0 0
      %1025 = vmatpush1.bf16.msra.mxu0 0
      %1026 = vmatprep.subr.bf16.mxu0 0
      %1027 = vmatpush1.bf16.msra.mxu0 0
      %1028 = vmatprep.subr.bf16.mxu0 0
      %1029 = vmatpush1.bf16.msra.mxu0 0
      %1030 = vmatprep.subr.bf16.mxu0 0
      %1031 = vmatpush1.bf16.msra.mxu0 0
      %1032 = vmatprep.subr.bf16.mxu0 0
      %1033 = vmatpush1.bf16.msra.mxu0 0
      %1034 = vmatprep.subr.bf16.mxu0 0
      %1035 = vmatpush1.bf16.msra.mxu0 0
      %1036 = vmatprep.subr.bf16.mxu0 0
      %1037 = vmatpush1.bf16.msra.mxu0 0
      %1038 = vmatprep.mubr.bf16.mxu0 0
      %1039 = vmatmul.mubr.bf16.gmra.mrb[0].mxu0 %v1001
      %v1040 = vpop.f32.mrb[0].mxu0
      %v1041 = vadd.f32 0.0, %v1040
      %v1042 = vpop.f32.mrb[0].mxu0
      %v1043 = vpop.f32.mrb[0].mxu0
      %v1044 = vpop.f32.mrb[0].mxu0
      %1045 = vdwg.mxu0
      %1047 = vrot.lane.b32.xlu0 %v811, 8
      %v1048 = vpop.permute.xlu0 %1047
      %1051 = vrot.lane.b32.xlu0 %v926, 16
      %v1052 = vpop.permute.xlu0 %1051
      %1055 = vrot.lane.b32.xlu0 %v1041, 24
      %v1056 = vpop.permute.xlu0 %1055
      %v1058 = vsel %vm581, %v695, %v1048
      %vm1059 = vcmask 130048
      %v1060 = vsel %vm1059, %v1058, %v1052
      %vm1061 = vcmask 195584
      %v1062 = vsel %vm1061, %v1060, %v1056
      %v1063 = vld [vmem:[%s8] sm:$0xff]
      %v1064 = vld [vmem:[%s8 + $0x8] sm:$0xff]
      %v1065 = vld [vmem:[%s8 + $0x10] sm:$0xff]
      %v1066 = vld [vmem:[%s8 + $0x18] sm:$0xff]
      %v1067 = vpack.c.bf16 %v1062, %v1062
      %v1068 = vpack.c.bf16 %v1064, %v1063
      %v1069 = vpack.c.bf16 %v1066, %v1065
      %v1070 = vld [vmem:[%s9] sm:$0x1]
      %v1072 = vlaneseq
      %v1073 = vshrl.u32 %v1072, 7
      %v1074 = vsub.s32 0, %v1073
      %v1075 = vrot.slane %v1070, %v1074
      %v1078 = vsel %vm478, %v1067, 0
      %1080 = vmatprep.subr.bf16.mxu0 0
      %1081 = vmatpush1.bf16.msra.mxu0 %v1068
      %1082 = vmatprep.subr.bf16.mxu0 0
      %1083 = vmatpush1.bf16.msra.mxu0 %v1069
      %1084 = vmatprep.subr.bf16.mxu0 0
      %1085 = vmatpush1.bf16.msra.mxu0 0
      %1086 = vmatprep.subr.bf16.mxu0 0
      %1087 = vmatpush1.bf16.msra.mxu0 0
      %1088 = vmatprep.subr.bf16.mxu0 0
      %1089 = vmatpush1.bf16.msra.mxu0 0
      %1090 = vmatprep.subr.bf16.mxu0 0
      %1091 = vmatpush1.bf16.msra.mxu0 0
      %1092 = vmatprep.subr.bf16.mxu0 0
      %1093 = vmatpush1.bf16.msra.mxu0 0
      %1094 = vmatprep.subr.bf16.mxu0 0
      %1095 = vmatpush1.bf16.msra.mxu0 0
      %1096 = vmatprep.subr.bf16.mxu0 0
      %1097 = vmatpush1.bf16.msra.mxu0 0
      %1098 = vmatprep.subr.bf16.mxu0 0
      %1099 = vmatpush1.bf16.msra.mxu0 0
      %1100 = vmatprep.subr.bf16.mxu0 0
      %1101 = vmatpush1.bf16.msra.mxu0 0
      %1102 = vmatprep.subr.bf16.mxu0 0
      %1103 = vmatpush1.bf16.msra.mxu0 0
      %1104 = vmatprep.subr.bf16.mxu0 0
      %1105 = vmatpush1.bf16.msra.mxu0 0
      %1106 = vmatprep.subr.bf16.mxu0 0
      %1107 = vmatpush1.bf16.msra.mxu0 0
      %1108 = vmatprep.subr.bf16.mxu0 0
      %1109 = vmatpush1.bf16.msra.mxu0 0
      %1110 = vmatprep.subr.bf16.mxu0 0
      %1111 = vmatpush1.bf16.msra.mxu0 0
      %1112 = vmatprep.mubr.bf16.mxu0 0
      %1113 = vmatmul.mubr.bf16.gmra.mrb[0].mxu0 %v1078
      %v1114 = vpop.f32.mrb[0].mxu0
      %v1115 = vadd.f32 %v1075, %v1114
      %v1116 = vpop.f32.mrb[0].mxu0
      %v1117 = vpop.f32.mrb[0].mxu0
      %v1118 = vpop.f32.mrb[0].mxu0
      %1119 = vdwg.mxu0
      %v1120 = vadd.f32 %v1115, %v461
      %v1121 = vld [vmem:[%s10] sm:$0x1]
      %v1122 = vld [vmem:[%s11] sm:$0x1]
      %v1123 = vsel %vm478, %v1120, 0.0
      %1124 = vadd.xlane.f32.xlu0 %v1123
      %v1125 = vpop.xlane.xlu0 %1124
      %v1126 = vrcp.pop 32.0
      %v1127 = vmul.f32 %v1125, %v1126
      %v1128 = vsub.f32 %v1120, %v1127
      %v1129 = vmul.f32 %v1128, %v1128
      %v1130 = vsel %vm478, %v1129, 0.0
      %1131 = vadd.xlane.f32.xlu0 %v1130
      %v1132 = vpop.xlane.xlu0 %1131
      %v1133 = vrcp.pop 31.0
      %v1134 = vmul.f32 %v1132, %v1133
      %v1136 = vlaneseq
      %v1137 = vshrl.u32 %v1136, 7
      %v1138 = vsub.s32 0, %v1137
      %v1139 = vrot.slane %v1121, %v1138
      %v1141 = vmul.f32 %v1139, %v1128
      %v1142 = vrsqrt.pop %v1134
      %v1143 = vmul.f32 %v1134, %v1142
      %vm1144 = vcmp.eq.f32.partialorder %v1134, inf
      %v1145 = vsel %vm1144, %v1134, %v1143
      %vm1146 = vcmp.eq.f32.partialorder %v1134, 0.0
      %v1147 = vand.u32 %v1134, 2147483648
      %v1148 = vsel %vm1146, %v1147, %v1145
      %v1149 = vadd.f32 %v1148, 1e-06
      %v1150 = vrcp.pop %v1149
      %v1151 = vmul.f32 %v1141, %v1150
      %v1153 = vlaneseq
      %v1154 = vshrl.u32 %v1153, 7
      %v1155 = vsub.s32 0, %v1154
      %v1156 = vrot.slane %v1122, %v1155
      %v1158 = vadd.f32 %v1151, %v1156
      %1159 = vst.msk [vmem:[%s459] sm:$0xff] %vm478, %v1158
      %p1160 = scmp.lt.s32.totalorder %s23, 1
      %s1161 = scalar_select %p1160, %s23, 1
      %s1162 = smul.addr %s1161, 8
      %s1163 = scalar_lea.vmem %s12, %s1162
      // Predicated region
      $region69: #{_lambda_.20} parent=67 // pred_check
        %p1164 = pneg %p313
      $region70: #{_lambda_.20} parent=67 // pred_check_branch
        %1166 = sbr.rel (%p1164) target = $region72
      $region71: #{_lambda_.20} parent=67 // pred_region
        _
      $region72: #{_lambda_.20} parent=67 // pred_fallthru
        _
    $region68: #{_lambda_.20} parent=5 // pred_fallthru
      _
    %p1167 = scmp.le.s32.totalorder 2, %s18
    // Predicated region
    $region73: #{_lambda_.20} parent=5 // pred_check
      %p1168 = pneg %p1167
    $region74: #{_lambda_.20} parent=5 // pred_check_branch
      %1170 = sbr.rel (%p1168) target = $region76
    $region75: #{_lambda_.20} parent=5 // pred_region
      %s1171 = ssub.s32 %s18, 2
      // Predicated region
      $region77: #{_lambda_.20} parent=75 // pred_check
        %p1172 = pneg %p319
      $region78: #{_lambda_.20} parent=75 // pred_check_branch
        %1174 = sbr.rel (%p1172) target = $region80
      $region79: #{_lambda_.20} parent=75 // pred_region
        %p1175 = scmp.lt.s32.totalorder %s24, 1
        %s1176 = scalar_select %p1175, %s24, 1
        %s1177 = smul.addr %s1176, 8
        %s1178 = scalar_lea.vmem %s12, %s1177
      $region80: #{_lambda_.20} parent=75 // pred_fallthru
        _
    $region76: #{_lambda_.20} parent=5 // pred_fallthru
      _
  $region6: #{_lambda_.20} parent=0 // loop_footer
    %s22 = sadd.s32 1, %s18
  $region7: #{_lambda_.20} parent=0 // loop_footer_branch
    %17 = sbr.rel target = $region3
  $region8: #{_lambda_.20} parent=0 // loop_exit
    _

// kernel: _lambda_.18
$region0: #{_lambda_.18}
  #allocation0 [shape = 'u32[]', space=smem, size = 0x4, offset = 0x4, fixed_abs, tag = 'smem constant byte address 0x4 - core index']
  #allocation1 [shape = 'u32[144,128]{1,0:T(1,128)}', space=vmem, size = 0x12000, scoped, tag = 'internal scratch']
  %s0 = inlined_call_operand.vmem [shape: f32[2,8,32], index: 0, kind: input, shape index: {}, may-alias: {0,1}]
  %s1 = inlined_call_operand.vmem [shape: f32[2,8,32], index: 1, kind: input, shape index: {}, may-alias: {0,1}]
  %s2 = inlined_call_operand.vmem [shape: f32[2,1,8], index: 2, kind: input, shape index: {}]
  %s3 = inlined_call_operand.vmem [shape: f32[32,32], index: 3, kind: input, shape index: {}]
  %s4 = inlined_call_operand.vmem [shape: f32[1,32], index: 4, kind: input, shape index: {}]
  %s5 = inlined_call_operand.vmem [shape: f32[32,64], index: 5, kind: input, shape index: {}]
  %s6 = inlined_call_operand.vmem [shape: f32[1,64], index: 6, kind: input, shape index: {}]
  %s7 = inlined_call_operand.vmem [shape: f32[32,32], index: 7, kind: input, shape index: {}]
  %s8 = inlined_call_operand.vmem [shape: f32[1,32], index: 8, kind: input, shape index: {}]
  %s9 = inlined_call_operand.vmem [shape: f32[1,32], index: 9, kind: input, shape index: {}]
  %s10 = inlined_call_operand.vmem [shape: f32[1,32], index: 10, kind: input, shape index: {}]
  %s11 = inlined_call_operand.vmem [shape: f32[2,8,32], index: 11, kind: output, shape index: {}]
  %s12 = sld [smem:[#allocation0]]
  $region77: #{_lambda_.18} parent=0
    _
  %s14 = ssub.s32 1, %s12
  %s15 = scalar_select 0, %s14, %s12
  loop: start=0, step=1, limit=4
  $region2: #{_lambda_.18} parent=0 // loop_pre_header
    _
  $region3: #{_lambda_.18} parent=0 // loop_header
    %s17 = sphi 0, %s21
    %p18 = scmp.ge.s32.totalorder %s17, 4
    %s27 = sphi 0, %s29
    %s30 = sphi 0, %s27
    %s31 = sphi 0, %s30
    %s47 = sphi 0, %s31
    %s53 = sphi 0, %s55
    %s56 = sphi 0, %s53
    %s57 = sphi 0, %s56
    %s73 = sphi 0, %s57
    %s79 = sphi 0, %s81
    %s82 = sphi 0, %s79
    %s83 = sphi 0, %s82
    %s99 = sphi 0, %s83
    %s103 = sphi 0, %s103
    %s105 = sphi 0, %s103
    %s106 = sphi 0, %s105
    %s120 = sphi 0, %s106
    %s124 = sphi 0, %s124
    %s126 = sphi 0, %s124
    %s127 = sphi 0, %s126
    %s141 = sphi 0, %s127
    %s145 = sphi 0, %s145
    %s147 = sphi 0, %s145
    %s148 = sphi 0, %s147
    %s162 = sphi 0, %s148
    %s166 = sphi 0, %s166
    %s168 = sphi 0, %s166
    %s169 = sphi 0, %s168
    %s183 = sphi 0, %s169
    %s187 = sphi 0, %s187
    %s189 = sphi 0, %s187
    %s190 = sphi 0, %s189
    %s204 = sphi 0, %s190
    %s208 = sphi 0, %s208
    %s210 = sphi 0, %s208
    %s211 = sphi 0, %s210
    %s225 = sphi 0, %s211
    %s229 = sphi 0, %s229
    %s231 = sphi 0, %s229
    %s232 = sphi 0, %s231
    %s246 = sphi 0, %s232
    %s250 = sphi 0, %s250
    %s252 = sphi 0, %s250
    %s253 = sphi 0, %s252
    %s267 = sphi 0, %s253
    %s273 = sphi 0, %s275
    %s276 = sphi 0, %s273
    %s277 = sphi 0, %s276
    %s293 = sphi 0, %s277
  $region4: #{_lambda_.18} parent=0 // loop_header_branch
    %20 = sbr.rel (%p18) target = $region8
  $region5: #{_lambda_.18} parent=0 // loop_body
    %s22 = ssub.s32 %s17, 1
    %s23 = ssub.s32 %s17, 2
    %s24 = sadd.s32 %s17, 1
    %s25 = ssub.s32 %s17, %s24
    %p26 = scmp.eq.s32.totalorder %s25, 0
    %s28 = sadd.s32 %s27, 1
    %s29 = scalar_select %p26, %s27, %s28
    %p32 = pneg %p26
    %p33 = scmp.eq.s32.totalorder %s17, 1
    %p34 = por %p32, %p33
    %p35 = scmp.ne.s32.totalorder %s27, %s30
    %p36 = scmp.eq.s32.totalorder %s17, 0
    %p37 = por %p35, %p36
    %p38 = scmp.ne.s32.totalorder %s27, %s30
    %p39 = scmp.eq.s32.totalorder %s22, 1
    %p40 = por %p38, %p39
    %p41 = scmp.ne.s32.totalorder %s30, %s31
    %p42 = scmp.eq.s32.totalorder %s22, 0
    %p43 = por %p41, %p42
    %p44 = scmp.ne.s32.totalorder %s30, %s31
    %p45 = scmp.eq.s32.totalorder %s23, 1
    %p46 = por %p44, %p45
    %p48 = scmp.ne.s32.totalorder %s31, %s47
    %p49 = scmp.eq.s32.totalorder %s23, 0
    %p50 = por %p48, %p49
    %s51 = ssub.s32 %s17, %s24
    %p52 = scmp.eq.s32.totalorder %s51, 0
    %s54 = sadd.s32 %s53, 1
    %s55 = scalar_select %p52, %s53, %s54
    %p58 = pneg %p52
    %p59 = scmp.eq.s32.totalorder %s17, 1
    %p60 = por %p58, %p59
    %p61 = scmp.ne.s32.totalorder %s53, %s56
    %p62 = scmp.eq.s32.totalorder %s17, 0
    %p63 = por %p61, %p62
    %p64 = scmp.ne.s32.totalorder %s53, %s56
    %p65 = scmp.eq.s32.totalorder %s22, 1
    %p66 = por %p64, %p65
    %p67 = scmp.ne.s32.totalorder %s56, %s57
    %p68 = scmp.eq.s32.totalorder %s22, 0
    %p69 = por %p67, %p68
    %p70 = scmp.ne.s32.totalorder %s56, %s57
    %p71 = scmp.eq.s32.totalorder %s23, 1
    %p72 = por %p70, %p71
    %p74 = scmp.ne.s32.totalorder %s57, %s73
    %p75 = scmp.eq.s32.totalorder %s23, 0
    %p76 = por %p74, %p75
    %s77 = ssub.s32 %s17, %s24
    %p78 = scmp.eq.s32.totalorder %s77, 0
    %s80 = sadd.s32 %s79, 1
    %s81 = scalar_select %p78, %s79, %s80
    %p84 = pneg %p78
    %p85 = scmp.eq.s32.totalorder %s17, 1
    %p86 = por %p84, %p85
    %p87 = scmp.ne.s32.totalorder %s79, %s82
    %p88 = scmp.eq.s32.totalorder %s17, 0
    %p89 = por %p87, %p88
    %p90 = scmp.ne.s32.totalorder %s79, %s82
    %p91 = scmp.eq.s32.totalorder %s22, 1
    %p92 = por %p90, %p91
    %p93 = scmp.ne.s32.totalorder %s82, %s83
    %p94 = scmp.eq.s32.totalorder %s22, 0
    %p95 = por %p93, %p94
    %p96 = scmp.ne.s32.totalorder %s82, %s83
    %p97 = scmp.eq.s32.totalorder %s23, 1
    %p98 = por %p96, %p97
    %p100 = scmp.ne.s32.totalorder %s83, %s99
    %p101 = scmp.eq.s32.totalorder %s23, 0
    %p102 = por %p100, %p101
    %s104 = sadd.s32 %s103, 1
    %p107 = scmp.eq.s32.totalorder %s17, 1
    %p108 = scmp.ne.s32.totalorder %s103, %s105
    %p109 = scmp.eq.s32.totalorder %s17, 0
    %p110 = por %p108, %p109
    %p111 = scmp.ne.s32.totalorder %s103, %s105
    %p112 = scmp.eq.s32.totalorder %s22, 1
    %p113 = por %p111, %p112
    %p114 = scmp.ne.s32.totalorder %s105, %s106
    %p115 = scmp.eq.s32.totalorder %s22, 0
    %p116 = por %p114, %p115
    %p117 = scmp.ne.s32.totalorder %s105, %s106
    %p118 = scmp.eq.s32.totalorder %s23, 1
    %p119 = por %p117, %p118
    %p121 = scmp.ne.s32.totalorder %s106, %s120
    %p122 = scmp.eq.s32.totalorder %s23, 0
    %p123 = por %p121, %p122
    %s125 = sadd.s32 %s124, 1
    %p128 = scmp.eq.s32.totalorder %s17, 1
    %p129 = scmp.ne.s32.totalorder %s124, %s126
    %p130 = scmp.eq.s32.totalorder %s17, 0
    %p131 = por %p129, %p130
    %p132 = scmp.ne.s32.totalorder %s124, %s126
    %p133 = scmp.eq.s32.totalorder %s22, 1
    %p134 = por %p132, %p133
    %p135 = scmp.ne.s32.totalorder %s126, %s127
    %p136 = scmp.eq.s32.totalorder %s22, 0
    %p137 = por %p135, %p136
    %p138 = scmp.ne.s32.totalorder %s126, %s127
    %p139 = scmp.eq.s32.totalorder %s23, 1
    %p140 = por %p138, %p139
    %p142 = scmp.ne.s32.totalorder %s127, %s141
    %p143 = scmp.eq.s32.totalorder %s23, 0
    %p144 = por %p142, %p143
    %s146 = sadd.s32 %s145, 1
    %p149 = scmp.eq.s32.totalorder %s17, 1
    %p150 = scmp.ne.s32.totalorder %s145, %s147
    %p151 = scmp.eq.s32.totalorder %s17, 0
    %p152 = por %p150, %p151
    %p153 = scmp.ne.s32.totalorder %s145, %s147
    %p154 = scmp.eq.s32.totalorder %s22, 1
    %p155 = por %p153, %p154
    %p156 = scmp.ne.s32.totalorder %s147, %s148
    %p157 = scmp.eq.s32.totalorder %s22, 0
    %p158 = por %p156, %p157
    %p159 = scmp.ne.s32.totalorder %s147, %s148
    %p160 = scmp.eq.s32.totalorder %s23, 1
    %p161 = por %p159, %p160
    %p163 = scmp.ne.s32.totalorder %s148, %s162
    %p164 = scmp.eq.s32.totalorder %s23, 0
    %p165 = por %p163, %p164
    %s167 = sadd.s32 %s166, 1
    %p170 = scmp.eq.s32.totalorder %s17, 1
    %p171 = scmp.ne.s32.totalorder %s166, %s168
    %p172 = scmp.eq.s32.totalorder %s17, 0
    %p173 = por %p171, %p172
    %p174 = scmp.ne.s32.totalorder %s166, %s168
    %p175 = scmp.eq.s32.totalorder %s22, 1
    %p176 = por %p174, %p175
    %p177 = scmp.ne.s32.totalorder %s168, %s169
    %p178 = scmp.eq.s32.totalorder %s22, 0
    %p179 = por %p177, %p178
    %p180 = scmp.ne.s32.totalorder %s168, %s169
    %p181 = scmp.eq.s32.totalorder %s23, 1
    %p182 = por %p180, %p181
    %p184 = scmp.ne.s32.totalorder %s169, %s183
    %p185 = scmp.eq.s32.totalorder %s23, 0
    %p186 = por %p184, %p185
    %s188 = sadd.s32 %s187, 1
    %p191 = scmp.eq.s32.totalorder %s17, 1
    %p192 = scmp.ne.s32.totalorder %s187, %s189
    %p193 = scmp.eq.s32.totalorder %s17, 0
    %p194 = por %p192, %p193
    %p195 = scmp.ne.s32.totalorder %s187, %s189
    %p196 = scmp.eq.s32.totalorder %s22, 1
    %p197 = por %p195, %p196
    %p198 = scmp.ne.s32.totalorder %s189, %s190
    %p199 = scmp.eq.s32.totalorder %s22, 0
    %p200 = por %p198, %p199
    %p201 = scmp.ne.s32.totalorder %s189, %s190
    %p202 = scmp.eq.s32.totalorder %s23, 1
    %p203 = por %p201, %p202
    %p205 = scmp.ne.s32.totalorder %s190, %s204
    %p206 = scmp.eq.s32.totalorder %s23, 0
    %p207 = por %p205, %p206
    %s209 = sadd.s32 %s208, 1
    %p212 = scmp.eq.s32.totalorder %s17, 1
    %p213 = scmp.ne.s32.totalorder %s208, %s210
    %p214 = scmp.eq.s32.totalorder %s17, 0
    %p215 = por %p213, %p214
    %p216 = scmp.ne.s32.totalorder %s208, %s210
    %p217 = scmp.eq.s32.totalorder %s22, 1
    %p218 = por %p216, %p217
    %p219 = scmp.ne.s32.totalorder %s210, %s211
    %p220 = scmp.eq.s32.totalorder %s22, 0
    %p221 = por %p219, %p220
    %p222 = scmp.ne.s32.totalorder %s210, %s211
    %p223 = scmp.eq.s32.totalorder %s23, 1
    %p224 = por %p222, %p223
    %p226 = scmp.ne.s32.totalorder %s211, %s225
    %p227 = scmp.eq.s32.totalorder %s23, 0
    %p228 = por %p226, %p227
    %s230 = sadd.s32 %s229, 1
    %p233 = scmp.eq.s32.totalorder %s17, 1
    %p234 = scmp.ne.s32.totalorder %s229, %s231
    %p235 = scmp.eq.s32.totalorder %s17, 0
    %p236 = por %p234, %p235
    %p237 = scmp.ne.s32.totalorder %s229, %s231
    %p238 = scmp.eq.s32.totalorder %s22, 1
    %p239 = por %p237, %p238
    %p240 = scmp.ne.s32.totalorder %s231, %s232
    %p241 = scmp.eq.s32.totalorder %s22, 0
    %p242 = por %p240, %p241
    %p243 = scmp.ne.s32.totalorder %s231, %s232
    %p244 = scmp.eq.s32.totalorder %s23, 1
    %p245 = por %p243, %p244
    %p247 = scmp.ne.s32.totalorder %s232, %s246
    %p248 = scmp.eq.s32.totalorder %s23, 0
    %p249 = por %p247, %p248
    %s251 = sadd.s32 %s250, 1
    %p254 = scmp.eq.s32.totalorder %s17, 1
    %p255 = scmp.ne.s32.totalorder %s250, %s252
    %p256 = scmp.eq.s32.totalorder %s17, 0
    %p257 = por %p255, %p256
    %p258 = scmp.ne.s32.totalorder %s250, %s252
    %p259 = scmp.eq.s32.totalorder %s22, 1
    %p260 = por %p258, %p259
    %p261 = scmp.ne.s32.totalorder %s252, %s253
    %p262 = scmp.eq.s32.totalorder %s22, 0
    %p263 = por %p261, %p262
    %p264 = scmp.ne.s32.totalorder %s252, %s253
    %p265 = scmp.eq.s32.totalorder %s23, 1
    %p266 = por %p264, %p265
    %p268 = scmp.ne.s32.totalorder %s253, %s267
    %p269 = scmp.eq.s32.totalorder %s23, 0
    %p270 = por %p268, %p269
    %s271 = ssub.s32 %s17, %s24
    %p272 = scmp.eq.s32.totalorder %s271, 0
    %s274 = sadd.s32 %s273, 1
    %s275 = scalar_select %p272, %s273, %s274
    %p278 = pneg %p272
    %p279 = scmp.eq.s32.totalorder %s17, 1
    %p280 = por %p278, %p279
    %p281 = scmp.ne.s32.totalorder %s273, %s276
    %p282 = scmp.eq.s32.totalorder %s17, 0
    %p283 = por %p281, %p282
    %p284 = scmp.ne.s32.totalorder %s273, %s276
    %p285 = scmp.eq.s32.totalorder %s22, 1
    %p286 = por %p284, %p285
    %p287 = scmp.ne.s32.totalorder %s276, %s277
    %p288 = scmp.eq.s32.totalorder %s22, 0
    %p289 = por %p287, %p288
    %p290 = scmp.ne.s32.totalorder %s276, %s277
    %p291 = scmp.eq.s32.totalorder %s23, 1
    %p292 = por %p290, %p291
    %p294 = scmp.ne.s32.totalorder %s277, %s293
    %p295 = scmp.eq.s32.totalorder %s23, 0
    %p296 = por %p294, %p295
    %p297 = scmp.le.s32.totalorder 1, %s17
    %p298 = scmp.lt.s32.totalorder %s17, 3
    %p299 = pnand %p297, %p298
    %p300 = pneg %p299
    // Predicated region
    $region9: #{_lambda_.18} parent=5 // pred_check
      _
    $region10: #{_lambda_.18} parent=5 // pred_check_branch
      %302 = sbr.rel (%p299) target = $region12
    $region11: #{_lambda_.18} parent=5 // pred_region
      %s303 = ssub.s32 %s17, 1
      // Predicated region
      $region13: #{_lambda_.18} parent=11 // pred_check
        %p304 = pneg %p116
      $region14: #{_lambda_.18} parent=11 // pred_check_branch
        %306 = sbr.rel (%p304) target = $region16
      $region15: #{_lambda_.18} parent=11 // pred_region
        _
      $region16: #{_lambda_.18} parent=11 // pred_fallthru
        _
      // Predicated region
      $region17: #{_lambda_.18} parent=11 // pred_check
        %p307 = pneg %p137
      $region18: #{_lambda_.18} parent=11 // pred_check_branch
        %309 = sbr.rel (%p307) target = $region20
      $region19: #{_lambda_.18} parent=11 // pred_region
        _
      $region20: #{_lambda_.18} parent=11 // pred_fallthru
        _
      // Predicated region
      $region21: #{_lambda_.18} parent=11 // pred_check
        %p310 = pneg %p158
      $region22: #{_lambda_.18} parent=11 // pred_check_branch
        %312 = sbr.rel (%p310) target = $region24
      $region23: #{_lambda_.18} parent=11 // pred_region
        _
      $region24: #{_lambda_.18} parent=11 // pred_fallthru
        _
      // Predicated region
      $region25: #{_lambda_.18} parent=11 // pred_check
        %p313 = pneg %p179
      $region26: #{_lambda_.18} parent=11 // pred_check_branch
        %315 = sbr.rel (%p313) target = $region28
      $region27: #{_lambda_.18} parent=11 // pred_region
        _
      $region28: #{_lambda_.18} parent=11 // pred_fallthru
        _
      // Predicated region
      $region29: #{_lambda_.18} parent=11 // pred_check
        %p316 = pneg %p200
      $region30: #{_lambda_.18} parent=11 // pred_check_branch
        %318 = sbr.rel (%p316) target = $region32
      $region31: #{_lambda_.18} parent=11 // pred_region
        _
      $region32: #{_lambda_.18} parent=11 // pred_fallthru
        _
      // Predicated region
      $region33: #{_lambda_.18} parent=11 // pred_check
        %p319 = pneg %p221
      $region34: #{_lambda_.18} parent=11 // pred_check_branch
        %321 = sbr.rel (%p319) target = $region36
      $region35: #{_lambda_.18} parent=11 // pred_region
        _
      $region36: #{_lambda_.18} parent=11 // pred_fallthru
        _
      // Predicated region
      $region37: #{_lambda_.18} parent=11 // pred_check
        %p322 = pneg %p242
      $region38: #{_lambda_.18} parent=11 // pred_check_branch
        %324 = sbr.rel (%p322) target = $region40
      $region39: #{_lambda_.18} parent=11 // pred_region
        _
      $region40: #{_lambda_.18} parent=11 // pred_fallthru
        _
      // Predicated region
      $region41: #{_lambda_.18} parent=11 // pred_check
        %p325 = pneg %p263
      $region42: #{_lambda_.18} parent=11 // pred_check_branch
        %327 = sbr.rel (%p325) target = $region44
      $region43: #{_lambda_.18} parent=11 // pred_region
        _
      $region44: #{_lambda_.18} parent=11 // pred_fallthru
        _
    $region12: #{_lambda_.18} parent=5 // pred_fallthru
      _
    %p328 = scmp.lt.s32.totalorder %s17, 2
    // Predicated region
    $region45: #{_lambda_.18} parent=5 // pred_check
      %p329 = pneg %p328
    $region46: #{_lambda_.18} parent=5 // pred_check_branch
      %331 = sbr.rel (%p329) target = $region48
    $region47: #{_lambda_.18} parent=5 // pred_region
      // Predicated region
      $region49: #{_lambda_.18} parent=47 // pred_check
        %p332 = pneg %p37
      $region50: #{_lambda_.18} parent=47 // pred_check_branch
        %334 = sbr.rel (%p332) target = $region52
      $region51: #{_lambda_.18} parent=47 // pred_region
        %p335 = scmp.lt.s32.totalorder %s17, 1
        %s336 = scalar_select %p335, %s17, 1
        %s337 = smul.addr %s336, 8
        %s338 = scalar_lea.vmem %s0, %s337
      $region52: #{_lambda_.18} parent=47 // pred_fallthru
        _
      // Predicated region
      $region53: #{_lambda_.18} parent=47 // pred_check
        %p339 = pneg %p63
      $region54: #{_lambda_.18} parent=47 // pred_check_branch
        %341 = sbr.rel (%p339) target = $region56
      $region55: #{_lambda_.18} parent=47 // pred_region
        %p342 = scmp.lt.s32.totalorder %s17, 1
        %s343 = scalar_select %p342, %s17, 1
        %s344 = smul.addr %s343, 8
        %s345 = scalar_lea.vmem %s1, %s344
      $region56: #{_lambda_.18} parent=47 // pred_fallthru
        _
      // Predicated region
      $region57: #{_lambda_.18} parent=47 // pred_check
        %p346 = pneg %p89
      $region58: #{_lambda_.18} parent=47 // pred_check_branch
        %348 = sbr.rel (%p346) target = $region60
      $region59: #{_lambda_.18} parent=47 // pred_region
        %p349 = scmp.lt.s32.totalorder %s17, 1
        %s350 = scalar_select %p349, %s17, 1
        %s351 = scalar_lea.vmem %s2, %s350
      $region60: #{_lambda_.18} parent=47 // pred_fallthru
        _
    $region48: #{_lambda_.18} parent=5 // pred_fallthru
      _
    %p352 = scmp.le.s32.totalorder 1, %s17
    %p353 = scmp.lt.s32.totalorder %s17, 3
    %p354 = pnand %p352, %p353
    %p355 = pneg %p354
    // Predicated region
    $region61: #{_lambda_.18} parent=5 // pred_check
      _
    $region62: #{_lambda_.18} parent=5 // pred_check_branch
      %357 = sbr.rel (%p354) target = $region64
    $region63: #{_lambda_.18} parent=5 // pred_region
      %s358 = ssub.s32 %s17, 1
      %p359 = scmp.lt.s32.totalorder %s22, 1
      %s360 = scalar_select %p359, %s22, 1
      %s361 = smul.addr %s360, 8
      %s362 = scalar_lea.vmem %s0, %s361
      %p363 = pneg %p43
      %p364 = pneg %p40
      %p365 = scmp.lt.s32.totalorder %s22, 1
      %s366 = scalar_select %p365, %s22, 1
      %s367 = smul.addr %s366, 8
      %s368 = scalar_lea.vmem %s1, %s367
      %p369 = pneg %p69
      %p370 = pneg %p66
      %p371 = scmp.lt.s32.totalorder %s22, 1
      %s372 = scalar_select %p371, %s22, 1
      %s373 = scalar_lea.vmem %s2, %s372
      %p374 = pneg %p95
      %p375 = pneg %p92
      %p376 = pneg %p116
      %p377 = pneg %p113
      %p378 = pneg %p137
      %p379 = pneg %p134
      %p380 = pneg %p158
      %p381 = pneg %p155
      %p382 = pneg %p179
      %p383 = pneg %p176
      %p384 = pneg %p200
      %p385 = pneg %p197
      %p386 = pneg %p221
      %p387 = pneg %p218
      %p388 = pneg %p242
      %p389 = pneg %p239
      %p390 = pneg %p263
      %p391 = pneg %p260
      %p392 = pneg %p289
      %p393 = pneg %p286
      %p394 = scmp.lt.s32.totalorder %s22, 1
      %s395 = scalar_select %p394, %s22, 1
      %s396 = smul.addr %s395, 8
      %s397 = scalar_lea.vmem %s11, %s396
      %p398 = scmp.lt.s32.totalorder %s22, 1
      %s399 = scalar_select %p398, %s22, 1
      %s400 = smul.addr %s399, 8
      %s401 = scalar_lea.vmem %s0, %s400
      %p402 = scmp.lt.s32.totalorder %s22, 1
      %s403 = scalar_select %p402, %s22, 1
      %s404 = smul.addr %s403, 8
      %s405 = scalar_lea.vmem %s1, %s404
      %p406 = scmp.lt.s32.totalorder %s22, 1
      %s407 = scalar_select %p406, %s22, 1
      %s408 = scalar_lea.vmem %s2, %s407
      %p409 = scmp.lt.s32.totalorder %s22, 1
      %s410 = scalar_select %p409, %s22, 1
      %s411 = smul.addr %s410, 8
      %s412 = scalar_lea.vmem %s11, %s411
      %v414 = vld [vmem:[%s401] sm:$0xff]
      %v415 = vld [vmem:[%s405] sm:$0xff]
      %v416 = vld [vmem:[%s408] sm:$0x1]
      %v417 = vld [vmem:[%s3] sm:$0xff]
      %v418 = vld [vmem:[%s3 + $0x8] sm:$0xff]
      %v419 = vld [vmem:[%s3 + $0x10] sm:$0xff]
      %v420 = vld [vmem:[%s3 + $0x18] sm:$0xff]
      %v421 = vpack.c.bf16 %v414, %v414
      %v422 = vpack.c.bf16 %v418, %v417
      %v423 = vpack.c.bf16 %v420, %v419
      %v424 = vld [vmem:[%s4] sm:$0x1]
      %v426 = vlaneseq
      %v427 = vshrl.u32 %v426, 7
      %v428 = vsub.s32 0, %v427
      %v429 = vrot.slane %v424, %v428
      %vm431 = vcmask 261120
      %v433 = vsel %vm431, %v421, 0
      %435 = vmatprep.subr.bf16.mxu0 0
      %436 = vmatpush1.bf16.msra.mxu0 %v422
      %437 = vmatprep.subr.bf16.mxu0 0
      %438 = vmatpush1.bf16.msra.mxu0 %v423
      %439 = vmatprep.subr.bf16.mxu0 0
      %440 = vmatpush1.bf16.msra.mxu0 0
      %441 = vmatprep.subr.bf16.mxu0 0
      %442 = vmatpush1.bf16.msra.mxu0 0
      %443 = vmatprep.subr.bf16.mxu0 0
      %444 = vmatpush1.bf16.msra.mxu0 0
      %445 = vmatprep.subr.bf16.mxu0 0
      %446 = vmatpush1.bf16.msra.mxu0 0
      %447 = vmatprep.subr.bf16.mxu0 0
      %448 = vmatpush1.bf16.msra.mxu0 0
      %449 = vmatprep.subr.bf16.mxu0 0
      %450 = vmatpush1.bf16.msra.mxu0 0
      %451 = vmatprep.subr.bf16.mxu0 0
      %452 = vmatpush1.bf16.msra.mxu0 0
      %453 = vmatprep.subr.bf16.mxu0 0
      %454 = vmatpush1.bf16.msra.mxu0 0
      %455 = vmatprep.subr.bf16.mxu0 0
      %456 = vmatpush1.bf16.msra.mxu0 0
      %457 = vmatprep.subr.bf16.mxu0 0
      %458 = vmatpush1.bf16.msra.mxu0 0
      %459 = vmatprep.subr.bf16.mxu0 0
      %460 = vmatpush1.bf16.msra.mxu0 0
      %461 = vmatprep.subr.bf16.mxu0 0
      %462 = vmatpush1.bf16.msra.mxu0 0
      %463 = vmatprep.subr.bf16.mxu0 0
      %464 = vmatpush1.bf16.msra.mxu0 0
      %465 = vmatprep.subr.bf16.mxu0 0
      %466 = vmatpush1.bf16.msra.mxu0 0
      %467 = vmatprep.mubr.bf16.mxu0 0
      %468 = vmatmul.mubr.bf16.gmra.mrb[0].mxu0 %v433
      %v469 = vpop.f32.mrb[0].mxu0
      %v470 = vadd.f32 %v429, %v469
      %v471 = vpop.f32.mrb[0].mxu0
      %v472 = vpop.f32.mrb[0].mxu0
      %v473 = vpop.f32.mrb[0].mxu0
      %474 = vdwg.mxu0
      %v475 = vld [vmem:[%s5] sm:$0xff]
      %v476 = vld [vmem:[%s5 + $0x8] sm:$0xff]
      %v477 = vld [vmem:[%s5 + $0x10] sm:$0xff]
      %v478 = vld [vmem:[%s5 + $0x18] sm:$0xff]
      %v479 = vpack.c.bf16 %v415, %v415
      %v480 = vpack.c.bf16 %v476, %v475
      %v481 = vpack.c.bf16 %v478, %v477
      %v482 = vld [vmem:[%s6] sm:$0x1]
      %v484 = vlaneseq
      %v485 = vshrl.u32 %v484, 7
      %v486 = vsub.s32 0, %v485
      %v487 = vrot.slane %v482, %v486
      %v490 = vsel %vm431, %v479, 0
      %492 = vmatprep.subr.bf16.mxu0 0
      %493 = vmatpush1.bf16.msra.mxu0 %v480
      %494 = vmatprep.subr.bf16.mxu0 0
      %495 = vmatpush1.bf16.msra.mxu0 %v481
      %496 = vmatprep.subr.bf16.mxu0 0
      %497 = vmatpush1.bf16.msra.mxu0 0
      %498 = vmatprep.subr.bf16.mxu0 0
      %499 = vmatpush1.bf16.msra.mxu0 0
      %500 = vmatprep.subr.bf16.mxu0 0
      %501 = vmatpush1.bf16.msra.mxu0 0
      %502 = vmatprep.subr.bf16.mxu0 0
      %503 = vmatpush1.bf16.msra.mxu0 0
      %504 = vmatprep.subr.bf16.mxu0 0
      %505 = vmatpush1.bf16.msra.mxu0 0
      %506 = vmatprep.subr.bf16.mxu0 0
      %507 = vmatpush1.bf16.msra.mxu0 0
      %508 = vmatprep.subr.bf16.mxu0 0
      %509 = vmatpush1.bf16.msra.mxu0 0
      %510 = vmatprep.subr.bf16.mxu0 0
      %511 = vmatpush1.bf16.msra.mxu0 0
      %512 = vmatprep.subr.bf16.mxu0 0
      %513 = vmatpush1.bf16.msra.mxu0 0
      %514 = vmatprep.subr.bf16.mxu0 0
      %515 = vmatpush1.bf16.msra.mxu0 0
      %516 = vmatprep.subr.bf16.mxu0 0
      %517 = vmatpush1.bf16.msra.mxu0 0
      %518 = vmatprep.subr.bf16.mxu0 0
      %519 = vmatpush1.bf16.msra.mxu0 0
      %520 = vmatprep.subr.bf16.mxu0 0
      %521 = vmatpush1.bf16.msra.mxu0 0
      %522 = vmatprep.subr.bf16.mxu0 0
      %523 = vmatpush1.bf16.msra.mxu0 0
      %524 = vmatprep.mubr.bf16.mxu0 0
      %525 = vmatmul.mubr.bf16.gmra.mrb[0].mxu0 %v490
      %v526 = vpop.f32.mrb[0].mxu0
      %v527 = vadd.f32 %v487, %v526
      %v528 = vpop.f32.mrb[0].mxu0
      %v529 = vpop.f32.mrb[0].mxu0
      %v530 = vpop.f32.mrb[0].mxu0
      %531 = vdwg.mxu0
      %v532 = vpack.c.bf16 %v470, %v470
      %v533 = vpack.c.bf16 %v527, %v527
      %vm534 = vcmask 64512
      %v536 = vsel %vm534, %v532, 0
      %v539 = vsel %vm534, %v533, 0
      %541 = vmatprep.subr.bf16.mxu0 0
      %542 = vmatpush1.bf16.xpose.msra.mxu0 %v539
      %543 = vmatprep.subr.bf16.mxu0 0
      %544 = vmatpush1.bf16.xpose.msra.mxu0 0
      %545 = vmatprep.subr.bf16.mxu0 0
      %546 = vmatpush1.bf16.xpose.msra.mxu0 0
      %547 = vmatprep.subr.bf16.mxu0 0
      %548 = vmatpush1.bf16.xpose.msra.mxu0 0
      %549 = vmatprep.subr.bf16.mxu0 0
      %550 = vmatpush1.bf16.xpose.msra.mxu0 0
      %551 = vmatprep.subr.bf16.mxu0 0
      %552 = vmatpush1.bf16.xpose.msra.mxu0 0
      %553 = vmatprep.subr.bf16.mxu0 0
      %554 = vmatpush1.bf16.xpose.msra.mxu0 0
      %555 = vmatprep.subr.bf16.mxu0 0
      %556 = vmatpush1.bf16.xpose.msra.mxu0 0
      %557 = vmatprep.subr.bf16.mxu0 0
      %558 = vmatpush1.bf16.xpose.msra.mxu0 0
      %559 = vmatprep.subr.bf16.mxu0 0
      %560 = vmatpush1.bf16.xpose.msra.mxu0 0
      %561 = vmatprep.subr.bf16.mxu0 0
      %562 = vmatpush1.bf16.xpose.msra.mxu0 0
      %563 = vmatprep.subr.bf16.mxu0 0
      %564 = vmatpush1.bf16.xpose.msra.mxu0 0
      %565 = vmatprep.subr.bf16.mxu0 0
      %566 = vmatpush1.bf16.xpose.msra.mxu0 0
      %567 = vmatprep.subr.bf16.mxu0 0
      %568 = vmatpush1.bf16.xpose.msra.mxu0 0
      %569 = vmatprep.subr.bf16.mxu0 0
      %570 = vmatpush1.bf16.xpose.msra.mxu0 0
      %571 = vmatprep.subr.bf16.mxu0 0
      %572 = vmatpush1.bf16.xpose.msra.mxu0 0
      %573 = vmatprep.mubr.bf16.mxu0 0
      %574 = vmatmul.mubr.bf16.gmra.mrb[0].mxu0 %v536
      %v575 = vpop.f32.mrb[0].mxu0
      %v576 = vadd.f32 0.0, %v575
      %v577 = vpop.f32.mrb[0].mxu0
      %v578 = vpop.f32.mrb[0].mxu0
      %v579 = vpop.f32.mrb[0].mxu0
      %580 = vdwg.mxu0
      %v581 = vmul.f32 %v576, 0.35355338
      %v583 = vlaneseq
      %v584 = vshrl.u32 %v583, 7
      %v585 = vsub.s32 0, %v584
      %v586 = vrot.slane %v416, %v585
      %v588 = vadd.f32 %v581, %v586
      %v589 = vsel %vm534, %v588, -inf
      %590 = vmax.xlane.f32.xlu0 %v589
      %v591 = vpop.xlane.xlu0 %590
      %v592 = vsub.f32 %v588, %v591
      %v593 = vmul.f32 %v592, 1.442695
      %v594 = vpow.pop %v593
      %v595 = vsel %vm534, %v594, 0.0
      %596 = vadd.xlane.f32.xlu0 %v595
      %v597 = vpop.xlane.xlu0 %596
      %v598 = vrcp.pop %v597
      %v599 = vmul.f32 %v594, %v598
      %v600 = vpack.c.bf16 %v599, %v599
      %602 = vrot.lane.b32.xlu0 %v533, 96
      %v603 = vpop.permute.xlu0 %602
      %v605 = vsel %vm534, %v600, 0
      %vm607 = vcmask 1043456
      %v609 = vsel %vm607, %v603, 0
      %611 = vmatprep.subr.bf16.mxu0 0
      %612 = vmatpush1.bf16.msra.mxu0 %v609
      %613 = vmatprep.subr.bf16.mxu0 0
      %614 = vmatpush1.bf16.msra.mxu0 0
      %615 = vmatprep.subr.bf16.mxu0 0
      %616 = vmatpush1.bf16.msra.mxu0 0
      %617 = vmatprep.subr.bf16.mxu0 0
      %618 = vmatpush1.bf16.msra.mxu0 0
      %619 = vmatprep.subr.bf16.mxu0 0
      %620 = vmatpush1.bf16.msra.mxu0 0
      %621 = vmatprep.subr.bf16.mxu0 0
      %622 = vmatpush1.bf16.msra.mxu0 0
      %623 = vmatprep.subr.bf16.mxu0 0
      %624 = vmatpush1.bf16.msra.mxu0 0
      %625 = vmatprep.subr.bf16.mxu0 0
      %626 = vmatpush1.bf16.msra.mxu0 0
      %627 = vmatprep.subr.bf16.mxu0 0
      %628 = vmatpush1.bf16.msra.mxu0 0
      %629 = vmatprep.subr.bf16.mxu0 0
      %630 = vmatpush1.bf16.msra.mxu0 0
      %631 = vmatprep.subr.bf16.mxu0 0
      %632 = vmatpush1.bf16.msra.mxu0 0
      %633 = vmatprep.subr.bf16.mxu0 0
      %634 = vmatpush1.bf16.msra.mxu0 0
      %635 = vmatprep.subr.bf16.mxu0 0
      %636 = vmatpush1.bf16.msra.mxu0 0
      %637 = vmatprep.subr.bf16.mxu0 0
      %638 = vmatpush1.bf16.msra.mxu0 0
      %639 = vmatprep.subr.bf16.mxu0 0
      %640 = vmatpush1.bf16.msra.mxu0 0
      %641 = vmatprep.subr.bf16.mxu0 0
      %642 = vmatpush1.bf16.msra.mxu0 0
      %643 = vmatprep.mubr.bf16.mxu0 0
      %644 = vmatmul.mubr.bf16.gmra.mrb[0].mxu0 %v605
      %v645 = vpop.f32.mrb[0].mxu0
      %v646 = vadd.f32 0.0, %v645
      %v647 = vpop.f32.mrb[0].mxu0
      %v648 = vpop.f32.mrb[0].mxu0
      %v649 = vpop.f32.mrb[0].mxu0
      %650 = vdwg.mxu0
      %652 = vrot.lane.b32.xlu0 %v532, 120
      %v653 = vpop.permute.xlu0 %652
      %654 = vrot.lane.b32.xlu0 %v533, 120
      %v655 = vpop.permute.xlu0 %654
      %v657 = vsel %vm534, %v653, 0
      %v660 = vsel %vm534, %v655, 0
      %662 = vmatprep.subr.bf16.mxu0 0
      %663 = vmatpush1.bf16.xpose.msra.mxu0 %v660
      %664 = vmatprep.subr.bf16.mxu0 0
      %665 = vmatpush1.bf16.xpose.msra.mxu0 0
      %666 = vmatprep.subr.bf16.mxu0 0
      %667 = vmatpush1.bf16.xpose.msra.mxu0 0
      %668 = vmatprep.subr.bf16.mxu0 0
      %669 = vmatpush1.bf16.xpose.msra.mxu0 0
      %670 = vmatprep.subr.bf16.mxu0 0
      %671 = vmatpush1.bf16.xpose.msra.mxu0 0
      %672 = vmatprep.subr.bf16.mxu0 0
      %673 = vmatpush1.bf16.xpose.msra.mxu0 0
      %674 = vmatprep.subr.bf16.mxu0 0
      %675 = vmatpush1.bf16.xpose.msra.mxu0 0
      %676 = vmatprep.subr.bf16.mxu0 0
      %677 = vmatpush1.bf16.xpose.msra.mxu0 0
      %678 = vmatprep.subr.bf16.mxu0 0
      %679 = vmatpush1.bf16.xpose.msra.mxu0 0
      %680 = vmatprep.subr.bf16.mxu0 0
      %681 = vmatpush1.bf16.xpose.msra.mxu0 0
      %682 = vmatprep.subr.bf16.mxu0 0
      %683 = vmatpush1.bf16.xpose.msra.mxu0 0
      %684 = vmatprep.subr.bf16.mxu0 0
      %685 = vmatpush1.bf16.xpose.msra.mxu0 0
      %686 = vmatprep.subr.bf16.mxu0 0
      %687 = vmatpush1.bf16.xpose.msra.mxu0 0
      %688 = vmatprep.subr.bf16.mxu0 0
      %689 = vmatpush1.bf16.xpose.msra.mxu0 0
      %690 = vmatprep.subr.bf16.mxu0 0
      %691 = vmatpush1.bf16.xpose.msra.mxu0 0
      %692 = vmatprep.subr.bf16.mxu0 0
      %693 = vmatpush1.bf16.xpose.msra.mxu0 0
      %694 = vmatprep.mubr.bf16.mxu0 0
      %695 = vmatmul.mubr.bf16.gmra.mrb[0].mxu0 %v657
      %v696 = vpop.f32.mrb[0].mxu0
      %v697 = vadd.f32 0.0, %v696
      %v698 = vpop.f32.mrb[0].mxu0
      %v699 = vpop.f32.mrb[0].mxu0
      %v700 = vpop.f32.mrb[0].mxu0
      %701 = vdwg.mxu0
      %v702 = vmul.f32 %v697, 0.35355338
      %v703 = vadd.f32 %v702, %v586
      %v704 = vsel %vm534, %v703, -inf
      %705 = vmax.xlane.f32.xlu0 %v704
      %v706 = vpop.xlane.xlu0 %705
      %v707 = vsub.f32 %v703, %v706
      %v708 = vmul.f32 %v707, 1.442695
      %v709 = vpow.pop %v708
      %v710 = vsel %vm534, %v709, 0.0
      %711 = vadd.xlane.f32.xlu0 %v710
      %v712 = vpop.xlane.xlu0 %711
      %v713 = vrcp.pop %v712
      %v714 = vmul.f32 %v709, %v713
      %v715 = vpack.c.bf16 %v714, %v714
      %716 = vrot.lane.b32.xlu0 %v533, 88
      %v717 = vpop.permute.xlu0 %716
      %v719 = vsel %vm534, %v715, 0
      %v722 = vsel %vm607, %v717, 0
      %724 = vmatprep.subr.bf16.mxu0 0
      %725 = vmatpush1.bf16.msra.mxu0 %v722
      %726 = vmatprep.subr.bf16.mxu0 0
      %727 = vmatpush1.bf16.msra.mxu0 0
      %728 = vmatprep.subr.bf16.mxu0 0
      %729 = vmatpush1.bf16.msra.mxu0 0
      %730 = vmatprep.subr.bf16.mxu0 0
      %731 = vmatpush1.bf16.msra.mxu0 0
      %732 = vmatprep.subr.bf16.mxu0 0
      %733 = vmatpush1.bf16.msra.mxu0 0
      %734 = vmatprep.subr.bf16.mxu0 0
      %735 = vmatpush1.bf16.msra.mxu0 0
      %736 = vmatprep.subr.bf16.mxu0 0
      %737 = vmatpush1.bf16.msra.mxu0 0
      %738 = vmatprep.subr.bf16.mxu0 0
      %739 = vmatpush1.bf16.msra.mxu0 0
      %740 = vmatprep.subr.bf16.mxu0 0
      %741 = vmatpush1.bf16.msra.mxu0 0
      %742 = vmatprep.subr.bf16.mxu0 0
      %743 = vmatpush1.bf16.msra.mxu0 0
      %744 = vmatprep.subr.bf16.mxu0 0
      %745 = vmatpush1.bf16.msra.mxu0 0
      %746 = vmatprep.subr.bf16.mxu0 0
      %747 = vmatpush1.bf16.msra.mxu0 0
      %748 = vmatprep.subr.bf16.mxu0 0
      %749 = vmatpush1.bf16.msra.mxu0 0
      %750 = vmatprep.subr.bf16.mxu0 0
      %751 = vmatpush1.bf16.msra.mxu0 0
      %752 = vmatprep.subr.bf16.mxu0 0
      %753 = vmatpush1.bf16.msra.mxu0 0
      %754 = vmatprep.subr.bf16.mxu0 0
      %755 = vmatpush1.bf16.msra.mxu0 0
      %756 = vmatprep.mubr.bf16.mxu0 0
      %757 = vmatmul.mubr.bf16.gmra.mrb[0].mxu0 %v719
      %v758 = vpop.f32.mrb[0].mxu0
      %v759 = vadd.f32 0.0, %v758
      %v760 = vpop.f32.mrb[0].mxu0
      %v761 = vpop.f32.mrb[0].mxu0
      %v762 = vpop.f32.mrb[0].mxu0
      %763 = vdwg.mxu0
      %764 = vrot.lane.b32.xlu0 %v532, 112
      %v765 = vpop.permute.xlu0 %764
      %766 = vrot.lane.b32.xlu0 %v533, 112
      %v767 = vpop.permute.xlu0 %766
      %v769 = vsel %vm534, %v765, 0
      %v772 = vsel %vm534, %v767, 0
      %774 = vmatprep.subr.bf16.mxu0 0
      %775 = vmatpush1.bf16.xpose.msra.mxu0 %v772
      %776 = vmatprep.subr.bf16.mxu0 0
      %777 = vmatpush1.bf16.xpose.msra.mxu0 0
      %778 = vmatprep.subr.bf16.mxu0 0
      %779 = vmatpush1.bf16.xpose.msra.mxu0 0
      %780 = vmatprep.subr.bf16.mxu0 0
      %781 = vmatpush1.bf16.xpose.msra.mxu0 0
      %782 = vmatprep.subr.bf16.mxu0 0
      %783 = vmatpush1.bf16.xpose.msra.mxu0 0
      %784 = vmatprep.subr.bf16.mxu0 0
      %785 = vmatpush1.bf16.xpose.msra.mxu0 0
      %786 = vmatprep.subr.bf16.mxu0 0
      %787 = vmatpush1.bf16.xpose.msra.mxu0 0
      %788 = vmatprep.subr.bf16.mxu0 0
      %789 = vmatpush1.bf16.xpose.msra.mxu0 0
      %790 = vmatprep.subr.bf16.mxu0 0
      %791 = vmatpush1.bf16.xpose.msra.mxu0 0
      %792 = vmatprep.subr.bf16.mxu0 0
      %793 = vmatpush1.bf16.xpose.msra.mxu0 0
      %794 = vmatprep.subr.bf16.mxu0 0
      %795 = vmatpush1.bf16.xpose.msra.mxu0 0
      %796 = vmatprep.subr.bf16.mxu0 0
      %797 = vmatpush1.bf16.xpose.msra.mxu0 0
      %798 = vmatprep.subr.bf16.mxu0 0
      %799 = vmatpush1.bf16.xpose.msra.mxu0 0
      %800 = vmatprep.subr.bf16.mxu0 0
      %801 = vmatpush1.bf16.xpose.msra.mxu0 0
      %802 = vmatprep.subr.bf16.mxu0 0
      %803 = vmatpush1.bf16.xpose.msra.mxu0 0
      %804 = vmatprep.subr.bf16.mxu0 0
      %805 = vmatpush1.bf16.xpose.msra.mxu0 0
      %806 = vmatprep.mubr.bf16.mxu0 0
      %807 = vmatmul.mubr.bf16.gmra.mrb[0].mxu0 %v769
      %v808 = vpop.f32.mrb[0].mxu0
      %v809 = vadd.f32 0.0, %v808
      %v810 = vpop.f32.mrb[0].mxu0
      %v811 = vpop.f32.mrb[0].mxu0
      %v812 = vpop.f32.mrb[0].mxu0
      %813 = vdwg.mxu0
      %v814 = vmul.f32 %v809, 0.35355338
      %v815 = vadd.f32 %v814, %v586
      %v816 = vsel %vm534, %v815, -inf
      %817 = vmax.xlane.f32.xlu0 %v816
      %v818 = vpop.xlane.xlu0 %817
      %v819 = vsub.f32 %v815, %v818
      %v820 = vmul.f32 %v819, 1.442695
      %v821 = vpow.pop %v820
      %v822 = vsel %vm534, %v821, 0.0
      %823 = vadd.xlane.f32.xlu0 %v822
      %v824 = vpop.xlane.xlu0 %823
      %v825 = vrcp.pop %v824
      %v826 = vmul.f32 %v821, %v825
      %v827 = vpack.c.bf16 %v826, %v826
      %828 = vrot.lane.b32.xlu0 %v533, 80
      %v829 = vpop.permute.xlu0 %828
      %v831 = vsel %vm534, %v827, 0
      %v834 = vsel %vm607, %v829, 0
      %836 = vmatprep.subr.bf16.mxu0 0
      %837 = vmatpush1.bf16.msra.mxu0 %v834
      %838 = vmatprep.subr.bf16.mxu0 0
      %839 = vmatpush1.bf16.msra.mxu0 0
      %840 = vmatprep.subr.bf16.mxu0 0
      %841 = vmatpush1.bf16.msra.mxu0 0
      %842 = vmatprep.subr.bf16.mxu0 0
      %843 = vmatpush1.bf16.msra.mxu0 0
      %844 = vmatprep.subr.bf16.mxu0 0
      %845 = vmatpush1.bf16.msra.mxu0 0
      %846 = vmatprep.subr.bf16.mxu0 0
      %847 = vmatpush1.bf16.msra.mxu0 0
      %848 = vmatprep.subr.bf16.mxu0 0
      %849 = vmatpush1.bf16.msra.mxu0 0
      %850 = vmatprep.subr.bf16.mxu0 0
      %851 = vmatpush1.bf16.msra.mxu0 0
      %852 = vmatprep.subr.bf16.mxu0 0
      %853 = vmatpush1.bf16.msra.mxu0 0
      %854 = vmatprep.subr.bf16.mxu0 0
      %855 = vmatpush1.bf16.msra.mxu0 0
      %856 = vmatprep.subr.bf16.mxu0 0
      %857 = vmatpush1.bf16.msra.mxu0 0
      %858 = vmatprep.subr.bf16.mxu0 0
      %859 = vmatpush1.bf16.msra.mxu0 0
      %860 = vmatprep.subr.bf16.mxu0 0
      %861 = vmatpush1.bf16.msra.mxu0 0
      %862 = vmatprep.subr.bf16.mxu0 0
      %863 = vmatpush1.bf16.msra.mxu0 0
      %864 = vmatprep.subr.bf16.mxu0 0
      %865 = vmatpush1.bf16.msra.mxu0 0
      %866 = vmatprep.subr.bf16.mxu0 0
      %867 = vmatpush1.bf16.msra.mxu0 0
      %868 = vmatprep.mubr.bf16.mxu0 0
      %869 = vmatmul.mubr.bf16.gmra.mrb[0].mxu0 %v831
      %v870 = vpop.f32.mrb[0].mxu0
      %v871 = vadd.f32 0.0, %v870
      %v872 = vpop.f32.mrb[0].mxu0
      %v873 = vpop.f32.mrb[0].mxu0
      %v874 = vpop.f32.mrb[0].mxu0
      %875 = vdwg.mxu0
      %876 = vrot.lane.b32.xlu0 %v532, 104
      %v877 = vpop.permute.xlu0 %876
      %878 = vrot.lane.b32.xlu0 %v533, 104
      %v879 = vpop.permute.xlu0 %878
      %v881 = vsel %vm534, %v877, 0
      %v884 = vsel %vm534, %v879, 0
      %886 = vmatprep.subr.bf16.mxu0 0
      %887 = vmatpush1.bf16.xpose.msra.mxu0 %v884
      %888 = vmatprep.subr.bf16.mxu0 0
      %889 = vmatpush1.bf16.xpose.msra.mxu0 0
      %890 = vmatprep.subr.bf16.mxu0 0
      %891 = vmatpush1.bf16.xpose.msra.mxu0 0
      %892 = vmatprep.subr.bf16.mxu0 0
      %893 = vmatpush1.bf16.xpose.msra.mxu0 0
      %894 = vmatprep.subr.bf16.mxu0 0
      %895 = vmatpush1.bf16.xpose.msra.mxu0 0
      %896 = vmatprep.subr.bf16.mxu0 0
      %897 = vmatpush1.bf16.xpose.msra.mxu0 0
      %898 = vmatprep.subr.bf16.mxu0 0
      %899 = vmatpush1.bf16.xpose.msra.mxu0 0
      %900 = vmatprep.subr.bf16.mxu0 0
      %901 = vmatpush1.bf16.xpose.msra.mxu0 0
      %902 = vmatprep.subr.bf16.mxu0 0
      %903 = vmatpush1.bf16.xpose.msra.mxu0 0
      %904 = vmatprep.subr.bf16.mxu0 0
      %905 = vmatpush1.bf16.xpose.msra.mxu0 0
      %906 = vmatprep.subr.bf16.mxu0 0
      %907 = vmatpush1.bf16.xpose.msra.mxu0 0
      %908 = vmatprep.subr.bf16.mxu0 0
      %909 = vmatpush1.bf16.xpose.msra.mxu0 0
      %910 = vmatprep.subr.bf16.mxu0 0
      %911 = vmatpush1.bf16.xpose.msra.mxu0 0
      %912 = vmatprep.subr.bf16.mxu0 0
      %913 = vmatpush1.bf16.xpose.msra.mxu0 0
      %914 = vmatprep.subr.bf16.mxu0 0
      %915 = vmatpush1.bf16.xpose.msra.mxu0 0
      %916 = vmatprep.subr.bf16.mxu0 0
      %917 = vmatpush1.bf16.xpose.msra.mxu0 0
      %918 = vmatprep.mubr.bf16.mxu0 0
      %919 = vmatmul.mubr.bf16.gmra.mrb[0].mxu0 %v881
      %v920 = vpop.f32.mrb[0].mxu0
      %v921 = vadd.f32 0.0, %v920
      %v922 = vpop.f32.mrb[0].mxu0
      %v923 = vpop.f32.mrb[0].mxu0
      %v924 = vpop.f32.mrb[0].mxu0
      %925 = vdwg.mxu0
      %v926 = vmul.f32 %v921, 0.35355338
      %v927 = vadd.f32 %v926, %v586
      %v928 = vsel %vm534, %v927, -inf
      %929 = vmax.xlane.f32.xlu0 %v928
      %v930 = vpop.xlane.xlu0 %929
      %v931 = vsub.f32 %v927, %v930
      %v932 = vmul.f32 %v931, 1.442695
      %v933 = vpow.pop %v932
      %v934 = vsel %vm534, %v933, 0.0
      %935 = vadd.xlane.f32.xlu0 %v934
      %v936 = vpop.xlane.xlu0 %935
      %v937 = vrcp.pop %v936
      %v938 = vmul.f32 %v933, %v937
      %v939 = vpack.c.bf16 %v938, %v938
      %940 = vrot.lane.b32.xlu0 %v533, 72
      %v941 = vpop.permute.xlu0 %940
      %v943 = vsel %vm534, %v939, 0
      %v946 = vsel %vm607, %v941, 0
      %948 = vmatprep.subr.bf16.mxu0 0
      %949 = vmatpush1.bf16.msra.mxu0 %v946
      %950 = vmatprep.subr.bf16.mxu0 0
      %951 = vmatpush1.bf16.msra.mxu0 0
      %952 = vmatprep.subr.bf16.mxu0 0
      %953 = vmatpush1.bf16.msra.mxu0 0
      %954 = vmatprep.subr.bf16.mxu0 0
      %955 = vmatpush1.bf16.msra.mxu0 0
      %956 = vmatprep.subr.bf16.mxu0 0
      %957 = vmatpush1.bf16.msra.mxu0 0
      %958 = vmatprep.subr.bf16.mxu0 0
      %959 = vmatpush1.bf16.msra.mxu0 0
      %960 = vmatprep.subr.bf16.mxu0 0
      %961 = vmatpush1.bf16.msra.mxu0 0
      %962 = vmatprep.subr.bf16.mxu0 0
      %963 = vmatpush1.bf16.msra.mxu0 0
      %964 = vmatprep.subr.bf16.mxu0 0
      %965 = vmatpush1.bf16.msra.mxu0 0
      %966 = vmatprep.subr.bf16.mxu0 0
      %967 = vmatpush1.bf16.msra.mxu0 0
      %968 = vmatprep.subr.bf16.mxu0 0
      %969 = vmatpush1.bf16.msra.mxu0 0
      %970 = vmatprep.subr.bf16.mxu0 0
      %971 = vmatpush1.bf16.msra.mxu0 0
      %972 = vmatprep.subr.bf16.mxu0 0
      %973 = vmatpush1.bf16.msra.mxu0 0
      %974 = vmatprep.subr.bf16.mxu0 0
      %975 = vmatpush1.bf16.msra.mxu0 0
      %976 = vmatprep.subr.bf16.mxu0 0
      %977 = vmatpush1.bf16.msra.mxu0 0
      %978 = vmatprep.subr.bf16.mxu0 0
      %979 = vmatpush1.bf16.msra.mxu0 0
      %980 = vmatprep.mubr.bf16.mxu0 0
      %981 = vmatmul.mubr.bf16.gmra.mrb[0].mxu0 %v943
      %v982 = vpop.f32.mrb[0].mxu0
      %v983 = vadd.f32 0.0, %v982
      %v984 = vpop.f32.mrb[0].mxu0
      %v985 = vpop.f32.mrb[0].mxu0
      %v986 = vpop.f32.mrb[0].mxu0
      %987 = vdwg.mxu0
      %989 = vrot.lane.b32.xlu0 %v759, 8
      %v990 = vpop.permute.xlu0 %989
      %993 = vrot.lane.b32.xlu0 %v871, 16
      %v994 = vpop.permute.xlu0 %993
      %997 = vrot.lane.b32.xlu0 %v983, 24
      %v998 = vpop.permute.xlu0 %997
      %v1000 = vsel %vm534, %v646, %v990
      %vm1001 = vcmask 130048
      %v1002 = vsel %vm1001, %v1000, %v994
      %vm1003 = vcmask 195584
      %v1004 = vsel %vm1003, %v1002, %v998
      %v1005 = vld [vmem:[%s7] sm:$0xff]
      %v1006 = vld [vmem:[%s7 + $0x8] sm:$0xff]
      %v1007 = vld [vmem:[%s7 + $0x10] sm:$0xff]
      %v1008 = vld [vmem:[%s7 + $0x18] sm:$0xff]
      %v1009 = vpack.c.bf16 %v1004, %v1004
      %v1010 = vpack.c.bf16 %v1006, %v1005
      %v1011 = vpack.c.bf16 %v1008, %v1007
      %v1012 = vld [vmem:[%s8] sm:$0x1]
      %v1014 = vlaneseq
      %v1015 = vshrl.u32 %v1014, 7
      %v1016 = vsub.s32 0, %v1015
      %v1017 = vrot.slane %v1012, %v1016
      %v1020 = vsel %vm431, %v1009, 0
      %1022 = vmatprep.subr.bf16.mxu0 0
      %1023 = vmatpush1.bf16.msra.mxu0 %v1010
      %1024 = vmatprep.subr.bf16.mxu0 0
      %1025 = vmatpush1.bf16.msra.mxu0 %v1011
      %1026 = vmatprep.subr.bf16.mxu0 0
      %1027 = vmatpush1.bf16.msra.mxu0 0
      %1028 = vmatprep.subr.bf16.mxu0 0
      %1029 = vmatpush1.bf16.msra.mxu0 0
      %1030 = vmatprep.subr.bf16.mxu0 0
      %1031 = vmatpush1.bf16.msra.mxu0 0
      %1032 = vmatprep.subr.bf16.mxu0 0
      %1033 = vmatpush1.bf16.msra.mxu0 0
      %1034 = vmatprep.subr.bf16.mxu0 0
      %1035 = vmatpush1.bf16.msra.mxu0 0
      %1036 = vmatprep.subr.bf16.mxu0 0
      %1037 = vmatpush1.bf16.msra.mxu0 0
      %1038 = vmatprep.subr.bf16.mxu0 0
      %1039 = vmatpush1.bf16.msra.mxu0 0
      %1040 = vmatprep.subr.bf16.mxu0 0
      %1041 = vmatpush1.bf16.msra.mxu0 0
      %1042 = vmatprep.subr.bf16.mxu0 0
      %1043 = vmatpush1.bf16.msra.mxu0 0
      %1044 = vmatprep.subr.bf16.mxu0 0
      %1045 = vmatpush1.bf16.msra.mxu0 0
      %1046 = vmatprep.subr.bf16.mxu0 0
      %1047 = vmatpush1.bf16.msra.mxu0 0
      %1048 = vmatprep.subr.bf16.mxu0 0
      %1049 = vmatpush1.bf16.msra.mxu0 0
      %1050 = vmatprep.subr.bf16.mxu0 0
      %1051 = vmatpush1.bf16.msra.mxu0 0
      %1052 = vmatprep.subr.bf16.mxu0 0
      %1053 = vmatpush1.bf16.msra.mxu0 0
      %1054 = vmatprep.mubr.bf16.mxu0 0
      %1055 = vmatmul.mubr.bf16.gmra.mrb[0].mxu0 %v1020
      %v1056 = vpop.f32.mrb[0].mxu0
      %v1057 = vadd.f32 %v1017, %v1056
      %v1058 = vpop.f32.mrb[0].mxu0
      %v1059 = vpop.f32.mrb[0].mxu0
      %v1060 = vpop.f32.mrb[0].mxu0
      %1061 = vdwg.mxu0
      %v1062 = vadd.f32 %v1057, %v414
      %v1063 = vld [vmem:[%s9] sm:$0x1]
      %v1064 = vld [vmem:[%s10] sm:$0x1]
      %v1065 = vsel %vm431, %v1062, 0.0
      %1066 = vadd.xlane.f32.xlu0 %v1065
      %v1067 = vpop.xlane.xlu0 %1066
      %v1068 = vrcp.pop 32.0
      %v1069 = vmul.f32 %v1067, %v1068
      %v1070 = vsub.f32 %v1062, %v1069
      %v1071 = vmul.f32 %v1070, %v1070
      %v1072 = vsel %vm431, %v1071, 0.0
      %1073 = vadd.xlane.f32.xlu0 %v1072
      %v1074 = vpop.xlane.xlu0 %1073
      %v1075 = vrcp.pop 31.0
      %v1076 = vmul.f32 %v1074, %v1075
      %v1078 = vlaneseq
      %v1079 = vshrl.u32 %v1078, 7
      %v1080 = vsub.s32 0, %v1079
      %v1081 = vrot.slane %v1063, %v1080
      %v1083 = vmul.f32 %v1081, %v1070
      %v1084 = vrsqrt.pop %v1076
      %v1085 = vmul.f32 %v1076, %v1084
      %vm1086 = vcmp.eq.f32.partialorder %v1076, inf
      %v1087 = vsel %vm1086, %v1076, %v1085
      %vm1088 = vcmp.eq.f32.partialorder %v1076, 0.0
      %v1089 = vand.u32 %v1076, 2147483648
      %v1090 = vsel %vm1088, %v1089, %v1087
      %v1091 = vadd.f32 %v1090, 1e-06
      %v1092 = vrcp.pop %v1091
      %v1093 = vmul.f32 %v1083, %v1092
      %v1095 = vlaneseq
      %v1096 = vshrl.u32 %v1095, 7
      %v1097 = vsub.s32 0, %v1096
      %v1098 = vrot.slane %v1064, %v1097
      %v1100 = vadd.f32 %v1093, %v1098
      %1101 = vst.msk [vmem:[%s412] sm:$0xff] %vm431, %v1100
      %p1102 = scmp.lt.s32.totalorder %s22, 1
      %s1103 = scalar_select %p1102, %s22, 1
      %s1104 = smul.addr %s1103, 8
      %s1105 = scalar_lea.vmem %s11, %s1104
      // Predicated region
      $region65: #{_lambda_.18} parent=63 // pred_check
        %p1106 = pneg %p286
      $region66: #{_lambda_.18} parent=63 // pred_check_branch
        %1108 = sbr.rel (%p1106) target = $region68
      $region67: #{_lambda_.18} parent=63 // pred_region
        _
      $region68: #{_lambda_.18} parent=63 // pred_fallthru
        _
    $region64: #{_lambda_.18} parent=5 // pred_fallthru
      _
    %p1109 = scmp.le.s32.totalorder 2, %s17
    // Predicated region
    $region69: #{_lambda_.18} parent=5 // pred_check
      %p1110 = pneg %p1109
    $region70: #{_lambda_.18} parent=5 // pred_check_branch
      %1112 = sbr.rel (%p1110) target = $region72
    $region71: #{_lambda_.18} parent=5 // pred_region
      %s1113 = ssub.s32 %s17, 2
      // Predicated region
      $region73: #{_lambda_.18} parent=71 // pred_check
        %p1114 = pneg %p292
      $region74: #{_lambda_.18} parent=71 // pred_check_branch
        %1116 = sbr.rel (%p1114) target = $region76
      $region75: #{_lambda_.18} parent=71 // pred_region
        %p1117 = scmp.lt.s32.totalorder %s23, 1
        %s1118 = scalar_select %p1117, %s23, 1
        %s1119 = smul.addr %s1118, 8
        %s1120 = scalar_lea.vmem %s11, %s1119
      $region76: #{_lambda_.18} parent=71 // pred_fallthru
        _
    $region72: #{_lambda_.18} parent=5 // pred_fallthru
      _
  $region6: #{_lambda_.18} parent=0 // loop_footer
    %s21 = sadd.s32 1, %s17
  $region7: #{_lambda_.18} parent=0 // loop_footer_branch
    %16 = sbr.rel target = $region3
  $region8: #{_lambda_.18} parent=0 // loop_exit
    _

// kernel: _lambda_.15
$region0: #{_lambda_.15}
  #allocation0 [shape = 'u32[]', space=smem, size = 0x4, offset = 0x4, fixed_abs, tag = 'smem constant byte address 0x4 - core index']
  #allocation1 [shape = 'u32[144,128]{1,0:T(1,128)}', space=vmem, size = 0x12000, scoped, tag = 'internal scratch']
  %s0 = inlined_call_operand.vmem [shape: f32[8,2,16], index: 0, kind: input, shape index: {}]
  %s1 = inlined_call_operand.vmem [shape: f32[16,128], index: 1, kind: input, shape index: {}]
  %s2 = inlined_call_operand.vmem [shape: f32[1,128], index: 2, kind: input, shape index: {}, may-alias: {2,4}]
  %s3 = inlined_call_operand.vmem [shape: f32[32,128], index: 3, kind: input, shape index: {}]
  %s4 = inlined_call_operand.vmem [shape: f32[1,128], index: 4, kind: input, shape index: {}, may-alias: {2,4}]
  %s5 = inlined_call_operand.vmem [shape: f32[8,2,32], index: 5, kind: output, shape index: {}]
  %s6 = sld [smem:[#allocation0]]
  $region30: #{_lambda_.15} parent=0
    _
  %s8 = ssub.s32 1, %s6
  %s9 = scalar_select 0, %s8, %s6
  // Predicated region
  $region2: #{_lambda_.15} parent=0 // pred_check
    _
  $region3: #{_lambda_.15} parent=0 // pred_check_branch
    %11 = sbr.rel (0) target = $region5
  $region4: #{_lambda_.15} parent=0 // pred_region
    _
  $region5: #{_lambda_.15} parent=0 // pred_fallthru
    _
  // Predicated region
  $region6: #{_lambda_.15} parent=0 // pred_check
    _
  $region7: #{_lambda_.15} parent=0 // pred_check_branch
    %13 = sbr.rel (0) target = $region9
  $region8: #{_lambda_.15} parent=0 // pred_region
    _
  $region9: #{_lambda_.15} parent=0 // pred_fallthru
    _
  // Predicated region
  $region10: #{_lambda_.15} parent=0 // pred_check
    _
  $region11: #{_lambda_.15} parent=0 // pred_check_branch
    %15 = sbr.rel (0) target = $region13
  $region12: #{_lambda_.15} parent=0 // pred_region
    _
  $region13: #{_lambda_.15} parent=0 // pred_fallthru
    _
  // Predicated region
  $region14: #{_lambda_.15} parent=0 // pred_check
    _
  $region15: #{_lambda_.15} parent=0 // pred_check_branch
    %17 = sbr.rel (0) target = $region17
  $region16: #{_lambda_.15} parent=0 // pred_region
    _
  $region17: #{_lambda_.15} parent=0 // pred_fallthru
    _
  // Predicated region
  $region18: #{_lambda_.15} parent=0 // pred_check
    _
  $region19: #{_lambda_.15} parent=0 // pred_check_branch
    %19 = sbr.rel (0) target = $region21
  $region20: #{_lambda_.15} parent=0 // pred_region
    _
  $region21: #{_lambda_.15} parent=0 // pred_fallthru
    _
  %v21 = vld [vmem:[%s0] sm:$0x3]
  %v22 = vld [vmem:[%s1] sm:$0xff]
  %v23 = vld [vmem:[%s1 + $0x8] sm:$0xff]
  %v24 = vpack.c.bf16 %v21, %v21
  %v25 = vpack.c.bf16 %v23, %v22
  %v26 = vld [vmem:[%s2] sm:$0x1]
  %v28 = vlaneseq
  %v29 = vshrl.u32 %v28, 7
  %v30 = vsub.s32 0, %v29
  %v31 = vrot.slane %v26, %v30
  %vm33 = vcmask 130048
  %v35 = vsel %vm33, %v24, 0
  %37 = vmatprep.subr.bf16.mxu0 0
  %38 = vmatpush1.bf16.msra.mxu0 %v25
  %39 = vmatprep.subr.bf16.mxu0 0
  %40 = vmatpush1.bf16.msra.mxu0 0
  %41 = vmatprep.subr.bf16.mxu0 0
  %42 = vmatpush1.bf16.msra.mxu0 0
  %43 = vmatprep.subr.bf16.mxu0 0
  %44 = vmatpush1.bf16.msra.mxu0 0
  %45 = vmatprep.subr.bf16.mxu0 0
  %46 = vmatpush1.bf16.msra.mxu0 0
  %47 = vmatprep.subr.bf16.mxu0 0
  %48 = vmatpush1.bf16.msra.mxu0 0
  %49 = vmatprep.subr.bf16.mxu0 0
  %50 = vmatpush1.bf16.msra.mxu0 0
  %51 = vmatprep.subr.bf16.mxu0 0
  %52 = vmatpush1.bf16.msra.mxu0 0
  %53 = vmatprep.subr.bf16.mxu0 0
  %54 = vmatpush1.bf16.msra.mxu0 0
  %55 = vmatprep.subr.bf16.mxu0 0
  %56 = vmatpush1.bf16.msra.mxu0 0
  %57 = vmatprep.subr.bf16.mxu0 0
  %58 = vmatpush1.bf16.msra.mxu0 0
  %59 = vmatprep.subr.bf16.mxu0 0
  %60 = vmatpush1.bf16.msra.mxu0 0
  %61 = vmatprep.subr.bf16.mxu0 0
  %62 = vmatpush1.bf16.msra.mxu0 0
  %63 = vmatprep.subr.bf16.mxu0 0
  %64 = vmatpush1.bf16.msra.mxu0 0
  %65 = vmatprep.subr.bf16.mxu0 0
  %66 = vmatpush1.bf16.msra.mxu0 0
  %67 = vmatprep.subr.bf16.mxu0 0
  %68 = vmatpush1.bf16.msra.mxu0 0
  %69 = vmatprep.mubr.bf16.mxu0 0
  %70 = vmatmul.mubr.bf16.gmra.mrb[0].mxu0 %v35
  %v71 = vpop.f32.mrb[0].mxu0
  %v72 = vadd.f32 %v31, %v71
  %v73 = vpop.f32.mrb[0].mxu0
  %v74 = vpop.f32.mrb[0].mxu0
  %v75 = vpop.f32.mrb[0].mxu0
  %76 = vdwg.mxu0
  %v77 = vld [vmem:[%s3] sm:$0xff]
  %v78 = vld [vmem:[%s3 + $0x8] sm:$0xff]
  %v79 = vld [vmem:[%s3 + $0x10] sm:$0xff]
  %v80 = vld [vmem:[%s3 + $0x18] sm:$0xff]
  %v81 = vpack.c.bf16 %v78, %v77
  %v82 = vpack.c.bf16 %v80, %v79
  %vm83 = vcmask 261120
  %v85 = vsel %vm83, 0, 0
  %87 = vmatprep.subr.bf16.mxu0 0
  %88 = vmatpush1.bf16.msra.mxu0 %v81
  %89 = vmatprep.subr.bf16.mxu0 0
  %90 = vmatpush1.bf16.msra.mxu0 %v82
  %91 = vmatprep.subr.bf16.mxu0 0
  %92 = vmatpush1.bf16.msra.mxu0 0
  %93 = vmatprep.subr.bf16.mxu0 0
  %94 = vmatpush1.bf16.msra.mxu0 0
  %95 = vmatprep.subr.bf16.mxu0 0
  %96 = vmatpush1.bf16.msra.mxu0 0
  %97 = vmatprep.subr.bf16.mxu0 0
  %98 = vmatpush1.bf16.msra.mxu0 0
  %99 = vmatprep.subr.bf16.mxu0 0
  %100 = vmatpush1.bf16.msra.mxu0 0
  %101 = vmatprep.subr.bf16.mxu0 0
  %102 = vmatpush1.bf16.msra.mxu0 0
  %103 = vmatprep.subr.bf16.mxu0 0
  %104 = vmatpush1.bf16.msra.mxu0 0
  %105 = vmatprep.subr.bf16.mxu0 0
  %106 = vmatpush1.bf16.msra.mxu0 0
  %107 = vmatprep.subr.bf16.mxu0 0
  %108 = vmatpush1.bf16.msra.mxu0 0
  %109 = vmatprep.subr.bf16.mxu0 0
  %110 = vmatpush1.bf16.msra.mxu0 0
  %111 = vmatprep.subr.bf16.mxu0 0
  %112 = vmatpush1.bf16.msra.mxu0 0
  %113 = vmatprep.subr.bf16.mxu0 0
  %114 = vmatpush1.bf16.msra.mxu0 0
  %115 = vmatprep.subr.bf16.mxu0 0
  %116 = vmatpush1.bf16.msra.mxu0 0
  %117 = vmatprep.subr.bf16.mxu0 0
  %118 = vmatpush1.bf16.msra.mxu0 0
  %119 = vmatprep.mubr.bf16.mxu0 0
  %120 = vmatmul.mubr.bf16.gmra.mrb[0].mxu0 %v85
  %v121 = vpop.f32.mrb[0].mxu0
  %v122 = vadd.f32 0.0, %v121
  %v123 = vpop.f32.mrb[0].mxu0
  %v124 = vpop.f32.mrb[0].mxu0
  %v125 = vpop.f32.mrb[0].mxu0
  %126 = vdwg.mxu0
  %v127 = vadd.f32 %v72, %v122
  %v128 = vld [vmem:[%s4] sm:$0x1]
  %v130 = vlaneseq
  %v131 = vshrl.u32 %v130, 7
  %v132 = vsub.s32 0, %v131
  %v133 = vrot.slane %v128, %v132
  %v135 = vadd.f32 %v127, %v133
  %v136 = vxor.u32 %v135, 2147483648
  %v137 = vmul.f32 %v136, 1.442695
  %v138 = vpow.pop %v137
  %v139 = vadd.f32 %v138, 1.0
  %v140 = vrcp.pop %v139
  %v141 = vmul.f32 1.0, %v140
  %v142 = vmul.f32 %v141, 0.0
  %v143 = vtanh.pop %v135
  %145 = vrot.lane.b32.xlu0 %v143, 64
  %v146 = vpop.permute.xlu0 %145
  %v148 = vmul.f32 %v141, %v146
  %150 = vrot.lane.b32.xlu0 %v148, 32
  %v151 = vpop.permute.xlu0 %150
  %v153 = vadd.f32 %v142, %v151
  %v154 = vtanh.pop %v153
  %156 = vrot.lane.b32.xlu0 %v154, 64
  %v157 = vpop.permute.xlu0 %156
  %v159 = vmul.f32 %v141, %v157
  %161 = vrot.lane.b32.xlu0 %v159, 32
  %v162 = vpop.permute.xlu0 %161
  %vm164 = vcmask 254976
  %165 = vst.msk [vmem:[%s5] sm:$0x3] %vm164, %v162
  %s166 = scalar_lea.vmem %s0, 2
  %v167 = vld [vmem:[%s166] sm:$0x3]
  %v168 = vld [vmem:[%s1] sm:$0xff]
  %v169 = vld [vmem:[%s1 + $0x8] sm:$0xff]
  %v170 = vpack.c.bf16 %v167, %v167
  %v171 = vpack.c.bf16 %v169, %v168
  %v172 = vld [vmem:[%s2] sm:$0x1]
  %v174 = vlaneseq
  %v175 = vshrl.u32 %v174, 7
  %v176 = vsub.s32 0, %v175
  %v177 = vrot.slane %v172, %v176
  %v180 = vsel %vm33, %v170, 0
  %182 = vmatprep.subr.bf16.mxu0 0
  %183 = vmatpush1.bf16.msra.mxu0 %v171
  %184 = vmatprep.subr.bf16.mxu0 0
  %185 = vmatpush1.bf16.msra.mxu0 0
  %186 = vmatprep.subr.bf16.mxu0 0
  %187 = vmatpush1.bf16.msra.mxu0 0
  %188 = vmatprep.subr.bf16.mxu0 0
  %189 = vmatpush1.bf16.msra.mxu0 0
  %190 = vmatprep.subr.bf16.mxu0 0
  %191 = vmatpush1.bf16.msra.mxu0 0
  %192 = vmatprep.subr.bf16.mxu0 0
  %193 = vmatpush1.bf16.msra.mxu0 0
  %194 = vmatprep.subr.bf16.mxu0 0
  %195 = vmatpush1.bf16.msra.mxu0 0
  %196 = vmatprep.subr.bf16.mxu0 0
  %197 = vmatpush1.bf16.msra.mxu0 0
  %198 = vmatprep.subr.bf16.mxu0 0
  %199 = vmatpush1.bf16.msra.mxu0 0
  %200 = vmatprep.subr.bf16.mxu0 0
  %201 = vmatpush1.bf16.msra.mxu0 0
  %202 = vmatprep.subr.bf16.mxu0 0
  %203 = vmatpush1.bf16.msra.mxu0 0
  %204 = vmatprep.subr.bf16.mxu0 0
  %205 = vmatpush1.bf16.msra.mxu0 0
  %206 = vmatprep.subr.bf16.mxu0 0
  %207 = vmatpush1.bf16.msra.mxu0 0
  %208 = vmatprep.subr.bf16.mxu0 0
  %209 = vmatpush1.bf16.msra.mxu0 0
  %210 = vmatprep.subr.bf16.mxu0 0
  %211 = vmatpush1.bf16.msra.mxu0 0
  %212 = vmatprep.subr.bf16.mxu0 0
  %213 = vmatpush1.bf16.msra.mxu0 0
  %214 = vmatprep.mubr.bf16.mxu0 0
  %215 = vmatmul.mubr.bf16.gmra.mrb[0].mxu0 %v180
  %v216 = vpop.f32.mrb[0].mxu0
  %v217 = vadd.f32 %v177, %v216
  %v218 = vpop.f32.mrb[0].mxu0
  %v219 = vpop.f32.mrb[0].mxu0
  %v220 = vpop.f32.mrb[0].mxu0
  %221 = vdwg.mxu0
  %v222 = vld [vmem:[%s3] sm:$0xff]
  %v223 = vld [vmem:[%s3 + $0x8] sm:$0xff]
  %v224 = vld [vmem:[%s3 + $0x10] sm:$0xff]
  %v225 = vld [vmem:[%s3 + $0x18] sm:$0xff]
  %v226 = vpack.c.bf16 %v159, %v159
  %v227 = vpack.c.bf16 %v223, %v222
  %v228 = vpack.c.bf16 %v225, %v224
  %230 = vrot.lane.b32.xlu0 %v226, 32
  %v231 = vpop.permute.xlu0 %230
  %v233 = vsel %vm83, %v231, 0
  %235 = vmatprep.subr.bf16.mxu0 0
  %236 = vmatpush1.bf16.msra.mxu0 %v227
  %237 = vmatprep.subr.bf16.mxu0 0
  %238 = vmatpush1.bf16.msra.mxu0 %v228
  %239 = vmatprep.subr.bf16.mxu0 0
  %240 = vmatpush1.bf16.msra.mxu0 0
  %241 = vmatprep.subr.bf16.mxu0 0
  %242 = vmatpush1.bf16.msra.mxu0 0
  %243 = vmatprep.subr.bf16.mxu0 0
  %244 = vmatpush1.bf16.msra.mxu0 0
  %245 = vmatprep.subr.bf16.mxu0 0
  %246 = vmatpush1.bf16.msra.mxu0 0
  %247 = vmatprep.subr.bf16.mxu0 0
  %248 = vmatpush1.bf16.msra.mxu0 0
  %249 = vmatprep.subr.bf16.mxu0 0
  %250 = vmatpush1.bf16.msra.mxu0 0
  %251 = vmatprep.subr.bf16.mxu0 0
  %252 = vmatpush1.bf16.msra.mxu0 0
  %253 = vmatprep.subr.bf16.mxu0 0
  %254 = vmatpush1.bf16.msra.mxu0 0
  %255 = vmatprep.subr.bf16.mxu0 0
  %256 = vmatpush1.bf16.msra.mxu0 0
  %257 = vmatprep.subr.bf16.mxu0 0
  %258 = vmatpush1.bf16.msra.mxu0 0
  %259 = vmatprep.subr.bf16.mxu0 0
  %260 = vmatpush1.bf16.msra.mxu0 0
  %261 = vmatprep.subr.bf16.mxu0 0
  %262 = vmatpush1.bf16.msra.mxu0 0
  %263 = vmatprep.subr.bf16.mxu0 0
  %264 = vmatpush1.bf16.msra.mxu0 0
  %265 = vmatprep.subr.bf16.mxu0 0
  %266 = vmatpush1.bf16.msra.mxu0 0
  %267 = vmatprep.mubr.bf16.mxu0 0
  %268 = vmatmul.mubr.bf16.gmra.mrb[0].mxu0 %v233
  %v269 = vpop.f32.mrb[0].mxu0
  %v270 = vadd.f32 0.0, %v269
  %v271 = vpop.f32.mrb[0].mxu0
  %v272 = vpop.f32.mrb[0].mxu0
  %v273 = vpop.f32.mrb[0].mxu0
  %274 = vdwg.mxu0
  %v275 = vadd.f32 %v217, %v270
  %v276 = vld [vmem:[%s4] sm:$0x1]
  %v278 = vlaneseq
  %v279 = vshrl.u32 %v278, 7
  %v280 = vsub.s32 0, %v279
  %v281 = vrot.slane %v276, %v280
  %v283 = vadd.f32 %v275, %v281
  %v284 = vxor.u32 %v283, 2147483648
  %v285 = vmul.f32 %v284, 1.442695
  %v286 = vpow.pop %v285
  %v287 = vadd.f32 %v286, 1.0
  %v288 = vrcp.pop %v287
  %v289 = vmul.f32 1.0, %v288
  %v290 = vmul.f32 %v289, %v153
  %v291 = vtanh.pop %v283
  %293 = vrot.lane.b32.xlu0 %v291, 64
  %v294 = vpop.permute.xlu0 %293
  %v296 = vmul.f32 %v289, %v294
  %298 = vrot.lane.b32.xlu0 %v296, 32
  %v299 = vpop.permute.xlu0 %298
  %v301 = vadd.f32 %v290, %v299
  %v302 = vtanh.pop %v301
  %304 = vrot.lane.b32.xlu0 %v302, 64
  %v305 = vpop.permute.xlu0 %304
  %v307 = vmul.f32 %v289, %v305
  %309 = vrot.lane.b32.xlu0 %v307, 32
  %v310 = vpop.permute.xlu0 %309
  %s312 = scalar_lea.vmem %s5, 2
  %313 = vst.msk [vmem:[%s312] sm:$0x3] %vm164, %v310
  %s314 = scalar_lea.vmem %s0, 4
  %v315 = vld [vmem:[%s314] sm:$0x3]
  %v316 = vld [vmem:[%s1] sm:$0xff]
  %v317 = vld [vmem:[%s1 + $0x8] sm:$0xff]
  %v318 = vpack.c.bf16 %v315, %v315
  %v319 = vpack.c.bf16 %v317, %v316
  %v320 = vld [vmem:[%s2] sm:$0x1]
  %v322 = vlaneseq
  %v323 = vshrl.u32 %v322, 7
  %v324 = vsub.s32 0, %v323
  %v325 = vrot.slane %v320, %v324
  %v328 = vsel %vm33, %v318, 0
  %330 = vmatprep.subr.bf16.mxu0 0
  %331 = vmatpush1.bf16.msra.mxu0 %v319
  %332 = vmatprep.subr.bf16.mxu0 0
  %333 = vmatpush1.bf16.msra.mxu0 0
  %334 = vmatprep.subr.bf16.mxu0 0
  %335 = vmatpush1.bf16.msra.mxu0 0
  %336 = vmatprep.subr.bf16.mxu0 0
  %337 = vmatpush1.bf16.msra.mxu0 0
  %338 = vmatprep.subr.bf16.mxu0 0
  %339 = vmatpush1.bf16.msra.mxu0 0
  %340 = vmatprep.subr.bf16.mxu0 0
  %341 = vmatpush1.bf16.msra.mxu0 0
  %342 = vmatprep.subr.bf16.mxu0 0
  %343 = vmatpush1.bf16.msra.mxu0 0
  %344 = vmatprep.subr.bf16.mxu0 0
  %345 = vmatpush1.bf16.msra.mxu0 0
  %346 = vmatprep.subr.bf16.mxu0 0
  %347 = vmatpush1.bf16.msra.mxu0 0
  %348 = vmatprep.subr.bf16.mxu0 0
  %349 = vmatpush1.bf16.msra.mxu0 0
  %350 = vmatprep.subr.bf16.mxu0 0
  %351 = vmatpush1.bf16.msra.mxu0 0
  %352 = vmatprep.subr.bf16.mxu0 0
  %353 = vmatpush1.bf16.msra.mxu0 0
  %354 = vmatprep.subr.bf16.mxu0 0
  %355 = vmatpush1.bf16.msra.mxu0 0
  %356 = vmatprep.subr.bf16.mxu0 0
  %357 = vmatpush1.bf16.msra.mxu0 0
  %358 = vmatprep.subr.bf16.mxu0 0
  %359 = vmatpush1.bf16.msra.mxu0 0
  %360 = vmatprep.subr.bf16.mxu0 0
  %361 = vmatpush1.bf16.msra.mxu0 0
  %362 = vmatprep.mubr.bf16.mxu0 0
  %363 = vmatmul.mubr.bf16.gmra.mrb[0].mxu0 %v328
  %v364 = vpop.f32.mrb[0].mxu0
  %v365 = vadd.f32 %v325, %v364
  %v366 = vpop.f32.mrb[0].mxu0
  %v367 = vpop.f32.mrb[0].mxu0
  %v368 = vpop.f32.mrb[0].mxu0
  %369 = vdwg.mxu0
  %v370 = vld [vmem:[%s3] sm:$0xff]
  %v371 = vld [vmem:[%s3 + $0x8] sm:$0xff]
  %v372 = vld [vmem:[%s3 + $0x10] sm:$0xff]
  %v373 = vld [vmem:[%s3 + $0x18] sm:$0xff]
  %v374 = vpack.c.bf16 %v307, %v307
  %v375 = vpack.c.bf16 %v371, %v370
  %v376 = vpack.c.bf16 %v373, %v372
  %378 = vrot.lane.b32.xlu0 %v374, 32
  %v379 = vpop.permute.xlu0 %378
  %v381 = vsel %vm83, %v379, 0
  %383 = vmatprep.subr.bf16.mxu0 0
  %384 = vmatpush1.bf16.msra.mxu0 %v375
  %385 = vmatprep.subr.bf16.mxu0 0
  %386 = vmatpush1.bf16.msra.mxu0 %v376
  %387 = vmatprep.subr.bf16.mxu0 0
  %388 = vmatpush1.bf16.msra.mxu0 0
  %389 = vmatprep.subr.bf16.mxu0 0
  %390 = vmatpush1.bf16.msra.mxu0 0
  %391 = vmatprep.subr.bf16.mxu0 0
  %392 = vmatpush1.bf16.msra.mxu0 0
  %393 = vmatprep.subr.bf16.mxu0 0
  %394 = vmatpush1.bf16.msra.mxu0 0
  %395 = vmatprep.subr.bf16.mxu0 0
  %396 = vmatpush1.bf16.msra.mxu0 0
  %397 = vmatprep.subr.bf16.mxu0 0
  %398 = vmatpush1.bf16.msra.mxu0 0
  %399 = vmatprep.subr.bf16.mxu0 0
  %400 = vmatpush1.bf16.msra.mxu0 0
  %401 = vmatprep.subr.bf16.mxu0 0
  %402 = vmatpush1.bf16.msra.mxu0 0
  %403 = vmatprep.subr.bf16.mxu0 0
  %404 = vmatpush1.bf16.msra.mxu0 0
  %405 = vmatprep.subr.bf16.mxu0 0
  %406 = vmatpush1.bf16.msra.mxu0 0
  %407 = vmatprep.subr.bf16.mxu0 0
  %408 = vmatpush1.bf16.msra.mxu0 0
  %409 = vmatprep.subr.bf16.mxu0 0
  %410 = vmatpush1.bf16.msra.mxu0 0
  %411 = vmatprep.subr.bf16.mxu0 0
  %412 = vmatpush1.bf16.msra.mxu0 0
  %413 = vmatprep.subr.bf16.mxu0 0
  %414 = vmatpush1.bf16.msra.mxu0 0
  %415 = vmatprep.mubr.bf16.mxu0 0
  %416 = vmatmul.mubr.bf16.gmra.mrb[0].mxu0 %v381
  %v417 = vpop.f32.mrb[0].mxu0
  %v418 = vadd.f32 0.0, %v417
  %v419 = vpop.f32.mrb[0].mxu0
  %v420 = vpop.f32.mrb[0].mxu0
  %v421 = vpop.f32.mrb[0].mxu0
  %422 = vdwg.mxu0
  %v423 = vadd.f32 %v365, %v418
  %v424 = vld [vmem:[%s4] sm:$0x1]
  %v426 = vlaneseq
  %v427 = vshrl.u32 %v426, 7
  %v428 = vsub.s32 0, %v427
  %v429 = vrot.slane %v424, %v428
  %v431 = vadd.f32 %v423, %v429
  %v432 = vxor.u32 %v431, 2147483648
  %v433 = vmul.f32 %v432, 1.442695
  %v434 = vpow.pop %v433
  %v435 = vadd.f32 %v434, 1.0
  %v436 = vrcp.pop %v435
  %v437 = vmul.f32 1.0, %v436
  %v438 = vmul.f32 %v437, %v301
  %v439 = vtanh.pop %v431
  %441 = vrot.lane.b32.xlu0 %v439, 64
  %v442 = vpop.permute.xlu0 %441
  %v444 = vmul.f32 %v437, %v442
  %446 = vrot.lane.b32.xlu0 %v444, 32
  %v447 = vpop.permute.xlu0 %446
  %v449 = vadd.f32 %v438, %v447
  %v450 = vtanh.pop %v449
  %452 = vrot.lane.b32.xlu0 %v450, 64
  %v453 = vpop.permute.xlu0 %452
  %v455 = vmul.f32 %v437, %v453
  %457 = vrot.lane.b32.xlu0 %v455, 32
  %v458 = vpop.permute.xlu0 %457
  %s460 = scalar_lea.vmem %s5, 4
  %461 = vst.msk [vmem:[%s460] sm:$0x3] %vm164, %v458
  %s462 = scalar_lea.vmem %s0, 6
  %v463 = vld [vmem:[%s462] sm:$0x3]
  %v464 = vld [vmem:[%s1] sm:$0xff]
  %v465 = vld [vmem:[%s1 + $0x8] sm:$0xff]
  %v466 = vpack.c.bf16 %v463, %v463
  %v467 = vpack.c.bf16 %v465, %v464
  %v468 = vld [vmem:[%s2] sm:$0x1]
  %v470 = vlaneseq
  %v471 = vshrl.u32 %v470, 7
  %v472 = vsub.s32 0, %v471
  %v473 = vrot.slane %v468, %v472
  %v476 = vsel %vm33, %v466, 0
  %478 = vmatprep.subr.bf16.mxu0 0
  %479 = vmatpush1.bf16.msra.mxu0 %v467
  %480 = vmatprep.subr.bf16.mxu0 0
  %481 = vmatpush1.bf16.msra.mxu0 0
  %482 = vmatprep.subr.bf16.mxu0 0
  %483 = vmatpush1.bf16.msra.mxu0 0
  %484 = vmatprep.subr.bf16.mxu0 0
  %485 = vmatpush1.bf16.msra.mxu0 0
  %486 = vmatprep.subr.bf16.mxu0 0
  %487 = vmatpush1.bf16.msra.mxu0 0
  %488 = vmatprep.subr.bf16.mxu0 0
  %489 = vmatpush1.bf16.msra.mxu0 0
  %490 = vmatprep.subr.bf16.mxu0 0
  %491 = vmatpush1.bf16.msra.mxu0 0
  %492 = vmatprep.subr.bf16.mxu0 0
  %493 = vmatpush1.bf16.msra.mxu0 0
  %494 = vmatprep.subr.bf16.mxu0 0
  %495 = vmatpush1.bf16.msra.mxu0 0
  %496 = vmatprep.subr.bf16.mxu0 0
  %497 = vmatpush1.bf16.msra.mxu0 0
  %498 = vmatprep.subr.bf16.mxu0 0
  %499 = vmatpush1.bf16.msra.mxu0 0
  %500 = vmatprep.subr.bf16.mxu0 0
  %501 = vmatpush1.bf16.msra.mxu0 0
  %502 = vmatprep.subr.bf16.mxu0 0
  %503 = vmatpush1.bf16.msra.mxu0 0
  %504 = vmatprep.subr.bf16.mxu0 0
  %505 = vmatpush1.bf16.msra.mxu0 0
  %506 = vmatprep.subr.bf16.mxu0 0
  %507 = vmatpush1.bf16.msra.mxu0 0
  %508 = vmatprep.subr.bf16.mxu0 0
  %509 = vmatpush1.bf16.msra.mxu0 0
  %510 = vmatprep.mubr.bf16.mxu0 0
  %511 = vmatmul.mubr.bf16.gmra.mrb[0].mxu0 %v476
  %v512 = vpop.f32.mrb[0].mxu0
  %v513 = vadd.f32 %v473, %v512
  %v514 = vpop.f32.mrb[0].mxu0
  %v515 = vpop.f32.mrb[0].mxu0
  %v516 = vpop.f32.mrb[0].mxu0
  %517 = vdwg.mxu0
  %v518 = vld [vmem:[%s3] sm:$0xff]
  %v519 = vld [vmem:[%s3 + $0x8] sm:$0xff]
  %v520 = vld [vmem:[%s3 + $0x10] sm:$0xff]
  %v521 = vld [vmem:[%s3 + $0x18] sm:$0xff]
  %v522 = vpack.c.bf16 %v455, %v455
  %v523 = vpack.c.bf16 %v519, %v518
  %v524 = vpack.c.bf16 %v521, %v520
  %526 = vrot.lane.b32.xlu0 %v522, 32
  %v527 = vpop.permute.xlu0 %526
  %v529 = vsel %vm83, %v527, 0
  %531 = vmatprep.subr.bf16.mxu0 0
  %532 = vmatpush1.bf16.msra.mxu0 %v523
  %533 = vmatprep.subr.bf16.mxu0 0
  %534 = vmatpush1.bf16.msra.mxu0 %v524
  %535 = vmatprep.subr.bf16.mxu0 0
  %536 = vmatpush1.bf16.msra.mxu0 0
  %537 = vmatprep.subr.bf16.mxu0 0
  %538 = vmatpush1.bf16.msra.mxu0 0
  %539 = vmatprep.subr.bf16.mxu0 0
  %540 = vmatpush1.bf16.msra.mxu0 0
  %541 = vmatprep.subr.bf16.mxu0 0
  %542 = vmatpush1.bf16.msra.mxu0 0
  %543 = vmatprep.subr.bf16.mxu0 0
  %544 = vmatpush1.bf16.msra.mxu0 0
  %545 = vmatprep.subr.bf16.mxu0 0
  %546 = vmatpush1.bf16.msra.mxu0 0
  %547 = vmatprep.subr.bf16.mxu0 0
  %548 = vmatpush1.bf16.msra.mxu0 0
  %549 = vmatprep.subr.bf16.mxu0 0
  %550 = vmatpush1.bf16.msra.mxu0 0
  %551 = vmatprep.subr.bf16.mxu0 0
  %552 = vmatpush1.bf16.msra.mxu0 0
  %553 = vmatprep.subr.bf16.mxu0 0
  %554 = vmatpush1.bf16.msra.mxu0 0
  %555 = vmatprep.subr.bf16.mxu0 0
  %556 = vmatpush1.bf16.msra.mxu0 0
  %557 = vmatprep.subr.bf16.mxu0 0
  %558 = vmatpush1.bf16.msra.mxu0 0
  %559 = vmatprep.subr.bf16.mxu0 0
  %560 = vmatpush1.bf16.msra.mxu0 0
  %561 = vmatprep.subr.bf16.mxu0 0
  %562 = vmatpush1.bf16.msra.mxu0 0
  %563 = vmatprep.mubr.bf16.mxu0 0
  %564 = vmatmul.mubr.bf16.gmra.mrb[0].mxu0 %v529
  %v565 = vpop.f32.mrb[0].mxu0
  %v566 = vadd.f32 0.0, %v565
  %v567 = vpop.f32.mrb[0].mxu0
  %v568 = vpop.f32.mrb[0].mxu0
  %v569 = vpop.f32.mrb[0].mxu0
  %570 = vdwg.mxu0
  %v571 = vadd.f32 %v513, %v566
  %v572 = vld [vmem:[%s4] sm:$0x1]
  %v574 = vlaneseq
  %v575 = vshrl.u32 %v574, 7
  %v576 = vsub.s32 0, %v575
  %v577 = vrot.slane %v572, %v576
  %v579 = vadd.f32 %v571, %v577
  %v580 = vxor.u32 %v579, 2147483648
  %v581 = vmul.f32 %v580, 1.442695
  %v582 = vpow.pop %v581
  %v583 = vadd.f32 %v582, 1.0
  %v584 = vrcp.pop %v583
  %v585 = vmul.f32 1.0, %v584
  %v586 = vmul.f32 %v585, %v449
  %v587 = vtanh.pop %v579
  %589 = vrot.lane.b32.xlu0 %v587, 64
  %v590 = vpop.permute.xlu0 %589
  %v592 = vmul.f32 %v585, %v590
  %594 = vrot.lane.b32.xlu0 %v592, 32
  %v595 = vpop.permute.xlu0 %594
  %v597 = vadd.f32 %v586, %v595
  %v598 = vtanh.pop %v597
  %600 = vrot.lane.b32.xlu0 %v598, 64
  %v601 = vpop.permute.xlu0 %600
  %v603 = vmul.f32 %v585, %v601
  %605 = vrot.lane.b32.xlu0 %v603, 32
  %v606 = vpop.permute.xlu0 %605
  %s608 = scalar_lea.vmem %s5, 6
  %609 = vst.msk [vmem:[%s608] sm:$0x3] %vm164, %v606
  %s610 = scalar_lea.vmem %s0, 8
  %v611 = vld [vmem:[%s610] sm:$0x3]
  %v612 = vld [vmem:[%s1] sm:$0xff]
  %v613 = vld [vmem:[%s1 + $0x8] sm:$0xff]
  %v614 = vpack.c.bf16 %v611, %v611
  %v615 = vpack.c.bf16 %v613, %v612
  %v616 = vld [vmem:[%s2] sm:$0x1]
  %v618 = vlaneseq
  %v619 = vshrl.u32 %v618, 7
  %v620 = vsub.s32 0, %v619
  %v621 = vrot.slane %v616, %v620
  %v624 = vsel %vm33, %v614, 0
  %626 = vmatprep.subr.bf16.mxu0 0
  %627 = vmatpush1.bf16.msra.mxu0 %v615
  %628 = vmatprep.subr.bf16.mxu0 0
  %629 = vmatpush1.bf16.msra.mxu0 0
  %630 = vmatprep.subr.bf16.mxu0 0
  %631 = vmatpush1.bf16.msra.mxu0 0
  %632 = vmatprep.subr.bf16.mxu0 0
  %633 = vmatpush1.bf16.msra.mxu0 0
  %634 = vmatprep.subr.bf16.mxu0 0
  %635 = vmatpush1.bf16.msra.mxu0 0
  %636 = vmatprep.subr.bf16.mxu0 0
  %637 = vmatpush1.bf16.msra.mxu0 0
  %638 = vmatprep.subr.bf16.mxu0 0
  %639 = vmatpush1.bf16.msra.mxu0 0
  %640 = vmatprep.subr.bf16.mxu0 0
  %641 = vmatpush1.bf16.msra.mxu0 0
  %642 = vmatprep.subr.bf16.mxu0 0
  %643 = vmatpush1.bf16.msra.mxu0 0
  %644 = vmatprep.subr.bf16.mxu0 0
  %645 = vmatpush1.bf16.msra.mxu0 0
  %646 = vmatprep.subr.bf16.mxu0 0
  %647 = vmatpush1.bf16.msra.mxu0 0
  %648 = vmatprep.subr.bf16.mxu0 0
  %649 = vmatpush1.bf16.msra.mxu0 0
  %650 = vmatprep.subr.bf16.mxu0 0
  %651 = vmatpush1.bf16.msra.mxu0 0
  %652 = vmatprep.subr.bf16.mxu0 0
  %653 = vmatpush1.bf16.msra.mxu0 0
  %654 = vmatprep.subr.bf16.mxu0 0
  %655 = vmatpush1.bf16.msra.mxu0 0
  %656 = vmatprep.subr.bf16.mxu0 0
  %657 = vmatpush1.bf16.msra.mxu0 0
  %658 = vmatprep.mubr.bf16.mxu0 0
  %659 = vmatmul.mubr.bf16.gmra.mrb[0].mxu0 %v624
  %v660 = vpop.f32.mrb[0].mxu0
  %v661 = vadd.f32 %v621, %v660
  %v662 = vpop.f32.mrb[0].mxu0
  %v663 = vpop.f32.mrb[0].mxu0
  %v664 = vpop.f32.mrb[0].mxu0
  %665 = vdwg.mxu0
  %v666 = vld [vmem:[%s3] sm:$0xff]
  %v667 = vld [vmem:[%s3 + $0x8] sm:$0xff]
  %v668 = vld [vmem:[%s3 + $0x10] sm:$0xff]
  %v669 = vld [vmem:[%s3 + $0x18] sm:$0xff]
  %v670 = vpack.c.bf16 %v603, %v603
  %v671 = vpack.c.bf16 %v667, %v666
  %v672 = vpack.c.bf16 %v669, %v668
  %674 = vrot.lane.b32.xlu0 %v670, 32
  %v675 = vpop.permute.xlu0 %674
  %v677 = vsel %vm83, %v675, 0
  %679 = vmatprep.subr.bf16.mxu0 0
  %680 = vmatpush1.bf16.msra.mxu0 %v671
  %681 = vmatprep.subr.bf16.mxu0 0
  %682 = vmatpush1.bf16.msra.mxu0 %v672
  %683 = vmatprep.subr.bf16.mxu0 0
  %684 = vmatpush1.bf16.msra.mxu0 0
  %685 = vmatprep.subr.bf16.mxu0 0
  %686 = vmatpush1.bf16.msra.mxu0 0
  %687 = vmatprep.subr.bf16.mxu0 0
  %688 = vmatpush1.bf16.msra.mxu0 0
  %689 = vmatprep.subr.bf16.mxu0 0
  %690 = vmatpush1.bf16.msra.mxu0 0
  %691 = vmatprep.subr.bf16.mxu0 0
  %692 = vmatpush1.bf16.msra.mxu0 0
  %693 = vmatprep.subr.bf16.mxu0 0
  %694 = vmatpush1.bf16.msra.mxu0 0
  %695 = vmatprep.subr.bf16.mxu0 0
  %696 = vmatpush1.bf16.msra.mxu0 0
  %697 = vmatprep.subr.bf16.mxu0 0
  %698 = vmatpush1.bf16.msra.mxu0 0
  %699 = vmatprep.subr.bf16.mxu0 0
  %700 = vmatpush1.bf16.msra.mxu0 0
  %701 = vmatprep.subr.bf16.mxu0 0
  %702 = vmatpush1.bf16.msra.mxu0 0
  %703 = vmatprep.subr.bf16.mxu0 0
  %704 = vmatpush1.bf16.msra.mxu0 0
  %705 = vmatprep.subr.bf16.mxu0 0
  %706 = vmatpush1.bf16.msra.mxu0 0
  %707 = vmatprep.subr.bf16.mxu0 0
  %708 = vmatpush1.bf16.msra.mxu0 0
  %709 = vmatprep.subr.bf16.mxu0 0
  %710 = vmatpush1.bf16.msra.mxu0 0
  %711 = vmatprep.mubr.bf16.mxu0 0
  %712 = vmatmul.mubr.bf16.gmra.mrb[0].mxu0 %v677
  %v713 = vpop.f32.mrb[0].mxu0
  %v714 = vadd.f32 0.0, %v713
  %v715 = vpop.f32.mrb[0].mxu0
  %v716 = vpop.f32.mrb[0].mxu0
  %v717 = vpop.f32.mrb[0].mxu0
  %718 = vdwg.mxu0
  %v719 = vadd.f32 %v661, %v714
  %v720 = vld [vmem:[%s4] sm:$0x1]
  %v722 = vlaneseq
  %v723 = vshrl.u32 %v722, 7
  %v724 = vsub.s32 0, %v723
  %v725 = vrot.slane %v720, %v724
  %v727 = vadd.f32 %v719, %v725
  %v728 = vxor.u32 %v727, 2147483648
  %v729 = vmul.f32 %v728, 1.442695
  %v730 = vpow.pop %v729
  %v731 = vadd.f32 %v730, 1.0
  %v732 = vrcp.pop %v731
  %v733 = vmul.f32 1.0, %v732
  %v734 = vmul.f32 %v733, %v597
  %v735 = vtanh.pop %v727
  %737 = vrot.lane.b32.xlu0 %v735, 64
  %v738 = vpop.permute.xlu0 %737
  %v740 = vmul.f32 %v733, %v738
  %742 = vrot.lane.b32.xlu0 %v740, 32
  %v743 = vpop.permute.xlu0 %742
  %v745 = vadd.f32 %v734, %v743
  %v746 = vtanh.pop %v745
  %748 = vrot.lane.b32.xlu0 %v746, 64
  %v749 = vpop.permute.xlu0 %748
  %v751 = vmul.f32 %v733, %v749
  %753 = vrot.lane.b32.xlu0 %v751, 32
  %v754 = vpop.permute.xlu0 %753
  %s756 = scalar_lea.vmem %s5, 8
  %757 = vst.msk [vmem:[%s756] sm:$0x3] %vm164, %v754
  %s758 = scalar_lea.vmem %s0, 10
  %v759 = vld [vmem:[%s758] sm:$0x3]
  %v760 = vld [vmem:[%s1] sm:$0xff]
  %v761 = vld [vmem:[%s1 + $0x8] sm:$0xff]
  %v762 = vpack.c.bf16 %v759, %v759
  %v763 = vpack.c.bf16 %v761, %v760
  %v764 = vld [vmem:[%s2] sm:$0x1]
  %v766 = vlaneseq
  %v767 = vshrl.u32 %v766, 7
  %v768 = vsub.s32 0, %v767
  %v769 = vrot.slane %v764, %v768
  %v772 = vsel %vm33, %v762, 0
  %774 = vmatprep.subr.bf16.mxu0 0
  %775 = vmatpush1.bf16.msra.mxu0 %v763
  %776 = vmatprep.subr.bf16.mxu0 0
  %777 = vmatpush1.bf16.msra.mxu0 0
  %778 = vmatprep.subr.bf16.mxu0 0
  %779 = vmatpush1.bf16.msra.mxu0 0
  %780 = vmatprep.subr.bf16.mxu0 0
  %781 = vmatpush1.bf16.msra.mxu0 0
  %782 = vmatprep.subr.bf16.mxu0 0
  %783 = vmatpush1.bf16.msra.mxu0 0
  %784 = vmatprep.subr.bf16.mxu0 0
  %785 = vmatpush1.bf16.msra.mxu0 0
  %786 = vmatprep.subr.bf16.mxu0 0
  %787 = vmatpush1.bf16.msra.mxu0 0
  %788 = vmatprep.subr.bf16.mxu0 0
  %789 = vmatpush1.bf16.msra.mxu0 0
  %790 = vmatprep.subr.bf16.mxu0 0
  %791 = vmatpush1.bf16.msra.mxu0 0
  %792 = vmatprep.subr.bf16.mxu0 0
  %793 = vmatpush1.bf16.msra.mxu0 0
  %794 = vmatprep.subr.bf16.mxu0 0
  %795 = vmatpush1.bf16.msra.mxu0 0
  %796 = vmatprep.subr.bf16.mxu0 0
  %797 = vmatpush1.bf16.msra.mxu0 0
  %798 = vmatprep.subr.bf16.mxu0 0
  %799 = vmatpush1.bf16.msra.mxu0 0
  %800 = vmatprep.subr.bf16.mxu0 0
  %801 = vmatpush1.bf16.msra.mxu0 0
  %802 = vmatprep.subr.bf16.mxu0 0
  %803 = vmatpush1.bf16.msra.mxu0 0
  %804 = vmatprep.subr.bf16.mxu0 0
  %805 = vmatpush1.bf16.msra.mxu0 0
  %806 = vmatprep.mubr.bf16.mxu0 0
  %807 = vmatmul.mubr.bf16.gmra.mrb[0].mxu0 %v772
  %v808 = vpop.f32.mrb[0].mxu0
  %v809 = vadd.f32 %v769, %v808
  %v810 = vpop.f32.mrb[0].mxu0
  %v811 = vpop.f32.mrb[0].mxu0
  %v812 = vpop.f32.mrb[0].mxu0
  %813 = vdwg.mxu0
  %v814 = vld [vmem:[%s3] sm:$0xff]
  %v815 = vld [vmem:[%s3 + $0x8] sm:$0xff]
  %v816 = vld [vmem:[%s3 + $0x10] sm:$0xff]
  %v817 = vld [vmem:[%s3 + $0x18] sm:$0xff]
  %v818 = vpack.c.bf16 %v751, %v751
  %v819 = vpack.c.bf16 %v815, %v814
  %v820 = vpack.c.bf16 %v817, %v816
  %822 = vrot.lane.b32.xlu0 %v818, 32
  %v823 = vpop.permute.xlu0 %822
  %v825 = vsel %vm83, %v823, 0
  %827 = vmatprep.subr.bf16.mxu0 0
  %828 = vmatpush1.bf16.msra.mxu0 %v819
  %829 = vmatprep.subr.bf16.mxu0 0
  %830 = vmatpush1.bf16.msra.mxu0 %v820
  %831 = vmatprep.subr.bf16.mxu0 0
  %832 = vmatpush1.bf16.msra.mxu0 0
  %833 = vmatprep.subr.bf16.mxu0 0
  %834 = vmatpush1.bf16.msra.mxu0 0
  %835 = vmatprep.subr.bf16.mxu0 0
  %836 = vmatpush1.bf16.msra.mxu0 0
  %837 = vmatprep.subr.bf16.mxu0 0
  %838 = vmatpush1.bf16.msra.mxu0 0
  %839 = vmatprep.subr.bf16.mxu0 0
  %840 = vmatpush1.bf16.msra.mxu0 0
  %841 = vmatprep.subr.bf16.mxu0 0
  %842 = vmatpush1.bf16.msra.mxu0 0
  %843 = vmatprep.subr.bf16.mxu0 0
  %844 = vmatpush1.bf16.msra.mxu0 0
  %845 = vmatprep.subr.bf16.mxu0 0
  %846 = vmatpush1.bf16.msra.mxu0 0
  %847 = vmatprep.subr.bf16.mxu0 0
  %848 = vmatpush1.bf16.msra.mxu0 0
  %849 = vmatprep.subr.bf16.mxu0 0
  %850 = vmatpush1.bf16.msra.mxu0 0
  %851 = vmatprep.subr.bf16.mxu0 0
  %852 = vmatpush1.bf16.msra.mxu0 0
  %853 = vmatprep.subr.bf16.mxu0 0
  %854 = vmatpush1.bf16.msra.mxu0 0
  %855 = vmatprep.subr.bf16.mxu0 0
  %856 = vmatpush1.bf16.msra.mxu0 0
  %857 = vmatprep.subr.bf16.mxu0 0
  %858 = vmatpush1.bf16.msra.mxu0 0
  %859 = vmatprep.mubr.bf16.mxu0 0
  %860 = vmatmul.mubr.bf16.gmra.mrb[0].mxu0 %v825
  %v861 = vpop.f32.mrb[0].mxu0
  %v862 = vadd.f32 0.0, %v861
  %v863 = vpop.f32.mrb[0].mxu0
  %v864 = vpop.f32.mrb[0].mxu0
  %v865 = vpop.f32.mrb[0].mxu0
  %866 = vdwg.mxu0
  %v867 = vadd.f32 %v809, %v862
  %v868 = vld [vmem:[%s4] sm:$0x1]
  %v870 = vlaneseq
  %v871 = vshrl.u32 %v870, 7
  %v872 = vsub.s32 0, %v871
  %v873 = vrot.slane %v868, %v872
  %v875 = vadd.f32 %v867, %v873
  %v876 = vxor.u32 %v875, 2147483648
  %v877 = vmul.f32 %v876, 1.442695
  %v878 = vpow.pop %v877
  %v879 = vadd.f32 %v878, 1.0
  %v880 = vrcp.pop %v879
  %v881 = vmul.f32 1.0, %v880
  %v882 = vmul.f32 %v881, %v745
  %v883 = vtanh.pop %v875
  %885 = vrot.lane.b32.xlu0 %v883, 64
  %v886 = vpop.permute.xlu0 %885
  %v888 = vmul.f32 %v881, %v886
  %890 = vrot.lane.b32.xlu0 %v888, 32
  %v891 = vpop.permute.xlu0 %890
  %v893 = vadd.f32 %v882, %v891
  %v894 = vtanh.pop %v893
  %896 = vrot.lane.b32.xlu0 %v894, 64
  %v897 = vpop.permute.xlu0 %896
  %v899 = vmul.f32 %v881, %v897
  %901 = vrot.lane.b32.xlu0 %v899, 32
  %v902 = vpop.permute.xlu0 %901
  %s904 = scalar_lea.vmem %s5, 10
  %905 = vst.msk [vmem:[%s904] sm:$0x3] %vm164, %v902
  %s906 = scalar_lea.vmem %s0, 12
  %v907 = vld [vmem:[%s906] sm:$0x3]
  %v908 = vld [vmem:[%s1] sm:$0xff]
  %v909 = vld [vmem:[%s1 + $0x8] sm:$0xff]
  %v910 = vpack.c.bf16 %v907, %v907
  %v911 = vpack.c.bf16 %v909, %v908
  %v912 = vld [vmem:[%s2] sm:$0x1]
  %v914 = vlaneseq
  %v915 = vshrl.u32 %v914, 7
  %v916 = vsub.s32 0, %v915
  %v917 = vrot.slane %v912, %v916
  %v920 = vsel %vm33, %v910, 0
  %922 = vmatprep.subr.bf16.mxu0 0
  %923 = vmatpush1.bf16.msra.mxu0 %v911
  %924 = vmatprep.subr.bf16.mxu0 0
  %925 = vmatpush1.bf16.msra.mxu0 0
  %926 = vmatprep.subr.bf16.mxu0 0
  %927 = vmatpush1.bf16.msra.mxu0 0
  %928 = vmatprep.subr.bf16.mxu0 0
  %929 = vmatpush1.bf16.msra.mxu0 0
  %930 = vmatprep.subr.bf16.mxu0 0
  %931 = vmatpush1.bf16.msra.mxu0 0
  %932 = vmatprep.subr.bf16.mxu0 0
  %933 = vmatpush1.bf16.msra.mxu0 0
  %934 = vmatprep.subr.bf16.mxu0 0
  %935 = vmatpush1.bf16.msra.mxu0 0
  %936 = vmatprep.subr.bf16.mxu0 0
  %937 = vmatpush1.bf16.msra.mxu0 0
  %938 = vmatprep.subr.bf16.mxu0 0
  %939 = vmatpush1.bf16.msra.mxu0 0
  %940 = vmatprep.subr.bf16.mxu0 0
  %941 = vmatpush1.bf16.msra.mxu0 0
  %942 = vmatprep.subr.bf16.mxu0 0
  %943 = vmatpush1.bf16.msra.mxu0 0
  %944 = vmatprep.subr.bf16.mxu0 0
  %945 = vmatpush1.bf16.msra.mxu0 0
  %946 = vmatprep.subr.bf16.mxu0 0
  %947 = vmatpush1.bf16.msra.mxu0 0
  %948 = vmatprep.subr.bf16.mxu0 0
  %949 = vmatpush1.bf16.msra.mxu0 0
  %950 = vmatprep.subr.bf16.mxu0 0
  %951 = vmatpush1.bf16.msra.mxu0 0
  %952 = vmatprep.subr.bf16.mxu0 0
  %953 = vmatpush1.bf16.msra.mxu0 0
  %954 = vmatprep.mubr.bf16.mxu0 0
  %955 = vmatmul.mubr.bf16.gmra.mrb[0].mxu0 %v920
  %v956 = vpop.f32.mrb[0].mxu0
  %v957 = vadd.f32 %v917, %v956
  %v958 = vpop.f32.mrb[0].mxu0
  %v959 = vpop.f32.mrb[0].mxu0
  %v960 = vpop.f32.mrb[0].mxu0
  %961 = vdwg.mxu0
  %v962 = vld [vmem:[%s3] sm:$0xff]
  %v963 = vld [vmem:[%s3 + $0x8] sm:$0xff]
  %v964 = vld [vmem:[%s3 + $0x10] sm:$0xff]
  %v965 = vld [vmem:[%s3 + $0x18] sm:$0xff]
  %v966 = vpack.c.bf16 %v899, %v899
  %v967 = vpack.c.bf16 %v963, %v962
  %v968 = vpack.c.bf16 %v965, %v964
  %970 = vrot.lane.b32.xlu0 %v966, 32
  %v971 = vpop.permute.xlu0 %970
  %v973 = vsel %vm83, %v971, 0
  %975 = vmatprep.subr.bf16.mxu0 0
  %976 = vmatpush1.bf16.msra.mxu0 %v967
  %977 = vmatprep.subr.bf16.mxu0 0
  %978 = vmatpush1.bf16.msra.mxu0 %v968
  %979 = vmatprep.subr.bf16.mxu0 0
  %980 = vmatpush1.bf16.msra.mxu0 0
  %981 = vmatprep.subr.bf16.mxu0 0
  %982 = vmatpush1.bf16.msra.mxu0 0
  %983 = vmatprep.subr.bf16.mxu0 0
  %984 = vmatpush1.bf16.msra.mxu0 0
  %985 = vmatprep.subr.bf16.mxu0 0
  %986 = vmatpush1.bf16.msra.mxu0 0
  %987 = vmatprep.subr.bf16.mxu0 0
  %988 = vmatpush1.bf16.msra.mxu0 0
  %989 = vmatprep.subr.bf16.mxu0 0
  %990 = vmatpush1.bf16.msra.mxu0 0
  %991 = vmatprep.subr.bf16.mxu0 0
  %992 = vmatpush1.bf16.msra.mxu0 0
  %993 = vmatprep.subr.bf16.mxu0 0
  %994 = vmatpush1.bf16.msra.mxu0 0
  %995 = vmatprep.subr.bf16.mxu0 0
  %996 = vmatpush1.bf16.msra.mxu0 0
  %997 = vmatprep.subr.bf16.mxu0 0
  %998 = vmatpush1.bf16.msra.mxu0 0
  %999 = vmatprep.subr.bf16.mxu0 0
  %1000 = vmatpush1.bf16.msra.mxu0 0
  %1001 = vmatprep.subr.bf16.mxu0 0
  %1002 = vmatpush1.bf16.msra.mxu0 0
  %1003 = vmatprep.subr.bf16.mxu0 0
  %1004 = vmatpush1.bf16.msra.mxu0 0
  %1005 = vmatprep.subr.bf16.mxu0 0
  %1006 = vmatpush1.bf16.msra.mxu0 0
  %1007 = vmatprep.mubr.bf16.mxu0 0
  %1008 = vmatmul.mubr.bf16.gmra.mrb[0].mxu0 %v973
  %v1009 = vpop.f32.mrb[0].mxu0
  %v1010 = vadd.f32 0.0, %v1009
  %v1011 = vpop.f32.mrb[0].mxu0
  %v1012 = vpop.f32.mrb[0].mxu0
  %v1013 = vpop.f32.mrb[0].mxu0
  %1014 = vdwg.mxu0
  %v1015 = vadd.f32 %v957, %v1010
  %v1016 = vld [vmem:[%s4] sm:$0x1]
  %v1018 = vlaneseq
  %v1019 = vshrl.u32 %v1018, 7
  %v1020 = vsub.s32 0, %v1019
  %v1021 = vrot.slane %v1016, %v1020
  %v1023 = vadd.f32 %v1015, %v1021
  %v1024 = vxor.u32 %v1023, 2147483648
  %v1025 = vmul.f32 %v1024, 1.442695
  %v1026 = vpow.pop %v1025
  %v1027 = vadd.f32 %v1026, 1.0
  %v1028 = vrcp.pop %v1027
  %v1029 = vmul.f32 1.0, %v1028
  %v1030 = vmul.f32 %v1029, %v893
  %v1031 = vtanh.pop %v1023
  %1033 = vrot.lane.b32.xlu0 %v1031, 64
  %v1034 = vpop.permute.xlu0 %1033
  %v1036 = vmul.f32 %v1029, %v1034
  %1038 = vrot.lane.b32.xlu0 %v1036, 32
  %v1039 = vpop.permute.xlu0 %1038
  %v1041 = vadd.f32 %v1030, %v1039
  %v1042 = vtanh.pop %v1041
  %1044 = vrot.lane.b32.xlu0 %v1042, 64
  %v1045 = vpop.permute.xlu0 %1044
  %v1047 = vmul.f32 %v1029, %v1045
  %1049 = vrot.lane.b32.xlu0 %v1047, 32
  %v1050 = vpop.permute.xlu0 %1049
  %s1052 = scalar_lea.vmem %s5, 12
  %1053 = vst.msk [vmem:[%s1052] sm:$0x3] %vm164, %v1050
  %s1054 = scalar_lea.vmem %s0, 14
  %v1055 = vld [vmem:[%s1054] sm:$0x3]
  %v1056 = vld [vmem:[%s1] sm:$0xff]
  %v1057 = vld [vmem:[%s1 + $0x8] sm:$0xff]
  %v1058 = vpack.c.bf16 %v1055, %v1055
  %v1059 = vpack.c.bf16 %v1057, %v1056
  %v1060 = vld [vmem:[%s2] sm:$0x1]
  %v1062 = vlaneseq
  %v1063 = vshrl.u32 %v1062, 7
  %v1064 = vsub.s32 0, %v1063
  %v1065 = vrot.slane %v1060, %v1064
  %v1068 = vsel %vm33, %v1058, 0
  %1070 = vmatprep.subr.bf16.mxu0 0
  %1071 = vmatpush1.bf16.msra.mxu0 %v1059
  %1072 = vmatprep.subr.bf16.mxu0 0
  %1073 = vmatpush1.bf16.msra.mxu0 0
  %1074 = vmatprep.subr.bf16.mxu0 0
  %1075 = vmatpush1.bf16.msra.mxu0 0
  %1076 = vmatprep.subr.bf16.mxu0 0
  %1077 = vmatpush1.bf16.msra.mxu0 0
  %1078 = vmatprep.subr.bf16.mxu0 0
  %1079 = vmatpush1.bf16.msra.mxu0 0
  %1080 = vmatprep.subr.bf16.mxu0 0
  %1081 = vmatpush1.bf16.msra.mxu0 0
  %1082 = vmatprep.subr.bf16.mxu0 0
  %1083 = vmatpush1.bf16.msra.mxu0 0
  %1084 = vmatprep.subr.bf16.mxu0 0
  %1085 = vmatpush1.bf16.msra.mxu0 0
  %1086 = vmatprep.subr.bf16.mxu0 0
  %1087 = vmatpush1.bf16.msra.mxu0 0
  %1088 = vmatprep.subr.bf16.mxu0 0
  %1089 = vmatpush1.bf16.msra.mxu0 0
  %1090 = vmatprep.subr.bf16.mxu0 0
  %1091 = vmatpush1.bf16.msra.mxu0 0
  %1092 = vmatprep.subr.bf16.mxu0 0
  %1093 = vmatpush1.bf16.msra.mxu0 0
  %1094 = vmatprep.subr.bf16.mxu0 0
  %1095 = vmatpush1.bf16.msra.mxu0 0
  %1096 = vmatprep.subr.bf16.mxu0 0
  %1097 = vmatpush1.bf16.msra.mxu0 0
  %1098 = vmatprep.subr.bf16.mxu0 0
  %1099 = vmatpush1.bf16.msra.mxu0 0
  %1100 = vmatprep.subr.bf16.mxu0 0
  %1101 = vmatpush1.bf16.msra.mxu0 0
  %1102 = vmatprep.mubr.bf16.mxu0 0
  %1103 = vmatmul.mubr.bf16.gmra.mrb[0].mxu0 %v1068
  %v1104 = vpop.f32.mrb[0].mxu0
  %v1105 = vadd.f32 %v1065, %v1104
  %v1106 = vpop.f32.mrb[0].mxu0
  %v1107 = vpop.f32.mrb[0].mxu0
  %v1108 = vpop.f32.mrb[0].mxu0
  %1109 = vdwg.mxu0
  %v1110 = vld [vmem:[%s3] sm:$0xff]
  %v1111 = vld [vmem:[%s3 + $0x8] sm:$0xff]
  %v1112 = vld [vmem:[%s3 + $0x10] sm:$0xff]
  %v1113 = vld [vmem:[%s3 + $0x18] sm:$0xff]
  %v1114 = vpack.c.bf16 %v1047, %v1047
  %v1115 = vpack.c.bf16 %v1111, %v1110
  %v1116 = vpack.c.bf16 %v1113, %v1112
  %1118 = vrot.lane.b32.xlu0 %v1114, 32
  %v1119 = vpop.permute.xlu0 %1118
  %v1121 = vsel %vm83, %v1119, 0
  %1123 = vmatprep.subr.bf16.mxu0 0
  %1124 = vmatpush1.bf16.msra.mxu0 %v1115
  %1125 = vmatprep.subr.bf16.mxu0 0
  %1126 = vmatpush1.bf16.msra.mxu0 %v1116
  %1127 = vmatprep.subr.bf16.mxu0 0
  %1128 = vmatpush1.bf16.msra.mxu0 0
  %1129 = vmatprep.subr.bf16.mxu0 0
  %1130 = vmatpush1.bf16.msra.mxu0 0
  %1131 = vmatprep.subr.bf16.mxu0 0
  %1132 = vmatpush1.bf16.msra.mxu0 0
  %1133 = vmatprep.subr.bf16.mxu0 0
  %1134 = vmatpush1.bf16.msra.mxu0 0
  %1135 = vmatprep.subr.bf16.mxu0 0
  %1136 = vmatpush1.bf16.msra.mxu0 0
  %1137 = vmatprep.subr.bf16.mxu0 0
  %1138 = vmatpush1.bf16.msra.mxu0 0
  %1139 = vmatprep.subr.bf16.mxu0 0
  %1140 = vmatpush1.bf16.msra.mxu0 0
  %1141 = vmatprep.subr.bf16.mxu0 0
  %1142 = vmatpush1.bf16.msra.mxu0 0
  %1143 = vmatprep.subr.bf16.mxu0 0
  %1144 = vmatpush1.bf16.msra.mxu0 0
  %1145 = vmatprep.subr.bf16.mxu0 0
  %1146 = vmatpush1.bf16.msra.mxu0 0
  %1147 = vmatprep.subr.bf16.mxu0 0
  %1148 = vmatpush1.bf16.msra.mxu0 0
  %1149 = vmatprep.subr.bf16.mxu0 0
  %1150 = vmatpush1.bf16.msra.mxu0 0
  %1151 = vmatprep.subr.bf16.mxu0 0
  %1152 = vmatpush1.bf16.msra.mxu0 0
  %1153 = vmatprep.subr.bf16.mxu0 0
  %1154 = vmatpush1.bf16.msra.mxu0 0
  %1155 = vmatprep.mubr.bf16.mxu0 0
  %1156 = vmatmul.mubr.bf16.gmra.mrb[0].mxu0 %v1121
  %v1157 = vpop.f32.mrb[0].mxu0
  %v1158 = vadd.f32 0.0, %v1157
  %v1159 = vpop.f32.mrb[0].mxu0
  %v1160 = vpop.f32.mrb[0].mxu0
  %v1161 = vpop.f32.mrb[0].mxu0
  %1162 = vdwg.mxu0
  %v1163 = vadd.f32 %v1105, %v1158
  %v1164 = vld [vmem:[%s4] sm:$0x1]
  %v1166 = vlaneseq
  %v1167 = vshrl.u32 %v1166, 7
  %v1168 = vsub.s32 0, %v1167
  %v1169 = vrot.slane %v1164, %v1168
  %v1171 = vadd.f32 %v1163, %v1169
  %v1172 = vxor.u32 %v1171, 2147483648
  %v1173 = vmul.f32 %v1172, 1.442695
  %v1174 = vpow.pop %v1173
  %v1175 = vadd.f32 %v1174, 1.0
  %v1176 = vrcp.pop %v1175
  %v1177 = vmul.f32 1.0, %v1176
  %v1178 = vmul.f32 %v1177, %v1041
  %v1179 = vtanh.pop %v1171
  %1181 = vrot.lane.b32.xlu0 %v1179, 64
  %v1182 = vpop.permute.xlu0 %1181
  %v1184 = vmul.f32 %v1177, %v1182
  %1186 = vrot.lane.b32.xlu0 %v1184, 32
  %v1187 = vpop.permute.xlu0 %1186
  %v1189 = vadd.f32 %v1178, %v1187
  %v1190 = vtanh.pop %v1189
  %1192 = vrot.lane.b32.xlu0 %v1190, 64
  %v1193 = vpop.permute.xlu0 %1192
  %v1195 = vmul.f32 %v1177, %v1193
  %1197 = vrot.lane.b32.xlu0 %v1195, 32
  %v1198 = vpop.permute.xlu0 %1197
  %s1200 = scalar_lea.vmem %s5, 14
  %1201 = vst.msk [vmem:[%s1200] sm:$0x3] %vm164, %v1198
  // Predicated region
  $region22: #{_lambda_.15} parent=0 // pred_check
    _
  $region23: #{_lambda_.15} parent=0 // pred_check_branch
    %1203 = sbr.rel (0) target = $region25
  $region24: #{_lambda_.15} parent=0 // pred_region
    _
  $region25: #{_lambda_.15} parent=0 // pred_fallthru
    _
  // Predicated region
  $region26: #{_lambda_.15} parent=0 // pred_check
    _
  $region27: #{_lambda_.15} parent=0 // pred_check_branch
    %1205 = sbr.rel (0) target = $region29
  $region28: #{_lambda_.15} parent=0 // pred_region
    _
  $region29: #{_lambda_.15} parent=0 // pred_fallthru
    _

// kernel: _lambda_.21
$region0: #{_lambda_.21}
  #allocation0 [shape = 'u32[]', space=smem, size = 0x4, offset = 0x4, fixed_abs, tag = 'smem constant byte address 0x4 - core index']
  #allocation1 [shape = 'u32[144,128]{1,0:T(1,128)}', space=vmem, size = 0x12000, scoped, tag = 'internal scratch']
  %s0 = inlined_call_operand.vmem [shape: f32[16,32], index: 0, kind: input, shape index: {}]
  %s1 = inlined_call_operand.vmem [shape: f32[32,64], index: 1, kind: input, shape index: {}]
  %s2 = inlined_call_operand.vmem [shape: f32[1,64], index: 2, kind: input, shape index: {}]
  %s3 = inlined_call_operand.vmem [shape: f32[64,32], index: 3, kind: input, shape index: {}]
  %s4 = inlined_call_operand.vmem [shape: f32[1,32], index: 4, kind: input, shape index: {}]
  %s5 = inlined_call_operand.vmem [shape: f32[1,32], index: 5, kind: input, shape index: {}]
  %s6 = inlined_call_operand.vmem [shape: f32[1,32], index: 6, kind: input, shape index: {}]
  %s7 = inlined_call_operand.vmem [shape: f32[16,32], index: 7, kind: output, shape index: {}]
  %s8 = sld [smem:[#allocation0]]
  $region38: #{_lambda_.21} parent=0
    _
  %s10 = ssub.s32 1, %s8
  %s11 = scalar_select 0, %s10, %s8
  // Predicated region
  $region2: #{_lambda_.21} parent=0 // pred_check
    _
  $region3: #{_lambda_.21} parent=0 // pred_check_branch
    %13 = sbr.rel (0) target = $region5
  $region4: #{_lambda_.21} parent=0 // pred_region
    _
  $region5: #{_lambda_.21} parent=0 // pred_fallthru
    _
  // Predicated region
  $region6: #{_lambda_.21} parent=0 // pred_check
    _
  $region7: #{_lambda_.21} parent=0 // pred_check_branch
    %15 = sbr.rel (0) target = $region9
  $region8: #{_lambda_.21} parent=0 // pred_region
    _
  $region9: #{_lambda_.21} parent=0 // pred_fallthru
    _
  // Predicated region
  $region10: #{_lambda_.21} parent=0 // pred_check
    _
  $region11: #{_lambda_.21} parent=0 // pred_check_branch
    %17 = sbr.rel (0) target = $region13
  $region12: #{_lambda_.21} parent=0 // pred_region
    _
  $region13: #{_lambda_.21} parent=0 // pred_fallthru
    _
  // Predicated region
  $region14: #{_lambda_.21} parent=0 // pred_check
    _
  $region15: #{_lambda_.21} parent=0 // pred_check_branch
    %19 = sbr.rel (0) target = $region17
  $region16: #{_lambda_.21} parent=0 // pred_region
    _
  $region17: #{_lambda_.21} parent=0 // pred_fallthru
    _
  // Predicated region
  $region18: #{_lambda_.21} parent=0 // pred_check
    _
  $region19: #{_lambda_.21} parent=0 // pred_check_branch
    %21 = sbr.rel (0) target = $region21
  $region20: #{_lambda_.21} parent=0 // pred_region
    _
  $region21: #{_lambda_.21} parent=0 // pred_fallthru
    _
  // Predicated region
  $region22: #{_lambda_.21} parent=0 // pred_check
    _
  $region23: #{_lambda_.21} parent=0 // pred_check_branch
    %23 = sbr.rel (0) target = $region25
  $region24: #{_lambda_.21} parent=0 // pred_region
    _
  $region25: #{_lambda_.21} parent=0 // pred_fallthru
    _
  // Predicated region
  $region26: #{_lambda_.21} parent=0 // pred_check
    _
  $region27: #{_lambda_.21} parent=0 // pred_check_branch
    %25 = sbr.rel (0) target = $region29
  $region28: #{_lambda_.21} parent=0 // pred_region
    _
  $region29: #{_lambda_.21} parent=0 // pred_fallthru
    _
  %v27 = vld [vmem:[%s0] sm:$0xff]
  %v28 = vld [vmem:[%s0 + $0x8] sm:$0xff]
  %v29 = vld [vmem:[%s1] sm:$0xff]
  %v30 = vld [vmem:[%s1 + $0x8] sm:$0xff]
  %v31 = vld [vmem:[%s1 + $0x10] sm:$0xff]
  %v32 = vld [vmem:[%s1 + $0x18] sm:$0xff]
  %v33 = vpack.c.bf16 %v28, %v27
  %v34 = vpack.c.bf16 %v30, %v29
  %v35 = vpack.c.bf16 %v32, %v31
  %v36 = vld [vmem:[%s2] sm:$0x1]
  %v38 = vlaneseq
  %v39 = vshrl.u32 %v38, 7
  %v40 = vsub.s32 0, %v39
  %v41 = vrot.slane %v36, %v40
  %vm43 = vcmask 261120
  %v45 = vsel %vm43, %v33, 0
  %47 = vmatprep.subr.bf16.mxu0 0
  %48 = vmatpush1.bf16.msra.mxu0 %v34
  %49 = vmatprep.subr.bf16.mxu0 0
  %50 = vmatpush1.bf16.msra.mxu0 %v35
  %51 = vmatprep.subr.bf16.mxu0 0
  %52 = vmatpush1.bf16.msra.mxu0 0
  %53 = vmatprep.subr.bf16.mxu0 0
  %54 = vmatpush1.bf16.msra.mxu0 0
  %55 = vmatprep.subr.bf16.mxu0 0
  %56 = vmatpush1.bf16.msra.mxu0 0
  %57 = vmatprep.subr.bf16.mxu0 0
  %58 = vmatpush1.bf16.msra.mxu0 0
  %59 = vmatprep.subr.bf16.mxu0 0
  %60 = vmatpush1.bf16.msra.mxu0 0
  %61 = vmatprep.subr.bf16.mxu0 0
  %62 = vmatpush1.bf16.msra.mxu0 0
  %63 = vmatprep.subr.bf16.mxu0 0
  %64 = vmatpush1.bf16.msra.mxu0 0
  %65 = vmatprep.subr.bf16.mxu0 0
  %66 = vmatpush1.bf16.msra.mxu0 0
  %67 = vmatprep.subr.bf16.mxu0 0
  %68 = vmatpush1.bf16.msra.mxu0 0
  %69 = vmatprep.subr.bf16.mxu0 0
  %70 = vmatpush1.bf16.msra.mxu0 0
  %71 = vmatprep.subr.bf16.mxu0 0
  %72 = vmatpush1.bf16.msra.mxu0 0
  %73 = vmatprep.subr.bf16.mxu0 0
  %74 = vmatpush1.bf16.msra.mxu0 0
  %75 = vmatprep.subr.bf16.mxu0 0
  %76 = vmatpush1.bf16.msra.mxu0 0
  %77 = vmatprep.subr.bf16.mxu0 0
  %78 = vmatpush1.bf16.msra.mxu0 0
  %79 = vmatprep.mubr.bf16.mxu0 0
  %80 = vmatmul.mubr.bf16.gmra.mrb[0].mxu0 %v45
  %v81 = vpop.f32.mrb[0].mxu0
  %v82 = vadd.f32 %v41, %v81
  %v83 = vpop.f32.mrb[0].mxu0
  %v84 = vpop.f32.mrb[0].mxu0
  %v85 = vadd.f32 %v41, %v84
  %v86 = vpop.f32.mrb[0].mxu0
  %87 = vdwg.mxu0
  %v88 = vmax.f32 %v82, 0.0
  %v89 = vmax.f32 %v85, 0.0
  %v90 = vld [vmem:[%s3] sm:$0xff]
  %v91 = vld [vmem:[%s3 + $0x8] sm:$0xff]
  %v92 = vld [vmem:[%s3 + $0x10] sm:$0xff]
  %v93 = vld [vmem:[%s3 + $0x18] sm:$0xff]
  %v94 = vld [vmem:[%s3 + $0x20] sm:$0xff]
  %v95 = vld [vmem:[%s3 + $0x28] sm:$0xff]
  %v96 = vld [vmem:[%s3 + $0x30] sm:$0xff]
  %v97 = vld [vmem:[%s3 + $0x38] sm:$0xff]
  %v98 = vpack.c.bf16 %v89, %v88
  %v99 = vpack.c.bf16 %v91, %v90
  %v100 = vpack.c.bf16 %v93, %v92
  %v101 = vpack.c.bf16 %v95, %v94
  %v102 = vpack.c.bf16 %v97, %v96
  %v103 = vld [vmem:[%s4] sm:$0x1]
  %v105 = vlaneseq
  %v106 = vshrl.u32 %v105, 7
  %v107 = vsub.s32 0, %v106
  %v108 = vrot.slane %v103, %v107
  %vm110 = vcmask 523264
  %v112 = vsel %vm110, %v98, 0
  %114 = vmatprep.subr.bf16.mxu0 0
  %115 = vmatpush1.bf16.msra.mxu0 %v99
  %116 = vmatprep.subr.bf16.mxu0 0
  %117 = vmatpush1.bf16.msra.mxu0 %v100
  %118 = vmatprep.subr.bf16.mxu0 0
  %119 = vmatpush1.bf16.msra.mxu0 %v101
  %120 = vmatprep.subr.bf16.mxu0 0
  %121 = vmatpush1.bf16.msra.mxu0 %v102
  %122 = vmatprep.subr.bf16.mxu0 0
  %123 = vmatpush1.bf16.msra.mxu0 0
  %124 = vmatprep.subr.bf16.mxu0 0
  %125 = vmatpush1.bf16.msra.mxu0 0
  %126 = vmatprep.subr.bf16.mxu0 0
  %127 = vmatpush1.bf16.msra.mxu0 0
  %128 = vmatprep.subr.bf16.mxu0 0
  %129 = vmatpush1.bf16.msra.mxu0 0
  %130 = vmatprep.subr.bf16.mxu0 0
  %131 = vmatpush1.bf16.msra.mxu0 0
  %132 = vmatprep.subr.bf16.mxu0 0
  %133 = vmatpush1.bf16.msra.mxu0 0
  %134 = vmatprep.subr.bf16.mxu0 0
  %135 = vmatpush1.bf16.msra.mxu0 0
  %136 = vmatprep.subr.bf16.mxu0 0
  %137 = vmatpush1.bf16.msra.mxu0 0
  %138 = vmatprep.subr.bf16.mxu0 0
  %139 = vmatpush1.bf16.msra.mxu0 0
  %140 = vmatprep.subr.bf16.mxu0 0
  %141 = vmatpush1.bf16.msra.mxu0 0
  %142 = vmatprep.subr.bf16.mxu0 0
  %143 = vmatpush1.bf16.msra.mxu0 0
  %144 = vmatprep.subr.bf16.mxu0 0
  %145 = vmatpush1.bf16.msra.mxu0 0
  %146 = vmatprep.mubr.bf16.mxu0 0
  %147 = vmatmul.mubr.bf16.gmra.mrb[0].mxu0 %v112
  %v148 = vpop.f32.mrb[0].mxu0
  %v149 = vadd.f32 %v108, %v148
  %v150 = vpop.f32.mrb[0].mxu0
  %v151 = vpop.f32.mrb[0].mxu0
  %v152 = vadd.f32 %v108, %v151
  %v153 = vpop.f32.mrb[0].mxu0
  %154 = vdwg.mxu0
  %v155 = vadd.f32 %v149, %v27
  %v156 = vadd.f32 %v152, %v28
  %v157 = vld [vmem:[%s5] sm:$0x1]
  %v158 = vld [vmem:[%s6] sm:$0x1]
  %v159 = vsel %vm43, %v155, 0.0
  %160 = vadd.xlane.f32.xlu0 %v159
  %v161 = vpop.xlane.xlu0 %160
  %v162 = vsel %vm43, %v156, 0.0
  %163 = vadd.xlane.f32.xlu0 %v162
  %v164 = vpop.xlane.xlu0 %163
  %v165 = vrcp.pop 32.0
  %v166 = vmul.f32 %v161, %v165
  %v167 = vmul.f32 %v164, %v165
  %v168 = vsub.f32 %v155, %v166
  %v169 = vsub.f32 %v156, %v167
  %v170 = vmul.f32 %v168, %v168
  %v171 = vmul.f32 %v169, %v169
  %v172 = vsel %vm43, %v170, 0.0
  %173 = vadd.xlane.f32.xlu0 %v172
  %v174 = vpop.xlane.xlu0 %173
  %v175 = vsel %vm43, %v171, 0.0
  %176 = vadd.xlane.f32.xlu0 %v175
  %v177 = vpop.xlane.xlu0 %176
  %v178 = vrcp.pop 31.0
  %v179 = vmul.f32 %v174, %v178
  %v180 = vmul.f32 %v177, %v178
  %v182 = vlaneseq
  %v183 = vshrl.u32 %v182, 7
  %v184 = vsub.s32 0, %v183
  %v185 = vrot.slane %v157, %v184
  %v187 = vmul.f32 %v185, %v168
  %v188 = vmul.f32 %v185, %v169
  %v189 = vrsqrt.pop %v179
  %v190 = vmul.f32 %v179, %v189
  %vm191 = vcmp.eq.f32.partialorder %v179, inf
  %v192 = vsel %vm191, %v179, %v190
  %vm193 = vcmp.eq.f32.partialorder %v179, 0.0
  %v194 = vand.u32 %v179, 2147483648
  %v195 = vsel %vm193, %v194, %v192
  %v196 = vrsqrt.pop %v180
  %v197 = vmul.f32 %v180, %v196
  %vm198 = vcmp.eq.f32.partialorder %v180, inf
  %v199 = vsel %vm198, %v180, %v197
  %vm200 = vcmp.eq.f32.partialorder %v180, 0.0
  %v201 = vand.u32 %v180, 2147483648
  %v202 = vsel %vm200, %v201, %v199
  %v203 = vadd.f32 %v195, 1e-06
  %v204 = vadd.f32 %v202, 1e-06
  %v205 = vrcp.pop %v203
  %v206 = vmul.f32 %v187, %v205
  %v207 = vrcp.pop %v204
  %v208 = vmul.f32 %v188, %v207
  %v210 = vlaneseq
  %v211 = vshrl.u32 %v210, 7
  %v212 = vsub.s32 0, %v211
  %v213 = vrot.slane %v158, %v212
  %v215 = vadd.f32 %v206, %v213
  %v216 = vadd.f32 %v208, %v213
  %217 = vst.msk [vmem:[%s7] sm:$0xff] %vm43, %v215
  %218 = vst.msk [vmem:[%s7 + $0x8] sm:$0xff] %vm43, %v216
  // Predicated region
  $region30: #{_lambda_.21} parent=0 // pred_check
    _
  $region31: #{_lambda_.21} parent=0 // pred_check_branch
    %220 = sbr.rel (0) target = $region33
  $region32: #{_lambda_.21} parent=0 // pred_region
    _
  $region33: #{_lambda_.21} parent=0 // pred_fallthru
    _
  // Predicated region
  $region34: #{_lambda_.21} parent=0 // pred_check
    _
  $region35: #{_lambda_.21} parent=0 // pred_check_branch
    %222 = sbr.rel (0) target = $region37
  $region36: #{_lambda_.21} parent=0 // pred_region
    _
  $region37: #{_lambda_.21} parent=0 // pred_fallthru
    _

// kernel: _lambda_.16
$region0: #{_lambda_.16}
  #allocation0 [shape = 'u32[]', space=smem, size = 0x4, offset = 0x4, fixed_abs, tag = 'smem constant byte address 0x4 - core index']
  #allocation1 [shape = 'u32[144,128]{1,0:T(1,128)}', space=vmem, size = 0x12000, scoped, tag = 'internal scratch']
  %s0 = inlined_call_operand.vmem [shape: f32[16,24], index: 0, kind: input, shape index: {}]
  %s1 = inlined_call_operand.vmem [shape: f32[16,5], index: 1, kind: input, shape index: {}]
  %s2 = inlined_call_operand.vmem [shape: f32[5,8], index: 2, kind: input, shape index: {}]
  %s3 = inlined_call_operand.vmem [shape: f32[1,8], index: 3, kind: input, shape index: {}]
  %s4 = inlined_call_operand.vmem [shape: f32[24,32], index: 4, kind: input, shape index: {}]
  %s5 = inlined_call_operand.vmem [shape: f32[8,32], index: 5, kind: input, shape index: {}]
  %s6 = inlined_call_operand.vmem [shape: f32[1,32], index: 6, kind: input, shape index: {}]
  %s7 = inlined_call_operand.vmem [shape: f32[16,32], index: 7, kind: output, shape index: {}]
  %s8 = sld [smem:[#allocation0]]
  $region38: #{_lambda_.16} parent=0
    _
  %s10 = ssub.s32 1, %s8
  %s11 = scalar_select 0, %s10, %s8
  // Predicated region
  $region2: #{_lambda_.16} parent=0 // pred_check
    _
  $region3: #{_lambda_.16} parent=0 // pred_check_branch
    %13 = sbr.rel (0) target = $region5
  $region4: #{_lambda_.16} parent=0 // pred_region
    _
  $region5: #{_lambda_.16} parent=0 // pred_fallthru
    _
  // Predicated region
  $region6: #{_lambda_.16} parent=0 // pred_check
    _
  $region7: #{_lambda_.16} parent=0 // pred_check_branch
    %15 = sbr.rel (0) target = $region9
  $region8: #{_lambda_.16} parent=0 // pred_region
    _
  $region9: #{_lambda_.16} parent=0 // pred_fallthru
    _
  // Predicated region
  $region10: #{_lambda_.16} parent=0 // pred_check
    _
  $region11: #{_lambda_.16} parent=0 // pred_check_branch
    %17 = sbr.rel (0) target = $region13
  $region12: #{_lambda_.16} parent=0 // pred_region
    _
  $region13: #{_lambda_.16} parent=0 // pred_fallthru
    _
  // Predicated region
  $region14: #{_lambda_.16} parent=0 // pred_check
    _
  $region15: #{_lambda_.16} parent=0 // pred_check_branch
    %19 = sbr.rel (0) target = $region17
  $region16: #{_lambda_.16} parent=0 // pred_region
    _
  $region17: #{_lambda_.16} parent=0 // pred_fallthru
    _
  // Predicated region
  $region18: #{_lambda_.16} parent=0 // pred_check
    _
  $region19: #{_lambda_.16} parent=0 // pred_check_branch
    %21 = sbr.rel (0) target = $region21
  $region20: #{_lambda_.16} parent=0 // pred_region
    _
  $region21: #{_lambda_.16} parent=0 // pred_fallthru
    _
  // Predicated region
  $region22: #{_lambda_.16} parent=0 // pred_check
    _
  $region23: #{_lambda_.16} parent=0 // pred_check_branch
    %23 = sbr.rel (0) target = $region25
  $region24: #{_lambda_.16} parent=0 // pred_region
    _
  $region25: #{_lambda_.16} parent=0 // pred_fallthru
    _
  // Predicated region
  $region26: #{_lambda_.16} parent=0 // pred_check
    _
  $region27: #{_lambda_.16} parent=0 // pred_check_branch
    %25 = sbr.rel (0) target = $region29
  $region28: #{_lambda_.16} parent=0 // pred_region
    _
  $region29: #{_lambda_.16} parent=0 // pred_fallthru
    _
  %v27 = vld [vmem:[%s1] sm:$0xff]
  %v28 = vld [vmem:[%s1 + $0x8] sm:$0xff]
  %v29 = vld [vmem:[%s2] sm:$0x1f]
  %v30 = vpack.c.bf16 %v28, %v27
  %v31 = vpack.c.bf16 %v29, %v29
  %v32 = vld [vmem:[%s3] sm:$0x1]
  %v34 = vlaneseq
  %v35 = vshrl.u32 %v34, 7
  %v36 = vsub.s32 0, %v35
  %v37 = vrot.slane %v32, %v36
  %vm39 = vcmask 39936
  %v41 = vsel %vm39, %v30, 0
  %vm43 = vcmask 1041408
  %vm44 = vcmask 1042432
  %v45 = vsel %vm43, 4294967295, 65535
  %v46 = vsel %vm44, %v45, 0
  %v48 = vand.u32 %v31, %v46
  %50 = vmatprep.subr.bf16.mxu0 0
  %51 = vmatpush1.bf16.msra.mxu0 %v48
  %52 = vmatprep.subr.bf16.mxu0 0
  %53 = vmatpush1.bf16.msra.mxu0 0
  %54 = vmatprep.subr.bf16.mxu0 0
  %55 = vmatpush1.bf16.msra.mxu0 0
  %56 = vmatprep.subr.bf16.mxu0 0
  %57 = vmatpush1.bf16.msra.mxu0 0
  %58 = vmatprep.subr.bf16.mxu0 0
  %59 = vmatpush1.bf16.msra.mxu0 0
  %60 = vmatprep.subr.bf16.mxu0 0
  %61 = vmatpush1.bf16.msra.mxu0 0
  %62 = vmatprep.subr.bf16.mxu0 0
  %63 = vmatpush1.bf16.msra.mxu0 0
  %64 = vmatprep.subr.bf16.mxu0 0
  %65 = vmatpush1.bf16.msra.mxu0 0
  %66 = vmatprep.subr.bf16.mxu0 0
  %67 = vmatpush1.bf16.msra.mxu0 0
  %68 = vmatprep.subr.bf16.mxu0 0
  %69 = vmatpush1.bf16.msra.mxu0 0
  %70 = vmatprep.subr.bf16.mxu0 0
  %71 = vmatpush1.bf16.msra.mxu0 0
  %72 = vmatprep.subr.bf16.mxu0 0
  %73 = vmatpush1.bf16.msra.mxu0 0
  %74 = vmatprep.subr.bf16.mxu0 0
  %75 = vmatpush1.bf16.msra.mxu0 0
  %76 = vmatprep.subr.bf16.mxu0 0
  %77 = vmatpush1.bf16.msra.mxu0 0
  %78 = vmatprep.subr.bf16.mxu0 0
  %79 = vmatpush1.bf16.msra.mxu0 0
  %80 = vmatprep.subr.bf16.mxu0 0
  %81 = vmatpush1.bf16.msra.mxu0 0
  %82 = vmatprep.mubr.bf16.mxu0 0
  %83 = vmatmul.mubr.bf16.gmra.mrb[0].mxu0 %v41
  %v84 = vpop.f32.mrb[0].mxu0
  %v85 = vadd.f32 %v37, %v84
  %v86 = vpop.f32.mrb[0].mxu0
  %v87 = vpop.f32.mrb[0].mxu0
  %v88 = vadd.f32 %v37, %v87
  %v89 = vpop.f32.mrb[0].mxu0
  %90 = vdwg.mxu0
  %v91 = vld [vmem:[%s0] sm:$0xff]
  %v92 = vld [vmem:[%s0 + $0x8] sm:$0xff]
  %v93 = vld [vmem:[%s4] sm:$0xff]
  %v94 = vld [vmem:[%s4 + $0x8] sm:$0xff]
  %v95 = vld [vmem:[%s4 + $0x10] sm:$0xff]
  %v96 = vpack.c.bf16 %v92, %v91
  %v97 = vpack.c.bf16 %v94, %v93
  %v98 = vpack.c.bf16 %v95, %v95
  %v99 = vld [vmem:[%s5] sm:$0xff]
  %v100 = vpack.c.bf16 %v88, %v85
  %v101 = vpack.c.bf16 %v99, %v99
  %vm102 = vcmask 64512
  %v104 = vsel %vm102, %v100, 0
  %vm106 = vcmask 1043456
  %v108 = vsel %vm106, %v101, 0
  %110 = vmatprep.subr.bf16.mxu0 0
  %111 = vmatpush1.bf16.msra.mxu0 %v108
  %112 = vmatprep.subr.bf16.mxu0 0
  %113 = vmatpush1.bf16.msra.mxu0 0
  %114 = vmatprep.subr.bf16.mxu0 0
  %115 = vmatpush1.bf16.msra.mxu0 0
  %116 = vmatprep.subr.bf16.mxu0 0
  %117 = vmatpush1.bf16.msra.mxu0 0
  %118 = vmatprep.subr.bf16.mxu0 0
  %119 = vmatpush1.bf16.msra.mxu0 0
  %120 = vmatprep.subr.bf16.mxu0 0
  %121 = vmatpush1.bf16.msra.mxu0 0
  %122 = vmatprep.subr.bf16.mxu0 0
  %123 = vmatpush1.bf16.msra.mxu0 0
  %124 = vmatprep.subr.bf16.mxu0 0
  %125 = vmatpush1.bf16.msra.mxu0 0
  %126 = vmatprep.subr.bf16.mxu0 0
  %127 = vmatpush1.bf16.msra.mxu0 0
  %128 = vmatprep.subr.bf16.mxu0 0
  %129 = vmatpush1.bf16.msra.mxu0 0
  %130 = vmatprep.subr.bf16.mxu0 0
  %131 = vmatpush1.bf16.msra.mxu0 0
  %132 = vmatprep.subr.bf16.mxu0 0
  %133 = vmatpush1.bf16.msra.mxu0 0
  %134 = vmatprep.subr.bf16.mxu0 0
  %135 = vmatpush1.bf16.msra.mxu0 0
  %136 = vmatprep.subr.bf16.mxu0 0
  %137 = vmatpush1.bf16.msra.mxu0 0
  %138 = vmatprep.subr.bf16.mxu0 0
  %139 = vmatpush1.bf16.msra.mxu0 0
  %140 = vmatprep.subr.bf16.mxu0 0
  %141 = vmatpush1.bf16.msra.mxu0 0
  %142 = vmatprep.mubr.bf16.mxu0 0
  %143 = vmatmul.mubr.bf16.gmra.mrb[0].mxu0 %v104
  %v144 = vpop.f32.mrb[0].mxu0
  %v145 = vadd.f32 0.0, %v144
  %v146 = vpop.f32.mrb[0].mxu0
  %v147 = vpop.f32.mrb[0].mxu0
  %v148 = vadd.f32 0.0, %v147
  %v149 = vpop.f32.mrb[0].mxu0
  %150 = vdwg.mxu0
  %vm151 = vcmask 195584
  %v153 = vsel %vm151, %v96, 0
  %v156 = vsel %vm106, %v98, 0
  %158 = vmatprep.subr.bf16.mxu0 0
  %159 = vmatpush1.bf16.msra.mxu0 %v97
  %160 = vmatprep.subr.bf16.mxu0 0
  %161 = vmatpush1.bf16.msra.mxu0 %v156
  %162 = vmatprep.subr.bf16.mxu0 0
  %163 = vmatpush1.bf16.msra.mxu0 0
  %164 = vmatprep.subr.bf16.mxu0 0
  %165 = vmatpush1.bf16.msra.mxu0 0
  %166 = vmatprep.subr.bf16.mxu0 0
  %167 = vmatpush1.bf16.msra.mxu0 0
  %168 = vmatprep.subr.bf16.mxu0 0
  %169 = vmatpush1.bf16.msra.mxu0 0
  %170 = vmatprep.subr.bf16.mxu0 0
  %171 = vmatpush1.bf16.msra.mxu0 0
  %172 = vmatprep.subr.bf16.mxu0 0
  %173 = vmatpush1.bf16.msra.mxu0 0
  %174 = vmatprep.subr.bf16.mxu0 0
  %175 = vmatpush1.bf16.msra.mxu0 0
  %176 = vmatprep.subr.bf16.mxu0 0
  %177 = vmatpush1.bf16.msra.mxu0 0
  %178 = vmatprep.subr.bf16.mxu0 0
  %179 = vmatpush1.bf16.msra.mxu0 0
  %180 = vmatprep.subr.bf16.mxu0 0
  %181 = vmatpush1.bf16.msra.mxu0 0
  %182 = vmatprep.subr.bf16.mxu0 0
  %183 = vmatpush1.bf16.msra.mxu0 0
  %184 = vmatprep.subr.bf16.mxu0 0
  %185 = vmatpush1.bf16.msra.mxu0 0
  %186 = vmatprep.subr.bf16.mxu0 0
  %187 = vmatpush1.bf16.msra.mxu0 0
  %188 = vmatprep.subr.bf16.mxu0 0
  %189 = vmatpush1.bf16.msra.mxu0 0
  %190 = vmatprep.mubr.bf16.mxu0 0
  %191 = vmatmul.mubr.bf16.gmra.mrb[0].mxu0 %v153
  %v192 = vpop.f32.mrb[0].mxu0
  %v193 = vadd.f32 %v145, %v192
  %v194 = vpop.f32.mrb[0].mxu0
  %v195 = vpop.f32.mrb[0].mxu0
  %v196 = vadd.f32 %v148, %v195
  %v197 = vpop.f32.mrb[0].mxu0
  %198 = vdwg.mxu0
  %v199 = vld [vmem:[%s6] sm:$0x1]
  %v201 = vlaneseq
  %v202 = vshrl.u32 %v201, 7
  %v203 = vsub.s32 0, %v202
  %v204 = vrot.slane %v199, %v203
  %v206 = vadd.f32 %v193, %v204
  %v207 = vadd.f32 %v196, %v204
  %vm208 = vcmask 261120
  %209 = vst.msk [vmem:[%s7] sm:$0xff] %vm208, %v206
  %210 = vst.msk [vmem:[%s7 + $0x8] sm:$0xff] %vm208, %v207
  // Predicated region
  $region30: #{_lambda_.16} parent=0 // pred_check
    _
  $region31: #{_lambda_.16} parent=0 // pred_check_branch
    %212 = sbr.rel (0) target = $region33
  $region32: #{_lambda_.16} parent=0 // pred_region
    _
  $region33: #{_lambda_.16} parent=0 // pred_fallthru
    _
  // Predicated region
  $region34: #{_lambda_.16} parent=0 // pred_check
    _
  $region35: #{_lambda_.16} parent=0 // pred_check_branch
    %214 = sbr.rel (0) target = $region37
  $region36: #{_lambda_.16} parent=0 // pred_region
    _
  $region37: #{_lambda_.16} parent=0 // pred_fallthru
    _

// kernel: _lambda_.17
$region0: #{_lambda_.17}
  #allocation0 [shape = 'u32[]', space=smem, size = 0x4, offset = 0x4, fixed_abs, tag = 'smem constant byte address 0x4 - core index']
  #allocation1 [shape = 'u32[144,128]{1,0:T(1,128)}', space=vmem, size = 0x12000, scoped, tag = 'internal scratch']
  %s0 = inlined_call_operand.vmem [shape: f32[128,4], index: 0, kind: input, shape index: {}]
  %s1 = inlined_call_operand.vmem [shape: f32[4,16], index: 1, kind: input, shape index: {}]
  %s2 = inlined_call_operand.vmem [shape: f32[1,16], index: 2, kind: input, shape index: {}]
  %s3 = inlined_call_operand.vmem [shape: f32[128,16], index: 3, kind: output, shape index: {}]
  %s4 = sld [smem:[#allocation0]]
  $region22: #{_lambda_.17} parent=0
    _
  %s6 = ssub.s32 1, %s4
  %s7 = scalar_select 0, %s6, %s4
  // Predicated region
  $region2: #{_lambda_.17} parent=0 // pred_check
    _
  $region3: #{_lambda_.17} parent=0 // pred_check_branch
    %9 = sbr.rel (0) target = $region5
  $region4: #{_lambda_.17} parent=0 // pred_region
    _
  $region5: #{_lambda_.17} parent=0 // pred_fallthru
    _
  // Predicated region
  $region6: #{_lambda_.17} parent=0 // pred_check
    _
  $region7: #{_lambda_.17} parent=0 // pred_check_branch
    %11 = sbr.rel (0) target = $region9
  $region8: #{_lambda_.17} parent=0 // pred_region
    _
  $region9: #{_lambda_.17} parent=0 // pred_fallthru
    _
  // Predicated region
  $region10: #{_lambda_.17} parent=0 // pred_check
    _
  $region11: #{_lambda_.17} parent=0 // pred_check_branch
    %13 = sbr.rel (0) target = $region13
  $region12: #{_lambda_.17} parent=0 // pred_region
    _
  $region13: #{_lambda_.17} parent=0 // pred_fallthru
    _
  %v15 = vld [vmem:[%s0] sm:$0xff]
  %v16 = vld [vmem:[%s0 + $0x8] sm:$0xff]
  %v17 = vld [vmem:[%s0 + $0x10] sm:$0xff]
  %v18 = vld [vmem:[%s0 + $0x18] sm:$0xff]
  %v19 = vld [vmem:[%s0 + $0x20] sm:$0xff]
  %v20 = vld [vmem:[%s0 + $0x28] sm:$0xff]
  %v21 = vld [vmem:[%s0 + $0x30] sm:$0xff]
  %v22 = vld [vmem:[%s0 + $0x38] sm:$0xff]
  %v23 = vld [vmem:[%s0 + $0x40] sm:$0xff]
  %v24 = vld [vmem:[%s0 + $0x48] sm:$0xff]
  %v25 = vld [vmem:[%s0 + $0x50] sm:$0xff]
  %v26 = vld [vmem:[%s0 + $0x58] sm:$0xff]
  %v27 = vld [vmem:[%s0 + $0x60] sm:$0xff]
  %v28 = vld [vmem:[%s0 + $0x68] sm:$0xff]
  %v29 = vld [vmem:[%s0 + $0x70] sm:$0xff]
  %v30 = vld [vmem:[%s0 + $0x78] sm:$0xff]
  %v31 = vld [vmem:[%s1] sm:$0xf]
  %v32 = vpack.c.bf16 %v16, %v15
  %v33 = vpack.c.bf16 %v18, %v17
  %v34 = vpack.c.bf16 %v20, %v19
  %v35 = vpack.c.bf16 %v22, %v21
  %v36 = vpack.c.bf16 %v24, %v23
  %v37 = vpack.c.bf16 %v26, %v25
  %v38 = vpack.c.bf16 %v28, %v27
  %v39 = vpack.c.bf16 %v30, %v29
  %v40 = vpack.c.bf16 %v31, %v31
  %v41 = vld [vmem:[%s2] sm:$0x1]
  %v43 = vlaneseq
  %v44 = vshrl.u32 %v43, 7
  %v45 = vsub.s32 0, %v44
  %v46 = vrot.slane %v41, %v45
  %vm48 = vcmask 31744
  %v50 = vsel %vm48, %v32, 0
  %v53 = vsel %vm48, %v33, 0
  %v56 = vsel %vm48, %v34, 0
  %v59 = vsel %vm48, %v35, 0
  %v62 = vsel %vm48, %v36, 0
  %v65 = vsel %vm48, %v37, 0
  %v68 = vsel %vm48, %v38, 0
  %v71 = vsel %vm48, %v39, 0
  %vm73 = vcmask 1041408
  %v75 = vsel %vm73, %v40, 0
  %77 = vmatprep.subr.bf16.mxu0 0
  %78 = vmatpush1.bf16.msra.mxu0 %v75
  %79 = vmatprep.subr.bf16.mxu0 0
  %80 = vmatpush1.bf16.msra.mxu0 0
  %81 = vmatprep.subr.bf16.mxu0 0
  %82 = vmatpush1.bf16.msra.mxu0 0
  %83 = vmatprep.subr.bf16.mxu0 0
  %84 = vmatpush1.bf16.msra.mxu0 0
  %85 = vmatprep.subr.bf16.mxu0 0
  %86 = vmatpush1.bf16.msra.mxu0 0
  %87 = vmatprep.subr.bf16.mxu0 0
  %88 = vmatpush1.bf16.msra.mxu0 0
  %89 = vmatprep.subr.bf16.mxu0 0
  %90 = vmatpush1.bf16.msra.mxu0 0
  %91 = vmatprep.subr.bf16.mxu0 0
  %92 = vmatpush1.bf16.msra.mxu0 0
  %93 = vmatprep.subr.bf16.mxu0 0
  %94 = vmatpush1.bf16.msra.mxu0 0
  %95 = vmatprep.subr.bf16.mxu0 0
  %96 = vmatpush1.bf16.msra.mxu0 0
  %97 = vmatprep.subr.bf16.mxu0 0
  %98 = vmatpush1.bf16.msra.mxu0 0
  %99 = vmatprep.subr.bf16.mxu0 0
  %100 = vmatpush1.bf16.msra.mxu0 0
  %101 = vmatprep.subr.bf16.mxu0 0
  %102 = vmatpush1.bf16.msra.mxu0 0
  %103 = vmatprep.subr.bf16.mxu0 0
  %104 = vmatpush1.bf16.msra.mxu0 0
  %105 = vmatprep.subr.bf16.mxu0 0
  %106 = vmatpush1.bf16.msra.mxu0 0
  %107 = vmatprep.subr.bf16.mxu0 0
  %108 = vmatpush1.bf16.msra.mxu0 0
  %109 = vmatprep.mubr.bf16.mxu0 0
  %110 = vmatmul.mubr.bf16.gmra.mrb[0].mxu0 %v50
  %v111 = vpop.f32.mrb[0].mxu0
  %v112 = vadd.f32 %v46, %v111
  %v113 = vpop.f32.mrb[0].mxu0
  %v114 = vpop.f32.mrb[0].mxu0
  %v115 = vadd.f32 %v46, %v114
  %v116 = vpop.f32.mrb[0].mxu0
  %117 = vmatprep.mubr.bf16.mxu0 0
  %118 = vmatmul.mubr.bf16.gmra.mrb[0].mxu0 %v53
  %v119 = vpop.f32.mrb[0].mxu0
  %v120 = vadd.f32 %v46, %v119
  %v121 = vpop.f32.mrb[0].mxu0
  %v122 = vpop.f32.mrb[0].mxu0
  %v123 = vadd.f32 %v46, %v122
  %v124 = vpop.f32.mrb[0].mxu0
  %125 = vmatprep.mubr.bf16.mxu0 0
  %126 = vmatmul.mubr.bf16.gmra.mrb[0].mxu0 %v56
  %v127 = vpop.f32.mrb[0].mxu0
  %v128 = vadd.f32 %v46, %v127
  %v129 = vpop.f32.mrb[0].mxu0
  %v130 = vpop.f32.mrb[0].mxu0
  %v131 = vadd.f32 %v46, %v130
  %v132 = vpop.f32.mrb[0].mxu0
  %133 = vmatprep.mubr.bf16.mxu0 0
  %134 = vmatmul.mubr.bf16.gmra.mrb[0].mxu0 %v59
  %v135 = vpop.f32.mrb[0].mxu0
  %v136 = vadd.f32 %v46, %v135
  %v137 = vpop.f32.mrb[0].mxu0
  %v138 = vpop.f32.mrb[0].mxu0
  %v139 = vadd.f32 %v46, %v138
  %v140 = vpop.f32.mrb[0].mxu0
  %141 = vmatprep.mubr.bf16.mxu0 0
  %142 = vmatmul.mubr.bf16.gmra.mrb[0].mxu0 %v62
  %v143 = vpop.f32.mrb[0].mxu0
  %v144 = vadd.f32 %v46, %v143
  %v145 = vpop.f32.mrb[0].mxu0
  %v146 = vpop.f32.mrb[0].mxu0
  %v147 = vadd.f32 %v46, %v146
  %v148 = vpop.f32.mrb[0].mxu0
  %149 = vmatprep.mubr.bf16.mxu0 0
  %150 = vmatmul.mubr.bf16.gmra.mrb[0].mxu0 %v65
  %v151 = vpop.f32.mrb[0].mxu0
  %v152 = vadd.f32 %v46, %v151
  %v153 = vpop.f32.mrb[0].mxu0
  %v154 = vpop.f32.mrb[0].mxu0
  %v155 = vadd.f32 %v46, %v154
  %v156 = vpop.f32.mrb[0].mxu0
  %157 = vmatprep.mubr.bf16.mxu0 0
  %158 = vmatmul.mubr.bf16.gmra.mrb[0].mxu0 %v68
  %v159 = vpop.f32.mrb[0].mxu0
  %v160 = vadd.f32 %v46, %v159
  %v161 = vpop.f32.mrb[0].mxu0
  %v162 = vpop.f32.mrb[0].mxu0
  %v163 = vadd.f32 %v46, %v162
  %v164 = vpop.f32.mrb[0].mxu0
  %165 = vmatprep.mubr.bf16.mxu0 0
  %166 = vmatmul.mubr.bf16.gmra.mrb[0].mxu0 %v71
  %v167 = vpop.f32.mrb[0].mxu0
  %v168 = vadd.f32 %v46, %v167
  %v169 = vpop.f32.mrb[0].mxu0
  %v170 = vpop.f32.mrb[0].mxu0
  %v171 = vadd.f32 %v46, %v170
  %v172 = vpop.f32.mrb[0].mxu0
  %173 = vdwg.mxu0
  %v174 = vmax.f32 %v112, 0.0
  %v175 = vmax.f32 %v115, 0.0
  %v176 = vmax.f32 %v120, 0.0
  %v177 = vmax.f32 %v123, 0.0
  %v178 = vmax.f32 %v128, 0.0
  %v179 = vmax.f32 %v131, 0.0
  %v180 = vmax.f32 %v136, 0.0
  %v181 = vmax.f32 %v139, 0.0
  %v182 = vmax.f32 %v144, 0.0
  %v183 = vmax.f32 %v147, 0.0
  %v184 = vmax.f32 %v152, 0.0
  %v185 = vmax.f32 %v155, 0.0
  %v186 = vmax.f32 %v160, 0.0
  %v187 = vmax.f32 %v163, 0.0
  %v188 = vmax.f32 %v168, 0.0
  %v189 = vmax.f32 %v171, 0.0
  %vm190 = vcmask 130048
  %191 = vst.msk [vmem:[%s3] sm:$0xff] %vm190, %v174
  %192 = vst.msk [vmem:[%s3 + $0x8] sm:$0xff] %vm190, %v175
  %193 = vst.msk [vmem:[%s3 + $0x10] sm:$0xff] %vm190, %v176
  %194 = vst.msk [vmem:[%s3 + $0x18] sm:$0xff] %vm190, %v177
  %195 = vst.msk [vmem:[%s3 + $0x20] sm:$0xff] %vm190, %v178
  %196 = vst.msk [vmem:[%s3 + $0x28] sm:$0xff] %vm190, %v179
  %197 = vst.msk [vmem:[%s3 + $0x30] sm:$0xff] %vm190, %v180
  %198 = vst.msk [vmem:[%s3 + $0x38] sm:$0xff] %vm190, %v181
  %199 = vst.msk [vmem:[%s3 + $0x40] sm:$0xff] %vm190, %v182
  %200 = vst.msk [vmem:[%s3 + $0x48] sm:$0xff] %vm190, %v183
  %201 = vst.msk [vmem:[%s3 + $0x50] sm:$0xff] %vm190, %v184
  %202 = vst.msk [vmem:[%s3 + $0x58] sm:$0xff] %vm190, %v185
  %203 = vst.msk [vmem:[%s3 + $0x60] sm:$0xff] %vm190, %v186
  %204 = vst.msk [vmem:[%s3 + $0x68] sm:$0xff] %vm190, %v187
  %205 = vst.msk [vmem:[%s3 + $0x70] sm:$0xff] %vm190, %v188
  %206 = vst.msk [vmem:[%s3 + $0x78] sm:$0xff] %vm190, %v189
  // Predicated region
  $region14: #{_lambda_.17} parent=0 // pred_check
    _
  $region15: #{_lambda_.17} parent=0 // pred_check_branch
    %208 = sbr.rel (0) target = $region17
  $region16: #{_lambda_.17} parent=0 // pred_region
    _
  $region17: #{_lambda_.17} parent=0 // pred_fallthru
    _
  // Predicated region
  $region18: #{_lambda_.17} parent=0 // pred_check
    _
  $region19: #{_lambda_.17} parent=0 // pred_check_branch
    %210 = sbr.rel (0) target = $region21
  $region20: #{_lambda_.17} parent=0 // pred_region
    _
  $region21: #{_lambda_.17} parent=0 // pred_fallthru
    _

// kernel: _lambda_.28
$region0: #{_lambda_.28}
  #allocation0 [shape = 'u32[]', space=smem, size = 0x4, offset = 0x4, fixed_abs, tag = 'smem constant byte address 0x4 - core index']
  #allocation1 [shape = 'u32[144,128]{1,0:T(1,128)}', space=vmem, size = 0x12000, scoped, tag = 'internal scratch']
  #allocation2 [shape = 'f32[1,1]{1,0:T(1,128)S(1)}', space=vmem, size = 0x200, scoped, tag = 'scoped memory for _lambda_.28']
  %s0 = inlined_call_operand.vmem [shape: f32[2,8,32], index: 0, kind: input, shape index: {}]
  %s1 = inlined_call_operand.vmem [shape: f32[2,8,1], index: 1, kind: input, shape index: {}]
  %s2 = inlined_call_operand.vmem [shape: f32[32,32], index: 2, kind: input, shape index: {}]
  %s3 = inlined_call_operand.vmem [shape: f32[1,32], index: 3, kind: input, shape index: {}]
  %s4 = inlined_call_operand.vmem [shape: f32[32,1], index: 4, kind: input, shape index: {}]
  %s5 = inlined_call_operand.<no memory space> [shape: f32[1,1], index: 5, kind: input, shape index: {}]
  %s6 = inlined_call_operand.vmem [shape: f32[32,64], index: 6, kind: input, shape index: {}]
  %s7 = inlined_call_operand.vmem [shape: f32[1,64], index: 7, kind: input, shape index: {}]
  %s8 = inlined_call_operand.vmem [shape: f32[2,1,64], index: 8, kind: output, shape index: {}]
  %s9 = sld [smem:[#allocation0]]
  $region65: #{_lambda_.28} parent=0
    _
  %s11 = ssub.s32 1, %s9
  %s12 = scalar_select 0, %s11, %s9
  %v13 = vstv %s5
  %14 = vst [vmem:[#allocation2] sm:$0x1] %v13
  loop: start=0, step=1, limit=4
  $region2: #{_lambda_.28} parent=0 // loop_pre_header
    _
  $region3: #{_lambda_.28} parent=0 // loop_header
    %s16 = sphi 0, %s20
    %p17 = scmp.ge.s32.totalorder %s16, 4
    %s26 = sphi 0, %s28
    %s29 = sphi 0, %s26
    %s30 = sphi 0, %s29
    %s46 = sphi 0, %s30
    %s52 = sphi 0, %s54
    %s55 = sphi 0, %s52
    %s56 = sphi 0, %s55
    %s72 = sphi 0, %s56
    %s76 = sphi 0, %s76
    %s78 = sphi 0, %s76
    %s79 = sphi 0, %s78
    %s93 = sphi 0, %s79
    %s97 = sphi 0, %s97
    %s99 = sphi 0, %s97
    %s100 = sphi 0, %s99
    %s114 = sphi 0, %s100
    %s118 = sphi 0, %s118
    %s120 = sphi 0, %s118
    %s121 = sphi 0, %s120
    %s135 = sphi 0, %s121
    %s139 = sphi 0, %s139
    %s141 = sphi 0, %s139
    %s142 = sphi 0, %s141
    %s156 = sphi 0, %s142
    %s160 = sphi 0, %s160
    %s162 = sphi 0, %s160
    %s163 = sphi 0, %s162
    %s177 = sphi 0, %s163
    %s181 = sphi 0, %s181
    %s183 = sphi 0, %s181
    %s184 = sphi 0, %s183
    %s198 = sphi 0, %s184
    %s204 = sphi 0, %s206
    %s207 = sphi 0, %s204
    %s208 = sphi 0, %s207
    %s224 = sphi 0, %s208
  $region4: #{_lambda_.28} parent=0 // loop_header_branch
    %19 = sbr.rel (%p17) target = $region8
  $region5: #{_lambda_.28} parent=0 // loop_body
    %s21 = ssub.s32 %s16, 1
    %s22 = ssub.s32 %s16, 2
    %s23 = sadd.s32 %s16, 1
    %s24 = ssub.s32 %s16, %s23
    %p25 = scmp.eq.s32.totalorder %s24, 0
    %s27 = sadd.s32 %s26, 1
    %s28 = scalar_select %p25, %s26, %s27
    %p31 = pneg %p25
    %p32 = scmp.eq.s32.totalorder %s16, 1
    %p33 = por %p31, %p32
    %p34 = scmp.ne.s32.totalorder %s26, %s29
    %p35 = scmp.eq.s32.totalorder %s16, 0
    %p36 = por %p34, %p35
    %p37 = scmp.ne.s32.totalorder %s26, %s29
    %p38 = scmp.eq.s32.totalorder %s21, 1
    %p39 = por %p37, %p38
    %p40 = scmp.ne.s32.totalorder %s29, %s30
    %p41 = scmp.eq.s32.totalorder %s21, 0
    %p42 = por %p40, %p41
    %p43 = scmp.ne.s32.totalorder %s29, %s30
    %p44 = scmp.eq.s32.totalorder %s22, 1
    %p45 = por %p43, %p44
    %p47 = scmp.ne.s32.totalorder %s30, %s46
    %p48 = scmp.eq.s32.totalorder %s22, 0
    %p49 = por %p47, %p48
    %s50 = ssub.s32 %s16, %s23
    %p51 = scmp.eq.s32.totalorder %s50, 0
    %s53 = sadd.s32 %s52, 1
    %s54 = scalar_select %p51, %s52, %s53
    %p57 = pneg %p51
    %p58 = scmp.eq.s32.totalorder %s16, 1
    %p59 = por %p57, %p58
    %p60 = scmp.ne.s32.totalorder %s52, %s55
    %p61 = scmp.eq.s32.totalorder %s16, 0
    %p62 = por %p60, %p61
    %p63 = scmp.ne.s32.totalorder %s52, %s55
    %p64 = scmp.eq.s32.totalorder %s21, 1
    %p65 = por %p63, %p64
    %p66 = scmp.ne.s32.totalorder %s55, %s56
    %p67 = scmp.eq.s32.totalorder %s21, 0
    %p68 = por %p66, %p67
    %p69 = scmp.ne.s32.totalorder %s55, %s56
    %p70 = scmp.eq.s32.totalorder %s22, 1
    %p71 = por %p69, %p70
    %p73 = scmp.ne.s32.totalorder %s56, %s72
    %p74 = scmp.eq.s32.totalorder %s22, 0
    %p75 = por %p73, %p74
    %s77 = sadd.s32 %s76, 1
    %p80 = scmp.eq.s32.totalorder %s16, 1
    %p81 = scmp.ne.s32.totalorder %s76, %s78
    %p82 = scmp.eq.s32.totalorder %s16, 0
    %p83 = por %p81, %p82
    %p84 = scmp.ne.s32.totalorder %s76, %s78
    %p85 = scmp.eq.s32.totalorder %s21, 1
    %p86 = por %p84, %p85
    %p87 = scmp.ne.s32.totalorder %s78, %s79
    %p88 = scmp.eq.s32.totalorder %s21, 0
    %p89 = por %p87, %p88
    %p90 = scmp.ne.s32.totalorder %s78, %s79
    %p91 = scmp.eq.s32.totalorder %s22, 1
    %p92 = por %p90, %p91
    %p94 = scmp.ne.s32.totalorder %s79, %s93
    %p95 = scmp.eq.s32.totalorder %s22, 0
    %p96 = por %p94, %p95
    %s98 = sadd.s32 %s97, 1
    %p101 = scmp.eq.s32.totalorder %s16, 1
    %p102 = scmp.ne.s32.totalorder %s97, %s99
    %p103 = scmp.eq.s32.totalorder %s16, 0
    %p104 = por %p102, %p103
    %p105 = scmp.ne.s32.totalorder %s97, %s99
    %p106 = scmp.eq.s32.totalorder %s21, 1
    %p107 = por %p105, %p106
    %p108 = scmp.ne.s32.totalorder %s99, %s100
    %p109 = scmp.eq.s32.totalorder %s21, 0
    %p110 = por %p108, %p109
    %p111 = scmp.ne.s32.totalorder %s99, %s100
    %p112 = scmp.eq.s32.totalorder %s22, 1
    %p113 = por %p111, %p112
    %p115 = scmp.ne.s32.totalorder %s100, %s114
    %p116 = scmp.eq.s32.totalorder %s22, 0
    %p117 = por %p115, %p116
    %s119 = sadd.s32 %s118, 1
    %p122 = scmp.eq.s32.totalorder %s16, 1
    %p123 = scmp.ne.s32.totalorder %s118, %s120
    %p124 = scmp.eq.s32.totalorder %s16, 0
    %p125 = por %p123, %p124
    %p126 = scmp.ne.s32.totalorder %s118, %s120
    %p127 = scmp.eq.s32.totalorder %s21, 1
    %p128 = por %p126, %p127
    %p129 = scmp.ne.s32.totalorder %s120, %s121
    %p130 = scmp.eq.s32.totalorder %s21, 0
    %p131 = por %p129, %p130
    %p132 = scmp.ne.s32.totalorder %s120, %s121
    %p133 = scmp.eq.s32.totalorder %s22, 1
    %p134 = por %p132, %p133
    %p136 = scmp.ne.s32.totalorder %s121, %s135
    %p137 = scmp.eq.s32.totalorder %s22, 0
    %p138 = por %p136, %p137
    %s140 = sadd.s32 %s139, 1
    %p143 = scmp.eq.s32.totalorder %s16, 1
    %p144 = scmp.ne.s32.totalorder %s139, %s141
    %p145 = scmp.eq.s32.totalorder %s16, 0
    %p146 = por %p144, %p145
    %p147 = scmp.ne.s32.totalorder %s139, %s141
    %p148 = scmp.eq.s32.totalorder %s21, 1
    %p149 = por %p147, %p148
    %p150 = scmp.ne.s32.totalorder %s141, %s142
    %p151 = scmp.eq.s32.totalorder %s21, 0
    %p152 = por %p150, %p151
    %p153 = scmp.ne.s32.totalorder %s141, %s142
    %p154 = scmp.eq.s32.totalorder %s22, 1
    %p155 = por %p153, %p154
    %p157 = scmp.ne.s32.totalorder %s142, %s156
    %p158 = scmp.eq.s32.totalorder %s22, 0
    %p159 = por %p157, %p158
    %s161 = sadd.s32 %s160, 1
    %p164 = scmp.eq.s32.totalorder %s16, 1
    %p165 = scmp.ne.s32.totalorder %s160, %s162
    %p166 = scmp.eq.s32.totalorder %s16, 0
    %p167 = por %p165, %p166
    %p168 = scmp.ne.s32.totalorder %s160, %s162
    %p169 = scmp.eq.s32.totalorder %s21, 1
    %p170 = por %p168, %p169
    %p171 = scmp.ne.s32.totalorder %s162, %s163
    %p172 = scmp.eq.s32.totalorder %s21, 0
    %p173 = por %p171, %p172
    %p174 = scmp.ne.s32.totalorder %s162, %s163
    %p175 = scmp.eq.s32.totalorder %s22, 1
    %p176 = por %p174, %p175
    %p178 = scmp.ne.s32.totalorder %s163, %s177
    %p179 = scmp.eq.s32.totalorder %s22, 0
    %p180 = por %p178, %p179
    %s182 = sadd.s32 %s181, 1
    %p185 = scmp.eq.s32.totalorder %s16, 1
    %p186 = scmp.ne.s32.totalorder %s181, %s183
    %p187 = scmp.eq.s32.totalorder %s16, 0
    %p188 = por %p186, %p187
    %p189 = scmp.ne.s32.totalorder %s181, %s183
    %p190 = scmp.eq.s32.totalorder %s21, 1
    %p191 = por %p189, %p190
    %p192 = scmp.ne.s32.totalorder %s183, %s184
    %p193 = scmp.eq.s32.totalorder %s21, 0
    %p194 = por %p192, %p193
    %p195 = scmp.ne.s32.totalorder %s183, %s184
    %p196 = scmp.eq.s32.totalorder %s22, 1
    %p197 = por %p195, %p196
    %p199 = scmp.ne.s32.totalorder %s184, %s198
    %p200 = scmp.eq.s32.totalorder %s22, 0
    %p201 = por %p199, %p200
    %s202 = ssub.s32 %s16, %s23
    %p203 = scmp.eq.s32.totalorder %s202, 0
    %s205 = sadd.s32 %s204, 1
    %s206 = scalar_select %p203, %s204, %s205
    %p209 = pneg %p203
    %p210 = scmp.eq.s32.totalorder %s16, 1
    %p211 = por %p209, %p210
    %p212 = scmp.ne.s32.totalorder %s204, %s207
    %p213 = scmp.eq.s32.totalorder %s16, 0
    %p214 = por %p212, %p213
    %p215 = scmp.ne.s32.totalorder %s204, %s207
    %p216 = scmp.eq.s32.totalorder %s21, 1
    %p217 = por %p215, %p216
    %p218 = scmp.ne.s32.totalorder %s207, %s208
    %p219 = scmp.eq.s32.totalorder %s21, 0
    %p220 = por %p218, %p219
    %p221 = scmp.ne.s32.totalorder %s207, %s208
    %p222 = scmp.eq.s32.totalorder %s22, 1
    %p223 = por %p221, %p222
    %p225 = scmp.ne.s32.totalorder %s208, %s224
    %p226 = scmp.eq.s32.totalorder %s22, 0
    %p227 = por %p225, %p226
    %p228 = scmp.le.s32.totalorder 1, %s16
    %p229 = scmp.lt.s32.totalorder %s16, 3
    %p230 = pnand %p228, %p229
    %p231 = pneg %p230
    // Predicated region
    $region9: #{_lambda_.28} parent=5 // pred_check
      _
    $region10: #{_lambda_.28} parent=5 // pred_check_branch
      %233 = sbr.rel (%p230) target = $region12
    $region11: #{_lambda_.28} parent=5 // pred_region
      %s234 = ssub.s32 %s16, 1
      // Predicated region
      $region13: #{_lambda_.28} parent=11 // pred_check
        %p235 = pneg %p89
      $region14: #{_lambda_.28} parent=11 // pred_check_branch
        %237 = sbr.rel (%p235) target = $region16
      $region15: #{_lambda_.28} parent=11 // pred_region
        _
      $region16: #{_lambda_.28} parent=11 // pred_fallthru
        _
      // Predicated region
      $region17: #{_lambda_.28} parent=11 // pred_check
        %p238 = pneg %p110
      $region18: #{_lambda_.28} parent=11 // pred_check_branch
        %240 = sbr.rel (%p238) target = $region20
      $region19: #{_lambda_.28} parent=11 // pred_region
        _
      $region20: #{_lambda_.28} parent=11 // pred_fallthru
        _
      // Predicated region
      $region21: #{_lambda_.28} parent=11 // pred_check
        %p241 = pneg %p131
      $region22: #{_lambda_.28} parent=11 // pred_check_branch
        %243 = sbr.rel (%p241) target = $region24
      $region23: #{_lambda_.28} parent=11 // pred_region
        _
      $region24: #{_lambda_.28} parent=11 // pred_fallthru
        _
      // Predicated region
      $region25: #{_lambda_.28} parent=11 // pred_check
        %p244 = pneg %p152
      $region26: #{_lambda_.28} parent=11 // pred_check_branch
        %246 = sbr.rel (%p244) target = $region28
      $region27: #{_lambda_.28} parent=11 // pred_region
        _
      $region28: #{_lambda_.28} parent=11 // pred_fallthru
        _
      // Predicated region
      $region29: #{_lambda_.28} parent=11 // pred_check
        %p247 = pneg %p173
      $region30: #{_lambda_.28} parent=11 // pred_check_branch
        %249 = sbr.rel (%p247) target = $region32
      $region31: #{_lambda_.28} parent=11 // pred_region
        _
      $region32: #{_lambda_.28} parent=11 // pred_fallthru
        _
      // Predicated region
      $region33: #{_lambda_.28} parent=11 // pred_check
        %p250 = pneg %p194
      $region34: #{_lambda_.28} parent=11 // pred_check_branch
        %252 = sbr.rel (%p250) target = $region36
      $region35: #{_lambda_.28} parent=11 // pred_region
        _
      $region36: #{_lambda_.28} parent=11 // pred_fallthru
        _
    $region12: #{_lambda_.28} parent=5 // pred_fallthru
      _
    %p253 = scmp.lt.s32.totalorder %s16, 2
    // Predicated region
    $region37: #{_lambda_.28} parent=5 // pred_check
      %p254 = pneg %p253
    $region38: #{_lambda_.28} parent=5 // pred_check_branch
      %256 = sbr.rel (%p254) target = $region40
    $region39: #{_lambda_.28} parent=5 // pred_region
      // Predicated region
      $region41: #{_lambda_.28} parent=39 // pred_check
        %p257 = pneg %p36
      $region42: #{_lambda_.28} parent=39 // pred_check_branch
        %259 = sbr.rel (%p257) target = $region44
      $region43: #{_lambda_.28} parent=39 // pred_region
        %p260 = scmp.lt.s32.totalorder %s16, 1
        %s261 = scalar_select %p260, %s16, 1
        %s262 = smul.addr %s261, 8
        %s263 = scalar_lea.vmem %s0, %s262
      $region44: #{_lambda_.28} parent=39 // pred_fallthru
        _
      // Predicated region
      $region45: #{_lambda_.28} parent=39 // pred_check
        %p264 = pneg %p62
      $region46: #{_lambda_.28} parent=39 // pred_check_branch
        %266 = sbr.rel (%p264) target = $region48
      $region47: #{_lambda_.28} parent=39 // pred_region
        %p267 = scmp.lt.s32.totalorder %s16, 1
        %s268 = scalar_select %p267, %s16, 1
        %s269 = smul.addr %s268, 8
        %s270 = scalar_lea.vmem %s1, %s269
      $region48: #{_lambda_.28} parent=39 // pred_fallthru
        _
    $region40: #{_lambda_.28} parent=5 // pred_fallthru
      _
    %p271 = scmp.le.s32.totalorder 1, %s16
    %p272 = scmp.lt.s32.totalorder %s16, 3
    %p273 = pnand %p271, %p272
    %p274 = pneg %p273
    // Predicated region
    $region49: #{_lambda_.28} parent=5 // pred_check
      _
    $region50: #{_lambda_.28} parent=5 // pred_check_branch
      %276 = sbr.rel (%p273) target = $region52
    $region51: #{_lambda_.28} parent=5 // pred_region
      %s277 = ssub.s32 %s16, 1
      %p278 = scmp.lt.s32.totalorder %s21, 1
      %s279 = scalar_select %p278, %s21, 1
      %s280 = smul.addr %s279, 8
      %s281 = scalar_lea.vmem %s0, %s280
      %p282 = pneg %p42
      %p283 = pneg %p39
      %p284 = scmp.lt.s32.totalorder %s21, 1
      %s285 = scalar_select %p284, %s21, 1
      %s286 = smul.addr %s285, 8
      %s287 = scalar_lea.vmem %s1, %s286
      %p288 = pneg %p68
      %p289 = pneg %p65
      %p290 = pneg %p89
      %p291 = pneg %p86
      %p292 = pneg %p110
      %p293 = pneg %p107
      %p294 = pneg %p131
      %p295 = pneg %p128
      %p296 = pneg %p152
      %p297 = pneg %p149
      %p298 = pneg %p173
      %p299 = pneg %p170
      %p300 = pneg %p194
      %p301 = pneg %p191
      %p302 = pneg %p220
      %p303 = pneg %p217
      %p304 = scmp.lt.s32.totalorder %s21, 1
      %s305 = scalar_select %p304, %s21, 1
      %s306 = scalar_lea.vmem %s8, %s305
      %p307 = scmp.lt.s32.totalorder %s21, 1
      %s308 = scalar_select %p307, %s21, 1
      %s309 = smul.addr %s308, 8
      %s310 = scalar_lea.vmem %s0, %s309
      %p311 = scmp.lt.s32.totalorder %s21, 1
      %s312 = scalar_select %p311, %s21, 1
      %s313 = smul.addr %s312, 8
      %s314 = scalar_lea.vmem %s1, %s313
      %p315 = scmp.lt.s32.totalorder %s21, 1
      %s316 = scalar_select %p315, %s21, 1
      %s317 = scalar_lea.vmem %s8, %s316
      %v319 = vld [vmem:[%s310] sm:$0xff]
      %v320 = vld [vmem:[%s2] sm:$0xff]
      %v321 = vld [vmem:[%s2 + $0x8] sm:$0xff]
      %v322 = vld [vmem:[%s2 + $0x10] sm:$0xff]
      %v323 = vld [vmem:[%s2 + $0x18] sm:$0xff]
      %v324 = vpack.c.bf16 %v319, %v319
      %v325 = vpack.c.bf16 %v321, %v320
      %v326 = vpack.c.bf16 %v323, %v322
      %v327 = vld [vmem:[%s3] sm:$0x1]
      %v329 = vlaneseq
      %v330 = vshrl.u32 %v329, 7
      %v331 = vsub.s32 0, %v330
      %v332 = vrot.slane %v327, %v331
      %vm334 = vcmask 261120
      %v336 = vsel %vm334, %v324, 0
      %338 = vmatprep.subr.bf16.mxu0 0
      %339 = vmatpush1.bf16.msra.mxu0 %v325
      %340 = vmatprep.subr.bf16.mxu0 0
      %341 = vmatpush1.bf16.msra.mxu0 %v326
      %342 = vmatprep.subr.bf16.mxu0 0
      %343 = vmatpush1.bf16.msra.mxu0 0
      %344 = vmatprep.subr.bf16.mxu0 0
      %345 = vmatpush1.bf16.msra.mxu0 0
      %346 = vmatprep.subr.bf16.mxu0 0
      %347 = vmatpush1.bf16.msra.mxu0 0
      %348 = vmatprep.subr.bf16.mxu0 0
      %349 = vmatpush1.bf16.msra.mxu0 0
      %350 = vmatprep.subr.bf16.mxu0 0
      %351 = vmatpush1.bf16.msra.mxu0 0
      %352 = vmatprep.subr.bf16.mxu0 0
      %353 = vmatpush1.bf16.msra.mxu0 0
      %354 = vmatprep.subr.bf16.mxu0 0
      %355 = vmatpush1.bf16.msra.mxu0 0
      %356 = vmatprep.subr.bf16.mxu0 0
      %357 = vmatpush1.bf16.msra.mxu0 0
      %358 = vmatprep.subr.bf16.mxu0 0
      %359 = vmatpush1.bf16.msra.mxu0 0
      %360 = vmatprep.subr.bf16.mxu0 0
      %361 = vmatpush1.bf16.msra.mxu0 0
      %362 = vmatprep.subr.bf16.mxu0 0
      %363 = vmatpush1.bf16.msra.mxu0 0
      %364 = vmatprep.subr.bf16.mxu0 0
      %365 = vmatpush1.bf16.msra.mxu0 0
      %366 = vmatprep.subr.bf16.mxu0 0
      %367 = vmatpush1.bf16.msra.mxu0 0
      %368 = vmatprep.subr.bf16.mxu0 0
      %369 = vmatpush1.bf16.msra.mxu0 0
      %370 = vmatprep.mubr.bf16.mxu0 0
      %371 = vmatmul.mubr.bf16.gmra.mrb[0].mxu0 %v336
      %v372 = vpop.f32.mrb[0].mxu0
      %v373 = vadd.f32 %v332, %v372
      %v374 = vpop.f32.mrb[0].mxu0
      %v375 = vpop.f32.mrb[0].mxu0
      %v376 = vpop.f32.mrb[0].mxu0
      %377 = vdwg.mxu0
      %v378 = vmax.f32 %v373, 0.0
      %v379 = vld [vmem:[%s4] sm:$0xff]
      %v380 = vld [vmem:[%s4 + $0x8] sm:$0xff]
      %v381 = vld [vmem:[%s4 + $0x10] sm:$0xff]
      %v382 = vld [vmem:[%s4 + $0x18] sm:$0xff]
      %v383 = vpack.c.bf16 %v378, %v378
      %v384 = vpack.c.bf16 %v380, %v379
      %v385 = vpack.c.bf16 %v382, %v381
      %v386 = vld [vmem:[#allocation2] sm:$0x1]
      %v388 = vlaneseq
      %v389 = vshrl.u32 %v388, 7
      %v390 = vsub.s32 0, %v389
      %v391 = vrot.slane %v386, %v390
      %v394 = vsel %vm334, %v383, 0
      %396 = vmatprep.subr.bf16.mxu0 0
      %397 = vmatpush1.bf16.msra.mxu0 %v384
      %398 = vmatprep.subr.bf16.mxu0 0
      %399 = vmatpush1.bf16.msra.mxu0 %v385
      %400 = vmatprep.subr.bf16.mxu0 0
      %401 = vmatpush1.bf16.msra.mxu0 0
      %402 = vmatprep.subr.bf16.mxu0 0
      %403 = vmatpush1.bf16.msra.mxu0 0
      %404 = vmatprep.subr.bf16.mxu0 0
      %405 = vmatpush1.bf16.msra.mxu0 0
      %406 = vmatprep.subr.bf16.mxu0 0
      %407 = vmatpush1.bf16.msra.mxu0 0
      %408 = vmatprep.subr.bf16.mxu0 0
      %409 = vmatpush1.bf16.msra.mxu0 0
      %410 = vmatprep.subr.bf16.mxu0 0
      %411 = vmatpush1.bf16.msra.mxu0 0
      %412 = vmatprep.subr.bf16.mxu0 0
      %413 = vmatpush1.bf16.msra.mxu0 0
      %414 = vmatprep.subr.bf16.mxu0 0
      %415 = vmatpush1.bf16.msra.mxu0 0
      %416 = vmatprep.subr.bf16.mxu0 0
      %417 = vmatpush1.bf16.msra.mxu0 0
      %418 = vmatprep.subr.bf16.mxu0 0
      %419 = vmatpush1.bf16.msra.mxu0 0
      %420 = vmatprep.subr.bf16.mxu0 0
      %421 = vmatpush1.bf16.msra.mxu0 0
      %422 = vmatprep.subr.bf16.mxu0 0
      %423 = vmatpush1.bf16.msra.mxu0 0
      %424 = vmatprep.subr.bf16.mxu0 0
      %425 = vmatpush1.bf16.msra.mxu0 0
      %426 = vmatprep.subr.bf16.mxu0 0
      %427 = vmatpush1.bf16.msra.mxu0 0
      %428 = vmatprep.mubr.bf16.mxu0 0
      %429 = vmatmul.mubr.bf16.gmra.mrb[0].mxu0 %v394
      %v430 = vpop.f32.mrb[0].mxu0
      %v431 = vadd.f32 %v391, %v430
      %v432 = vpop.f32.mrb[0].mxu0
      %v433 = vpop.f32.mrb[0].mxu0
      %v434 = vpop.f32.mrb[0].mxu0
      %435 = vdwg.mxu0
      %v436 = vld [vmem:[%s314] sm:$0xff]
      %v437 = vadd.f32 %v431, %v436
      %vm438 = vcmask 7168
      %v439 = vsel %vm438, %v437, -inf
      %v440 = vrot.slane %v439, 4
      %v441 = vmax.f32 %v439, %v440
      %v442 = vrot.slane %v441, 2
      %v443 = vmax.f32 %v441, %v442
      %v444 = vrot.slane %v443, 1
      %v445 = vmax.f32 %v443, %v444
      %v446 = vsub.f32 %v437, %v445
      %v447 = vmul.f32 %v446, 1.442695
      %v448 = vpow.pop %v447
      %v449 = vsel %vm438, %v448, 0.0
      %v450 = vrot.slane %v449, 4
      %v451 = vadd.f32 %v449, %v450
      %v452 = vrot.slane %v451, 2
      %v453 = vadd.f32 %v451, %v452
      %v454 = vrot.slane %v453, 1
      %v455 = vadd.f32 %v453, %v454
      %v456 = vrcp.pop %v455
      %v457 = vmul.f32 %v448, %v456
      %459 = vset.pattern.permute.xlu0 0
      %460 = vperm.xlu0 %459, %v457
      %v461 = vpop.permute.xlu0 %460
      %v463 = vmul.f32 %v461, %v319
      %v464 = vsel %vm334, %v463, 0.0
      %v465 = vrot.slane %v464, 4
      %v466 = vadd.f32 %v464, %v465
      %v467 = vrot.slane %v466, 2
      %v468 = vadd.f32 %v466, %v467
      %v469 = vrot.slane %v468, 1
      %v470 = vadd.f32 %v468, %v469
      %v471 = vld [vmem:[%s6] sm:$0xff]
      %v472 = vld [vmem:[%s6 + $0x8] sm:$0xff]
      %v473 = vld [vmem:[%s6 + $0x10] sm:$0xff]
      %v474 = vld [vmem:[%s6 + $0x18] sm:$0xff]
      %v475 = vpack.c.bf16 %v470, %v470
      %v476 = vpack.c.bf16 %v472, %v471
      %v477 = vpack.c.bf16 %v474, %v473
      %v478 = vld [vmem:[%s7] sm:$0x1]
      %v480 = vsel %vm334, %v475, 0
      %482 = vmatprep.subr.bf16.mxu0 0
      %483 = vmatpush1.bf16.msra.mxu0 %v476
      %484 = vmatprep.subr.bf16.mxu0 0
      %485 = vmatpush1.bf16.msra.mxu0 %v477
      %486 = vmatprep.subr.bf16.mxu0 0
      %487 = vmatpush1.bf16.msra.mxu0 0
      %488 = vmatprep.subr.bf16.mxu0 0
      %489 = vmatpush1.bf16.msra.mxu0 0
      %490 = vmatprep.subr.bf16.mxu0 0
      %491 = vmatpush1.bf16.msra.mxu0 0
      %492 = vmatprep.subr.bf16.mxu0 0
      %493 = vmatpush1.bf16.msra.mxu0 0
      %494 = vmatprep.subr.bf16.mxu0 0
      %495 = vmatpush1.bf16.msra.mxu0 0
      %496 = vmatprep.subr.bf16.mxu0 0
      %497 = vmatpush1.bf16.msra.mxu0 0
      %498 = vmatprep.subr.bf16.mxu0 0
      %499 = vmatpush1.bf16.msra.mxu0 0
      %500 = vmatprep.subr.bf16.mxu0 0
      %501 = vmatpush1.bf16.msra.mxu0 0
      %502 = vmatprep.subr.bf16.mxu0 0
      %503 = vmatpush1.bf16.msra.mxu0 0
      %504 = vmatprep.subr.bf16.mxu0 0
      %505 = vmatpush1.bf16.msra.mxu0 0
      %506 = vmatprep.subr.bf16.mxu0 0
      %507 = vmatpush1.bf16.msra.mxu0 0
      %508 = vmatprep.subr.bf16.mxu0 0
      %509 = vmatpush1.bf16.msra.mxu0 0
      %510 = vmatprep.subr.bf16.mxu0 0
      %511 = vmatpush1.bf16.msra.mxu0 0
      %512 = vmatprep.subr.bf16.mxu0 0
      %513 = vmatpush1.bf16.msra.mxu0 0
      %514 = vmatprep.mubr.bf16.mxu0 0
      %515 = vmatmul.mubr.bf16.gmra.mrb[0].mxu0 %v480
      %v516 = vpop.f32.mrb[0].mxu0
      %v517 = vadd.f32 %v478, %v516
      %v518 = vpop.f32.mrb[0].mxu0
      %v519 = vpop.f32.mrb[0].mxu0
      %v520 = vpop.f32.mrb[0].mxu0
      %521 = vdwg.mxu0
      %vm522 = vcmask 516096
      %523 = vst.msk [vmem:[%s317] sm:$0x1] %vm522, %v517
      %p524 = scmp.lt.s32.totalorder %s21, 1
      %s525 = scalar_select %p524, %s21, 1
      %s526 = scalar_lea.vmem %s8, %s525
      // Predicated region
      $region53: #{_lambda_.28} parent=51 // pred_check
        %p527 = pneg %p217
      $region54: #{_lambda_.28} parent=51 // pred_check_branch
        %529 = sbr.rel (%p527) target = $region56
      $region55: #{_lambda_.28} parent=51 // pred_region
        _
      $region56: #{_lambda_.28} parent=51 // pred_fallthru
        _
    $region52: #{_lambda_.28} parent=5 // pred_fallthru
      _
    %p530 = scmp.le.s32.totalorder 2, %s16
    // Predicated region
    $region57: #{_lambda_.28} parent=5 // pred_check
      %p531 = pneg %p530
    $region58: #{_lambda_.28} parent=5 // pred_check_branch
      %533 = sbr.rel (%p531) target = $region60
    $region59: #{_lambda_.28} parent=5 // pred_region
      %s534 = ssub.s32 %s16, 2
      // Predicated region
      $region61: #{_lambda_.28} parent=59 // pred_check
        %p535 = pneg %p223
      $region62: #{_lambda_.28} parent=59 // pred_check_branch
        %537 = sbr.rel (%p535) target = $region64
      $region63: #{_lambda_.28} parent=59 // pred_region
        %p538 = scmp.lt.s32.totalorder %s22, 1
        %s539 = scalar_select %p538, %s22, 1
        %s540 = scalar_lea.vmem %s8, %s539
      $region64: #{_lambda_.28} parent=59 // pred_fallthru
        _
    $region60: #{_lambda_.28} parent=5 // pred_fallthru
      _
  $region6: #{_lambda_.28} parent=0 // loop_footer
    %s20 = sadd.s32 1, %s16
  $region7: #{_lambda_.28} parent=0 // loop_footer_branch
    %15 = sbr.rel target = $region3
  $region8: #{_lambda_.28} parent=0 // loop_exit
    _

// kernel: _lambda_.29
$region0: #{_lambda_.29}
  #allocation0 [shape = 'u32[]', space=smem, size = 0x4, offset = 0x4, fixed_abs, tag = 'smem constant byte address 0x4 - core index']
  #allocation1 [shape = 'u32[144,128]{1,0:T(1,128)}', space=vmem, size = 0x12000, scoped, tag = 'internal scratch']
  #allocation2 [shape = 'f32[1,1]{1,0:T(1,128)S(1)}', space=vmem, size = 0x200, scoped, tag = 'scoped memory for _lambda_.29']
  %s0 = inlined_call_operand.vmem [shape: f32[2,64], index: 0, kind: input, shape index: {}]
  %s1 = inlined_call_operand.vmem [shape: f32[2,64], index: 1, kind: input, shape index: {}]
  %s2 = inlined_call_operand.vmem [shape: f32[1,64], index: 2, kind: input, shape index: {}]
  %s3 = inlined_call_operand.vmem [shape: f32[1,64], index: 3, kind: input, shape index: {}]
  %s4 = inlined_call_operand.vmem [shape: f32[64,1], index: 4, kind: input, shape index: {}]
  %s5 = inlined_call_operand.<no memory space> [shape: f32[1,1], index: 5, kind: input, shape index: {}]
  %s6 = inlined_call_operand.vmem [shape: f32[2,1], index: 6, kind: output, shape index: {}]
  %s7 = sld [smem:[#allocation0]]
  $region34: #{_lambda_.29} parent=0
    _
  %s9 = ssub.s32 1, %s7
  %s10 = scalar_select 0, %s9, %s7
  %v11 = vstv %s5
  %12 = vst [vmem:[#allocation2] sm:$0x1] %v11
  // Predicated region
  $region2: #{_lambda_.29} parent=0 // pred_check
    _
  $region3: #{_lambda_.29} parent=0 // pred_check_branch
    %14 = sbr.rel (0) target = $region5
  $region4: #{_lambda_.29} parent=0 // pred_region
    _
  $region5: #{_lambda_.29} parent=0 // pred_fallthru
    _
  // Predicated region
  $region6: #{_lambda_.29} parent=0 // pred_check
    _
  $region7: #{_lambda_.29} parent=0 // pred_check_branch
    %16 = sbr.rel (0) target = $region9
  $region8: #{_lambda_.29} parent=0 // pred_region
    _
  $region9: #{_lambda_.29} parent=0 // pred_fallthru
    _
  // Predicated region
  $region10: #{_lambda_.29} parent=0 // pred_check
    _
  $region11: #{_lambda_.29} parent=0 // pred_check_branch
    %18 = sbr.rel (0) target = $region13
  $region12: #{_lambda_.29} parent=0 // pred_region
    _
  $region13: #{_lambda_.29} parent=0 // pred_fallthru
    _
  // Predicated region
  $region14: #{_lambda_.29} parent=0 // pred_check
    _
  $region15: #{_lambda_.29} parent=0 // pred_check_branch
    %20 = sbr.rel (0) target = $region17
  $region16: #{_lambda_.29} parent=0 // pred_region
    _
  $region17: #{_lambda_.29} parent=0 // pred_fallthru
    _
  // Predicated region
  $region18: #{_lambda_.29} parent=0 // pred_check
    _
  $region19: #{_lambda_.29} parent=0 // pred_check_branch
    %22 = sbr.rel (0) target = $region21
  $region20: #{_lambda_.29} parent=0 // pred_region
    _
  $region21: #{_lambda_.29} parent=0 // pred_fallthru
    _
  // Predicated region
  $region22: #{_lambda_.29} parent=0 // pred_check
    _
  $region23: #{_lambda_.29} parent=0 // pred_check_branch
    %24 = sbr.rel (0) target = $region25
  $region24: #{_lambda_.29} parent=0 // pred_region
    _
  $region25: #{_lambda_.29} parent=0 // pred_fallthru
    _
  %v26 = vld [vmem:[%s0] sm:$0x3]
  %v27 = vld [vmem:[%s1] sm:$0x3]
  %v28 = vadd.f32 %v26, %v27
  %v29 = vld [vmem:[%s2] sm:$0x1]
  %v30 = vld [vmem:[%s3] sm:$0x1]
  %vm31 = vcmask 517120
  %v32 = vsel %vm31, %v28, 0.0
  %33 = vadd.xlane.f32.xlu0 %v32
  %v34 = vpop.xlane.xlu0 %33
  %v35 = vrcp.pop 64.0
  %v36 = vmul.f32 %v34, %v35
  %v37 = vsub.f32 %v28, %v36
  %v38 = vmul.f32 %v37, %v37
  %v39 = vsel %vm31, %v38, 0.0
  %40 = vadd.xlane.f32.xlu0 %v39
  %v41 = vpop.xlane.xlu0 %40
  %v42 = vrcp.pop 63.0
  %v43 = vmul.f32 %v41, %v42
  %v45 = vlaneseq
  %v46 = vshrl.u32 %v45, 7
  %v47 = vsub.s32 0, %v46
  %v48 = vrot.slane %v29, %v47
  %v50 = vmul.f32 %v48, %v37
  %v51 = vrsqrt.pop %v43
  %v52 = vmul.f32 %v43, %v51
  %vm53 = vcmp.eq.f32.partialorder %v43, inf
  %v54 = vsel %vm53, %v43, %v52
  %vm55 = vcmp.eq.f32.partialorder %v43, 0.0
  %v56 = vand.u32 %v43, 2147483648
  %v57 = vsel %vm55, %v56, %v54
  %v58 = vadd.f32 %v57, 1e-06
  %v59 = vrcp.pop %v58
  %v60 = vmul.f32 %v50, %v59
  %v62 = vlaneseq
  %v63 = vshrl.u32 %v62, 7
  %v64 = vsub.s32 0, %v63
  %v65 = vrot.slane %v30, %v64
  %v67 = vadd.f32 %v60, %v65
  %v68 = vld [vmem:[%s4] sm:$0xff]
  %v69 = vld [vmem:[%s4 + $0x8] sm:$0xff]
  %v70 = vld [vmem:[%s4 + $0x10] sm:$0xff]
  %v71 = vld [vmem:[%s4 + $0x18] sm:$0xff]
  %v72 = vld [vmem:[%s4 + $0x20] sm:$0xff]
  %v73 = vld [vmem:[%s4 + $0x28] sm:$0xff]
  %v74 = vld [vmem:[%s4 + $0x30] sm:$0xff]
  %v75 = vld [vmem:[%s4 + $0x38] sm:$0xff]
  %v76 = vpack.c.bf16 %v67, %v67
  %v77 = vpack.c.bf16 %v69, %v68
  %v78 = vpack.c.bf16 %v71, %v70
  %v79 = vpack.c.bf16 %v73, %v72
  %v80 = vpack.c.bf16 %v75, %v74
  %v81 = vld [vmem:[#allocation2] sm:$0x1]
  %v83 = vlaneseq
  %v84 = vshrl.u32 %v83, 7
  %v85 = vsub.s32 0, %v84
  %v86 = vrot.slane %v81, %v85
  %vm88 = vcmask 523264
  %v90 = vsel %vm88, %v76, 0
  %92 = vmatprep.subr.bf16.mxu0 0
  %93 = vmatpush1.bf16.msra.mxu0 %v77
  %94 = vmatprep.subr.bf16.mxu0 0
  %95 = vmatpush1.bf16.msra.mxu0 %v78
  %96 = vmatprep.subr.bf16.mxu0 0
  %97 = vmatpush1.bf16.msra.mxu0 %v79
  %98 = vmatprep.subr.bf16.mxu0 0
  %99 = vmatpush1.bf16.msra.mxu0 %v80
  %100 = vmatprep.subr.bf16.mxu0 0
  %101 = vmatpush1.bf16.msra.mxu0 0
  %102 = vmatprep.subr.bf16.mxu0 0
  %103 = vmatpush1.bf16.msra.mxu0 0
  %104 = vmatprep.subr.bf16.mxu0 0
  %105 = vmatpush1.bf16.msra.mxu0 0
  %106 = vmatprep.subr.bf16.mxu0 0
  %107 = vmatpush1.bf16.msra.mxu0 0
  %108 = vmatprep.subr.bf16.mxu0 0
  %109 = vmatpush1.bf16.msra.mxu0 0
  %110 = vmatprep.subr.bf16.mxu0 0
  %111 = vmatpush1.bf16.msra.mxu0 0
  %112 = vmatprep.subr.bf16.mxu0 0
  %113 = vmatpush1.bf16.msra.mxu0 0
  %114 = vmatprep.subr.bf16.mxu0 0
  %115 = vmatpush1.bf16.msra.mxu0 0
  %116 = vmatprep.subr.bf16.mxu0 0
  %117 = vmatpush1.bf16.msra.mxu0 0
  %118 = vmatprep.subr.bf16.mxu0 0
  %119 = vmatpush1.bf16.msra.mxu0 0
  %120 = vmatprep.subr.bf16.mxu0 0
  %121 = vmatpush1.bf16.msra.mxu0 0
  %122 = vmatprep.subr.bf16.mxu0 0
  %123 = vmatpush1.bf16.msra.mxu0 0
  %124 = vmatprep.mubr.bf16.mxu0 0
  %125 = vmatmul.mubr.bf16.gmra.mrb[0].mxu0 %v90
  %v126 = vpop.f32.mrb[0].mxu0
  %v127 = vadd.f32 %v86, %v126
  %v128 = vpop.f32.mrb[0].mxu0
  %v129 = vpop.f32.mrb[0].mxu0
  %v130 = vpop.f32.mrb[0].mxu0
  %131 = vdwg.mxu0
  %v132 = vxor.u32 %v127, 2147483648
  %v133 = vmul.f32 %v132, 1.442695
  %v134 = vpow.pop %v133
  %v135 = vadd.f32 %v134, 1.0
  %v136 = vrcp.pop %v135
  %v137 = vmul.f32 1.0, %v136
  %vm138 = vcmask 1024
  %139 = vst.msk [vmem:[%s6] sm:$0x3] %vm138, %v137
  // Predicated region
  $region26: #{_lambda_.29} parent=0 // pred_check
    _
  $region27: #{_lambda_.29} parent=0 // pred_check_branch
    %141 = sbr.rel (0) target = $region29
  $region28: #{_lambda_.29} parent=0 // pred_region
    _
  $region29: #{_lambda_.29} parent=0 // pred_fallthru
    _
  // Predicated region
  $region30: #{_lambda_.29} parent=0 // pred_check
    _
  $region31: #{_lambda_.29} parent=0 // pred_check_branch
    %143 = sbr.rel (0) target = $region33
  $region32: #{_lambda_.29} parent=0 // pred_region
    _
  $region33: #{_lambda_.29} parent=0 // pred_fallthru
    _

</llo_original>
